<compile_context>
chip_gen: v6e
topology: v6e:2x2x1
jax: 0.10.0
libtpu: 0.0.40
codegen_flags: <defaults>
</compile_context>

<pallas_src>
import jax
import jax.numpy as jnp
from jax.experimental import pallas as pl
from jax.experimental.pallas import tpu as pltpu


# ----------------------------------------------------------------------------
# Small dense Pallas kernel (single-block matmul + bias) for the few one-shot
# projections (mel_linear, attention "processed memory", BiLSTM input proj).
# ----------------------------------------------------------------------------
def _linear_kernel(x_ref, w_ref, b_ref, o_ref):
    o_ref[...] = (jnp.dot(x_ref[...], w_ref[...],
                          preferred_element_type=jnp.float32) + b_ref[...])


def linear_bias(x, w, b):
    """y = x @ w + b.  x:(M,K) w:(K,N) b:(1,N)."""
    M, K = x.shape
    N = w.shape[1]
    return pl.pallas_call(
        _linear_kernel,
        grid=(1,),
        in_specs=[pl.BlockSpec((M, K), lambda i: (0, 0)),
                  pl.BlockSpec((K, N), lambda i: (0, 0)),
                  pl.BlockSpec((1, N), lambda i: (0, 0))],
        out_specs=pl.BlockSpec((M, N), lambda i: (0, 0)),
        out_shape=jax.ShapeDtypeStruct((M, N), jnp.float32),
    )(x, w, b)


# ----------------------------------------------------------------------------
# Fused Conv1d(+BN(eval)+act) stack: whole stack in one pallas_call, all
# intermediates stay in VMEM (no HBM im2col, no per-layer round trips).
# ----------------------------------------------------------------------------
def _make_conv_stack_kernel(B, T, layer_meta):
    """layer_meta: list of (k, Cin, Cout, act)."""
    n = len(layer_meta)

    def kernel(*refs):
        x_ref, tmask_ref = refs[0], refs[1]
        out_ref = refs[2 + 3 * n]
        tmask = tmask_ref[...]                       # (1, T, 1)
        h = x_ref[...]                               # (B, T, C0)
        for li, (k, cin, cout, act) in enumerate(layer_meta):
            w_ref = refs[2 + 3 * li]                 # (k, Cin, Cout)
            s_ref = refs[3 + 3 * li]                 # (1, Cout)  BN scale
            b_ref = refs[4 + 3 * li]                 # (1, Cout)  BN shift
            pad = (k - 1) // 2
            acc = jnp.zeros((B * T, cout), jnp.float32)
            for kk in range(k):
                off = kk - pad
                if off < 0:
                    sh = jnp.concatenate(
                        [jnp.zeros((B, -off, cin), jnp.float32),
                         h[:, :T + off, :]], axis=1)
                elif off > 0:
                    sh = jnp.concatenate(
                        [h[:, off:, :],
                         jnp.zeros((B, off, cin), jnp.float32)], axis=1)
                else:
                    sh = h
                acc = acc + jnp.dot(sh.reshape(B * T, cin), w_ref[kk],
                                    preferred_element_type=jnp.float32)
            y = acc * s_ref[...] + b_ref[...]
            if act == "relu":
                y = jnp.maximum(y, 0.0)
            elif act == "tanh":
                y = jnp.tanh(y)
            # keep the sublane-alignment padding at zero so it behaves exactly
            # like the implicit zero conv padding of the un-padded sequence.
            h = y.reshape(B, T, cout) * tmask
        out_ref[...] = h

    return kernel


def conv_stack(x, layers):
    """Fused stack of Conv1d(same-pad, bias=False) + BatchNorm(eval) + act.

    x: (B, T, C0) channels-last.
    layers: list of (w_torch (Cout,Cin,k), bn_scale (1,Cout), bn_shift (1,Cout), act).
    """
    B, T, _ = x.shape
    Tp = ((T + 7) // 8) * 8            # sublane-align T so in-kernel reshapes are free
    if Tp != T:
        x = jnp.pad(x, ((0, 0), (0, Tp - T), (0, 0)))
    tmask = (jnp.arange(Tp) < T).astype(jnp.float32)[None, :, None]   # (1, Tp, 1)

    meta = []
    inputs = [x, tmask]
    in_specs = [pl.BlockSpec(x.shape, lambda i: (0, 0, 0)),
                pl.BlockSpec(tmask.shape, lambda i: (0, 0, 0))]
    for (w, s, b, act) in layers:
        cout, cin, k = w.shape
        meta.append((k, cin, cout, act))
        inputs += [jnp.transpose(w, (2, 1, 0)), s, b]                  # (k, Cin, Cout)
        in_specs += [pl.BlockSpec((k, cin, cout), lambda i: (0, 0, 0)),
                     pl.BlockSpec((1, cout), lambda i: (0, 0)),
                     pl.BlockSpec((1, cout), lambda i: (0, 0))]
    cout_last = meta[-1][2]
    out = pl.pallas_call(
        _make_conv_stack_kernel(B, Tp, meta),
        grid=(1,),
        in_specs=in_specs,
        out_specs=pl.BlockSpec((B, Tp, cout_last), lambda i: (0, 0, 0)),
        out_shape=jax.ShapeDtypeStruct((B, Tp, cout_last), jnp.float32),
        compiler_params=pltpu.CompilerParams(dimension_semantics=("arbitrary",)),
    )(*inputs)
    return out[:, :T, :]


# ----------------------------------------------------------------------------
# Fused bidirectional LSTM recurrence (packed-sequence semantics), grid=(T,).
# Input projections are precomputed; W_hh stays VMEM-resident; h/c in scratch.
# ----------------------------------------------------------------------------
def _make_bilstm_kernel(H):
    def kernel(lens_ref, gxf_ref, gxb_ref, whhf_ref, whhb_ref,
               outf_ref, outb_ref, hf, cf, hb, cb):
        t = pl.program_id(0)
        n_t = pl.num_programs(0)

        @pl.when(t == 0)
        def _init():
            hf[...] = jnp.zeros_like(hf)
            cf[...] = jnp.zeros_like(cf)
            hb[...] = jnp.zeros_like(hb)
            cb[...] = jnp.zeros_like(cb)

        def cell(gx, h_prev, c_prev, whh):
            g = gx + jnp.dot(h_prev, whh, preferred_element_type=jnp.float32)
            i = jax.nn.sigmoid(g[:, 0:H])
            f = jax.nn.sigmoid(g[:, H:2 * H])
            cc = jnp.tanh(g[:, 2 * H:3 * H])
            o = jax.nn.sigmoid(g[:, 3 * H:4 * H])
            c_new = f * c_prev + i * cc
            return o * jnp.tanh(c_new), c_new

        lens = lens_ref[...]                                    # (B, 1) int32

        # forward direction, time index t
        vf = (t < lens).astype(jnp.float32)
        hn, cn = cell(gxf_ref[0], hf[...], cf[...], whhf_ref[...])
        hf[...] = vf * hn + (1.0 - vf) * hf[...]
        cf[...] = vf * cn + (1.0 - vf) * cf[...]
        outf_ref[0] = vf * hn                                   # zero at padded steps

        # backward direction, time index T-1-t
        tb = n_t - 1 - t
        vb = (tb < lens).astype(jnp.float32)
        hn2, cn2 = cell(gxb_ref[0], hb[...], cb[...], whhb_ref[...])
        hb[...] = vb * hn2 + (1.0 - vb) * hb[...]
        cb[...] = vb * cn2 + (1.0 - vb) * cb[...]
        outb_ref[0] = vb * hn2

    return kernel


def bilstm(gx_f, gx_b, whh_f, whh_b, lens):
    """gx_f/gx_b: (T, B, 4H) = x @ W_ih + (b_ih + b_hh), time-major.
    Returns (B, T, 2H) with zeros at padded positions (pad_packed semantics)."""
    T, B, H4 = gx_f.shape
    H = H4 // 4
    lens_col = lens.astype(jnp.int32)[:, None]
    out_f, out_b = pl.pallas_call(
        _make_bilstm_kernel(H),
        grid=(T,),
        in_specs=[pl.BlockSpec((B, 1), lambda t: (0, 0)),
                  pl.BlockSpec((1, B, H4), lambda t: (t, 0, 0)),
                  pl.BlockSpec((1, B, H4), lambda t: (T - 1 - t, 0, 0)),
                  pl.BlockSpec((H, H4), lambda t: (0, 0)),
                  pl.BlockSpec((H, H4), lambda t: (0, 0))],
        out_specs=[pl.BlockSpec((1, B, H), lambda t: (t, 0, 0)),
                   pl.BlockSpec((1, B, H), lambda t: (T - 1 - t, 0, 0))],
        out_shape=[jax.ShapeDtypeStruct((T, B, H), jnp.float32),
                   jax.ShapeDtypeStruct((T, B, H), jnp.float32)],
        scratch_shapes=[pltpu.VMEM((B, H), jnp.float32) for _ in range(4)],
        compiler_params=pltpu.CompilerParams(dimension_semantics=("arbitrary",)),
    )(lens_col, gx_f, gx_b, whh_f, whh_b)
    out = jnp.concatenate([out_f, out_b], axis=-1)              # (T, B, 2H)
    return jnp.transpose(out, (1, 0, 2))


# ----------------------------------------------------------------------------
# Fused decoder time-step: attention + prenet + zoneout LSTM stack + outputs.
# One pallas_call over grid=(Td,); weights / memory constant-indexed (VMEM
# resident), recurrent state in scratch, packed lane-dense output per step.
# ----------------------------------------------------------------------------
def _make_decoder_step_kernel(B, Ts, A, mel, r, Hdec, n_pre, n_lstm,
                              k_attn, zoneout, n_pad):
    pad = (k_attn - 1) // 2

    def kernel(*refs):
        (pin_ref, pm_ref, enc_ref, mask_ref, uni_ref, locf_ref,
         wq_ref, wv_ref, wb_ref) = refs[0:9]
        idx = 9
        pre_refs = refs[idx:idx + 2 * n_pre]
        idx += 2 * n_pre
        lstm_refs = refs[idx:idx + 2 * n_lstm]
        idx += 2 * n_lstm
        featw_ref, probw_ref, probb_ref = refs[idx:idx + 3]
        idx += 3
        out_ref = refs[idx]
        idx += 1
        state_refs = refs[idx:idx + 2 * n_lstm]
        idx += 2 * n_lstm
        cum_ref = refs[idx]

        t = pl.program_id(0)

        @pl.when(t == 0)
        def _init():
            for sref in state_refs:
                sref[...] = jnp.zeros_like(sref)
            cum_ref[...] = jnp.zeros_like(cum_ref)

        h_prev = [state_refs[2 * li][...] for li in range(n_lstm)]
        c_prev = [state_refs[2 * li + 1][...] for li in range(n_lstm)]

        # ---- location-sensitive attention (query = h of layer 0, pre-update) ----
        sel = (t == 0).astype(jnp.float32)
        att_prev = sel * uni_ref[...] + (1.0 - sel) * cum_ref[...]      # (B, Ts)

        dec_proj = jnp.dot(h_prev[0], wq_ref[...],
                           preferred_element_type=jnp.float32)          # (B, A)
        pre_tanh = pm_ref[...] + dec_proj[:, None, :]                   # (B, Ts, A)
        # location conv (Cin=1) folded with U into locf (k, 1, 1, A), applied to
        # lane-shifted views of the (cumulative) attention weights.
        for kk in range(k_attn):
            off = kk - pad
            if off < 0:
                sh = jnp.concatenate(
                    [jnp.zeros((B, -off), jnp.float32), att_prev[:, :Ts + off]],
                    axis=1)
            elif off > 0:
                sh = jnp.concatenate(
                    [att_prev[:, off:], jnp.zeros((B, off), jnp.float32)],
                    axis=1)
            else:
                sh = att_prev
            pre_tanh = pre_tanh + sh[:, :, None] * locf_ref[kk]

        s3 = jnp.tanh(pre_tanh)
        e = jnp.sum(s3 * wv_ref[...], axis=-1) + wb_ref[...]            # (B, Ts)
        e = jnp.where(mask_ref[...] > 0.5, -1e30, e)
        e = e - jnp.max(e, axis=-1, keepdims=True)
        p = jnp.exp(e)
        aw = p * pl.reciprocal(jnp.sum(p, axis=-1, keepdims=True), approx=True)
        ctx = jnp.einsum("bqs,bse->bqe", aw[:, None, :], enc_ref[...],
                         preferred_element_type=jnp.float32)[:, 0, :]   # (B, E)
        cum_ref[...] = cum_ref[...] + aw

        # ---- prenet (dropout treated as identity / eval) -------------------------
        pre = pin_ref[0]                                                # (B, mel)
        for li in range(n_pre):
            w = pre_refs[2 * li][...]
            b = pre_refs[2 * li + 1][...]
            pre = jnp.maximum(
                jnp.dot(pre, w, preferred_element_type=jnp.float32) + b, 0.0)

        # ---- stacked LSTM cells with zoneout (eval blend), single fused matmul ---
        inp = jnp.concatenate([ctx, pre], axis=1)
        for li in range(n_lstm):
            w = lstm_refs[2 * li][...]                                  # (In+H, 4H)
            b = lstm_refs[2 * li + 1][...]                              # (1, 4H)
            xh = jnp.concatenate([inp, h_prev[li]], axis=1)
            g = jnp.dot(xh, w, preferred_element_type=jnp.float32) + b
            i = jax.nn.sigmoid(g[:, 0:Hdec])
            f = jax.nn.sigmoid(g[:, Hdec:2 * Hdec])
            cc = jnp.tanh(g[:, 2 * Hdec:3 * Hdec])
            o = jax.nn.sigmoid(g[:, 3 * Hdec:4 * Hdec])
            c_new = f * c_prev[li] + i * cc
            h_new = o * jnp.tanh(c_new)
            hz = zoneout * h_prev[li] + (1.0 - zoneout) * h_new
            cz = zoneout * c_prev[li] + (1.0 - zoneout) * c_new
            state_refs[2 * li][...] = hz
            state_refs[2 * li + 1][...] = cz
            inp = hz

        # ---- output projections, packed into one lane slab -----------------------
        hcs = jnp.concatenate([inp, ctx], axis=1)                       # (B, Hdec+E)
        out_t = jnp.dot(hcs, featw_ref[...],
                        preferred_element_type=jnp.float32)             # (B, mel*r)
        logit_t = (jnp.dot(hcs, probw_ref[...],
                           preferred_element_type=jnp.float32) + probb_ref[...])
        parts = [out_t, logit_t, aw]
        if n_pad > 0:
            parts.append(jnp.zeros((B, n_pad), jnp.float32))
        out_ref[0] = jnp.concatenate(parts, axis=1)

    return kernel


def decoder_apply(params, cfg, enc_outs, src_lens, targets):
    B, Ts, E = enc_outs.shape
    mel = cfg["n_mel_channel"]
    r = cfg["reduction_factor"]
    Hdec = cfg["decoder_hidden_dim"]
    A = cfg["attention_hidden_dim"]
    z = cfg["decoder_zoneout"]
    n_lstm = cfg["decoder_layers"]
    n_pre = cfg["decoder_prenet_layers"]
    k_attn = params["attn"]["F_w"].shape[2]

    dec_targets = targets[:, r - 1::r, :]                      # (B, Td, mel)
    Td = dec_targets.shape[1]

    # processed memory V(encoder_outs) + bias, computed once
    pm = linear_bias(enc_outs.reshape(B * Ts, E), params["attn"]["V_t"],
                     params["attn"]["V_b"]).reshape(B, Ts, A)

    mask_f = make_pad_mask(src_lens, Ts).astype(jnp.float32)   # 1 where padded
    uniform = (1.0 - mask_f) / src_lens[:, None].astype(jnp.float32)

    # fold location conv (in_channels=1) with U: locf[k, a] = sum_c F[c,0,k]*U[c,a]
    locf = jnp.einsum("ck,ca->ka", params["attn"]["F_w"][:, 0, :],
                      params["attn"]["U_t"]).reshape(k_attn, 1, 1, A)

    # teacher forcing: prenet input at step t is target frame t-1 (go-frame = zeros)
    prenet_inputs = jnp.concatenate(
        [jnp.zeros((B, 1, mel), jnp.float32), dec_targets[:, :-1, :]], axis=1)
    prenet_inputs = jnp.transpose(prenet_inputs, (1, 0, 2))    # (Td, B, mel)

    # stacked LSTM weights: single (In+H, 4H) matmul per cell
    lstm_inputs = []
    for li in range(n_lstm):
        lp = params["dec_lstm"][li]
        lstm_inputs += [jnp.concatenate([lp["w_ih_t"], lp["w_hh_t"]], axis=0),
                        lp["b"]]
    pre_inputs = []
    for lyr in params["prenet"]:
        pre_inputs += [lyr["w_t"], lyr["b"]]

    step_map = lambda t: (t, 0, 0)

    def const_map(nd):
        return lambda t: (0,) * nd

    const_arrays = ([pm, enc_outs, mask_f, uniform, locf,
                     params["attn"]["W_t"], params["attn"]["w_v"],
                     params["attn"]["w_b"]]
                    + pre_inputs + lstm_inputs
                    + [params["feat_out_t"], params["prob_out_t"],
                       params["prob_out_b"]])

    in_specs = [pl.BlockSpec((1, B, mel), step_map)]
    in_specs += [pl.BlockSpec(a.shape, const_map(a.ndim)) for a in const_arrays]

    Npack = mel * r + r + Ts
    Npack_pad = ((Npack + 127) // 128) * 128                   # lane-dense output slab
    n_pad = Npack_pad - Npack
    scratch = ([pltpu.VMEM((B, Hdec), jnp.float32) for _ in range(2 * n_lstm)]
               + [pltpu.VMEM((B, Ts), jnp.float32)])

    packed = pl.pallas_call(
        _make_decoder_step_kernel(B=B, Ts=Ts, A=A, mel=mel, r=r, Hdec=Hdec,
                                  n_pre=n_pre, n_lstm=n_lstm, k_attn=k_attn,
                                  zoneout=z, n_pad=n_pad),
        grid=(Td,),
        in_specs=in_specs,
        out_specs=pl.BlockSpec((1, B, Npack_pad), step_map),
        out_shape=jax.ShapeDtypeStruct((Td, B, Npack_pad), jnp.float32),
        scratch_shapes=scratch,
        compiler_params=pltpu.CompilerParams(
            dimension_semantics=("arbitrary",),
            vmem_limit_bytes=64 * 1024 * 1024),
    )(prenet_inputs, *const_arrays)

    outs = packed[:, :, :mel * r]                              # (Td, B, mel*r)
    logits = packed[:, :, mel * r:mel * r + r]                 # (Td, B, r)
    aws = packed[:, :, mel * r + r:mel * r + r + Ts]           # (Td, B, Ts)

    # assemble exactly like torch.cat(...) / .view(...) / final .transpose(2,1)
    outs = jnp.transpose(outs.reshape(Td, B, mel, r), (1, 0, 3, 2)).reshape(B, Td * r, mel)
    logits = jnp.transpose(logits, (1, 0, 2)).reshape(B, Td * r)
    att_ws = jnp.transpose(aws, (1, 0, 2))                     # (B, Td, Ts)
    return outs, logits, att_ws


# ----------------------------------------------------------------------------
# Glue / module pieces
# ----------------------------------------------------------------------------
def make_pad_mask(lengths, maxlen):
    return jnp.arange(maxlen)[None, :] >= lengths[:, None]


def encoder_apply(params, cfg, x, lens):
    B, T, E = x.shape
    Cenc = cfg["encoder_conv_channels"]
    H = E // 2

    # fused conv + BN(eval) + ReLU stack (dropout = identity in eval)
    h = conv_stack(x, [(lyr["w"], lyr["bn_scale"], lyr["bn_shift"], "relu")
                       for lyr in params["enc_convs"]])

    # BiLSTM input projections hoisted out of the recurrence (both dirs stacked)
    w_ih = jnp.concatenate([params["blstm_f"]["w_ih_t"],
                            params["blstm_b"]["w_ih_t"]], axis=1)      # (Cenc, 8H)
    bias = jnp.concatenate([params["blstm_f"]["b"], params["blstm_b"]["b"]], axis=1)
    gx = linear_bias(h.reshape(B * T, Cenc), w_ih, bias).reshape(B, T, 8 * H)
    gx = jnp.transpose(gx, (1, 0, 2))                                   # (T, B, 8H)
    return bilstm(gx[:, :, :4 * H], gx[:, :, 4 * H:],
                  params["blstm_f"]["w_hh_t"], params["blstm_b"]["w_hh_t"], lens)


def postnet_apply(params, x):
    n = len(params["postnet"])
    layers = [(lyr["w"], lyr["bn_scale"], lyr["bn_shift"],
               "tanh" if li != n - 1 else "none")
              for li, lyr in enumerate(params["postnet"])]
    return conv_stack(x, layers)


def tacotron2vc_forward(params, cfg, s_sp_ids, t_sp_ids, s_em_ids, t_em_ids,
                        s_mels, s_mel_lens, t_mels, t_mel_lens):
    """Teacher-forcing forward of Tacotron2VC (reduction_factor fixed to 1)."""
    r = cfg["reduction_factor"]
    assert r == 1  # TODO(synk): reduction_factor > 1 length trimming not implemented
    B, Ts, M = s_mels.shape
    E = cfg["encoder_hidden_dim"]
    max_t_mel_len = t_mels.shape[1]

    # init_forward (r == 1: lengths untouched)
    t_mel_masks = make_pad_mask(t_mel_lens, max_t_mel_len)

    # encoder_forward: mel_linear + source speaker/emotion embeddings + encoder
    x = linear_bias(s_mels.reshape(B * Ts, M * r), params["mel_linear_wt"],
                    params["mel_linear_b"]).reshape(B, Ts, E)
    x = x + params["speaker_emb"][s_sp_ids][:, None, :]
    x = x + params["emotion_emb"][s_em_ids][:, None, :]
    enc_out = encoder_apply(params, cfg, x, s_mel_lens)

    # decoder_forward: target speaker/emotion embeddings + decoder + postnet
    enc_out = enc_out + params["speaker_emb"][t_sp_ids][:, None, :]
    enc_out = enc_out + params["emotion_emb"][t_em_ids][:, None, :]
    outs, logits, att_ws = decoder_apply(params, cfg, enc_out, s_mel_lens, t_mels)
    outs_fine = outs + postnet_apply(params, outs)

    # (module transposes channel-first -> (B, T, mel); our layout already matches)
    return outs, outs_fine, logits, att_ws, t_mel_lens, t_mel_masks


# ----------------------------------------------------------------------------
# Deterministic parameter init (shapes from the module's __init__, eval mode)
# ----------------------------------------------------------------------------
def init_params(key, cfg):
    keys = iter(jax.random.split(key, 128))

    def nrm(shape, scale=0.1):
        return scale * jax.random.normal(next(keys), shape, dtype=jnp.float32)

    mel = cfg["n_mel_channel"]; r = cfg["reduction_factor"]
    E = cfg["encoder_hidden_dim"]; Cenc = cfg["encoder_conv_channels"]
    kenc = cfg["encoder_conv_kernel_size"]
    A = cfg["attention_hidden_dim"]; Cattn = cfg["attention_conv_channels"]
    kattn = cfg["attention_conv_kernel_size"]
    Hdec = cfg["decoder_hidden_dim"]; P = cfg["decoder_prenet_hidden_dim"]
    Cp = cfg["postnet_channels"]; kp = cfg["postnet_kernel_size"]
    bn_eps = 1e-5
    bn_scale = lambda c: jnp.full((1, c), 1.0 / jnp.sqrt(1.0 + bn_eps), jnp.float32)

    def lstm_params(cin, h):
        return dict(w_ih_t=nrm((cin, 4 * h)), w_hh_t=nrm((h, 4 * h)), b=nrm((1, 4 * h)))

    params = {
        "mel_linear_wt": nrm((mel * r, E)),
        "mel_linear_b": nrm((1, E)),
        "speaker_emb": nrm((cfg["n_speaker"], E)),
        "emotion_emb": nrm((cfg["n_emotion"], E)),
        "enc_convs": [dict(w=nrm((Cenc, E if li == 0 else Cenc, kenc)),
                           bn_scale=bn_scale(Cenc),
                           bn_shift=jnp.zeros((1, Cenc), jnp.float32))
                      for li in range(cfg["encoder_conv_layers"])],
        "blstm_f": lstm_params(Cenc, E // 2),
        "blstm_b": lstm_params(Cenc, E // 2),
        "attn": dict(V_t=nrm((E, A)), V_b=nrm((1, A)),
                     W_t=nrm((Hdec, A)), U_t=nrm((Cattn, A)),
                     F_w=nrm((Cattn, 1, kattn)),
                     w_v=nrm((1, 1, A)), w_b=nrm((1, 1))),
        "prenet": [dict(w_t=nrm((mel if li == 0 else P, P)), b=nrm((1, P)))
                   for li in range(cfg["decoder_prenet_layers"])],
        "dec_lstm": [lstm_params(E + P if li == 0 else Hdec, Hdec)
                     for li in range(cfg["decoder_layers"])],
        "feat_out_t": nrm((Hdec + E, mel * r)),
        "prob_out_t": nrm((Hdec + E, r)),
        "prob_out_b": nrm((1, r)),
        "postnet": [dict(w=nrm((mel if li == cfg["postnet_layers"] - 1 else Cp,
                                mel if li == 0 else Cp, kp)),
                         bn_scale=bn_scale(mel if li == cfg["postnet_layers"] - 1 else Cp),
                         bn_shift=jnp.zeros(
                             (1, mel if li == cfg["postnet_layers"] - 1 else Cp),
                             jnp.float32))
                    for li in range(cfg["postnet_layers"])],
    }
    return params


# ----------------------------------------------------------------------------
if __name__ == "__main__":
    cfg = dict(
        n_mel_channel=8,
        encoder_hidden_dim=32, encoder_conv_layers=2,
        encoder_conv_channels=32, encoder_conv_kernel_size=5,
        attention_hidden_dim=16, attention_conv_channels=8,
        attention_conv_kernel_size=7,
        decoder_layers=2, decoder_hidden_dim=32,
        decoder_prenet_layers=2, decoder_prenet_hidden_dim=16,
        decoder_zoneout=0.1,
        postnet_layers=3, postnet_channels=16, postnet_kernel_size=5,
        reduction_factor=1,
        n_speaker=2, n_emotion=2,
    )

    key = jax.random.PRNGKey(0)
    k_param, k_s, k_t = jax.random.split(key, 3)
    params = init_params(k_param, cfg)

    B, Ts, Td = 2, 8, 6
    s_mels = jax.random.normal(k_s, (B, Ts, cfg["n_mel_channel"]), jnp.float32)
    t_mels = jax.random.normal(k_t, (B, Td, cfg["n_mel_channel"]), jnp.float32)
    s_mel_lens = jnp.array([Ts, Ts - 2], jnp.int32)
    t_mel_lens = jnp.array([Td, Td - 1], jnp.int32)
    s_sp_ids = jnp.array([0, 1], jnp.int32)
    t_sp_ids = jnp.array([1, 0], jnp.int32)
    s_em_ids = jnp.array([0, 1], jnp.int32)
    t_em_ids = jnp.array([1, 1], jnp.int32)

    fwd = jax.jit(lambda p, *a: tacotron2vc_forward(p, cfg, *a))
    outs, outs_fine, logits, att_ws, t_lens, t_masks = fwd(
        params, s_sp_ids, t_sp_ids, s_em_ids, t_em_ids,
        s_mels, s_mel_lens, t_mels, t_mel_lens)
    jax.block_until_ready((outs, outs_fine, logits, att_ws, t_lens, t_masks))

    assert outs.shape == (B, Td, cfg["n_mel_channel"])
    assert outs_fine.shape == (B, Td, cfg["n_mel_channel"])
    assert logits.shape == (B, Td)
    assert att_ws.shape == (B, Td, Ts)
    assert t_masks.shape == (B, Td)
    assert bool(jnp.all(jnp.isfinite(outs_fine)))
    assert bool(jnp.all(jnp.isfinite(att_ws)))
    print("KERNEL_OK")
</pallas_src>

<mosaic_0001>
module attributes {stable_mosaic.version = 11 : i64} {
  func.func @_linear_kernel(%arg0: i32, %arg1: memref<16x8xf32, #tpu.memory_space<vmem>>, %arg2: memref<8x32xf32, #tpu.memory_space<vmem>>, %arg3: memref<1x32xf32, #tpu.memory_space<vmem>>, %arg4: memref<16x32xf32, #tpu.memory_space<vmem>>) attributes {dimension_semantics = [#tpu.dimension_semantics<arbitrary>], iteration_bounds = array<i64: 1>, scalar_prefetch = 0 : i64, scratch_operands = 0 : i64, tpu.core_type = #tpu.core_type<tc>, window_params = [{pipeline_mode = #tpu.pipeline_mode<synchronous>, transform_indices = @transform_0, window_bounds = array<i64: 16, 8>}, {pipeline_mode = #tpu.pipeline_mode<synchronous>, transform_indices = @transform_1, window_bounds = array<i64: 8, 32>}, {pipeline_mode = #tpu.pipeline_mode<synchronous>, transform_indices = @transform_2, window_bounds = array<i64: 1, 32>}, {pipeline_mode = #tpu.pipeline_mode<synchronous>, transform_indices = @transform_3, window_bounds = array<i64: 16, 32>}]} {
    %c0 = arith.constant 0 : index
    %c0_0 = arith.constant 0 : index
    %0 = vector.load %arg1[%c0, %c0_0] : memref<16x8xf32, #tpu.memory_space<vmem>>, vector<16x8xf32>
    %c0_1 = arith.constant 0 : index
    %c0_2 = arith.constant 0 : index
    %1 = vector.load %arg2[%c0_1, %c0_2] : memref<8x32xf32, #tpu.memory_space<vmem>>, vector<8x32xf32>
    %cst = arith.constant dense<0.000000e+00> : vector<16x32xf32>
    %2 = tpu.matmul %0, %1, %cst {dimension_numbers = #tpu.dot_dimension_numbers<[1], [0], [0], [1], [0, 0, 1, 1], [], []>} : vector<16x8xf32>, vector<8x32xf32>, vector<16x32xf32> -> vector<16x32xf32>
    %c0_3 = arith.constant 0 : index
    %c0_4 = arith.constant 0 : index
    %3 = vector.load %arg3[%c0_3, %c0_4] : memref<1x32xf32, #tpu.memory_space<vmem>>, vector<1x32xf32>
    %4 = vector.broadcast %3 : vector<1x32xf32> to vector<16x32xf32>
    %5 = arith.addf %2, %4 : vector<16x32xf32>
    %c0_5 = arith.constant 0 : index
    %c0_6 = arith.constant 0 : index
    %6 = vector.load %arg4[%c0_5, %c0_6] : memref<16x32xf32, #tpu.memory_space<vmem>>, vector<16x32xf32>
    tpu.vector_store %arg4[%c0_5, %c0_6], %5 {strides = array<i32>} : memref<16x32xf32, #tpu.memory_space<vmem>>, vector<16x32xf32>,
    return
  }
  func.func @transform_0(%arg0: i32) -> (i32, i32) {
    %c0_i32 = arith.constant 0 : i32
    %c0_i32_0 = arith.constant 0 : i32
    %c0_i32_1 = arith.constant 0 : i32
    return %c0_i32, %c0_i32_0 : i32, i32
  }
  func.func @transform_1(%arg0: i32) -> (i32, i32) {
    %c0_i32 = arith.constant 0 : i32
    %c0_i32_0 = arith.constant 0 : i32
    %c0_i32_1 = arith.constant 0 : i32
    return %c0_i32, %c0_i32_0 : i32, i32
  }
  func.func @transform_2(%arg0: i32) -> (i32, i32) {
    %c0_i32 = arith.constant 0 : i32
    %c0_i32_0 = arith.constant 0 : i32
    %c0_i32_1 = arith.constant 0 : i32
    return %c0_i32, %c0_i32_0 : i32, i32
  }
  func.func @transform_3(%arg0: i32) -> (i32, i32) {
    %c0_i32 = arith.constant 0 : i32
    %c0_i32_0 = arith.constant 0 : i32
    %c0_i32_1 = arith.constant 0 : i32
    return %c0_i32, %c0_i32_0 : i32, i32
  }
}

module attributes {stable_mosaic.version = 11 : i64} {
  func.func @kernel(%arg0: i32, %arg1: memref<2x8x32xf32, #tpu.memory_space<vmem>>, %arg2: memref<1x8x1xf32, #tpu.memory_space<vmem>>, %arg3: memref<5x32x32xf32, #tpu.memory_space<vmem>>, %arg4: memref<1x32xf32, #tpu.memory_space<vmem>>, %arg5: memref<1x32xf32, #tpu.memory_space<vmem>>, %arg6: memref<5x32x32xf32, #tpu.memory_space<vmem>>, %arg7: memref<1x32xf32, #tpu.memory_space<vmem>>, %arg8: memref<1x32xf32, #tpu.memory_space<vmem>>, %arg9: memref<2x8x32xf32, #tpu.memory_space<vmem>>) attributes {dimension_semantics = [#tpu.dimension_semantics<arbitrary>], iteration_bounds = array<i64: 1>, scalar_prefetch = 0 : i64, scratch_operands = 0 : i64, tpu.core_type = #tpu.core_type<tc>, window_params = [{pipeline_mode = #tpu.pipeline_mode<synchronous>, transform_indices = @transform_0, window_bounds = array<i64: 2, 8, 32>}, {pipeline_mode = #tpu.pipeline_mode<synchronous>, transform_indices = @transform_1, window_bounds = array<i64: 1, 8, 1>}, {pipeline_mode = #tpu.pipeline_mode<synchronous>, transform_indices = @transform_2, window_bounds = array<i64: 5, 32, 32>}, {pipeline_mode = #tpu.pipeline_mode<synchronous>, transform_indices = @transform_3, window_bounds = array<i64: 1, 32>}, {pipeline_mode = #tpu.pipeline_mode<synchronous>, transform_indices = @transform_4, window_bounds = array<i64: 1, 32>}, {pipeline_mode = #tpu.pipeline_mode<synchronous>, transform_indices = @transform_5, window_bounds = array<i64: 5, 32, 32>}, {pipeline_mode = #tpu.pipeline_mode<synchronous>, transform_indices = @transform_6, window_bounds = array<i64: 1, 32>}, {pipeline_mode = #tpu.pipeline_mode<synchronous>, transform_indices = @transform_7, window_bounds = array<i64: 1, 32>}, {pipeline_mode = #tpu.pipeline_mode<synchronous>, transform_indices = @transform_8, window_bounds = array<i64: 2, 8, 32>}]} {
    %c0 = arith.constant 0 : index
    %c0_0 = arith.constant 0 : index
    %c0_1 = arith.constant 0 : index
    %0 = vector.load %arg2[%c0, %c0_0, %c0_1] : memref<1x8x1xf32, #tpu.memory_space<vmem>>, vector<1x8x1xf32>
    %c0_2 = arith.constant 0 : index
    %c0_3 = arith.constant 0 : index
    %c0_4 = arith.constant 0 : index
    %1 = vector.load %arg1[%c0_2, %c0_3, %c0_4] : memref<2x8x32xf32, #tpu.memory_space<vmem>>, vector<2x8x32xf32>
    %cst = arith.constant 0.000000e+00 : f32
    %2 = vector.broadcast %cst : f32 to vector<16x32xf32>
    %cst_5 = arith.constant 0.000000e+00 : f32
    %3 = vector.broadcast %cst_5 : f32 to vector<2x2x32xf32>
    %4 = vector.extract_strided_slice %1 {offsets = [0, 0, 0], sizes = [2, 6, 32], strides = [1, 1, 1]} : vector<2x8x32xf32> to vector<2x6x32xf32>
    %5 = tpu.concatenate %3, %4 in 1 : vector<2x2x32xf32>, vector<2x6x32xf32> -> vector<2x8x32xf32>
    %6 = vector.shape_cast %5 : vector<2x8x32xf32> to vector<16x32xf32>
    %c0_6 = arith.constant 0 : index
    %c0_7 = arith.constant 0 : index
    %c0_8 = arith.constant 0 : index
    %7 = vector.load %arg3[%c0_6, %c0_7, %c0_8] : memref<5x32x32xf32, #tpu.memory_space<vmem>>, vector<1x32x32xf32>
    %8 = vector.shape_cast %7 : vector<1x32x32xf32> to vector<32x32xf32>
    %cst_9 = arith.constant dense<0.000000e+00> : vector<16x32xf32>
    %9 = tpu.matmul %6, %8, %cst_9 {dimension_numbers = #tpu.dot_dimension_numbers<[1], [0], [0], [1], [0, 0, 1, 1], [], []>} : vector<16x32xf32>, vector<32x32xf32>, vector<16x32xf32> -> vector<16x32xf32>
    %10 = arith.addf %2, %9 : vector<16x32xf32>
    %cst_10 = arith.constant 0.000000e+00 : f32
    %11 = vector.broadcast %cst_10 : f32 to vector<2x1x32xf32>
    %12 = vector.extract_strided_slice %1 {offsets = [0, 0, 0], sizes = [2, 7, 32], strides = [1, 1, 1]} : vector<2x8x32xf32> to vector<2x7x32xf32>
    %13 = tpu.concatenate %11, %12 in 1 : vector<2x1x32xf32>, vector<2x7x32xf32> -> vector<2x8x32xf32>
    %14 = vector.shape_cast %13 : vector<2x8x32xf32> to vector<16x32xf32>
    %c1 = arith.constant 1 : index
    %c0_11 = arith.constant 0 : index
    %c0_12 = arith.constant 0 : index
    %15 = vector.load %arg3[%c1, %c0_11, %c0_12] : memref<5x32x32xf32, #tpu.memory_space<vmem>>, vector<1x32x32xf32>
    %16 = vector.shape_cast %15 : vector<1x32x32xf32> to vector<32x32xf32>
    %cst_13 = arith.constant dense<0.000000e+00> : vector<16x32xf32>
    %17 = tpu.matmul %14, %16, %cst_13 {dimension_numbers = #tpu.dot_dimension_numbers<[1], [0], [0], [1], [0, 0, 1, 1], [], []>} : vector<16x32xf32>, vector<32x32xf32>, vector<16x32xf32> -> vector<16x32xf32>
    %18 = arith.addf %10, %17 : vector<16x32xf32>
    %19 = vector.shape_cast %1 : vector<2x8x32xf32> to vector<16x32xf32>
    %c2 = arith.constant 2 : index
    %c0_14 = arith.constant 0 : index
    %c0_15 = arith.constant 0 : index
    %20 = vector.load %arg3[%c2, %c0_14, %c0_15] : memref<5x32x32xf32, #tpu.memory_space<vmem>>, vector<1x32x32xf32>
    %21 = vector.shape_cast %20 : vector<1x32x32xf32> to vector<32x32xf32>
    %cst_16 = arith.constant dense<0.000000e+00> : vector<16x32xf32>
    %22 = tpu.matmul %19, %21, %cst_16 {dimension_numbers = #tpu.dot_dimension_numbers<[1], [0], [0], [1], [0, 0, 1, 1], [], []>} : vector<16x32xf32>, vector<32x32xf32>, vector<16x32xf32> -> vector<16x32xf32>
    %23 = arith.addf %18, %22 : vector<16x32xf32>
    %24 = vector.extract_strided_slice %1 {offsets = [0, 1, 0], sizes = [2, 7, 32], strides = [1, 1, 1]} : vector<2x8x32xf32> to vector<2x7x32xf32>
    %cst_17 = arith.constant 0.000000e+00 : f32
    %25 = vector.broadcast %cst_17 : f32 to vector<2x1x32xf32>
    %26 = tpu.concatenate %24, %25 in 1 : vector<2x7x32xf32>, vector<2x1x32xf32> -> vector<2x8x32xf32>
    %27 = vector.shape_cast %26 : vector<2x8x32xf32> to vector<16x32xf32>
    %c3 = arith.constant 3 : index
    %c0_18 = arith.constant 0 : index
    %c0_19 = arith.constant 0 : index
    %28 = vector.load %arg3[%c3, %c0_18, %c0_19] : memref<5x32x32xf32, #tpu.memory_space<vmem>>, vector<1x32x32xf32>
    %29 = vector.shape_cast %28 : vector<1x32x32xf32> to vector<32x32xf32>
    %cst_20 = arith.constant dense<0.000000e+00> : vector<16x32xf32>
    %30 = tpu.matmul %27, %29, %cst_20 {dimension_numbers = #tpu.dot_dimension_numbers<[1], [0], [0], [1], [0, 0, 1, 1], [], []>} : vector<16x32xf32>, vector<32x32xf32>, vector<16x32xf32> -> vector<16x32xf32>
    %31 = arith.addf %23, %30 : vector<16x32xf32>
    %32 = vector.extract_strided_slice %1 {offsets = [0, 2, 0], sizes = [2, 6, 32], strides = [1, 1, 1]} : vector<2x8x32xf32> to vector<2x6x32xf32>
    %cst_21 = arith.constant 0.000000e+00 : f32
    %33 = vector.broadcast %cst_21 : f32 to vector<2x2x32xf32>
    %34 = tpu.concatenate %32, %33 in 1 : vector<2x6x32xf32>, vector<2x2x32xf32> -> vector<2x8x32xf32>
    %35 = vector.shape_cast %34 : vector<2x8x32xf32> to vector<16x32xf32>
    %c4 = arith.constant 4 : index
    %c0_22 = arith.constant 0 : index
    %c0_23 = arith.constant 0 : index
    %36 = vector.load %arg3[%c4, %c0_22, %c0_23] : memref<5x32x32xf32, #tpu.memory_space<vmem>>, vector<1x32x32xf32>
    %37 = vector.shape_cast %36 : vector<1x32x32xf32> to vector<32x32xf32>
    %cst_24 = arith.constant dense<0.000000e+00> : vector<16x32xf32>
    %38 = tpu.matmul %35, %37, %cst_24 {dimension_numbers = #tpu.dot_dimension_numbers<[1], [0], [0], [1], [0, 0, 1, 1], [], []>} : vector<16x32xf32>, vector<32x32xf32>, vector<16x32xf32> -> vector<16x32xf32>
    %39 = arith.addf %31, %38 : vector<16x32xf32>
    %c0_25 = arith.constant 0 : index
    %c0_26 = arith.constant 0 : index
    %40 = vector.load %arg4[%c0_25, %c0_26] : memref<1x32xf32, #tpu.memory_space<vmem>>, vector<1x32xf32>
    %41 = vector.broadcast %40 : vector<1x32xf32> to vector<16x32xf32>
    %42 = arith.mulf %39, %41 : vector<16x32xf32>
    %c0_27 = arith.constant 0 : index
    %c0_28 = arith.constant 0 : index
    %43 = vector.load %arg5[%c0_27, %c0_28] : memref<1x32xf32, #tpu.memory_space<vmem>>, vector<1x32xf32>
    %44 = vector.broadcast %43 : vector<1x32xf32> to vector<16x32xf32>
    %45 = arith.addf %42, %44 : vector<16x32xf32>
    %cst_29 = arith.constant 0.000000e+00 : f32
    %46 = vector.broadcast %cst_29 : f32 to vector<16x32xf32>
    %47 = arith.maximumf %45, %46 : vector<16x32xf32>
    %48 = vector.shape_cast %47 : vector<16x32xf32> to vector<2x8x32xf32>
    %49 = vector.broadcast %0 : vector<1x8x1xf32> to vector<2x8x32xf32>
    %50 = arith.mulf %48, %49 : vector<2x8x32xf32>
    %cst_30 = arith.constant 0.000000e+00 : f32
    %51 = vector.broadcast %cst_30 : f32 to vector<16x32xf32>
    %cst_31 = arith.constant 0.000000e+00 : f32
    %52 = vector.broadcast %cst_31 : f32 to vector<2x2x32xf32>
    %53 = vector.extract_strided_slice %50 {offsets = [0, 0, 0], sizes = [2, 6, 32], strides = [1, 1, 1]} : vector<2x8x32xf32> to vector<2x6x32xf32>
    %54 = tpu.concatenate %52, %53 in 1 : vector<2x2x32xf32>, vector<2x6x32xf32> -> vector<2x8x32xf32>
    %55 = vector.shape_cast %54 : vector<2x8x32xf32> to vector<16x32xf32>
    %c0_32 = arith.constant 0 : index
    %c0_33 = arith.constant 0 : index
    %c0_34 = arith.constant 0 : index
    %56 = vector.load %arg6[%c0_32, %c0_33, %c0_34] : memref<5x32x32xf32, #tpu.memory_space<vmem>>, vector<1x32x32xf32>
    %57 = vector.shape_cast %56 : vector<1x32x32xf32> to vector<32x32xf32>
    %cst_35 = arith.constant dense<0.000000e+00> : vector<16x32xf32>
    %58 = tpu.matmul %55, %57, %cst_35 {dimension_numbers = #tpu.dot_dimension_numbers<[1], [0], [0], [1], [0, 0, 1, 1], [], []>} : vector<16x32xf32>, vector<32x32xf32>, vector<16x32xf32> -> vector<16x32xf32>
    %59 = arith.addf %51, %58 : vector<16x32xf32>
    %cst_36 = arith.constant 0.000000e+00 : f32
    %60 = vector.broadcast %cst_36 : f32 to vector<2x1x32xf32>
    %61 = vector.extract_strided_slice %50 {offsets = [0, 0, 0], sizes = [2, 7, 32], strides = [1, 1, 1]} : vector<2x8x32xf32> to vector<2x7x32xf32>
    %62 = tpu.concatenate %60, %61 in 1 : vector<2x1x32xf32>, vector<2x7x32xf32> -> vector<2x8x32xf32>
    %63 = vector.shape_cast %62 : vector<2x8x32xf32> to vector<16x32xf32>
    %c1_37 = arith.constant 1 : index
    %c0_38 = arith.constant 0 : index
    %c0_39 = arith.constant 0 : index
    %64 = vector.load %arg6[%c1_37, %c0_38, %c0_39] : memref<5x32x32xf32, #tpu.memory_space<vmem>>, vector<1x32x32xf32>
    %65 = vector.shape_cast %64 : vector<1x32x32xf32> to vector<32x32xf32>
    %cst_40 = arith.constant dense<0.000000e+00> : vector<16x32xf32>
    %66 = tpu.matmul %63, %65, %cst_40 {dimension_numbers = #tpu.dot_dimension_numbers<[1], [0], [0], [1], [0, 0, 1, 1], [], []>} : vector<16x32xf32>, vector<32x32xf32>, vector<16x32xf32> -> vector<16x32xf32>
    %67 = arith.addf %59, %66 : vector<16x32xf32>
    %68 = vector.shape_cast %50 : vector<2x8x32xf32> to vector<16x32xf32>
    %c2_41 = arith.constant 2 : index
    %c0_42 = arith.constant 0 : index
    %c0_43 = arith.constant 0 : index
    %69 = vector.load %arg6[%c2_41, %c0_42, %c0_43] : memref<5x32x32xf32, #tpu.memory_space<vmem>>, vector<1x32x32xf32>
    %70 = vector.shape_cast %69 : vector<1x32x32xf32> to vector<32x32xf32>
    %cst_44 = arith.constant dense<0.000000e+00> : vector<16x32xf32>
    %71 = tpu.matmul %68, %70, %cst_44 {dimension_numbers = #tpu.dot_dimension_numbers<[1], [0], [0], [1], [0, 0, 1, 1], [], []>} : vector<16x32xf32>, vector<32x32xf32>, vector<16x32xf32> -> vector<16x32xf32>
    %72 = arith.addf %67, %71 : vector<16x32xf32>
    %73 = vector.extract_strided_slice %50 {offsets = [0, 1, 0], sizes = [2, 7, 32], strides = [1, 1, 1]} : vector<2x8x32xf32> to vector<2x7x32xf32>
    %cst_45 = arith.constant 0.000000e+00 : f32
    %74 = vector.broadcast %cst_45 : f32 to vector<2x1x32xf32>
    %75 = tpu.concatenate %73, %74 in 1 : vector<2x7x32xf32>, vector<2x1x32xf32> -> vector<2x8x32xf32>
    %76 = vector.shape_cast %75 : vector<2x8x32xf32> to vector<16x32xf32>
    %c3_46 = arith.constant 3 : index
    %c0_47 = arith.constant 0 : index
    %c0_48 = arith.constant 0 : index
    %77 = vector.load %arg6[%c3_46, %c0_47, %c0_48] : memref<5x32x32xf32, #tpu.memory_space<vmem>>, vector<1x32x32xf32>
    %78 = vector.shape_cast %77 : vector<1x32x32xf32> to vector<32x32xf32>
    %cst_49 = arith.constant dense<0.000000e+00> : vector<16x32xf32>
    %79 = tpu.matmul %76, %78, %cst_49 {dimension_numbers = #tpu.dot_dimension_numbers<[1], [0], [0], [1], [0, 0, 1, 1], [], []>} : vector<16x32xf32>, vector<32x32xf32>, vector<16x32xf32> -> vector<16x32xf32>
    %80 = arith.addf %72, %79 : vector<16x32xf32>
    %81 = vector.extract_strided_slice %50 {offsets = [0, 2, 0], sizes = [2, 6, 32], strides = [1, 1, 1]} : vector<2x8x32xf32> to vector<2x6x32xf32>
    %cst_50 = arith.constant 0.000000e+00 : f32
    %82 = vector.broadcast %cst_50 : f32 to vector<2x2x32xf32>
    %83 = tpu.concatenate %81, %82 in 1 : vector<2x6x32xf32>, vector<2x2x32xf32> -> vector<2x8x32xf32>
    %84 = vector.shape_cast %83 : vector<2x8x32xf32> to vector<16x32xf32>
    %c4_51 = arith.constant 4 : index
    %c0_52 = arith.constant 0 : index
    %c0_53 = arith.constant 0 : index
    %85 = vector.load %arg6[%c4_51, %c0_52, %c0_53] : memref<5x32x32xf32, #tpu.memory_space<vmem>>, vector<1x32x32xf32>
    %86 = vector.shape_cast %85 : vector<1x32x32xf32> to vector<32x32xf32>
    %cst_54 = arith.constant dense<0.000000e+00> : vector<16x32xf32>
    %87 = tpu.matmul %84, %86, %cst_54 {dimension_numbers = #tpu.dot_dimension_numbers<[1], [0], [0], [1], [0, 0, 1, 1], [], []>} : vector<16x32xf32>, vector<32x32xf32>, vector<16x32xf32> -> vector<16x32xf32>
    %88 = arith.addf %80, %87 : vector<16x32xf32>
    %c0_55 = arith.constant 0 : index
    %c0_56 = arith.constant 0 : index
    %89 = vector.load %arg7[%c0_55, %c0_56] : memref<1x32xf32, #tpu.memory_space<vmem>>, vector<1x32xf32>
    %90 = vector.broadcast %89 : vector<1x32xf32> to vector<16x32xf32>
    %91 = arith.mulf %88, %90 : vector<16x32xf32>
    %c0_57 = arith.constant 0 : index
    %c0_58 = arith.constant 0 : index
    %92 = vector.load %arg8[%c0_57, %c0_58] : memref<1x32xf32, #tpu.memory_space<vmem>>, vector<1x32xf32>
    %93 = vector.broadcast %92 : vector<1x32xf32> to vector<16x32xf32>
    %94 = arith.addf %91, %93 : vector<16x32xf32>
    %cst_59 = arith.constant 0.000000e+00 : f32
    %95 = vector.broadcast %cst_59 : f32 to vector<16x32xf32>
    %96 = arith.maximumf %94, %95 : vector<16x32xf32>
    %97 = vector.shape_cast %96 : vector<16x32xf32> to vector<2x8x32xf32>
    %98 = vector.broadcast %0 : vector<1x8x1xf32> to vector<2x8x32xf32>
    %99 = arith.mulf %97, %98 : vector<2x8x32xf32>
    %c0_60 = arith.constant 0 : index
    %c0_61 = arith.constant 0 : index
    %c0_62 = arith.constant 0 : index
    %100 = vector.load %arg9[%c0_60, %c0_61, %c0_62] : memref<2x8x32xf32, #tpu.memory_space<vmem>>, vector<2x8x32xf32>
    tpu.vector_store %arg9[%c0_60, %c0_61, %c0_62], %99 {strides = array<i32>} : memref<2x8x32xf32, #tpu.memory_space<vmem>>, vector<2x8x32xf32>,
    return
  }
  func.func @transform_0(%arg0: i32) -> (i32, i32, i32) {
    %c0_i32 = arith.constant 0 : i32
    %c0_i32_0 = arith.constant 0 : i32
    %c0_i32_1 = arith.constant 0 : i32
    %c0_i32_2 = arith.constant 0 : i32
    return %c0_i32, %c0_i32_0, %c0_i32_1 : i32, i32, i32
  }
  func.func @transform_1(%arg0: i32) -> (i32, i32, i32) {
    %c0_i32 = arith.constant 0 : i32
    %c0_i32_0 = arith.constant 0 : i32
    %c0_i32_1 = arith.constant 0 : i32
    %c0_i32_2 = arith.constant 0 : i32
    return %c0_i32, %c0_i32_0, %c0_i32_1 : i32, i32, i32
  }
  func.func @transform_2(%arg0: i32) -> (i32, i32, i32) {
    %c0_i32 = arith.constant 0 : i32
    %c0_i32_0 = arith.constant 0 : i32
    %c0_i32_1 = arith.constant 0 : i32
    %c0_i32_2 = arith.constant 0 : i32
    return %c0_i32, %c0_i32_0, %c0_i32_1 : i32, i32, i32
  }
  func.func @transform_3(%arg0: i32) -> (i32, i32) {
    %c0_i32 = arith.constant 0 : i32
    %c0_i32_0 = arith.constant 0 : i32
    %c0_i32_1 = arith.constant 0 : i32
    return %c0_i32, %c0_i32_0 : i32, i32
  }
  func.func @transform_4(%arg0: i32) -> (i32, i32) {
    %c0_i32 = arith.constant 0 : i32
    %c0_i32_0 = arith.constant 0 : i32
    %c0_i32_1 = arith.constant 0 : i32
    return %c0_i32, %c0_i32_0 : i32, i32
  }
  func.func @transform_5(%arg0: i32) -> (i32, i32, i32) {
    %c0_i32 = arith.constant 0 : i32
    %c0_i32_0 = arith.constant 0 : i32
    %c0_i32_1 = arith.constant 0 : i32
    %c0_i32_2 = arith.constant 0 : i32
    return %c0_i32, %c0_i32_0, %c0_i32_1 : i32, i32, i32
  }
  func.func @transform_6(%arg0: i32) -> (i32, i32) {
    %c0_i32 = arith.constant 0 : i32
    %c0_i32_0 = arith.constant 0 : i32
    %c0_i32_1 = arith.constant 0 : i32
    return %c0_i32, %c0_i32_0 : i32, i32
  }
  func.func @transform_7(%arg0: i32) -> (i32, i32) {
    %c0_i32 = arith.constant 0 : i32
    %c0_i32_0 = arith.constant 0 : i32
    %c0_i32_1 = arith.constant 0 : i32
    return %c0_i32, %c0_i32_0 : i32, i32
  }
  func.func @transform_8(%arg0: i32) -> (i32, i32, i32) {
    %c0_i32 = arith.constant 0 : i32
    %c0_i32_0 = arith.constant 0 : i32
    %c0_i32_1 = arith.constant 0 : i32
    %c0_i32_2 = arith.constant 0 : i32
    return %c0_i32, %c0_i32_0, %c0_i32_1 : i32, i32, i32
  }
}

module attributes {stable_mosaic.version = 11 : i64} {
  func.func @_linear_kernel(%arg0: i32, %arg1: memref<16x32xf32, #tpu.memory_space<vmem>>, %arg2: memref<32x128xf32, #tpu.memory_space<vmem>>, %arg3: memref<1x128xf32, #tpu.memory_space<vmem>>, %arg4: memref<16x128xf32, #tpu.memory_space<vmem>>) attributes {dimension_semantics = [#tpu.dimension_semantics<arbitrary>], iteration_bounds = array<i64: 1>, scalar_prefetch = 0 : i64, scratch_operands = 0 : i64, tpu.core_type = #tpu.core_type<tc>, window_params = [{pipeline_mode = #tpu.pipeline_mode<synchronous>, transform_indices = @transform_0, window_bounds = array<i64: 16, 32>}, {pipeline_mode = #tpu.pipeline_mode<synchronous>, transform_indices = @transform_1, window_bounds = array<i64: 32, 128>}, {pipeline_mode = #tpu.pipeline_mode<synchronous>, transform_indices = @transform_2, window_bounds = array<i64: 1, 128>}, {pipeline_mode = #tpu.pipeline_mode<synchronous>, transform_indices = @transform_3, window_bounds = array<i64: 16, 128>}]} {
    %c0 = arith.constant 0 : index
    %c0_0 = arith.constant 0 : index
    %0 = vector.load %arg1[%c0, %c0_0] : memref<16x32xf32, #tpu.memory_space<vmem>>, vector<16x32xf32>
    %c0_1 = arith.constant 0 : index
    %c0_2 = arith.constant 0 : index
    %1 = vector.load %arg2[%c0_1, %c0_2] : memref<32x128xf32, #tpu.memory_space<vmem>>, vector<32x128xf32>
    %cst = arith.constant dense<0.000000e+00> : vector<16x128xf32>
    %2 = tpu.matmul %0, %1, %cst {dimension_numbers = #tpu.dot_dimension_numbers<[1], [0], [0], [1], [0, 0, 1, 1], [], []>} : vector<16x32xf32>, vector<32x128xf32>, vector<16x128xf32> -> vector<16x128xf32>
    %c0_3 = arith.constant 0 : index
    %c0_4 = arith.constant 0 : index
    %3 = vector.load %arg3[%c0_3, %c0_4] : memref<1x128xf32, #tpu.memory_space<vmem>>, vector<1x128xf32>
    %4 = vector.broadcast %3 : vector<1x128xf32> to vector<16x128xf32>
    %5 = arith.addf %2, %4 : vector<16x128xf32>
    %c0_5 = arith.constant 0 : index
    %c0_6 = arith.constant 0 : index
    %6 = vector.load %arg4[%c0_5, %c0_6] : memref<16x128xf32, #tpu.memory_space<vmem>>, vector<16x128xf32>
    tpu.vector_store %arg4[%c0_5, %c0_6], %5 {strides = array<i32>} : memref<16x128xf32, #tpu.memory_space<vmem>>, vector<16x128xf32>,
    return
  }
  func.func @transform_0(%arg0: i32) -> (i32, i32) {
    %c0_i32 = arith.constant 0 : i32
    %c0_i32_0 = arith.constant 0 : i32
    %c0_i32_1 = arith.constant 0 : i32
    return %c0_i32, %c0_i32_0 : i32, i32
  }
  func.func @transform_1(%arg0: i32) -> (i32, i32) {
    %c0_i32 = arith.constant 0 : i32
    %c0_i32_0 = arith.constant 0 : i32
    %c0_i32_1 = arith.constant 0 : i32
    return %c0_i32, %c0_i32_0 : i32, i32
  }
  func.func @transform_2(%arg0: i32) -> (i32, i32) {
    %c0_i32 = arith.constant 0 : i32
    %c0_i32_0 = arith.constant 0 : i32
    %c0_i32_1 = arith.constant 0 : i32
    return %c0_i32, %c0_i32_0 : i32, i32
  }
  func.func @transform_3(%arg0: i32) -> (i32, i32) {
    %c0_i32 = arith.constant 0 : i32
    %c0_i32_0 = arith.constant 0 : i32
    %c0_i32_1 = arith.constant 0 : i32
    return %c0_i32, %c0_i32_0 : i32, i32
  }
}

module attributes {stable_mosaic.version = 11 : i64} {
  func.func @kernel(%arg0: i32, %arg1: memref<2x1xi32, #tpu.memory_space<vmem>>, %arg2: memref<1x2x64xf32, #tpu.memory_space<vmem>>, %arg3: memref<1x2x64xf32, #tpu.memory_space<vmem>>, %arg4: memref<16x64xf32, #tpu.memory_space<vmem>>, %arg5: memref<16x64xf32, #tpu.memory_space<vmem>>, %arg6: memref<1x2x16xf32, #tpu.memory_space<vmem>>, %arg7: memref<1x2x16xf32, #tpu.memory_space<vmem>>, %arg8: memref<2x16xf32, #tpu.memory_space<vmem>>, %arg9: memref<2x16xf32, #tpu.memory_space<vmem>>, %arg10: memref<2x16xf32, #tpu.memory_space<vmem>>, %arg11: memref<2x16xf32, #tpu.memory_space<vmem>>) attributes {dimension_semantics = [#tpu.dimension_semantics<arbitrary>], iteration_bounds = array<i64: 8>, scalar_prefetch = 0 : i64, scratch_operands = 4 : i64, tpu.core_type = #tpu.core_type<tc>, window_params = [{pipeline_mode = #tpu.pipeline_mode<synchronous>, transform_indices = @transform_0, window_bounds = array<i64: 2, 1>}, {transform_indices = @transform_1, window_bounds = array<i64: 1, 2, 64>}, {transform_indices = @transform_2, window_bounds = array<i64: 1, 2, 64>}, {pipeline_mode = #tpu.pipeline_mode<synchronous>, transform_indices = @transform_3, window_bounds = array<i64: 16, 64>}, {pipeline_mode = #tpu.pipeline_mode<synchronous>, transform_indices = @transform_4, window_bounds = array<i64: 16, 64>}, {transform_indices = @transform_5, window_bounds = array<i64: 1, 2, 16>}, {transform_indices = @transform_6, window_bounds = array<i64: 1, 2, 16>}]} {
    %c0_i32 = arith.constant 0 : i32
    %0 = arith.cmpi eq, %arg0, %c0_i32 : i32
    %1 = arith.extui %0 : i1 to i32
    %c0_i32_0 = arith.constant 0 : i32
    %2 = arith.cmpi ne, %1, %c0_i32_0 : i32
    scf.if %2 {
      %cst_53 = arith.constant 0.000000e+00 : f32
      %123 = vector.broadcast %cst_53 : f32 to vector<2x16xf32>
      %c0_54 = arith.constant 0 : index
      %c0_55 = arith.constant 0 : index
      %124 = vector.load %arg8[%c0_54, %c0_55] : memref<2x16xf32, #tpu.memory_space<vmem>>, vector<2x16xf32>
      tpu.vector_store %arg8[%c0_54, %c0_55], %123 {strides = array<i32>} : memref<2x16xf32, #tpu.memory_space<vmem>>, vector<2x16xf32>,
      %cst_56 = arith.constant 0.000000e+00 : f32
      %125 = vector.broadcast %cst_56 : f32 to vector<2x16xf32>
      %c0_57 = arith.constant 0 : index
      %c0_58 = arith.constant 0 : index
      %126 = vector.load %arg9[%c0_57, %c0_58] : memref<2x16xf32, #tpu.memory_space<vmem>>, vector<2x16xf32>
      tpu.vector_store %arg9[%c0_57, %c0_58], %125 {strides = array<i32>} : memref<2x16xf32, #tpu.memory_space<vmem>>, vector<2x16xf32>,
      %cst_59 = arith.constant 0.000000e+00 : f32
      %127 = vector.broadcast %cst_59 : f32 to vector<2x16xf32>
      %c0_60 = arith.constant 0 : index
      %c0_61 = arith.constant 0 : index
      %128 = vector.load %arg10[%c0_60, %c0_61] : memref<2x16xf32, #tpu.memory_space<vmem>>, vector<2x16xf32>
      tpu.vector_store %arg10[%c0_60, %c0_61], %127 {strides = array<i32>} : memref<2x16xf32, #tpu.memory_space<vmem>>, vector<2x16xf32>,
      %cst_62 = arith.constant 0.000000e+00 : f32
      %129 = vector.broadcast %cst_62 : f32 to vector<2x16xf32>
      %c0_63 = arith.constant 0 : index
      %c0_64 = arith.constant 0 : index
      %130 = vector.load %arg11[%c0_63, %c0_64] : memref<2x16xf32, #tpu.memory_space<vmem>>, vector<2x16xf32>
      tpu.vector_store %arg11[%c0_63, %c0_64], %129 {strides = array<i32>} : memref<2x16xf32, #tpu.memory_space<vmem>>, vector<2x16xf32>,
    } else {
    }
    %c0 = arith.constant 0 : index
    %c0_1 = arith.constant 0 : index
    %3 = vector.load %arg1[%c0, %c0_1] : memref<2x1xi32, #tpu.memory_space<vmem>>, vector<2x1xi32>
    %4 = vector.broadcast %arg0 : i32 to vector<2x1xi32>
    %5 = arith.cmpi slt, %4, %3 : vector<2x1xi32>
    %6 = arith.extui %5 : vector<2x1xi1> to vector<2x1xi32>
    %7 = arith.sitofp %6 : vector<2x1xi32> to vector<2x1xf32>
    %c0_2 = arith.constant 0 : index
    %c0_3 = arith.constant 0 : index
    %c0_4 = arith.constant 0 : index
    %8 = vector.load %arg2[%c0_2, %c0_3, %c0_4] : memref<1x2x64xf32, #tpu.memory_space<vmem>>, vector<1x2x64xf32>
    %9 = vector.shape_cast %8 : vector<1x2x64xf32> to vector<2x64xf32>
    %c0_5 = arith.constant 0 : index
    %c0_6 = arith.constant 0 : index
    %10 = vector.load %arg8[%c0_5, %c0_6] : memref<2x16xf32, #tpu.memory_space<vmem>>, vector<2x16xf32>
    %c0_7 = arith.constant 0 : index
    %c0_8 = arith.constant 0 : index
    %11 = vector.load %arg9[%c0_7, %c0_8] : memref<2x16xf32, #tpu.memory_space<vmem>>, vector<2x16xf32>
    %c0_9 = arith.constant 0 : index
    %c0_10 = arith.constant 0 : index
    %12 = vector.load %arg4[%c0_9, %c0_10] : memref<16x64xf32, #tpu.memory_space<vmem>>, vector<16x64xf32>
    %cst = arith.constant dense<0.000000e+00> : vector<2x64xf32>
    %13 = tpu.matmul %10, %12, %cst {dimension_numbers = #tpu.dot_dimension_numbers<[1], [0], [0], [1], [0, 0, 1, 1], [], []>} : vector<2x16xf32>, vector<16x64xf32>, vector<2x64xf32> -> vector<2x64xf32>
    %14 = arith.addf %9, %13 : vector<2x64xf32>
    %15 = vector.extract_strided_slice %14 {offsets = [0, 0], sizes = [2, 16], strides = [1, 1]} : vector<2x64xf32> to vector<2x16xf32>
    %16 = arith.negf %15 : vector<2x16xf32>
    %17 = math.exp %16 : vector<2x16xf32>
    %cst_11 = arith.constant 1.000000e+00 : f32
    %18 = vector.broadcast %cst_11 : f32 to vector<2x16xf32>
    %19 = arith.addf %18, %17 : vector<2x16xf32>
    %20 = arith.divf %18, %19 : vector<2x16xf32>
    %21 = vector.extract_strided_slice %14 {offsets = [0, 16], sizes = [2, 16], strides = [1, 1]} : vector<2x64xf32> to vector<2x16xf32>
    %22 = arith.negf %21 : vector<2x16xf32>
    %23 = math.exp %22 : vector<2x16xf32>
    %cst_12 = arith.constant 1.000000e+00 : f32
    %24 = vector.broadcast %cst_12 : f32 to vector<2x16xf32>
    %25 = arith.addf %24, %23 : vector<2x16xf32>
    %26 = arith.divf %24, %25 : vector<2x16xf32>
    %27 = vector.extract_strided_slice %14 {offsets = [0, 32], sizes = [2, 16], strides = [1, 1]} : vector<2x64xf32> to vector<2x16xf32>
    %28 = math.tanh %27 : vector<2x16xf32>
    %29 = vector.extract_strided_slice %14 {offsets = [0, 48], sizes = [2, 16], strides = [1, 1]} : vector<2x64xf32> to vector<2x16xf32>
    %30 = arith.negf %29 : vector<2x16xf32>
    %31 = math.exp %30 : vector<2x16xf32>
    %cst_13 = arith.constant 1.000000e+00 : f32
    %32 = vector.broadcast %cst_13 : f32 to vector<2x16xf32>
    %33 = arith.addf %32, %31 : vector<2x16xf32>
    %34 = arith.divf %32, %33 : vector<2x16xf32>
    %35 = arith.mulf %26, %11 : vector<2x16xf32>
    %36 = arith.mulf %20, %28 : vector<2x16xf32>
    %37 = arith.addf %35, %36 : vector<2x16xf32>
    %38 = math.tanh %37 : vector<2x16xf32>
    %39 = arith.mulf %34, %38 : vector<2x16xf32>
    %40 = vector.broadcast %7 : vector<2x1xf32> to vector<2x16xf32>
    %41 = arith.mulf %40, %39 : vector<2x16xf32>
    %cst_14 = arith.constant 1.000000e+00 : f32
    %42 = vector.broadcast %cst_14 : f32 to vector<2x1xf32>
    %43 = arith.subf %42, %7 : vector<2x1xf32>
    %c0_15 = arith.constant 0 : index
    %c0_16 = arith.constant 0 : index
    %44 = vector.load %arg8[%c0_15, %c0_16] : memref<2x16xf32, #tpu.memory_space<vmem>>, vector<2x16xf32>
    %45 = vector.broadcast %43 : vector<2x1xf32> to vector<2x16xf32>
    %46 = arith.mulf %45, %44 : vector<2x16xf32>
    %47 = arith.addf %41, %46 : vector<2x16xf32>
    %c0_17 = arith.constant 0 : index
    %c0_18 = arith.constant 0 : index
    %48 = vector.load %arg8[%c0_17, %c0_18] : memref<2x16xf32, #tpu.memory_space<vmem>>, vector<2x16xf32>
    tpu.vector_store %arg8[%c0_17, %c0_18], %47 {strides = array<i32>} : memref<2x16xf32, #tpu.memory_space<vmem>>, vector<2x16xf32>,
    %49 = vector.broadcast %7 : vector<2x1xf32> to vector<2x16xf32>
    %50 = arith.mulf %49, %37 : vector<2x16xf32>
    %cst_19 = arith.constant 1.000000e+00 : f32
    %51 = vector.broadcast %cst_19 : f32 to vector<2x1xf32>
    %52 = arith.subf %51, %7 : vector<2x1xf32>
    %c0_20 = arith.constant 0 : index
    %c0_21 = arith.constant 0 : index
    %53 = vector.load %arg9[%c0_20, %c0_21] : memref<2x16xf32, #tpu.memory_space<vmem>>, vector<2x16xf32>
    %54 = vector.broadcast %52 : vector<2x1xf32> to vector<2x16xf32>
    %55 = arith.mulf %54, %53 : vector<2x16xf32>
    %56 = arith.addf %50, %55 : vector<2x16xf32>
    %c0_22 = arith.constant 0 : index
    %c0_23 = arith.constant 0 : index
    %57 = vector.load %arg9[%c0_22, %c0_23] : memref<2x16xf32, #tpu.memory_space<vmem>>, vector<2x16xf32>
    tpu.vector_store %arg9[%c0_22, %c0_23], %56 {strides = array<i32>} : memref<2x16xf32, #tpu.memory_space<vmem>>, vector<2x16xf32>,
    %58 = vector.broadcast %7 : vector<2x1xf32> to vector<2x16xf32>
    %59 = arith.mulf %58, %39 : vector<2x16xf32>
    %c0_24 = arith.constant 0 : index
    %c0_25 = arith.constant 0 : index
    %c0_26 = arith.constant 0 : index
    %60 = vector.load %arg6[%c0_24, %c0_25, %c0_26] : memref<1x2x16xf32, #tpu.memory_space<vmem>>, vector<1x2x16xf32>
    %61 = vector.shape_cast %60 : vector<1x2x16xf32> to vector<2x16xf32>
    %62 = vector.shape_cast %59 : vector<2x16xf32> to vector<1x2x16xf32>
    tpu.vector_store %arg6[%c0_24, %c0_25, %c0_26], %62 {strides = array<i32>} : memref<1x2x16xf32, #tpu.memory_space<vmem>>, vector<1x2x16xf32>,
    %c7_i32 = arith.constant 7 : i32
    %63 = arith.subi %c7_i32, %arg0 : i32
    %64 = vector.broadcast %63 : i32 to vector<2x1xi32>
    %65 = arith.cmpi slt, %64, %3 : vector<2x1xi32>
    %66 = arith.extui %65 : vector<2x1xi1> to vector<2x1xi32>
    %67 = arith.sitofp %66 : vector<2x1xi32> to vector<2x1xf32>
    %c0_27 = arith.constant 0 : index
    %c0_28 = arith.constant 0 : index
    %c0_29 = arith.constant 0 : index
    %68 = vector.load %arg3[%c0_27, %c0_28, %c0_29] : memref<1x2x64xf32, #tpu.memory_space<vmem>>, vector<1x2x64xf32>
    %69 = vector.shape_cast %68 : vector<1x2x64xf32> to vector<2x64xf32>
    %c0_30 = arith.constant 0 : index
    %c0_31 = arith.constant 0 : index
    %70 = vector.load %arg10[%c0_30, %c0_31] : memref<2x16xf32, #tpu.memory_space<vmem>>, vector<2x16xf32>
    %c0_32 = arith.constant 0 : index
    %c0_33 = arith.constant 0 : index
    %71 = vector.load %arg11[%c0_32, %c0_33] : memref<2x16xf32, #tpu.memory_space<vmem>>, vector<2x16xf32>
    %c0_34 = arith.constant 0 : index
    %c0_35 = arith.constant 0 : index
    %72 = vector.load %arg5[%c0_34, %c0_35] : memref<16x64xf32, #tpu.memory_space<vmem>>, vector<16x64xf32>
    %cst_36 = arith.constant dense<0.000000e+00> : vector<2x64xf32>
    %73 = tpu.matmul %70, %72, %cst_36 {dimension_numbers = #tpu.dot_dimension_numbers<[1], [0], [0], [1], [0, 0, 1, 1], [], []>} : vector<2x16xf32>, vector<16x64xf32>, vector<2x64xf32> -> vector<2x64xf32>
    %74 = arith.addf %69, %73 : vector<2x64xf32>
    %75 = vector.extract_strided_slice %74 {offsets = [0, 0], sizes = [2, 16], strides = [1, 1]} : vector<2x64xf32> to vector<2x16xf32>
    %76 = arith.negf %75 : vector<2x16xf32>
    %77 = math.exp %76 : vector<2x16xf32>
    %cst_37 = arith.constant 1.000000e+00 : f32
    %78 = vector.broadcast %cst_37 : f32 to vector<2x16xf32>
    %79 = arith.addf %78, %77 : vector<2x16xf32>
    %80 = arith.divf %78, %79 : vector<2x16xf32>
    %81 = vector.extract_strided_slice %74 {offsets = [0, 16], sizes = [2, 16], strides = [1, 1]} : vector<2x64xf32> to vector<2x16xf32>
    %82 = arith.negf %81 : vector<2x16xf32>
    %83 = math.exp %82 : vector<2x16xf32>
    %cst_38 = arith.constant 1.000000e+00 : f32
    %84 = vector.broadcast %cst_38 : f32 to vector<2x16xf32>
    %85 = arith.addf %84, %83 : vector<2x16xf32>
    %86 = arith.divf %84, %85 : vector<2x16xf32>
    %87 = vector.extract_strided_slice %74 {offsets = [0, 32], sizes = [2, 16], strides = [1, 1]} : vector<2x64xf32> to vector<2x16xf32>
    %88 = math.tanh %87 : vector<2x16xf32>
    %89 = vector.extract_strided_slice %74 {offsets = [0, 48], sizes = [2, 16], strides = [1, 1]} : vector<2x64xf32> to vector<2x16xf32>
    %90 = arith.negf %89 : vector<2x16xf32>
    %91 = math.exp %90 : vector<2x16xf32>
    %cst_39 = arith.constant 1.000000e+00 : f32
    %92 = vector.broadcast %cst_39 : f32 to vector<2x16xf32>
    %93 = arith.addf %92, %91 : vector<2x16xf32>
    %94 = arith.divf %92, %93 : vector<2x16xf32>
    %95 = arith.mulf %86, %71 : vector<2x16xf32>
    %96 = arith.mulf %80, %88 : vector<2x16xf32>
    %97 = arith.addf %95, %96 : vector<2x16xf32>
    %98 = math.tanh %97 : vector<2x16xf32>
    %99 = arith.mulf %94, %98 : vector<2x16xf32>
    %100 = vector.broadcast %67 : vector<2x1xf32> to vector<2x16xf32>
    %101 = arith.mulf %100, %99 : vector<2x16xf32>
    %cst_40 = arith.constant 1.000000e+00 : f32
    %102 = vector.broadcast %cst_40 : f32 to vector<2x1xf32>
    %103 = arith.subf %102, %67 : vector<2x1xf32>
    %c0_41 = arith.constant 0 : index
    %c0_42 = arith.constant 0 : index
    %104 = vector.load %arg10[%c0_41, %c0_42] : memref<2x16xf32, #tpu.memory_space<vmem>>, vector<2x16xf32>
    %105 = vector.broadcast %103 : vector<2x1xf32> to vector<2x16xf32>
    %106 = arith.mulf %105, %104 : vector<2x16xf32>
    %107 = arith.addf %101, %106 : vector<2x16xf32>
    %c0_43 = arith.constant 0 : index
    %c0_44 = arith.constant 0 : index
    %108 = vector.load %arg10[%c0_43, %c0_44] : memref<2x16xf32, #tpu.memory_space<vmem>>, vector<2x16xf32>
    tpu.vector_store %arg10[%c0_43, %c0_44], %107 {strides = array<i32>} : memref<2x16xf32, #tpu.memory_space<vmem>>, vector<2x16xf32>,
    %109 = vector.broadcast %67 : vector<2x1xf32> to vector<2x16xf32>
    %110 = arith.mulf %109, %97 : vector<2x16xf32>
    %cst_45 = arith.constant 1.000000e+00 : f32
    %111 = vector.broadcast %cst_45 : f32 to vector<2x1xf32>
    %112 = arith.subf %111, %67 : vector<2x1xf32>
    %c0_46 = arith.constant 0 : index
    %c0_47 = arith.constant 0 : index
    %113 = vector.load %arg11[%c0_46, %c0_47] : memref<2x16xf32, #tpu.memory_space<vmem>>, vector<2x16xf32>
    %114 = vector.broadcast %112 : vector<2x1xf32> to vector<2x16xf32>
    %115 = arith.mulf %114, %113 : vector<2x16xf32>
    %116 = arith.addf %110, %115 : vector<2x16xf32>
    %c0_48 = arith.constant 0 : index
    %c0_49 = arith.constant 0 : index
    %117 = vector.load %arg11[%c0_48, %c0_49] : memref<2x16xf32, #tpu.memory_space<vmem>>, vector<2x16xf32>
    tpu.vector_store %arg11[%c0_48, %c0_49], %116 {strides = array<i32>} : memref<2x16xf32, #tpu.memory_space<vmem>>, vector<2x16xf32>,
    %118 = vector.broadcast %67 : vector<2x1xf32> to vector<2x16xf32>
    %119 = arith.mulf %118, %99 : vector<2x16xf32>
    %c0_50 = arith.constant 0 : index
    %c0_51 = arith.constant 0 : index
    %c0_52 = arith.constant 0 : index
    %120 = vector.load %arg7[%c0_50, %c0_51, %c0_52] : memref<1x2x16xf32, #tpu.memory_space<vmem>>, vector<1x2x16xf32>
    %121 = vector.shape_cast %120 : vector<1x2x16xf32> to vector<2x16xf32>
    %122 = vector.shape_cast %119 : vector<2x16xf32> to vector<1x2x16xf32>
    tpu.vector_store %arg7[%c0_50, %c0_51, %c0_52], %122 {strides = array<i32>} : memref<1x2x16xf32, #tpu.memory_space<vmem>>, vector<1x2x16xf32>,
    return
  }
  func.func @transform_0(%arg0: i32) -> (i32, i32) {
    %c0_i32 = arith.constant 0 : i32
    %c0_i32_0 = arith.constant 0 : i32
    %c0_i32_1 = arith.constant 0 : i32
    return %c0_i32, %c0_i32_0 : i32, i32
  }
  func.func @transform_1(%arg0: i32) -> (i32, i32, i32) {
    %c0_i32 = arith.constant 0 : i32
    %c0_i32_0 = arith.constant 0 : i32
    %c0_i32_1 = arith.constant 0 : i32
    return %arg0, %c0_i32, %c0_i32_0 : i32, i32, i32
  }
  func.func @transform_2(%arg0: i32) -> (i32, i32, i32) {
    %c7_i32 = arith.constant 7 : i32
    %0 = arith.subi %c7_i32, %arg0 : i32
    %c0_i32 = arith.constant 0 : i32
    %c0_i32_0 = arith.constant 0 : i32
    %c0_i32_1 = arith.constant 0 : i32
    return %0, %c0_i32, %c0_i32_0 : i32, i32, i32
  }
  func.func @transform_3(%arg0: i32) -> (i32, i32) {
    %c0_i32 = arith.constant 0 : i32
    %c0_i32_0 = arith.constant 0 : i32
    %c0_i32_1 = arith.constant 0 : i32
    return %c0_i32, %c0_i32_0 : i32, i32
  }
  func.func @transform_4(%arg0: i32) -> (i32, i32) {
    %c0_i32 = arith.constant 0 : i32
    %c0_i32_0 = arith.constant 0 : i32
    %c0_i32_1 = arith.constant 0 : i32
    return %c0_i32, %c0_i32_0 : i32, i32
  }
  func.func @transform_5(%arg0: i32) -> (i32, i32, i32) {
    %c0_i32 = arith.constant 0 : i32
    %c0_i32_0 = arith.constant 0 : i32
    %c0_i32_1 = arith.constant 0 : i32
    return %arg0, %c0_i32, %c0_i32_0 : i32, i32, i32
  }
  func.func @transform_6(%arg0: i32) -> (i32, i32, i32) {
    %c7_i32 = arith.constant 7 : i32
    %0 = arith.subi %c7_i32, %arg0 : i32
    %c0_i32 = arith.constant 0 : i32
    %c0_i32_0 = arith.constant 0 : i32
    %c0_i32_1 = arith.constant 0 : i32
    return %0, %c0_i32, %c0_i32_0 : i32, i32, i32
  }
}

module attributes {stable_mosaic.version = 11 : i64} {
  func.func @_linear_kernel(%arg0: i32, %arg1: memref<16x32xf32, #tpu.memory_space<vmem>>, %arg2: memref<32x16xf32, #tpu.memory_space<vmem>>, %arg3: memref<1x16xf32, #tpu.memory_space<vmem>>, %arg4: memref<16x16xf32, #tpu.memory_space<vmem>>) attributes {dimension_semantics = [#tpu.dimension_semantics<arbitrary>], iteration_bounds = array<i64: 1>, scalar_prefetch = 0 : i64, scratch_operands = 0 : i64, tpu.core_type = #tpu.core_type<tc>, window_params = [{pipeline_mode = #tpu.pipeline_mode<synchronous>, transform_indices = @transform_0, window_bounds = array<i64: 16, 32>}, {pipeline_mode = #tpu.pipeline_mode<synchronous>, transform_indices = @transform_1, window_bounds = array<i64: 32, 16>}, {pipeline_mode = #tpu.pipeline_mode<synchronous>, transform_indices = @transform_2, window_bounds = array<i64: 1, 16>}, {pipeline_mode = #tpu.pipeline_mode<synchronous>, transform_indices = @transform_3, window_bounds = array<i64: 16, 16>}]} {
    %c0 = arith.constant 0 : index
    %c0_0 = arith.constant 0 : index
    %0 = vector.load %arg1[%c0, %c0_0] : memref<16x32xf32, #tpu.memory_space<vmem>>, vector<16x32xf32>
    %c0_1 = arith.constant 0 : index
    %c0_2 = arith.constant 0 : index
    %1 = vector.load %arg2[%c0_1, %c0_2] : memref<32x16xf32, #tpu.memory_space<vmem>>, vector<32x16xf32>
    %cst = arith.constant dense<0.000000e+00> : vector<16x16xf32>
    %2 = tpu.matmul %0, %1, %cst {dimension_numbers = #tpu.dot_dimension_numbers<[1], [0], [0], [1], [0, 0, 1, 1], [], []>} : vector<16x32xf32>, vector<32x16xf32>, vector<16x16xf32> -> vector<16x16xf32>
    %c0_3 = arith.constant 0 : index
    %c0_4 = arith.constant 0 : index
    %3 = vector.load %arg3[%c0_3, %c0_4] : memref<1x16xf32, #tpu.memory_space<vmem>>, vector<1x16xf32>
    %4 = vector.broadcast %3 : vector<1x16xf32> to vector<16x16xf32>
    %5 = arith.addf %2, %4 : vector<16x16xf32>
    %c0_5 = arith.constant 0 : index
    %c0_6 = arith.constant 0 : index
    %6 = vector.load %arg4[%c0_5, %c0_6] : memref<16x16xf32, #tpu.memory_space<vmem>>, vector<16x16xf32>
    tpu.vector_store %arg4[%c0_5, %c0_6], %5 {strides = array<i32>} : memref<16x16xf32, #tpu.memory_space<vmem>>, vector<16x16xf32>,
    return
  }
  func.func @transform_0(%arg0: i32) -> (i32, i32) {
    %c0_i32 = arith.constant 0 : i32
    %c0_i32_0 = arith.constant 0 : i32
    %c0_i32_1 = arith.constant 0 : i32
    return %c0_i32, %c0_i32_0 : i32, i32
  }
  func.func @transform_1(%arg0: i32) -> (i32, i32) {
    %c0_i32 = arith.constant 0 : i32
    %c0_i32_0 = arith.constant 0 : i32
    %c0_i32_1 = arith.constant 0 : i32
    return %c0_i32, %c0_i32_0 : i32, i32
  }
  func.func @transform_2(%arg0: i32) -> (i32, i32) {
    %c0_i32 = arith.constant 0 : i32
    %c0_i32_0 = arith.constant 0 : i32
    %c0_i32_1 = arith.constant 0 : i32
    return %c0_i32, %c0_i32_0 : i32, i32
  }
  func.func @transform_3(%arg0: i32) -> (i32, i32) {
    %c0_i32 = arith.constant 0 : i32
    %c0_i32_0 = arith.constant 0 : i32
    %c0_i32_1 = arith.constant 0 : i32
    return %c0_i32, %c0_i32_0 : i32, i32
  }
}

module attributes {stable_mosaic.version = 11 : i64} {
  func.func @kernel(%arg0: i32, %arg1: memref<1x2x8xf32, #tpu.memory_space<vmem>>, %arg2: memref<2x8x16xf32, #tpu.memory_space<vmem>>, %arg3: memref<2x8x32xf32, #tpu.memory_space<vmem>>, %arg4: memref<2x8xf32, #tpu.memory_space<vmem>>, %arg5: memref<2x8xf32, #tpu.memory_space<vmem>>, %arg6: memref<7x1x1x16xf32, #tpu.memory_space<vmem>>, %arg7: memref<32x16xf32, #tpu.memory_space<vmem>>, %arg8: memref<1x1x16xf32, #tpu.memory_space<vmem>>, %arg9: memref<1x1xf32, #tpu.memory_space<vmem>>, %arg10: memref<8x16xf32, #tpu.memory_space<vmem>>, %arg11: memref<1x16xf32, #tpu.memory_space<vmem>>, %arg12: memref<16x16xf32, #tpu.memory_space<vmem>>, %arg13: memref<1x16xf32, #tpu.memory_space<vmem>>, %arg14: memref<80x128xf32, #tpu.memory_space<vmem>>, %arg15: memref<1x128xf32, #tpu.memory_space<vmem>>, %arg16: memref<64x128xf32, #tpu.memory_space<vmem>>, %arg17: memref<1x128xf32, #tpu.memory_space<vmem>>, %arg18: memref<64x8xf32, #tpu.memory_space<vmem>>, %arg19: memref<64x1xf32, #tpu.memory_space<vmem>>, %arg20: memref<1x1xf32, #tpu.memory_space<vmem>>, %arg21: memref<1x2x128xf32, #tpu.memory_space<vmem>>, %arg22: memref<2x32xf32, #tpu.memory_space<vmem>>, %arg23: memref<2x32xf32, #tpu.memory_space<vmem>>, %arg24: memref<2x32xf32, #tpu.memory_space<vmem>>, %arg25: memref<2x32xf32, #tpu.memory_space<vmem>>, %arg26: memref<2x8xf32, #tpu.memory_space<vmem>>) attributes {dimension_semantics = [#tpu.dimension_semantics<arbitrary>], iteration_bounds = array<i64: 6>, scalar_prefetch = 0 : i64, scratch_operands = 5 : i64, tpu.core_type = #tpu.core_type<tc>, window_params = [{transform_indices = @transform_0, window_bounds = array<i64: 1, 2, 8>}, {pipeline_mode = #tpu.pipeline_mode<synchronous>, transform_indices = @transform_1, window_bounds = array<i64: 2, 8, 16>}, {pipeline_mode = #tpu.pipeline_mode<synchronous>, transform_indices = @transform_2, window_bounds = array<i64: 2, 8, 32>}, {pipeline_mode = #tpu.pipeline_mode<synchronous>, transform_indices = @transform_3, window_bounds = array<i64: 2, 8>}, {pipeline_mode = #tpu.pipeline_mode<synchronous>, transform_indices = @transform_4, window_bounds = array<i64: 2, 8>}, {pipeline_mode = #tpu.pipeline_mode<synchronous>, transform_indices = @transform_5, window_bounds = array<i64: 7, 1, 1, 16>}, {pipeline_mode = #tpu.pipeline_mode<synchronous>, transform_indices = @transform_6, window_bounds = array<i64: 32, 16>}, {pipeline_mode = #tpu.pipeline_mode<synchronous>, transform_indices = @transform_7, window_bounds = array<i64: 1, 1, 16>}, {pipeline_mode = #tpu.pipeline_mode<synchronous>, transform_indices = @transform_8, window_bounds = array<i64: 1, 1>}, {pipeline_mode = #tpu.pipeline_mode<synchronous>, transform_indices = @transform_9, window_bounds = array<i64: 8, 16>}, {pipeline_mode = #tpu.pipeline_mode<synchronous>, transform_indices = @transform_10, window_bounds = array<i64: 1, 16>}, {pipeline_mode = #tpu.pipeline_mode<synchronous>, transform_indices = @transform_11, window_bounds = array<i64: 16, 16>}, {pipeline_mode = #tpu.pipeline_mode<synchronous>, transform_indices = @transform_12, window_bounds = array<i64: 1, 16>}, {pipeline_mode = #tpu.pipeline_mode<synchronous>, transform_indices = @transform_13, window_bounds = array<i64: 80, 128>}, {pipeline_mode = #tpu.pipeline_mode<synchronous>, transform_indices = @transform_14, window_bounds = array<i64: 1, 128>}, {pipeline_mode = #tpu.pipeline_mode<synchronous>, transform_indices = @transform_15, window_bounds = array<i64: 64, 128>}, {pipeline_mode = #tpu.pipeline_mode<synchronous>, transform_indices = @transform_16, window_bounds = array<i64: 1, 128>}, {pipeline_mode = #tpu.pipeline_mode<synchronous>, transform_indices = @transform_17, window_bounds = array<i64: 64, 8>}, {pipeline_mode = #tpu.pipeline_mode<synchronous>, transform_indices = @transform_18, window_bounds = array<i64: 64, 1>}, {pipeline_mode = #tpu.pipeline_mode<synchronous>, transform_indices = @transform_19, window_bounds = array<i64: 1, 1>}, {transform_indices = @transform_20, window_bounds = array<i64: 1, 2, 128>}]} {
    %c0_i32 = arith.constant 0 : i32
    %0 = arith.cmpi eq, %arg0, %c0_i32 : i32
    %1 = arith.extui %0 : i1 to i32
    %c0_i32_0 = arith.constant 0 : i32
    %2 = arith.cmpi ne, %1, %c0_i32_0 : i32
    scf.if %2 {
      %cst_126 = arith.constant 0.000000e+00 : f32
      %237 = vector.broadcast %cst_126 : f32 to vector<2x32xf32>
      %c0_127 = arith.constant 0 : index
      %c0_128 = arith.constant 0 : index
      %238 = vector.load %arg22[%c0_127, %c0_128] : memref<2x32xf32, #tpu.memory_space<vmem>>, vector<2x32xf32>
      tpu.vector_store %arg22[%c0_127, %c0_128], %237 {strides = array<i32>} : memref<2x32xf32, #tpu.memory_space<vmem>>, vector<2x32xf32>,
      %cst_129 = arith.constant 0.000000e+00 : f32
      %239 = vector.broadcast %cst_129 : f32 to vector<2x32xf32>
      %c0_130 = arith.constant 0 : index
      %c0_131 = arith.constant 0 : index
      %240 = vector.load %arg23[%c0_130, %c0_131] : memref<2x32xf32, #tpu.memory_space<vmem>>, vector<2x32xf32>
      tpu.vector_store %arg23[%c0_130, %c0_131], %239 {strides = array<i32>} : memref<2x32xf32, #tpu.memory_space<vmem>>, vector<2x32xf32>,
      %cst_132 = arith.constant 0.000000e+00 : f32
      %241 = vector.broadcast %cst_132 : f32 to vector<2x32xf32>
      %c0_133 = arith.constant 0 : index
      %c0_134 = arith.constant 0 : index
      %242 = vector.load %arg24[%c0_133, %c0_134] : memref<2x32xf32, #tpu.memory_space<vmem>>, vector<2x32xf32>
      tpu.vector_store %arg24[%c0_133, %c0_134], %241 {strides = array<i32>} : memref<2x32xf32, #tpu.memory_space<vmem>>, vector<2x32xf32>,
      %cst_135 = arith.constant 0.000000e+00 : f32
      %243 = vector.broadcast %cst_135 : f32 to vector<2x32xf32>
      %c0_136 = arith.constant 0 : index
      %c0_137 = arith.constant 0 : index
      %244 = vector.load %arg25[%c0_136, %c0_137] : memref<2x32xf32, #tpu.memory_space<vmem>>, vector<2x32xf32>
      tpu.vector_store %arg25[%c0_136, %c0_137], %243 {strides = array<i32>} : memref<2x32xf32, #tpu.memory_space<vmem>>, vector<2x32xf32>,
      %cst_138 = arith.constant 0.000000e+00 : f32
      %245 = vector.broadcast %cst_138 : f32 to vector<2x8xf32>
      %c0_139 = arith.constant 0 : index
      %c0_140 = arith.constant 0 : index
      %246 = vector.load %arg26[%c0_139, %c0_140] : memref<2x8xf32, #tpu.memory_space<vmem>>, vector<2x8xf32>
      tpu.vector_store %arg26[%c0_139, %c0_140], %245 {strides = array<i32>} : memref<2x8xf32, #tpu.memory_space<vmem>>, vector<2x8xf32>,
    } else {
    }
    %c0 = arith.constant 0 : index
    %c0_1 = arith.constant 0 : index
    %3 = vector.load %arg22[%c0, %c0_1] : memref<2x32xf32, #tpu.memory_space<vmem>>, vector<2x32xf32>
    %c0_2 = arith.constant 0 : index
    %c0_3 = arith.constant 0 : index
    %4 = vector.load %arg24[%c0_2, %c0_3] : memref<2x32xf32, #tpu.memory_space<vmem>>, vector<2x32xf32>
    %c0_4 = arith.constant 0 : index
    %c0_5 = arith.constant 0 : index
    %5 = vector.load %arg23[%c0_4, %c0_5] : memref<2x32xf32, #tpu.memory_space<vmem>>, vector<2x32xf32>
    %c0_6 = arith.constant 0 : index
    %c0_7 = arith.constant 0 : index
    %6 = vector.load %arg25[%c0_6, %c0_7] : memref<2x32xf32, #tpu.memory_space<vmem>>, vector<2x32xf32>
    %c0_i32_8 = arith.constant 0 : i32
    %7 = arith.cmpi eq, %arg0, %c0_i32_8 : i32
    %8 = arith.extui %7 : i1 to i32
    %9 = arith.sitofp %8 : i32 to f32
    %c0_9 = arith.constant 0 : index
    %c0_10 = arith.constant 0 : index
    %10 = vector.load %arg5[%c0_9, %c0_10] : memref<2x8xf32, #tpu.memory_space<vmem>>, vector<2x8xf32>
    %11 = vector.broadcast %9 : f32 to vector<2x8xf32>
    %12 = arith.mulf %11, %10 : vector<2x8xf32>
    %cst = arith.constant 1.000000e+00 : f32
    %13 = arith.subf %cst, %9 : f32
    %c0_11 = arith.constant 0 : index
    %c0_12 = arith.constant 0 : index
    %14 = vector.load %arg26[%c0_11, %c0_12] : memref<2x8xf32, #tpu.memory_space<vmem>>, vector<2x8xf32>
    %15 = vector.broadcast %13 : f32 to vector<2x8xf32>
    %16 = arith.mulf %15, %14 : vector<2x8xf32>
    %17 = arith.addf %12, %16 : vector<2x8xf32>
    %c0_13 = arith.constant 0 : index
    %c0_14 = arith.constant 0 : index
    %18 = vector.load %arg7[%c0_13, %c0_14] : memref<32x16xf32, #tpu.memory_space<vmem>>, vector<32x16xf32>
    %cst_15 = arith.constant dense<0.000000e+00> : vector<2x16xf32>
    %19 = tpu.matmul %3, %18, %cst_15 {dimension_numbers = #tpu.dot_dimension_numbers<[1], [0], [0], [1], [0, 0, 1, 1], [], []>} : vector<2x32xf32>, vector<32x16xf32>, vector<2x16xf32> -> vector<2x16xf32>
    %c0_16 = arith.constant 0 : index
    %c0_17 = arith.constant 0 : index
    %c0_18 = arith.constant 0 : index
    %20 = vector.load %arg2[%c0_16, %c0_17, %c0_18] : memref<2x8x16xf32, #tpu.memory_space<vmem>>, vector<2x8x16xf32>
    %21 = vector.shape_cast %19 : vector<2x16xf32> to vector<2x1x16xf32>
    %22 = vector.broadcast %21 : vector<2x1x16xf32> to vector<2x8x16xf32>
    %23 = arith.addf %20, %22 : vector<2x8x16xf32>
    %cst_19 = arith.constant 0.000000e+00 : f32
    %24 = vector.broadcast %cst_19 : f32 to vector<2x3xf32>
    %25 = vector.extract_strided_slice %17 {offsets = [0, 0], sizes = [2, 5], strides = [1, 1]} : vector<2x8xf32> to vector<2x5xf32>
    %26 = tpu.concatenate %24, %25 in 1 : vector<2x3xf32>, vector<2x5xf32> -> vector<2x8xf32>
    %27 = vector.shape_cast %26 : vector<2x8xf32> to vector<2x8x1xf32>
    %c0_20 = arith.constant 0 : index
    %c0_21 = arith.constant 0 : index
    %c0_22 = arith.constant 0 : index
    %c0_23 = arith.constant 0 : index
    %28 = vector.load %arg6[%c0_20, %c0_21, %c0_22, %c0_23] : memref<7x1x1x16xf32, #tpu.memory_space<vmem>>, vector<1x1x1x16xf32>
    %29 = vector.shape_cast %28 : vector<1x1x1x16xf32> to vector<1x1x16xf32>
    %30 = vector.broadcast %27 : vector<2x8x1xf32> to vector<2x8x16xf32>
    %31 = vector.broadcast %29 : vector<1x1x16xf32> to vector<2x8x16xf32>
    %32 = arith.mulf %30, %31 : vector<2x8x16xf32>
    %33 = arith.addf %23, %32 : vector<2x8x16xf32>
    %cst_24 = arith.constant 0.000000e+00 : f32
    %34 = vector.broadcast %cst_24 : f32 to vector<2x2xf32>
    %35 = vector.extract_strided_slice %17 {offsets = [0, 0], sizes = [2, 6], strides = [1, 1]} : vector<2x8xf32> to vector<2x6xf32>
    %36 = tpu.concatenate %34, %35 in 1 : vector<2x2xf32>, vector<2x6xf32> -> vector<2x8xf32>
    %37 = vector.shape_cast %36 : vector<2x8xf32> to vector<2x8x1xf32>
    %c1 = arith.constant 1 : index
    %c0_25 = arith.constant 0 : index
    %c0_26 = arith.constant 0 : index
    %c0_27 = arith.constant 0 : index
    %38 = vector.load %arg6[%c1, %c0_25, %c0_26, %c0_27] : memref<7x1x1x16xf32, #tpu.memory_space<vmem>>, vector<1x1x1x16xf32>
    %39 = vector.shape_cast %38 : vector<1x1x1x16xf32> to vector<1x1x16xf32>
    %40 = vector.broadcast %37 : vector<2x8x1xf32> to vector<2x8x16xf32>
    %41 = vector.broadcast %39 : vector<1x1x16xf32> to vector<2x8x16xf32>
    %42 = arith.mulf %40, %41 : vector<2x8x16xf32>
    %43 = arith.addf %33, %42 : vector<2x8x16xf32>
    %cst_28 = arith.constant 0.000000e+00 : f32
    %44 = vector.broadcast %cst_28 : f32 to vector<2x1xf32>
    %45 = vector.extract_strided_slice %17 {offsets = [0, 0], sizes = [2, 7], strides = [1, 1]} : vector<2x8xf32> to vector<2x7xf32>
    %46 = tpu.concatenate %44, %45 in 1 : vector<2x1xf32>, vector<2x7xf32> -> vector<2x8xf32>
    %47 = vector.shape_cast %46 : vector<2x8xf32> to vector<2x8x1xf32>
    %c2 = arith.constant 2 : index
    %c0_29 = arith.constant 0 : index
    %c0_30 = arith.constant 0 : index
    %c0_31 = arith.constant 0 : index
    %48 = vector.load %arg6[%c2, %c0_29, %c0_30, %c0_31] : memref<7x1x1x16xf32, #tpu.memory_space<vmem>>, vector<1x1x1x16xf32>
    %49 = vector.shape_cast %48 : vector<1x1x1x16xf32> to vector<1x1x16xf32>
    %50 = vector.broadcast %47 : vector<2x8x1xf32> to vector<2x8x16xf32>
    %51 = vector.broadcast %49 : vector<1x1x16xf32> to vector<2x8x16xf32>
    %52 = arith.mulf %50, %51 : vector<2x8x16xf32>
    %53 = arith.addf %43, %52 : vector<2x8x16xf32>
    %54 = vector.shape_cast %17 : vector<2x8xf32> to vector<2x8x1xf32>
    %c3 = arith.constant 3 : index
    %c0_32 = arith.constant 0 : index
    %c0_33 = arith.constant 0 : index
    %c0_34 = arith.constant 0 : index
    %55 = vector.load %arg6[%c3, %c0_32, %c0_33, %c0_34] : memref<7x1x1x16xf32, #tpu.memory_space<vmem>>, vector<1x1x1x16xf32>
    %56 = vector.shape_cast %55 : vector<1x1x1x16xf32> to vector<1x1x16xf32>
    %57 = vector.broadcast %54 : vector<2x8x1xf32> to vector<2x8x16xf32>
    %58 = vector.broadcast %56 : vector<1x1x16xf32> to vector<2x8x16xf32>
    %59 = arith.mulf %57, %58 : vector<2x8x16xf32>
    %60 = arith.addf %53, %59 : vector<2x8x16xf32>
    %61 = vector.extract_strided_slice %17 {offsets = [0, 1], sizes = [2, 7], strides = [1, 1]} : vector<2x8xf32> to vector<2x7xf32>
    %cst_35 = arith.constant 0.000000e+00 : f32
    %62 = vector.broadcast %cst_35 : f32 to vector<2x1xf32>
    %63 = tpu.concatenate %61, %62 in 1 : vector<2x7xf32>, vector<2x1xf32> -> vector<2x8xf32>
    %64 = vector.shape_cast %63 : vector<2x8xf32> to vector<2x8x1xf32>
    %c4 = arith.constant 4 : index
    %c0_36 = arith.constant 0 : index
    %c0_37 = arith.constant 0 : index
    %c0_38 = arith.constant 0 : index
    %65 = vector.load %arg6[%c4, %c0_36, %c0_37, %c0_38] : memref<7x1x1x16xf32, #tpu.memory_space<vmem>>, vector<1x1x1x16xf32>
    %66 = vector.shape_cast %65 : vector<1x1x1x16xf32> to vector<1x1x16xf32>
    %67 = vector.broadcast %64 : vector<2x8x1xf32> to vector<2x8x16xf32>
    %68 = vector.broadcast %66 : vector<1x1x16xf32> to vector<2x8x16xf32>
    %69 = arith.mulf %67, %68 : vector<2x8x16xf32>
    %70 = arith.addf %60, %69 : vector<2x8x16xf32>
    %71 = vector.extract_strided_slice %17 {offsets = [0, 2], sizes = [2, 6], strides = [1, 1]} : vector<2x8xf32> to vector<2x6xf32>
    %cst_39 = arith.constant 0.000000e+00 : f32
    %72 = vector.broadcast %cst_39 : f32 to vector<2x2xf32>
    %73 = tpu.concatenate %71, %72 in 1 : vector<2x6xf32>, vector<2x2xf32> -> vector<2x8xf32>
    %74 = vector.shape_cast %73 : vector<2x8xf32> to vector<2x8x1xf32>
    %c5 = arith.constant 5 : index
    %c0_40 = arith.constant 0 : index
    %c0_41 = arith.constant 0 : index
    %c0_42 = arith.constant 0 : index
    %75 = vector.load %arg6[%c5, %c0_40, %c0_41, %c0_42] : memref<7x1x1x16xf32, #tpu.memory_space<vmem>>, vector<1x1x1x16xf32>
    %76 = vector.shape_cast %75 : vector<1x1x1x16xf32> to vector<1x1x16xf32>
    %77 = vector.broadcast %74 : vector<2x8x1xf32> to vector<2x8x16xf32>
    %78 = vector.broadcast %76 : vector<1x1x16xf32> to vector<2x8x16xf32>
    %79 = arith.mulf %77, %78 : vector<2x8x16xf32>
    %80 = arith.addf %70, %79 : vector<2x8x16xf32>
    %81 = vector.extract_strided_slice %17 {offsets = [0, 3], sizes = [2, 5], strides = [1, 1]} : vector<2x8xf32> to vector<2x5xf32>
    %cst_43 = arith.constant 0.000000e+00 : f32
    %82 = vector.broadcast %cst_43 : f32 to vector<2x3xf32>
    %83 = tpu.concatenate %81, %82 in 1 : vector<2x5xf32>, vector<2x3xf32> -> vector<2x8xf32>
    %84 = vector.shape_cast %83 : vector<2x8xf32> to vector<2x8x1xf32>
    %c6 = arith.constant 6 : index
    %c0_44 = arith.constant 0 : index
    %c0_45 = arith.constant 0 : index
    %c0_46 = arith.constant 0 : index
    %85 = vector.load %arg6[%c6, %c0_44, %c0_45, %c0_46] : memref<7x1x1x16xf32, #tpu.memory_space<vmem>>, vector<1x1x1x16xf32>
    %86 = vector.shape_cast %85 : vector<1x1x1x16xf32> to vector<1x1x16xf32>
    %87 = vector.broadcast %84 : vector<2x8x1xf32> to vector<2x8x16xf32>
    %88 = vector.broadcast %86 : vector<1x1x16xf32> to vector<2x8x16xf32>
    %89 = arith.mulf %87, %88 : vector<2x8x16xf32>
    %90 = arith.addf %80, %89 : vector<2x8x16xf32>
    %91 = math.tanh %90 : vector<2x8x16xf32>
    %c0_47 = arith.constant 0 : index
    %c0_48 = arith.constant 0 : index
    %c0_49 = arith.constant 0 : index
    %92 = vector.load %arg8[%c0_47, %c0_48, %c0_49] : memref<1x1x16xf32, #tpu.memory_space<vmem>>, vector<1x1x16xf32>
    %93 = vector.broadcast %92 : vector<1x1x16xf32> to vector<2x8x16xf32>
    %94 = arith.mulf %91, %93 : vector<2x8x16xf32>
    %cst_50 = arith.constant dense<0.000000e+00> : vector<2x8xf32>
    %95 = vector.multi_reduction <add>, %94, %cst_50 [2] : vector<2x8x16xf32> to vector<2x8xf32>
    %c0_51 = arith.constant 0 : index
    %c0_52 = arith.constant 0 : index
    %96 = vector.load %arg9[%c0_51, %c0_52] : memref<1x1xf32, #tpu.memory_space<vmem>>, vector<1x1xf32>
    %97 = vector.broadcast %96 : vector<1x1xf32> to vector<2x8xf32>
    %98 = arith.addf %95, %97 : vector<2x8xf32>
    %c0_53 = arith.constant 0 : index
    %c0_54 = arith.constant 0 : index
    %99 = vector.load %arg4[%c0_53, %c0_54] : memref<2x8xf32, #tpu.memory_space<vmem>>, vector<2x8xf32>
    %cst_55 = arith.constant 5.000000e-01 : f32
    %100 = vector.broadcast %cst_55 : f32 to vector<2x8xf32>
    %101 = arith.cmpf ogt, %99, %100 : vector<2x8xf32>
    %cst_56 = arith.constant -1.000000e+30 : f32
    %102 = vector.broadcast %cst_56 : f32 to vector<2x8xf32>
    %103 = arith.select %101, %102, %98 : vector<2x8xi1>, vector<2x8xf32>
    %cst_57 = arith.constant dense<0xFF800000> : vector<2xf32>
    %104 = vector.multi_reduction <maximumf>, %103, %cst_57 [1] : vector<2x8xf32> to vector<2xf32>
    %105 = vector.shape_cast %104 : vector<2xf32> to vector<2x1xf32>
    %106 = vector.broadcast %105 : vector<2x1xf32> to vector<2x8xf32>
    %107 = arith.subf %103, %106 : vector<2x8xf32>
    %108 = math.exp %107 : vector<2x8xf32>
    %cst_58 = arith.constant dense<0.000000e+00> : vector<2xf32>
    %109 = vector.multi_reduction <add>, %108, %cst_58 [1] : vector<2x8xf32> to vector<2xf32>
    %110 = vector.shape_cast %109 : vector<2xf32> to vector<2x1xf32>
    %111 = tpu.reciprocal %110 {approx = true} : vector<2x1xf32> -> vector<2x1xf32>
    %112 = vector.broadcast %111 : vector<2x1xf32> to vector<2x8xf32>
    %113 = arith.mulf %108, %112 : vector<2x8xf32>
    %114 = vector.shape_cast %113 : vector<2x8xf32> to vector<2x1x8xf32>
    %c0_59 = arith.constant 0 : index
    %c0_60 = arith.constant 0 : index
    %c0_61 = arith.constant 0 : index
    %115 = vector.load %arg3[%c0_59, %c0_60, %c0_61] : memref<2x8x32xf32, #tpu.memory_space<vmem>>, vector<2x8x32xf32>
    "tpu.trace_start"() <{level = 10 : i32, message = "bqs,bse->bqe"}> : () -> ()
    %cst_62 = arith.constant dense<0.000000e+00> : vector<2x1x32xf32>
    %116 = tpu.matmul %114, %115, %cst_62 {dimension_numbers = #tpu.dot_dimension_numbers<[2], [1], [1], [2], [0, 0, 0, 1, 1, 2], [0], [0]>} : vector<2x1x8xf32>, vector<2x8x32xf32>, vector<2x1x32xf32> -> vector<2x1x32xf32>
    "tpu.trace_stop"() : () -> ()
    %117 = vector.shape_cast %116 : vector<2x1x32xf32> to vector<2x32xf32>
    %c0_63 = arith.constant 0 : index
    %c0_64 = arith.constant 0 : index
    %118 = vector.load %arg26[%c0_63, %c0_64] : memref<2x8xf32, #tpu.memory_space<vmem>>, vector<2x8xf32>
    %119 = arith.addf %118, %113 : vector<2x8xf32>
    %c0_65 = arith.constant 0 : index
    %c0_66 = arith.constant 0 : index
    %120 = vector.load %arg26[%c0_65, %c0_66] : memref<2x8xf32, #tpu.memory_space<vmem>>, vector<2x8xf32>
    tpu.vector_store %arg26[%c0_65, %c0_66], %119 {strides = array<i32>} : memref<2x8xf32, #tpu.memory_space<vmem>>, vector<2x8xf32>,
    %c0_67 = arith.constant 0 : index
    %c0_68 = arith.constant 0 : index
    %c0_69 = arith.constant 0 : index
    %121 = vector.load %arg1[%c0_67, %c0_68, %c0_69] : memref<1x2x8xf32, #tpu.memory_space<vmem>>, vector<1x2x8xf32>
    %122 = vector.shape_cast %121 : vector<1x2x8xf32> to vector<2x8xf32>
    %c0_70 = arith.constant 0 : index
    %c0_71 = arith.constant 0 : index
    %123 = vector.load %arg10[%c0_70, %c0_71] : memref<8x16xf32, #tpu.memory_space<vmem>>, vector<8x16xf32>
    %c0_72 = arith.constant 0 : index
    %c0_73 = arith.constant 0 : index
    %124 = vector.load %arg11[%c0_72, %c0_73] : memref<1x16xf32, #tpu.memory_space<vmem>>, vector<1x16xf32>
    %cst_74 = arith.constant dense<0.000000e+00> : vector<2x16xf32>
    %125 = tpu.matmul %122, %123, %cst_74 {dimension_numbers = #tpu.dot_dimension_numbers<[1], [0], [0], [1], [0, 0, 1, 1], [], []>} : vector<2x8xf32>, vector<8x16xf32>, vector<2x16xf32> -> vector<2x16xf32>
    %126 = vector.broadcast %124 : vector<1x16xf32> to vector<2x16xf32>
    %127 = arith.addf %125, %126 : vector<2x16xf32>
    %cst_75 = arith.constant 0.000000e+00 : f32
    %128 = vector.broadcast %cst_75 : f32 to vector<2x16xf32>
    %129 = arith.maximumf %127, %128 : vector<2x16xf32>
    %c0_76 = arith.constant 0 : index
    %c0_77 = arith.constant 0 : index
    %130 = vector.load %arg12[%c0_76, %c0_77] : memref<16x16xf32, #tpu.memory_space<vmem>>, vector<16x16xf32>
    %c0_78 = arith.constant 0 : index
    %c0_79 = arith.constant 0 : index
    %131 = vector.load %arg13[%c0_78, %c0_79] : memref<1x16xf32, #tpu.memory_space<vmem>>, vector<1x16xf32>
    %cst_80 = arith.constant dense<0.000000e+00> : vector<2x16xf32>
    %132 = tpu.matmul %129, %130, %cst_80 {dimension_numbers = #tpu.dot_dimension_numbers<[1], [0], [0], [1], [0, 0, 1, 1], [], []>} : vector<2x16xf32>, vector<16x16xf32>, vector<2x16xf32> -> vector<2x16xf32>
    %133 = vector.broadcast %131 : vector<1x16xf32> to vector<2x16xf32>
    %134 = arith.addf %132, %133 : vector<2x16xf32>
    %cst_81 = arith.constant 0.000000e+00 : f32
    %135 = vector.broadcast %cst_81 : f32 to vector<2x16xf32>
    %136 = arith.maximumf %134, %135 : vector<2x16xf32>
    %137 = tpu.concatenate %117, %136 in 1 : vector<2x32xf32>, vector<2x16xf32> -> vector<2x48xf32>
    %c0_82 = arith.constant 0 : index
    %c0_83 = arith.constant 0 : index
    %138 = vector.load %arg14[%c0_82, %c0_83] : memref<80x128xf32, #tpu.memory_space<vmem>>, vector<80x128xf32>
    %c0_84 = arith.constant 0 : index
    %c0_85 = arith.constant 0 : index
    %139 = vector.load %arg15[%c0_84, %c0_85] : memref<1x128xf32, #tpu.memory_space<vmem>>, vector<1x128xf32>
    %140 = tpu.concatenate %137, %3 in 1 : vector<2x48xf32>, vector<2x32xf32> -> vector<2x80xf32>
    %cst_86 = arith.constant dense<0.000000e+00> : vector<2x128xf32>
    %141 = tpu.matmul %140, %138, %cst_86 {dimension_numbers = #tpu.dot_dimension_numbers<[1], [0], [0], [1], [0, 0, 1, 1], [], []>} : vector<2x80xf32>, vector<80x128xf32>, vector<2x128xf32> -> vector<2x128xf32>
    %142 = vector.broadcast %139 : vector<1x128xf32> to vector<2x128xf32>
    %143 = arith.addf %141, %142 : vector<2x128xf32>
    %144 = vector.extract_strided_slice %143 {offsets = [0, 0], sizes = [2, 32], strides = [1, 1]} : vector<2x128xf32> to vector<2x32xf32>
    %145 = arith.negf %144 : vector<2x32xf32>
    %146 = math.exp %145 : vector<2x32xf32>
    %cst_87 = arith.constant 1.000000e+00 : f32
    %147 = vector.broadcast %cst_87 : f32 to vector<2x32xf32>
    %148 = arith.addf %147, %146 : vector<2x32xf32>
    %149 = arith.divf %147, %148 : vector<2x32xf32>
    %150 = vector.extract_strided_slice %143 {offsets = [0, 32], sizes = [2, 32], strides = [1, 1]} : vector<2x128xf32> to vector<2x32xf32>
    %151 = arith.negf %150 : vector<2x32xf32>
    %152 = math.exp %151 : vector<2x32xf32>
    %cst_88 = arith.constant 1.000000e+00 : f32
    %153 = vector.broadcast %cst_88 : f32 to vector<2x32xf32>
    %154 = arith.addf %153, %152 : vector<2x32xf32>
    %155 = arith.divf %153, %154 : vector<2x32xf32>
    %156 = vector.extract_strided_slice %143 {offsets = [0, 64], sizes = [2, 32], strides = [1, 1]} : vector<2x128xf32> to vector<2x32xf32>
    %157 = math.tanh %156 : vector<2x32xf32>
    %158 = vector.extract_strided_slice %143 {offsets = [0, 96], sizes = [2, 32], strides = [1, 1]} : vector<2x128xf32> to vector<2x32xf32>
    %159 = arith.negf %158 : vector<2x32xf32>
    %160 = math.exp %159 : vector<2x32xf32>
    %cst_89 = arith.constant 1.000000e+00 : f32
    %161 = vector.broadcast %cst_89 : f32 to vector<2x32xf32>
    %162 = arith.addf %161, %160 : vector<2x32xf32>
    %163 = arith.divf %161, %162 : vector<2x32xf32>
    %164 = arith.mulf %155, %5 : vector<2x32xf32>
    %165 = arith.mulf %149, %157 : vector<2x32xf32>
    %166 = arith.addf %164, %165 : vector<2x32xf32>
    %167 = math.tanh %166 : vector<2x32xf32>
    %168 = arith.mulf %163, %167 : vector<2x32xf32>
    %cst_90 = arith.constant 1.000000e-01 : f32
    %169 = vector.broadcast %cst_90 : f32 to vector<2x32xf32>
    %170 = arith.mulf %169, %3 : vector<2x32xf32>
    %cst_91 = arith.constant 0.899999976 : f32
    %171 = vector.broadcast %cst_91 : f32 to vector<2x32xf32>
    %172 = arith.mulf %171, %168 : vector<2x32xf32>
    %173 = arith.addf %170, %172 : vector<2x32xf32>
    %cst_92 = arith.constant 1.000000e-01 : f32
    %174 = vector.broadcast %cst_92 : f32 to vector<2x32xf32>
    %175 = arith.mulf %174, %5 : vector<2x32xf32>
    %cst_93 = arith.constant 0.899999976 : f32
    %176 = vector.broadcast %cst_93 : f32 to vector<2x32xf32>
    %177 = arith.mulf %176, %166 : vector<2x32xf32>
    %178 = arith.addf %175, %177 : vector<2x32xf32>
    %c0_94 = arith.constant 0 : index
    %c0_95 = arith.constant 0 : index
    %179 = vector.load %arg22[%c0_94, %c0_95] : memref<2x32xf32, #tpu.memory_space<vmem>>, vector<2x32xf32>
    tpu.vector_store %arg22[%c0_94, %c0_95], %173 {strides = array<i32>} : memref<2x32xf32, #tpu.memory_space<vmem>>, vector<2x32xf32>,
    %c0_96 = arith.constant 0 : index
    %c0_97 = arith.constant 0 : index
    %180 = vector.load %arg23[%c0_96, %c0_97] : memref<2x32xf32, #tpu.memory_space<vmem>>, vector<2x32xf32>
    tpu.vector_store %arg23[%c0_96, %c0_97], %178 {strides = array<i32>} : memref<2x32xf32, #tpu.memory_space<vmem>>, vector<2x32xf32>,
    %c0_98 = arith.constant 0 : index
    %c0_99 = arith.constant 0 : index
    %181 = vector.load %arg16[%c0_98, %c0_99] : memref<64x128xf32, #tpu.memory_space<vmem>>, vector<64x128xf32>
    %c0_100 = arith.constant 0 : index
    %c0_101 = arith.constant 0 : index
    %182 = vector.load %arg17[%c0_100, %c0_101] : memref<1x128xf32, #tpu.memory_space<vmem>>, vector<1x128xf32>
    %183 = tpu.concatenate %173, %4 in 1 : vector<2x32xf32>, vector<2x32xf32> -> vector<2x64xf32>
    %cst_102 = arith.constant dense<0.000000e+00> : vector<2x128xf32>
    %184 = tpu.matmul %183, %181, %cst_102 {dimension_numbers = #tpu.dot_dimension_numbers<[1], [0], [0], [1], [0, 0, 1, 1], [], []>} : vector<2x64xf32>, vector<64x128xf32>, vector<2x128xf32> -> vector<2x128xf32>
    %185 = vector.broadcast %182 : vector<1x128xf32> to vector<2x128xf32>
    %186 = arith.addf %184, %185 : vector<2x128xf32>
    %187 = vector.extract_strided_slice %186 {offsets = [0, 0], sizes = [2, 32], strides = [1, 1]} : vector<2x128xf32> to vector<2x32xf32>
    %188 = arith.negf %187 : vector<2x32xf32>
    %189 = math.exp %188 : vector<2x32xf32>
    %cst_103 = arith.constant 1.000000e+00 : f32
    %190 = vector.broadcast %cst_103 : f32 to vector<2x32xf32>
    %191 = arith.addf %190, %189 : vector<2x32xf32>
    %192 = arith.divf %190, %191 : vector<2x32xf32>
    %193 = vector.extract_strided_slice %186 {offsets = [0, 32], sizes = [2, 32], strides = [1, 1]} : vector<2x128xf32> to vector<2x32xf32>
    %194 = arith.negf %193 : vector<2x32xf32>
    %195 = math.exp %194 : vector<2x32xf32>
    %cst_104 = arith.constant 1.000000e+00 : f32
    %196 = vector.broadcast %cst_104 : f32 to vector<2x32xf32>
    %197 = arith.addf %196, %195 : vector<2x32xf32>
    %198 = arith.divf %196, %197 : vector<2x32xf32>
    %199 = vector.extract_strided_slice %186 {offsets = [0, 64], sizes = [2, 32], strides = [1, 1]} : vector<2x128xf32> to vector<2x32xf32>
    %200 = math.tanh %199 : vector<2x32xf32>
    %201 = vector.extract_strided_slice %186 {offsets = [0, 96], sizes = [2, 32], strides = [1, 1]} : vector<2x128xf32> to vector<2x32xf32>
    %202 = arith.negf %201 : vector<2x32xf32>
    %203 = math.exp %202 : vector<2x32xf32>
    %cst_105 = arith.constant 1.000000e+00 : f32
    %204 = vector.broadcast %cst_105 : f32 to vector<2x32xf32>
    %205 = arith.addf %204, %203 : vector<2x32xf32>
    %206 = arith.divf %204, %205 : vector<2x32xf32>
    %207 = arith.mulf %198, %6 : vector<2x32xf32>
    %208 = arith.mulf %192, %200 : vector<2x32xf32>
    %209 = arith.addf %207, %208 : vector<2x32xf32>
    %210 = math.tanh %209 : vector<2x32xf32>
    %211 = arith.mulf %206, %210 : vector<2x32xf32>
    %cst_106 = arith.constant 1.000000e-01 : f32
    %212 = vector.broadcast %cst_106 : f32 to vector<2x32xf32>
    %213 = arith.mulf %212, %4 : vector<2x32xf32>
    %cst_107 = arith.constant 0.899999976 : f32
    %214 = vector.broadcast %cst_107 : f32 to vector<2x32xf32>
    %215 = arith.mulf %214, %211 : vector<2x32xf32>
    %216 = arith.addf %213, %215 : vector<2x32xf32>
    %cst_108 = arith.constant 1.000000e-01 : f32
    %217 = vector.broadcast %cst_108 : f32 to vector<2x32xf32>
    %218 = arith.mulf %217, %6 : vector<2x32xf32>
    %cst_109 = arith.constant 0.899999976 : f32
    %219 = vector.broadcast %cst_109 : f32 to vector<2x32xf32>
    %220 = arith.mulf %219, %209 : vector<2x32xf32>
    %221 = arith.addf %218, %220 : vector<2x32xf32>
    %c0_110 = arith.constant 0 : index
    %c0_111 = arith.constant 0 : index
    %222 = vector.load %arg24[%c0_110, %c0_111] : memref<2x32xf32, #tpu.memory_space<vmem>>, vector<2x32xf32>
    tpu.vector_store %arg24[%c0_110, %c0_111], %216 {strides = array<i32>} : memref<2x32xf32, #tpu.memory_space<vmem>>, vector<2x32xf32>,
    %c0_112 = arith.constant 0 : index
    %c0_113 = arith.constant 0 : index
    %223 = vector.load %arg25[%c0_112, %c0_113] : memref<2x32xf32, #tpu.memory_space<vmem>>, vector<2x32xf32>
    tpu.vector_store %arg25[%c0_112, %c0_113], %221 {strides = array<i32>} : memref<2x32xf32, #tpu.memory_space<vmem>>, vector<2x32xf32>,
    %224 = tpu.concatenate %216, %117 in 1 : vector<2x32xf32>, vector<2x32xf32> -> vector<2x64xf32>
    %c0_114 = arith.constant 0 : index
    %c0_115 = arith.constant 0 : index
    %225 = vector.load %arg18[%c0_114, %c0_115] : memref<64x8xf32, #tpu.memory_space<vmem>>, vector<64x8xf32>
    %cst_116 = arith.constant dense<0.000000e+00> : vector<2x8xf32>
    %226 = tpu.matmul %224, %225, %cst_116 {dimension_numbers = #tpu.dot_dimension_numbers<[1], [0], [0], [1], [0, 0, 1, 1], [], []>} : vector<2x64xf32>, vector<64x8xf32>, vector<2x8xf32> -> vector<2x8xf32>
    %c0_117 = arith.constant 0 : index
    %c0_118 = arith.constant 0 : index
    %227 = vector.load %arg19[%c0_117, %c0_118] : memref<64x1xf32, #tpu.memory_space<vmem>>, vector<64x1xf32>
    %cst_119 = arith.constant dense<0.000000e+00> : vector<2x1xf32>
    %228 = tpu.matmul %224, %227, %cst_119 {dimension_numbers = #tpu.dot_dimension_numbers<[1], [0], [0], [1], [0, 0, 1, 1], [], []>} : vector<2x64xf32>, vector<64x1xf32>, vector<2x1xf32> -> vector<2x1xf32>
    %c0_120 = arith.constant 0 : index
    %c0_121 = arith.constant 0 : index
    %229 = vector.load %arg20[%c0_120, %c0_121] : memref<1x1xf32, #tpu.memory_space<vmem>>, vector<1x1xf32>
    %230 = vector.broadcast %229 : vector<1x1xf32> to vector<2x1xf32>
    %231 = arith.addf %228, %230 : vector<2x1xf32>
    %cst_122 = arith.constant 0.000000e+00 : f32
    %232 = vector.broadcast %cst_122 : f32 to vector<2x111xf32>
    %233 = tpu.concatenate %226, %231, %113, %232 in 1 : vector<2x8xf32>, vector<2x1xf32>, vector<2x8xf32>, vector<2x111xf32> -> vector<2x128xf32>
    %c0_123 = arith.constant 0 : index
    %c0_124 = arith.constant 0 : index
    %c0_125 = arith.constant 0 : index
    %234 = vector.load %arg21[%c0_123, %c0_124, %c0_125] : memref<1x2x128xf32, #tpu.memory_space<vmem>>, vector<1x2x128xf32>
    %235 = vector.shape_cast %234 : vector<1x2x128xf32> to vector<2x128xf32>
    %236 = vector.shape_cast %233 : vector<2x128xf32> to vector<1x2x128xf32>
    tpu.vector_store %arg21[%c0_123, %c0_124, %c0_125], %236 {strides = array<i32>} : memref<1x2x128xf32, #tpu.memory_space<vmem>>, vector<1x2x128xf32>,
    return
  }
  func.func @transform_0(%arg0: i32) -> (i32, i32, i32) {
    %c0_i32 = arith.constant 0 : i32
    %c0_i32_0 = arith.constant 0 : i32
    %c0_i32_1 = arith.constant 0 : i32
    return %arg0, %c0_i32, %c0_i32_0 : i32, i32, i32
  }
  func.func @transform_1(%arg0: i32) -> (i32, i32, i32) {
    %c0_i32 = arith.constant 0 : i32
    %c0_i32_0 = arith.constant 0 : i32
    %c0_i32_1 = arith.constant 0 : i32
    %c0_i32_2 = arith.constant 0 : i32
    return %c0_i32, %c0_i32_0, %c0_i32_1 : i32, i32, i32
  }
  func.func @transform_2(%arg0: i32) -> (i32, i32, i32) {
    %c0_i32 = arith.constant 0 : i32
    %c0_i32_0 = arith.constant 0 : i32
    %c0_i32_1 = arith.constant 0 : i32
    %c0_i32_2 = arith.constant 0 : i32
    return %c0_i32, %c0_i32_0, %c0_i32_1 : i32, i32, i32
  }
  func.func @transform_3(%arg0: i32) -> (i32, i32) {
    %c0_i32 = arith.constant 0 : i32
    %c0_i32_0 = arith.constant 0 : i32
    %c0_i32_1 = arith.constant 0 : i32
    return %c0_i32, %c0_i32_0 : i32, i32
  }
  func.func @transform_4(%arg0: i32) -> (i32, i32) {
    %c0_i32 = arith.constant 0 : i32
    %c0_i32_0 = arith.constant 0 : i32
    %c0_i32_1 = arith.constant 0 : i32
    return %c0_i32, %c0_i32_0 : i32, i32
  }
  func.func @transform_5(%arg0: i32) -> (i32, i32, i32, i32) {
    %c0_i32 = arith.constant 0 : i32
    %c0_i32_0 = arith.constant 0 : i32
    %c0_i32_1 = arith.constant 0 : i32
    %c0_i32_2 = arith.constant 0 : i32
    %c0_i32_3 = arith.constant 0 : i32
    return %c0_i32, %c0_i32_0, %c0_i32_1, %c0_i32_2 : i32, i32, i32, i32
  }
  func.func @transform_6(%arg0: i32) -> (i32, i32) {
    %c0_i32 = arith.constant 0 : i32
    %c0_i32_0 = arith.constant 0 : i32
    %c0_i32_1 = arith.constant 0 : i32
    return %c0_i32, %c0_i32_0 : i32, i32
  }
  func.func @transform_7(%arg0: i32) -> (i32, i32, i32) {
    %c0_i32 = arith.constant 0 : i32
    %c0_i32_0 = arith.constant 0 : i32
    %c0_i32_1 = arith.constant 0 : i32
    %c0_i32_2 = arith.constant 0 : i32
    return %c0_i32, %c0_i32_0, %c0_i32_1 : i32, i32, i32
  }
  func.func @transform_8(%arg0: i32) -> (i32, i32) {
    %c0_i32 = arith.constant 0 : i32
    %c0_i32_0 = arith.constant 0 : i32
    %c0_i32_1 = arith.constant 0 : i32
    return %c0_i32, %c0_i32_0 : i32, i32
  }
  func.func @transform_9(%arg0: i32) -> (i32, i32) {
    %c0_i32 = arith.constant 0 : i32
    %c0_i32_0 = arith.constant 0 : i32
    %c0_i32_1 = arith.constant 0 : i32
    return %c0_i32, %c0_i32_0 : i32, i32
  }
  func.func @transform_10(%arg0: i32) -> (i32, i32) {
    %c0_i32 = arith.constant 0 : i32
    %c0_i32_0 = arith.constant 0 : i32
    %c0_i32_1 = arith.constant 0 : i32
    return %c0_i32, %c0_i32_0 : i32, i32
  }
  func.func @transform_11(%arg0: i32) -> (i32, i32) {
    %c0_i32 = arith.constant 0 : i32
    %c0_i32_0 = arith.constant 0 : i32
    %c0_i32_1 = arith.constant 0 : i32
    return %c0_i32, %c0_i32_0 : i32, i32
  }
  func.func @transform_12(%arg0: i32) -> (i32, i32) {
    %c0_i32 = arith.constant 0 : i32
    %c0_i32_0 = arith.constant 0 : i32
    %c0_i32_1 = arith.constant 0 : i32
    return %c0_i32, %c0_i32_0 : i32, i32
  }
  func.func @transform_13(%arg0: i32) -> (i32, i32) {
    %c0_i32 = arith.constant 0 : i32
    %c0_i32_0 = arith.constant 0 : i32
    %c0_i32_1 = arith.constant 0 : i32
    return %c0_i32, %c0_i32_0 : i32, i32
  }
  func.func @transform_14(%arg0: i32) -> (i32, i32) {
    %c0_i32 = arith.constant 0 : i32
    %c0_i32_0 = arith.constant 0 : i32
    %c0_i32_1 = arith.constant 0 : i32
    return %c0_i32, %c0_i32_0 : i32, i32
  }
  func.func @transform_15(%arg0: i32) -> (i32, i32) {
    %c0_i32 = arith.constant 0 : i32
    %c0_i32_0 = arith.constant 0 : i32
    %c0_i32_1 = arith.constant 0 : i32
    return %c0_i32, %c0_i32_0 : i32, i32
  }
  func.func @transform_16(%arg0: i32) -> (i32, i32) {
    %c0_i32 = arith.constant 0 : i32
    %c0_i32_0 = arith.constant 0 : i32
    %c0_i32_1 = arith.constant 0 : i32
    return %c0_i32, %c0_i32_0 : i32, i32
  }
  func.func @transform_17(%arg0: i32) -> (i32, i32) {
    %c0_i32 = arith.constant 0 : i32
    %c0_i32_0 = arith.constant 0 : i32
    %c0_i32_1 = arith.constant 0 : i32
    return %c0_i32, %c0_i32_0 : i32, i32
  }
  func.func @transform_18(%arg0: i32) -> (i32, i32) {
    %c0_i32 = arith.constant 0 : i32
    %c0_i32_0 = arith.constant 0 : i32
    %c0_i32_1 = arith.constant 0 : i32
    return %c0_i32, %c0_i32_0 : i32, i32
  }
  func.func @transform_19(%arg0: i32) -> (i32, i32) {
    %c0_i32 = arith.constant 0 : i32
    %c0_i32_0 = arith.constant 0 : i32
    %c0_i32_1 = arith.constant 0 : i32
    return %c0_i32, %c0_i32_0 : i32, i32
  }
  func.func @transform_20(%arg0: i32) -> (i32, i32, i32) {
    %c0_i32 = arith.constant 0 : i32
    %c0_i32_0 = arith.constant 0 : i32
    %c0_i32_1 = arith.constant 0 : i32
    return %arg0, %c0_i32, %c0_i32_0 : i32, i32, i32
  }
}

module attributes {stable_mosaic.version = 11 : i64} {
  func.func @kernel(%arg0: i32, %arg1: memref<2x8x8xf32, #tpu.memory_space<vmem>>, %arg2: memref<1x8x1xf32, #tpu.memory_space<vmem>>, %arg3: memref<5x8x16xf32, #tpu.memory_space<vmem>>, %arg4: memref<1x16xf32, #tpu.memory_space<vmem>>, %arg5: memref<1x16xf32, #tpu.memory_space<vmem>>, %arg6: memref<5x16x16xf32, #tpu.memory_space<vmem>>, %arg7: memref<1x16xf32, #tpu.memory_space<vmem>>, %arg8: memref<1x16xf32, #tpu.memory_space<vmem>>, %arg9: memref<5x16x8xf32, #tpu.memory_space<vmem>>, %arg10: memref<1x8xf32, #tpu.memory_space<vmem>>, %arg11: memref<1x8xf32, #tpu.memory_space<vmem>>, %arg12: memref<2x8x8xf32, #tpu.memory_space<vmem>>) attributes {dimension_semantics = [#tpu.dimension_semantics<arbitrary>], iteration_bounds = array<i64: 1>, scalar_prefetch = 0 : i64, scratch_operands = 0 : i64, tpu.core_type = #tpu.core_type<tc>, window_params = [{pipeline_mode = #tpu.pipeline_mode<synchronous>, transform_indices = @transform_0, window_bounds = array<i64: 2, 8, 8>}, {pipeline_mode = #tpu.pipeline_mode<synchronous>, transform_indices = @transform_1, window_bounds = array<i64: 1, 8, 1>}, {pipeline_mode = #tpu.pipeline_mode<synchronous>, transform_indices = @transform_2, window_bounds = array<i64: 5, 8, 16>}, {pipeline_mode = #tpu.pipeline_mode<synchronous>, transform_indices = @transform_3, window_bounds = array<i64: 1, 16>}, {pipeline_mode = #tpu.pipeline_mode<synchronous>, transform_indices = @transform_4, window_bounds = array<i64: 1, 16>}, {pipeline_mode = #tpu.pipeline_mode<synchronous>, transform_indices = @transform_5, window_bounds = array<i64: 5, 16, 16>}, {pipeline_mode = #tpu.pipeline_mode<synchronous>, transform_indices = @transform_6, window_bounds = array<i64: 1, 16>}, {pipeline_mode = #tpu.pipeline_mode<synchronous>, transform_indices = @transform_7, window_bounds = array<i64: 1, 16>}, {pipeline_mode = #tpu.pipeline_mode<synchronous>, transform_indices = @transform_8, window_bounds = array<i64: 5, 16, 8>}, {pipeline_mode = #tpu.pipeline_mode<synchronous>, transform_indices = @transform_9, window_bounds = array<i64: 1, 8>}, {pipeline_mode = #tpu.pipeline_mode<synchronous>, transform_indices = @transform_10, window_bounds = array<i64: 1, 8>}, {pipeline_mode = #tpu.pipeline_mode<synchronous>, transform_indices = @transform_11, window_bounds = array<i64: 2, 8, 8>}]} {
    %c0 = arith.constant 0 : index
    %c0_0 = arith.constant 0 : index
    %c0_1 = arith.constant 0 : index
    %0 = vector.load %arg2[%c0, %c0_0, %c0_1] : memref<1x8x1xf32, #tpu.memory_space<vmem>>, vector<1x8x1xf32>
    %c0_2 = arith.constant 0 : index
    %c0_3 = arith.constant 0 : index
    %c0_4 = arith.constant 0 : index
    %1 = vector.load %arg1[%c0_2, %c0_3, %c0_4] : memref<2x8x8xf32, #tpu.memory_space<vmem>>, vector<2x8x8xf32>
    %cst = arith.constant 0.000000e+00 : f32
    %2 = vector.broadcast %cst : f32 to vector<16x16xf32>
    %cst_5 = arith.constant 0.000000e+00 : f32
    %3 = vector.broadcast %cst_5 : f32 to vector<2x2x8xf32>
    %4 = vector.extract_strided_slice %1 {offsets = [0, 0, 0], sizes = [2, 6, 8], strides = [1, 1, 1]} : vector<2x8x8xf32> to vector<2x6x8xf32>
    %5 = tpu.concatenate %3, %4 in 1 : vector<2x2x8xf32>, vector<2x6x8xf32> -> vector<2x8x8xf32>
    %6 = vector.shape_cast %5 : vector<2x8x8xf32> to vector<16x8xf32>
    %c0_6 = arith.constant 0 : index
    %c0_7 = arith.constant 0 : index
    %c0_8 = arith.constant 0 : index
    %7 = vector.load %arg3[%c0_6, %c0_7, %c0_8] : memref<5x8x16xf32, #tpu.memory_space<vmem>>, vector<1x8x16xf32>
    %8 = vector.shape_cast %7 : vector<1x8x16xf32> to vector<8x16xf32>
    %cst_9 = arith.constant dense<0.000000e+00> : vector<16x16xf32>
    %9 = tpu.matmul %6, %8, %cst_9 {dimension_numbers = #tpu.dot_dimension_numbers<[1], [0], [0], [1], [0, 0, 1, 1], [], []>} : vector<16x8xf32>, vector<8x16xf32>, vector<16x16xf32> -> vector<16x16xf32>
    %10 = arith.addf %2, %9 : vector<16x16xf32>
    %cst_10 = arith.constant 0.000000e+00 : f32
    %11 = vector.broadcast %cst_10 : f32 to vector<2x1x8xf32>
    %12 = vector.extract_strided_slice %1 {offsets = [0, 0, 0], sizes = [2, 7, 8], strides = [1, 1, 1]} : vector<2x8x8xf32> to vector<2x7x8xf32>
    %13 = tpu.concatenate %11, %12 in 1 : vector<2x1x8xf32>, vector<2x7x8xf32> -> vector<2x8x8xf32>
    %14 = vector.shape_cast %13 : vector<2x8x8xf32> to vector<16x8xf32>
    %c1 = arith.constant 1 : index
    %c0_11 = arith.constant 0 : index
    %c0_12 = arith.constant 0 : index
    %15 = vector.load %arg3[%c1, %c0_11, %c0_12] : memref<5x8x16xf32, #tpu.memory_space<vmem>>, vector<1x8x16xf32>
    %16 = vector.shape_cast %15 : vector<1x8x16xf32> to vector<8x16xf32>
    %cst_13 = arith.constant dense<0.000000e+00> : vector<16x16xf32>
    %17 = tpu.matmul %14, %16, %cst_13 {dimension_numbers = #tpu.dot_dimension_numbers<[1], [0], [0], [1], [0, 0, 1, 1], [], []>} : vector<16x8xf32>, vector<8x16xf32>, vector<16x16xf32> -> vector<16x16xf32>
    %18 = arith.addf %10, %17 : vector<16x16xf32>
    %19 = vector.shape_cast %1 : vector<2x8x8xf32> to vector<16x8xf32>
    %c2 = arith.constant 2 : index
    %c0_14 = arith.constant 0 : index
    %c0_15 = arith.constant 0 : index
    %20 = vector.load %arg3[%c2, %c0_14, %c0_15] : memref<5x8x16xf32, #tpu.memory_space<vmem>>, vector<1x8x16xf32>
    %21 = vector.shape_cast %20 : vector<1x8x16xf32> to vector<8x16xf32>
    %cst_16 = arith.constant dense<0.000000e+00> : vector<16x16xf32>
    %22 = tpu.matmul %19, %21, %cst_16 {dimension_numbers = #tpu.dot_dimension_numbers<[1], [0], [0], [1], [0, 0, 1, 1], [], []>} : vector<16x8xf32>, vector<8x16xf32>, vector<16x16xf32> -> vector<16x16xf32>
    %23 = arith.addf %18, %22 : vector<16x16xf32>
    %24 = vector.extract_strided_slice %1 {offsets = [0, 1, 0], sizes = [2, 7, 8], strides = [1, 1, 1]} : vector<2x8x8xf32> to vector<2x7x8xf32>
    %cst_17 = arith.constant 0.000000e+00 : f32
    %25 = vector.broadcast %cst_17 : f32 to vector<2x1x8xf32>
    %26 = tpu.concatenate %24, %25 in 1 : vector<2x7x8xf32>, vector<2x1x8xf32> -> vector<2x8x8xf32>
    %27 = vector.shape_cast %26 : vector<2x8x8xf32> to vector<16x8xf32>
    %c3 = arith.constant 3 : index
    %c0_18 = arith.constant 0 : index
    %c0_19 = arith.constant 0 : index
    %28 = vector.load %arg3[%c3, %c0_18, %c0_19] : memref<5x8x16xf32, #tpu.memory_space<vmem>>, vector<1x8x16xf32>
    %29 = vector.shape_cast %28 : vector<1x8x16xf32> to vector<8x16xf32>
    %cst_20 = arith.constant dense<0.000000e+00> : vector<16x16xf32>
    %30 = tpu.matmul %27, %29, %cst_20 {dimension_numbers = #tpu.dot_dimension_numbers<[1], [0], [0], [1], [0, 0, 1, 1], [], []>} : vector<16x8xf32>, vector<8x16xf32>, vector<16x16xf32> -> vector<16x16xf32>
    %31 = arith.addf %23, %30 : vector<16x16xf32>
    %32 = vector.extract_strided_slice %1 {offsets = [0, 2, 0], sizes = [2, 6, 8], strides = [1, 1, 1]} : vector<2x8x8xf32> to vector<2x6x8xf32>
    %cst_21 = arith.constant 0.000000e+00 : f32
    %33 = vector.broadcast %cst_21 : f32 to vector<2x2x8xf32>
    %34 = tpu.concatenate %32, %33 in 1 : vector<2x6x8xf32>, vector<2x2x8xf32> -> vector<2x8x8xf32>
    %35 = vector.shape_cast %34 : vector<2x8x8xf32> to vector<16x8xf32>
    %c4 = arith.constant 4 : index
    %c0_22 = arith.constant 0 : index
    %c0_23 = arith.constant 0 : index
    %36 = vector.load %arg3[%c4, %c0_22, %c0_23] : memref<5x8x16xf32, #tpu.memory_space<vmem>>, vector<1x8x16xf32>
    %37 = vector.shape_cast %36 : vector<1x8x16xf32> to vector<8x16xf32>
    %cst_24 = arith.constant dense<0.000000e+00> : vector<16x16xf32>
    %38 = tpu.matmul %35, %37, %cst_24 {dimension_numbers = #tpu.dot_dimension_numbers<[1], [0], [0], [1], [0, 0, 1, 1], [], []>} : vector<16x8xf32>, vector<8x16xf32>, vector<16x16xf32> -> vector<16x16xf32>
    %39 = arith.addf %31, %38 : vector<16x16xf32>
    %c0_25 = arith.constant 0 : index
    %c0_26 = arith.constant 0 : index
    %40 = vector.load %arg4[%c0_25, %c0_26] : memref<1x16xf32, #tpu.memory_space<vmem>>, vector<1x16xf32>
    %41 = vector.broadcast %40 : vector<1x16xf32> to vector<16x16xf32>
    %42 = arith.mulf %39, %41 : vector<16x16xf32>
    %c0_27 = arith.constant 0 : index
    %c0_28 = arith.constant 0 : index
    %43 = vector.load %arg5[%c0_27, %c0_28] : memref<1x16xf32, #tpu.memory_space<vmem>>, vector<1x16xf32>
    %44 = vector.broadcast %43 : vector<1x16xf32> to vector<16x16xf32>
    %45 = arith.addf %42, %44 : vector<16x16xf32>
    %46 = math.tanh %45 : vector<16x16xf32>
    %47 = vector.shape_cast %46 : vector<16x16xf32> to vector<2x8x16xf32>
    %48 = vector.broadcast %0 : vector<1x8x1xf32> to vector<2x8x16xf32>
    %49 = arith.mulf %47, %48 : vector<2x8x16xf32>
    %cst_29 = arith.constant 0.000000e+00 : f32
    %50 = vector.broadcast %cst_29 : f32 to vector<16x16xf32>
    %cst_30 = arith.constant 0.000000e+00 : f32
    %51 = vector.broadcast %cst_30 : f32 to vector<2x2x16xf32>
    %52 = vector.extract_strided_slice %49 {offsets = [0, 0, 0], sizes = [2, 6, 16], strides = [1, 1, 1]} : vector<2x8x16xf32> to vector<2x6x16xf32>
    %53 = tpu.concatenate %51, %52 in 1 : vector<2x2x16xf32>, vector<2x6x16xf32> -> vector<2x8x16xf32>
    %54 = vector.shape_cast %53 : vector<2x8x16xf32> to vector<16x16xf32>
    %c0_31 = arith.constant 0 : index
    %c0_32 = arith.constant 0 : index
    %c0_33 = arith.constant 0 : index
    %55 = vector.load %arg6[%c0_31, %c0_32, %c0_33] : memref<5x16x16xf32, #tpu.memory_space<vmem>>, vector<1x16x16xf32>
    %56 = vector.shape_cast %55 : vector<1x16x16xf32> to vector<16x16xf32>
    %cst_34 = arith.constant dense<0.000000e+00> : vector<16x16xf32>
    %57 = tpu.matmul %54, %56, %cst_34 {dimension_numbers = #tpu.dot_dimension_numbers<[1], [0], [0], [1], [0, 0, 1, 1], [], []>} : vector<16x16xf32>, vector<16x16xf32>, vector<16x16xf32> -> vector<16x16xf32>
    %58 = arith.addf %50, %57 : vector<16x16xf32>
    %cst_35 = arith.constant 0.000000e+00 : f32
    %59 = vector.broadcast %cst_35 : f32 to vector<2x1x16xf32>
    %60 = vector.extract_strided_slice %49 {offsets = [0, 0, 0], sizes = [2, 7, 16], strides = [1, 1, 1]} : vector<2x8x16xf32> to vector<2x7x16xf32>
    %61 = tpu.concatenate %59, %60 in 1 : vector<2x1x16xf32>, vector<2x7x16xf32> -> vector<2x8x16xf32>
    %62 = vector.shape_cast %61 : vector<2x8x16xf32> to vector<16x16xf32>
    %c1_36 = arith.constant 1 : index
    %c0_37 = arith.constant 0 : index
    %c0_38 = arith.constant 0 : index
    %63 = vector.load %arg6[%c1_36, %c0_37, %c0_38] : memref<5x16x16xf32, #tpu.memory_space<vmem>>, vector<1x16x16xf32>
    %64 = vector.shape_cast %63 : vector<1x16x16xf32> to vector<16x16xf32>
    %cst_39 = arith.constant dense<0.000000e+00> : vector<16x16xf32>
    %65 = tpu.matmul %62, %64, %cst_39 {dimension_numbers = #tpu.dot_dimension_numbers<[1], [0], [0], [1], [0, 0, 1, 1], [], []>} : vector<16x16xf32>, vector<16x16xf32>, vector<16x16xf32> -> vector<16x16xf32>
    %66 = arith.addf %58, %65 : vector<16x16xf32>
    %67 = vector.shape_cast %49 : vector<2x8x16xf32> to vector<16x16xf32>
    %c2_40 = arith.constant 2 : index
    %c0_41 = arith.constant 0 : index
    %c0_42 = arith.constant 0 : index
    %68 = vector.load %arg6[%c2_40, %c0_41, %c0_42] : memref<5x16x16xf32, #tpu.memory_space<vmem>>, vector<1x16x16xf32>
    %69 = vector.shape_cast %68 : vector<1x16x16xf32> to vector<16x16xf32>
    %cst_43 = arith.constant dense<0.000000e+00> : vector<16x16xf32>
    %70 = tpu.matmul %67, %69, %cst_43 {dimension_numbers = #tpu.dot_dimension_numbers<[1], [0], [0], [1], [0, 0, 1, 1], [], []>} : vector<16x16xf32>, vector<16x16xf32>, vector<16x16xf32> -> vector<16x16xf32>
    %71 = arith.addf %66, %70 : vector<16x16xf32>
    %72 = vector.extract_strided_slice %49 {offsets = [0, 1, 0], sizes = [2, 7, 16], strides = [1, 1, 1]} : vector<2x8x16xf32> to vector<2x7x16xf32>
    %cst_44 = arith.constant 0.000000e+00 : f32
    %73 = vector.broadcast %cst_44 : f32 to vector<2x1x16xf32>
    %74 = tpu.concatenate %72, %73 in 1 : vector<2x7x16xf32>, vector<2x1x16xf32> -> vector<2x8x16xf32>
    %75 = vector.shape_cast %74 : vector<2x8x16xf32> to vector<16x16xf32>
    %c3_45 = arith.constant 3 : index
    %c0_46 = arith.constant 0 : index
    %c0_47 = arith.constant 0 : index
    %76 = vector.load %arg6[%c3_45, %c0_46, %c0_47] : memref<5x16x16xf32, #tpu.memory_space<vmem>>, vector<1x16x16xf32>
    %77 = vector.shape_cast %76 : vector<1x16x16xf32> to vector<16x16xf32>
    %cst_48 = arith.constant dense<0.000000e+00> : vector<16x16xf32>
    %78 = tpu.matmul %75, %77, %cst_48 {dimension_numbers = #tpu.dot_dimension_numbers<[1], [0], [0], [1], [0, 0, 1, 1], [], []>} : vector<16x16xf32>, vector<16x16xf32>, vector<16x16xf32> -> vector<16x16xf32>
    %79 = arith.addf %71, %78 : vector<16x16xf32>
    %80 = vector.extract_strided_slice %49 {offsets = [0, 2, 0], sizes = [2, 6, 16], strides = [1, 1, 1]} : vector<2x8x16xf32> to vector<2x6x16xf32>
    %cst_49 = arith.constant 0.000000e+00 : f32
    %81 = vector.broadcast %cst_49 : f32 to vector<2x2x16xf32>
    %82 = tpu.concatenate %80, %81 in 1 : vector<2x6x16xf32>, vector<2x2x16xf32> -> vector<2x8x16xf32>
    %83 = vector.shape_cast %82 : vector<2x8x16xf32> to vector<16x16xf32>
    %c4_50 = arith.constant 4 : index
    %c0_51 = arith.constant 0 : index
    %c0_52 = arith.constant 0 : index
    %84 = vector.load %arg6[%c4_50, %c0_51, %c0_52] : memref<5x16x16xf32, #tpu.memory_space<vmem>>, vector<1x16x16xf32>
    %85 = vector.shape_cast %84 : vector<1x16x16xf32> to vector<16x16xf32>
    %cst_53 = arith.constant dense<0.000000e+00> : vector<16x16xf32>
    %86 = tpu.matmul %83, %85, %cst_53 {dimension_numbers = #tpu.dot_dimension_numbers<[1], [0], [0], [1], [0, 0, 1, 1], [], []>} : vector<16x16xf32>, vector<16x16xf32>, vector<16x16xf32> -> vector<16x16xf32>
    %87 = arith.addf %79, %86 : vector<16x16xf32>
    %c0_54 = arith.constant 0 : index
    %c0_55 = arith.constant 0 : index
    %88 = vector.load %arg7[%c0_54, %c0_55] : memref<1x16xf32, #tpu.memory_space<vmem>>, vector<1x16xf32>
    %89 = vector.broadcast %88 : vector<1x16xf32> to vector<16x16xf32>
    %90 = arith.mulf %87, %89 : vector<16x16xf32>
    %c0_56 = arith.constant 0 : index
    %c0_57 = arith.constant 0 : index
    %91 = vector.load %arg8[%c0_56, %c0_57] : memref<1x16xf32, #tpu.memory_space<vmem>>, vector<1x16xf32>
    %92 = vector.broadcast %91 : vector<1x16xf32> to vector<16x16xf32>
    %93 = arith.addf %90, %92 : vector<16x16xf32>
    %94 = math.tanh %93 : vector<16x16xf32>
    %95 = vector.shape_cast %94 : vector<16x16xf32> to vector<2x8x16xf32>
    %96 = vector.broadcast %0 : vector<1x8x1xf32> to vector<2x8x16xf32>
    %97 = arith.mulf %95, %96 : vector<2x8x16xf32>
    %cst_58 = arith.constant 0.000000e+00 : f32
    %98 = vector.broadcast %cst_58 : f32 to vector<16x8xf32>
    %cst_59 = arith.constant 0.000000e+00 : f32
    %99 = vector.broadcast %cst_59 : f32 to vector<2x2x16xf32>
    %100 = vector.extract_strided_slice %97 {offsets = [0, 0, 0], sizes = [2, 6, 16], strides = [1, 1, 1]} : vector<2x8x16xf32> to vector<2x6x16xf32>
    %101 = tpu.concatenate %99, %100 in 1 : vector<2x2x16xf32>, vector<2x6x16xf32> -> vector<2x8x16xf32>
    %102 = vector.shape_cast %101 : vector<2x8x16xf32> to vector<16x16xf32>
    %c0_60 = arith.constant 0 : index
    %c0_61 = arith.constant 0 : index
    %c0_62 = arith.constant 0 : index
    %103 = vector.load %arg9[%c0_60, %c0_61, %c0_62] : memref<5x16x8xf32, #tpu.memory_space<vmem>>, vector<1x16x8xf32>
    %104 = vector.shape_cast %103 : vector<1x16x8xf32> to vector<16x8xf32>
    %cst_63 = arith.constant dense<0.000000e+00> : vector<16x8xf32>
    %105 = tpu.matmul %102, %104, %cst_63 {dimension_numbers = #tpu.dot_dimension_numbers<[1], [0], [0], [1], [0, 0, 1, 1], [], []>} : vector<16x16xf32>, vector<16x8xf32>, vector<16x8xf32> -> vector<16x8xf32>
    %106 = arith.addf %98, %105 : vector<16x8xf32>
    %cst_64 = arith.constant 0.000000e+00 : f32
    %107 = vector.broadcast %cst_64 : f32 to vector<2x1x16xf32>
    %108 = vector.extract_strided_slice %97 {offsets = [0, 0, 0], sizes = [2, 7, 16], strides = [1, 1, 1]} : vector<2x8x16xf32> to vector<2x7x16xf32>
    %109 = tpu.concatenate %107, %108 in 1 : vector<2x1x16xf32>, vector<2x7x16xf32> -> vector<2x8x16xf32>
    %110 = vector.shape_cast %109 : vector<2x8x16xf32> to vector<16x16xf32>
    %c1_65 = arith.constant 1 : index
    %c0_66 = arith.constant 0 : index
    %c0_67 = arith.constant 0 : index
    %111 = vector.load %arg9[%c1_65, %c0_66, %c0_67] : memref<5x16x8xf32, #tpu.memory_space<vmem>>, vector<1x16x8xf32>
    %112 = vector.shape_cast %111 : vector<1x16x8xf32> to vector<16x8xf32>
    %cst_68 = arith.constant dense<0.000000e+00> : vector<16x8xf32>
    %113 = tpu.matmul %110, %112, %cst_68 {dimension_numbers = #tpu.dot_dimension_numbers<[1], [0], [0], [1], [0, 0, 1, 1], [], []>} : vector<16x16xf32>, vector<16x8xf32>, vector<16x8xf32> -> vector<16x8xf32>
    %114 = arith.addf %106, %113 : vector<16x8xf32>
    %115 = vector.shape_cast %97 : vector<2x8x16xf32> to vector<16x16xf32>
    %c2_69 = arith.constant 2 : index
    %c0_70 = arith.constant 0 : index
    %c0_71 = arith.constant 0 : index
    %116 = vector.load %arg9[%c2_69, %c0_70, %c0_71] : memref<5x16x8xf32, #tpu.memory_space<vmem>>, vector<1x16x8xf32>
    %117 = vector.shape_cast %116 : vector<1x16x8xf32> to vector<16x8xf32>
    %cst_72 = arith.constant dense<0.000000e+00> : vector<16x8xf32>
    %118 = tpu.matmul %115, %117, %cst_72 {dimension_numbers = #tpu.dot_dimension_numbers<[1], [0], [0], [1], [0, 0, 1, 1], [], []>} : vector<16x16xf32>, vector<16x8xf32>, vector<16x8xf32> -> vector<16x8xf32>
    %119 = arith.addf %114, %118 : vector<16x8xf32>
    %120 = vector.extract_strided_slice %97 {offsets = [0, 1, 0], sizes = [2, 7, 16], strides = [1, 1, 1]} : vector<2x8x16xf32> to vector<2x7x16xf32>
    %cst_73 = arith.constant 0.000000e+00 : f32
    %121 = vector.broadcast %cst_73 : f32 to vector<2x1x16xf32>
    %122 = tpu.concatenate %120, %121 in 1 : vector<2x7x16xf32>, vector<2x1x16xf32> -> vector<2x8x16xf32>
    %123 = vector.shape_cast %122 : vector<2x8x16xf32> to vector<16x16xf32>
    %c3_74 = arith.constant 3 : index
    %c0_75 = arith.constant 0 : index
    %c0_76 = arith.constant 0 : index
    %124 = vector.load %arg9[%c3_74, %c0_75, %c0_76] : memref<5x16x8xf32, #tpu.memory_space<vmem>>, vector<1x16x8xf32>
    %125 = vector.shape_cast %124 : vector<1x16x8xf32> to vector<16x8xf32>
    %cst_77 = arith.constant dense<0.000000e+00> : vector<16x8xf32>
    %126 = tpu.matmul %123, %125, %cst_77 {dimension_numbers = #tpu.dot_dimension_numbers<[1], [0], [0], [1], [0, 0, 1, 1], [], []>} : vector<16x16xf32>, vector<16x8xf32>, vector<16x8xf32> -> vector<16x8xf32>
    %127 = arith.addf %119, %126 : vector<16x8xf32>
    %128 = vector.extract_strided_slice %97 {offsets = [0, 2, 0], sizes = [2, 6, 16], strides = [1, 1, 1]} : vector<2x8x16xf32> to vector<2x6x16xf32>
    %cst_78 = arith.constant 0.000000e+00 : f32
    %129 = vector.broadcast %cst_78 : f32 to vector<2x2x16xf32>
    %130 = tpu.concatenate %128, %129 in 1 : vector<2x6x16xf32>, vector<2x2x16xf32> -> vector<2x8x16xf32>
    %131 = vector.shape_cast %130 : vector<2x8x16xf32> to vector<16x16xf32>
    %c4_79 = arith.constant 4 : index
    %c0_80 = arith.constant 0 : index
    %c0_81 = arith.constant 0 : index
    %132 = vector.load %arg9[%c4_79, %c0_80, %c0_81] : memref<5x16x8xf32, #tpu.memory_space<vmem>>, vector<1x16x8xf32>
    %133 = vector.shape_cast %132 : vector<1x16x8xf32> to vector<16x8xf32>
    %cst_82 = arith.constant dense<0.000000e+00> : vector<16x8xf32>
    %134 = tpu.matmul %131, %133, %cst_82 {dimension_numbers = #tpu.dot_dimension_numbers<[1], [0], [0], [1], [0, 0, 1, 1], [], []>} : vector<16x16xf32>, vector<16x8xf32>, vector<16x8xf32> -> vector<16x8xf32>
    %135 = arith.addf %127, %134 : vector<16x8xf32>
    %c0_83 = arith.constant 0 : index
    %c0_84 = arith.constant 0 : index
    %136 = vector.load %arg10[%c0_83, %c0_84] : memref<1x8xf32, #tpu.memory_space<vmem>>, vector<1x8xf32>
    %137 = vector.broadcast %136 : vector<1x8xf32> to vector<16x8xf32>
    %138 = arith.mulf %135, %137 : vector<16x8xf32>
    %c0_85 = arith.constant 0 : index
    %c0_86 = arith.constant 0 : index
    %139 = vector.load %arg11[%c0_85, %c0_86] : memref<1x8xf32, #tpu.memory_space<vmem>>, vector<1x8xf32>
    %140 = vector.broadcast %139 : vector<1x8xf32> to vector<16x8xf32>
    %141 = arith.addf %138, %140 : vector<16x8xf32>
    %142 = vector.shape_cast %141 : vector<16x8xf32> to vector<2x8x8xf32>
    %143 = vector.broadcast %0 : vector<1x8x1xf32> to vector<2x8x8xf32>
    %144 = arith.mulf %142, %143 : vector<2x8x8xf32>
    %c0_87 = arith.constant 0 : index
    %c0_88 = arith.constant 0 : index
    %c0_89 = arith.constant 0 : index
    %145 = vector.load %arg12[%c0_87, %c0_88, %c0_89] : memref<2x8x8xf32, #tpu.memory_space<vmem>>, vector<2x8x8xf32>
    tpu.vector_store %arg12[%c0_87, %c0_88, %c0_89], %144 {strides = array<i32>} : memref<2x8x8xf32, #tpu.memory_space<vmem>>, vector<2x8x8xf32>,
    return
  }
  func.func @transform_0(%arg0: i32) -> (i32, i32, i32) {
    %c0_i32 = arith.constant 0 : i32
    %c0_i32_0 = arith.constant 0 : i32
    %c0_i32_1 = arith.constant 0 : i32
    %c0_i32_2 = arith.constant 0 : i32
    return %c0_i32, %c0_i32_0, %c0_i32_1 : i32, i32, i32
  }
  func.func @transform_1(%arg0: i32) -> (i32, i32, i32) {
    %c0_i32 = arith.constant 0 : i32
    %c0_i32_0 = arith.constant 0 : i32
    %c0_i32_1 = arith.constant 0 : i32
    %c0_i32_2 = arith.constant 0 : i32
    return %c0_i32, %c0_i32_0, %c0_i32_1 : i32, i32, i32
  }
  func.func @transform_2(%arg0: i32) -> (i32, i32, i32) {
    %c0_i32 = arith.constant 0 : i32
    %c0_i32_0 = arith.constant 0 : i32
    %c0_i32_1 = arith.constant 0 : i32
    %c0_i32_2 = arith.constant 0 : i32
    return %c0_i32, %c0_i32_0, %c0_i32_1 : i32, i32, i32
  }
  func.func @transform_3(%arg0: i32) -> (i32, i32) {
    %c0_i32 = arith.constant 0 : i32
    %c0_i32_0 = arith.constant 0 : i32
    %c0_i32_1 = arith.constant 0 : i32
    return %c0_i32, %c0_i32_0 : i32, i32
  }
  func.func @transform_4(%arg0: i32) -> (i32, i32) {
    %c0_i32 = arith.constant 0 : i32
    %c0_i32_0 = arith.constant 0 : i32
    %c0_i32_1 = arith.constant 0 : i32
    return %c0_i32, %c0_i32_0 : i32, i32
  }
  func.func @transform_5(%arg0: i32) -> (i32, i32, i32) {
    %c0_i32 = arith.constant 0 : i32
    %c0_i32_0 = arith.constant 0 : i32
    %c0_i32_1 = arith.constant 0 : i32
    %c0_i32_2 = arith.constant 0 : i32
    return %c0_i32, %c0_i32_0, %c0_i32_1 : i32, i32, i32
  }
  func.func @transform_6(%arg0: i32) -> (i32, i32) {
    %c0_i32 = arith.constant 0 : i32
    %c0_i32_0 = arith.constant 0 : i32
    %c0_i32_1 = arith.constant 0 : i32
    return %c0_i32, %c0_i32_0 : i32, i32
  }
  func.func @transform_7(%arg0: i32) -> (i32, i32) {
    %c0_i32 = arith.constant 0 : i32
    %c0_i32_0 = arith.constant 0 : i32
    %c0_i32_1 = arith.constant 0 : i32
    return %c0_i32, %c0_i32_0 : i32, i32
  }
  func.func @transform_8(%arg0: i32) -> (i32, i32, i32) {
    %c0_i32 = arith.constant 0 : i32
    %c0_i32_0 = arith.constant 0 : i32
    %c0_i32_1 = arith.constant 0 : i32
    %c0_i32_2 = arith.constant 0 : i32
    return %c0_i32, %c0_i32_0, %c0_i32_1 : i32, i32, i32
  }
  func.func @transform_9(%arg0: i32) -> (i32, i32) {
    %c0_i32 = arith.constant 0 : i32
    %c0_i32_0 = arith.constant 0 : i32
    %c0_i32_1 = arith.constant 0 : i32
    return %c0_i32, %c0_i32_0 : i32, i32
  }
  func.func @transform_10(%arg0: i32) -> (i32, i32) {
    %c0_i32 = arith.constant 0 : i32
    %c0_i32_0 = arith.constant 0 : i32
    %c0_i32_1 = arith.constant 0 : i32
    return %c0_i32, %c0_i32_0 : i32, i32
  }
  func.func @transform_11(%arg0: i32) -> (i32, i32, i32) {
    %c0_i32 = arith.constant 0 : i32
    %c0_i32_0 = arith.constant 0 : i32
    %c0_i32_1 = arith.constant 0 : i32
    %c0_i32_2 = arith.constant 0 : i32
    return %c0_i32, %c0_i32_0, %c0_i32_1 : i32, i32, i32
  }
}

</mosaic_0001>

<llo_original>
// kernel: _lambda_.7
$region0: #{_lambda_.7}
  #allocation0 [shape = 'u32[]', space=smem, size = 0x4, offset = 0x4, fixed_abs, tag = 'smem constant byte address 0x4 - core index']
  #allocation1 [shape = 'u32[144,128]{1,0:T(1,128)}', space=vmem, size = 0x12000, scoped, tag = 'internal scratch']
  %s0 = inlined_call_operand.vmem [shape: f32[16,8], index: 0, kind: input, shape index: {}]
  %s1 = inlined_call_operand.vmem [shape: f32[8,32], index: 1, kind: input, shape index: {}]
  %s2 = inlined_call_operand.vmem [shape: f32[1,32], index: 2, kind: input, shape index: {}]
  %s3 = inlined_call_operand.vmem [shape: f32[16,32], index: 3, kind: output, shape index: {}]
  %s4 = sld [smem:[#allocation0]]
  $region22: #{_lambda_.7} parent=0
    _
  %s6 = ssub.s32 1, %s4
  %s7 = scalar_select 0, %s6, %s4
  // Predicated region
  $region2: #{_lambda_.7} parent=0 // pred_check
    _
  $region3: #{_lambda_.7} parent=0 // pred_check_branch
    %9 = sbr.rel (0) target = $region5
  $region4: #{_lambda_.7} parent=0 // pred_region
    _
  $region5: #{_lambda_.7} parent=0 // pred_fallthru
    _
  // Predicated region
  $region6: #{_lambda_.7} parent=0 // pred_check
    _
  $region7: #{_lambda_.7} parent=0 // pred_check_branch
    %11 = sbr.rel (0) target = $region9
  $region8: #{_lambda_.7} parent=0 // pred_region
    _
  $region9: #{_lambda_.7} parent=0 // pred_fallthru
    _
  // Predicated region
  $region10: #{_lambda_.7} parent=0 // pred_check
    _
  $region11: #{_lambda_.7} parent=0 // pred_check_branch
    %13 = sbr.rel (0) target = $region13
  $region12: #{_lambda_.7} parent=0 // pred_region
    _
  $region13: #{_lambda_.7} parent=0 // pred_fallthru
    _
  %v14 = vld [vmem:[%s0] sm:$0xff]
  %v15 = vld [vmem:[%s0 + $0x8] sm:$0xff]
  %v16 = vld [vmem:[%s1] sm:$0xff]
  %v17 = vld [vmem:[%s2] sm:$0x1]
  %v19 = vlaneseq
  %v20 = vshrl.u32 %v19, 7
  %v21 = vsub.s32 0, %v20
  %v22 = vrot.slane %v17, %v21
  %vm24 = vcmask 64512
  %v26 = vsel %vm24, %v14, 0
  %v29 = vsel %vm24, %v15, 0
  %31 = vmatprep.subr.mxu0 0.0
  %32 = vmatpush1.msra.mxu0 0.0
  %33 = vmatprep.subr.mxu0 0.0
  %34 = vmatpush1.msra.mxu0 0.0
  %35 = vmatprep.subr.mxu0 0.0
  %36 = vmatpush1.msra.mxu0 0.0
  %37 = vmatprep.subr.mxu0 0.0
  %38 = vmatpush1.msra.mxu0 0.0
  %39 = vmatprep.subr.mxu0 0.0
  %40 = vmatpush1.msra.mxu0 0.0
  %41 = vmatprep.subr.mxu0 0.0
  %42 = vmatpush1.msra.mxu0 0.0
  %43 = vmatprep.subr.mxu0 0.0
  %44 = vmatpush1.msra.mxu0 0.0
  %45 = vmatprep.subr.mxu0 0.0
  %46 = vmatpush1.msra.mxu0 0.0
  %47 = vmatprep.subr.mxu0 0.0
  %48 = vmatpush1.msra.mxu0 0.0
  %49 = vmatprep.subr.mxu0 0.0
  %50 = vmatpush1.msra.mxu0 0.0
  %51 = vmatprep.subr.mxu0 0.0
  %52 = vmatpush1.msra.mxu0 0.0
  %53 = vmatprep.subr.mxu0 0.0
  %54 = vmatpush1.msra.mxu0 0.0
  %55 = vmatprep.subr.mxu0 0.0
  %56 = vmatpush1.msra.mxu0 0.0
  %57 = vmatprep.subr.mxu0 0.0
  %58 = vmatpush1.msra.mxu0 0.0
  %59 = vmatprep.subr.mxu0 0.0
  %60 = vmatpush1.msra.mxu0 0.0
  %61 = vmatprep.subr.mxu0 0.0
  %62 = vmatpush1.msra.mxu0 %v16
  %63 = vmatprep.subr.mxu0 0.0
  %64 = vmatpush2.msra.mxu0 0.0
  %65 = vmatprep.subr.mxu0 0.0
  %66 = vmatpush2.msra.mxu0 0.0
  %67 = vmatprep.subr.mxu0 0.0
  %68 = vmatpush2.msra.mxu0 0.0
  %69 = vmatprep.subr.mxu0 0.0
  %70 = vmatpush2.msra.mxu0 0.0
  %71 = vmatprep.subr.mxu0 0.0
  %72 = vmatpush2.msra.mxu0 0.0
  %73 = vmatprep.subr.mxu0 0.0
  %74 = vmatpush2.msra.mxu0 0.0
  %75 = vmatprep.subr.mxu0 0.0
  %76 = vmatpush2.msra.mxu0 0.0
  %77 = vmatprep.subr.mxu0 0.0
  %78 = vmatpush2.msra.mxu0 0.0
  %79 = vmatprep.subr.mxu0 0.0
  %80 = vmatpush2.msra.mxu0 0.0
  %81 = vmatprep.subr.mxu0 0.0
  %82 = vmatpush2.msra.mxu0 0.0
  %83 = vmatprep.subr.mxu0 0.0
  %84 = vmatpush2.msra.mxu0 0.0
  %85 = vmatprep.subr.mxu0 0.0
  %86 = vmatpush2.msra.mxu0 0.0
  %87 = vmatprep.subr.mxu0 0.0
  %88 = vmatpush2.msra.mxu0 0.0
  %89 = vmatprep.subr.mxu0 0.0
  %90 = vmatpush2.msra.mxu0 0.0
  %91 = vmatprep.subr.mxu0 0.0
  %92 = vmatpush2.msra.mxu0 0.0
  %93 = vmatprep.subr.mxu0 0.0
  %94 = vmatpush2.msra.mxu0 0.0
  %95 = vmatprep.mubr.f32.mxu0 0.0
  %96 = vmatmul.mubr.f32.gmra.mxu0 %v26
  %v97 = vpop.f32.mrf.mxu0
  %v98 = vadd.f32 %v22, %v97
  %v99 = vpop.f32.mrf.mxu0
  %100 = vmatprep.mubr.f32.mxu0 0.0
  %101 = vmatmul.mubr.f32.gmra.mxu0 %v29
  %v102 = vpop.f32.mrf.mxu0
  %v103 = vadd.f32 %v22, %v102
  %v104 = vpop.f32.mrf.mxu0
  %105 = vdwg.mxu0
  %vm106 = vcmask 261120
  %107 = vst.msk [vmem:[%s3] sm:$0xff] %vm106, %v98
  %108 = vst.msk [vmem:[%s3 + $0x8] sm:$0xff] %vm106, %v103
  // Predicated region
  $region14: #{_lambda_.7} parent=0 // pred_check
    _
  $region15: #{_lambda_.7} parent=0 // pred_check_branch
    %110 = sbr.rel (0) target = $region17
  $region16: #{_lambda_.7} parent=0 // pred_region
    _
  $region17: #{_lambda_.7} parent=0 // pred_fallthru
    _
  // Predicated region
  $region18: #{_lambda_.7} parent=0 // pred_check
    _
  $region19: #{_lambda_.7} parent=0 // pred_check_branch
    %112 = sbr.rel (0) target = $region21
  $region20: #{_lambda_.7} parent=0 // pred_region
    _
  $region21: #{_lambda_.7} parent=0 // pred_fallthru
    _

// kernel: _lambda_.9
$region0: #{_lambda_.9}
  #allocation0 [shape = 'u32[]', space=smem, size = 0x4, offset = 0x4, fixed_abs, tag = 'smem constant byte address 0x4 - core index']
  #allocation1 [shape = 'u32[144,128]{1,0:T(1,128)}', space=vmem, size = 0x12000, scoped, tag = 'internal scratch']
  %s0 = inlined_call_operand.vmem [shape: f32[16,32], index: 0, kind: input, shape index: {}]
  %s1 = inlined_call_operand.vmem [shape: f32[32,128], index: 1, kind: input, shape index: {}]
  %s2 = inlined_call_operand.vmem [shape: f32[1,128], index: 2, kind: input, shape index: {}]
  %s3 = inlined_call_operand.vmem [shape: f32[16,128], index: 3, kind: output, shape index: {}]
  %s4 = sld [smem:[#allocation0]]
  $region22: #{_lambda_.9} parent=0
    _
  %s6 = ssub.s32 1, %s4
  %s7 = scalar_select 0, %s6, %s4
  // Predicated region
  $region2: #{_lambda_.9} parent=0 // pred_check
    _
  $region3: #{_lambda_.9} parent=0 // pred_check_branch
    %9 = sbr.rel (0) target = $region5
  $region4: #{_lambda_.9} parent=0 // pred_region
    _
  $region5: #{_lambda_.9} parent=0 // pred_fallthru
    _
  // Predicated region
  $region6: #{_lambda_.9} parent=0 // pred_check
    _
  $region7: #{_lambda_.9} parent=0 // pred_check_branch
    %11 = sbr.rel (0) target = $region9
  $region8: #{_lambda_.9} parent=0 // pred_region
    _
  $region9: #{_lambda_.9} parent=0 // pred_fallthru
    _
  // Predicated region
  $region10: #{_lambda_.9} parent=0 // pred_check
    _
  $region11: #{_lambda_.9} parent=0 // pred_check_branch
    %13 = sbr.rel (0) target = $region13
  $region12: #{_lambda_.9} parent=0 // pred_region
    _
  $region13: #{_lambda_.9} parent=0 // pred_fallthru
    _
  %v14 = vld [vmem:[%s0] sm:$0xff]
  %v15 = vld [vmem:[%s0 + $0x8] sm:$0xff]
  %v16 = vld [vmem:[%s1] sm:$0xff]
  %v17 = vld [vmem:[%s1 + $0x8] sm:$0xff]
  %v18 = vld [vmem:[%s1 + $0x10] sm:$0xff]
  %v19 = vld [vmem:[%s1 + $0x18] sm:$0xff]
  %v20 = vld [vmem:[%s2] sm:$0x1]
  %v22 = vlaneseq
  %v23 = vshrl.u32 %v22, 7
  %v24 = vsub.s32 0, %v23
  %v25 = vrot.slane %v20, %v24
  %vm27 = vcmask 261120
  %v29 = vsel %vm27, %v14, 0
  %v32 = vsel %vm27, %v15, 0
  %34 = vmatprep.subr.mxu0 0.0
  %35 = vmatpush1.msra.mxu0 0.0
  %36 = vmatprep.subr.mxu0 0.0
  %37 = vmatpush1.msra.mxu0 0.0
  %38 = vmatprep.subr.mxu0 0.0
  %39 = vmatpush1.msra.mxu0 0.0
  %40 = vmatprep.subr.mxu0 0.0
  %41 = vmatpush1.msra.mxu0 0.0
  %42 = vmatprep.subr.mxu0 0.0
  %43 = vmatpush1.msra.mxu0 0.0
  %44 = vmatprep.subr.mxu0 0.0
  %45 = vmatpush1.msra.mxu0 0.0
  %46 = vmatprep.subr.mxu0 0.0
  %47 = vmatpush1.msra.mxu0 0.0
  %48 = vmatprep.subr.mxu0 0.0
  %49 = vmatpush1.msra.mxu0 0.0
  %50 = vmatprep.subr.mxu0 0.0
  %51 = vmatpush1.msra.mxu0 0.0
  %52 = vmatprep.subr.mxu0 0.0
  %53 = vmatpush1.msra.mxu0 0.0
  %54 = vmatprep.subr.mxu0 0.0
  %55 = vmatpush1.msra.mxu0 0.0
  %56 = vmatprep.subr.mxu0 0.0
  %57 = vmatpush1.msra.mxu0 0.0
  %58 = vmatprep.subr.mxu0 0.0
  %59 = vmatpush1.msra.mxu0 %v19
  %60 = vmatprep.subr.mxu0 0.0
  %61 = vmatpush1.msra.mxu0 %v18
  %62 = vmatprep.subr.mxu0 0.0
  %63 = vmatpush1.msra.mxu0 %v17
  %64 = vmatprep.subr.mxu0 0.0
  %65 = vmatpush1.msra.mxu0 %v16
  %66 = vmatprep.subr.mxu0 0.0
  %67 = vmatpush2.msra.mxu0 0.0
  %68 = vmatprep.subr.mxu0 0.0
  %69 = vmatpush2.msra.mxu0 0.0
  %70 = vmatprep.subr.mxu0 0.0
  %71 = vmatpush2.msra.mxu0 0.0
  %72 = vmatprep.subr.mxu0 0.0
  %73 = vmatpush2.msra.mxu0 0.0
  %74 = vmatprep.subr.mxu0 0.0
  %75 = vmatpush2.msra.mxu0 0.0
  %76 = vmatprep.subr.mxu0 0.0
  %77 = vmatpush2.msra.mxu0 0.0
  %78 = vmatprep.subr.mxu0 0.0
  %79 = vmatpush2.msra.mxu0 0.0
  %80 = vmatprep.subr.mxu0 0.0
  %81 = vmatpush2.msra.mxu0 0.0
  %82 = vmatprep.subr.mxu0 0.0
  %83 = vmatpush2.msra.mxu0 0.0
  %84 = vmatprep.subr.mxu0 0.0
  %85 = vmatpush2.msra.mxu0 0.0
  %86 = vmatprep.subr.mxu0 0.0
  %87 = vmatpush2.msra.mxu0 0.0
  %88 = vmatprep.subr.mxu0 0.0
  %89 = vmatpush2.msra.mxu0 0.0
  %90 = vmatprep.subr.mxu0 0.0
  %91 = vmatpush2.msra.mxu0 0.0
  %92 = vmatprep.subr.mxu0 0.0
  %93 = vmatpush2.msra.mxu0 0.0
  %94 = vmatprep.subr.mxu0 0.0
  %95 = vmatpush2.msra.mxu0 0.0
  %96 = vmatprep.subr.mxu0 0.0
  %97 = vmatpush2.msra.mxu0 0.0
  %98 = vmatprep.mubr.f32.mxu0 0.0
  %99 = vmatmul.mubr.f32.gmra.mxu0 %v29
  %v100 = vpop.f32.mrf.mxu0
  %v101 = vadd.f32 %v25, %v100
  %v102 = vpop.f32.mrf.mxu0
  %103 = vmatprep.mubr.f32.mxu0 0.0
  %104 = vmatmul.mubr.f32.gmra.mxu0 %v32
  %v105 = vpop.f32.mrf.mxu0
  %v106 = vadd.f32 %v25, %v105
  %v107 = vpop.f32.mrf.mxu0
  %108 = vdwg.mxu0
  %109 = vst [vmem:[%s3] sm:$0xff] %v101
  %110 = vst [vmem:[%s3 + $0x8] sm:$0xff] %v106
  // Predicated region
  $region14: #{_lambda_.9} parent=0 // pred_check
    _
  $region15: #{_lambda_.9} parent=0 // pred_check_branch
    %112 = sbr.rel (0) target = $region17
  $region16: #{_lambda_.9} parent=0 // pred_region
    _
  $region17: #{_lambda_.9} parent=0 // pred_fallthru
    _
  // Predicated region
  $region18: #{_lambda_.9} parent=0 // pred_check
    _
  $region19: #{_lambda_.9} parent=0 // pred_check_branch
    %114 = sbr.rel (0) target = $region21
  $region20: #{_lambda_.9} parent=0 // pred_region
    _
  $region21: #{_lambda_.9} parent=0 // pred_fallthru
    _

// kernel: _lambda_.11
$region0: #{_lambda_.11}
  #allocation0 [shape = 'u32[]', space=smem, size = 0x4, offset = 0x4, fixed_abs, tag = 'smem constant byte address 0x4 - core index']
  #allocation1 [shape = 'u32[144,128]{1,0:T(1,128)}', space=vmem, size = 0x12000, scoped, tag = 'internal scratch']
  %s0 = inlined_call_operand.vmem [shape: f32[16,32], index: 0, kind: input, shape index: {}]
  %s1 = inlined_call_operand.vmem [shape: f32[32,16], index: 1, kind: input, shape index: {}]
  %s2 = inlined_call_operand.vmem [shape: f32[1,16], index: 2, kind: input, shape index: {}]
  %s3 = inlined_call_operand.vmem [shape: f32[16,16], index: 3, kind: output, shape index: {}]
  %s4 = sld [smem:[#allocation0]]
  $region22: #{_lambda_.11} parent=0
    _
  %s6 = ssub.s32 1, %s4
  %s7 = scalar_select 0, %s6, %s4
  // Predicated region
  $region2: #{_lambda_.11} parent=0 // pred_check
    _
  $region3: #{_lambda_.11} parent=0 // pred_check_branch
    %9 = sbr.rel (0) target = $region5
  $region4: #{_lambda_.11} parent=0 // pred_region
    _
  $region5: #{_lambda_.11} parent=0 // pred_fallthru
    _
  // Predicated region
  $region6: #{_lambda_.11} parent=0 // pred_check
    _
  $region7: #{_lambda_.11} parent=0 // pred_check_branch
    %11 = sbr.rel (0) target = $region9
  $region8: #{_lambda_.11} parent=0 // pred_region
    _
  $region9: #{_lambda_.11} parent=0 // pred_fallthru
    _
  // Predicated region
  $region10: #{_lambda_.11} parent=0 // pred_check
    _
  $region11: #{_lambda_.11} parent=0 // pred_check_branch
    %13 = sbr.rel (0) target = $region13
  $region12: #{_lambda_.11} parent=0 // pred_region
    _
  $region13: #{_lambda_.11} parent=0 // pred_fallthru
    _
  %v14 = vld [vmem:[%s0] sm:$0xff]
  %v15 = vld [vmem:[%s0 + $0x8] sm:$0xff]
  %v16 = vld [vmem:[%s1] sm:$0xff]
  %v17 = vld [vmem:[%s1 + $0x8] sm:$0xff]
  %v18 = vld [vmem:[%s1 + $0x10] sm:$0xff]
  %v19 = vld [vmem:[%s1 + $0x18] sm:$0xff]
  %v20 = vld [vmem:[%s2] sm:$0x1]
  %v22 = vlaneseq
  %v23 = vshrl.u32 %v22, 7
  %v24 = vsub.s32 0, %v23
  %v25 = vrot.slane %v20, %v24
  %vm27 = vcmask 261120
  %v29 = vsel %vm27, %v14, 0
  %v32 = vsel %vm27, %v15, 0
  %34 = vmatprep.subr.mxu0 0.0
  %35 = vmatpush1.msra.mxu0 0.0
  %36 = vmatprep.subr.mxu0 0.0
  %37 = vmatpush1.msra.mxu0 0.0
  %38 = vmatprep.subr.mxu0 0.0
  %39 = vmatpush1.msra.mxu0 0.0
  %40 = vmatprep.subr.mxu0 0.0
  %41 = vmatpush1.msra.mxu0 0.0
  %42 = vmatprep.subr.mxu0 0.0
  %43 = vmatpush1.msra.mxu0 0.0
  %44 = vmatprep.subr.mxu0 0.0
  %45 = vmatpush1.msra.mxu0 0.0
  %46 = vmatprep.subr.mxu0 0.0
  %47 = vmatpush1.msra.mxu0 0.0
  %48 = vmatprep.subr.mxu0 0.0
  %49 = vmatpush1.msra.mxu0 0.0
  %50 = vmatprep.subr.mxu0 0.0
  %51 = vmatpush1.msra.mxu0 0.0
  %52 = vmatprep.subr.mxu0 0.0
  %53 = vmatpush1.msra.mxu0 0.0
  %54 = vmatprep.subr.mxu0 0.0
  %55 = vmatpush1.msra.mxu0 0.0
  %56 = vmatprep.subr.mxu0 0.0
  %57 = vmatpush1.msra.mxu0 0.0
  %58 = vmatprep.subr.mxu0 0.0
  %59 = vmatpush1.msra.mxu0 %v19
  %60 = vmatprep.subr.mxu0 0.0
  %61 = vmatpush1.msra.mxu0 %v18
  %62 = vmatprep.subr.mxu0 0.0
  %63 = vmatpush1.msra.mxu0 %v17
  %64 = vmatprep.subr.mxu0 0.0
  %65 = vmatpush1.msra.mxu0 %v16
  %66 = vmatprep.subr.mxu0 0.0
  %67 = vmatpush2.msra.mxu0 0.0
  %68 = vmatprep.subr.mxu0 0.0
  %69 = vmatpush2.msra.mxu0 0.0
  %70 = vmatprep.subr.mxu0 0.0
  %71 = vmatpush2.msra.mxu0 0.0
  %72 = vmatprep.subr.mxu0 0.0
  %73 = vmatpush2.msra.mxu0 0.0
  %74 = vmatprep.subr.mxu0 0.0
  %75 = vmatpush2.msra.mxu0 0.0
  %76 = vmatprep.subr.mxu0 0.0
  %77 = vmatpush2.msra.mxu0 0.0
  %78 = vmatprep.subr.mxu0 0.0
  %79 = vmatpush2.msra.mxu0 0.0
  %80 = vmatprep.subr.mxu0 0.0
  %81 = vmatpush2.msra.mxu0 0.0
  %82 = vmatprep.subr.mxu0 0.0
  %83 = vmatpush2.msra.mxu0 0.0
  %84 = vmatprep.subr.mxu0 0.0
  %85 = vmatpush2.msra.mxu0 0.0
  %86 = vmatprep.subr.mxu0 0.0
  %87 = vmatpush2.msra.mxu0 0.0
  %88 = vmatprep.subr.mxu0 0.0
  %89 = vmatpush2.msra.mxu0 0.0
  %90 = vmatprep.subr.mxu0 0.0
  %91 = vmatpush2.msra.mxu0 0.0
  %92 = vmatprep.subr.mxu0 0.0
  %93 = vmatpush2.msra.mxu0 0.0
  %94 = vmatprep.subr.mxu0 0.0
  %95 = vmatpush2.msra.mxu0 0.0
  %96 = vmatprep.subr.mxu0 0.0
  %97 = vmatpush2.msra.mxu0 0.0
  %98 = vmatprep.mubr.f32.mxu0 0.0
  %99 = vmatmul.mubr.f32.gmra.mxu0 %v29
  %v100 = vpop.f32.mrf.mxu0
  %v101 = vadd.f32 %v25, %v100
  %v102 = vpop.f32.mrf.mxu0
  %103 = vmatprep.mubr.f32.mxu0 0.0
  %104 = vmatmul.mubr.f32.gmra.mxu0 %v32
  %v105 = vpop.f32.mrf.mxu0
  %v106 = vadd.f32 %v25, %v105
  %v107 = vpop.f32.mrf.mxu0
  %108 = vdwg.mxu0
  %vm109 = vcmask 130048
  %110 = vst.msk [vmem:[%s3] sm:$0xff] %vm109, %v101
  %111 = vst.msk [vmem:[%s3 + $0x8] sm:$0xff] %vm109, %v106
  // Predicated region
  $region14: #{_lambda_.11} parent=0 // pred_check
    _
  $region15: #{_lambda_.11} parent=0 // pred_check_branch
    %113 = sbr.rel (0) target = $region17
  $region16: #{_lambda_.11} parent=0 // pred_region
    _
  $region17: #{_lambda_.11} parent=0 // pred_fallthru
    _
  // Predicated region
  $region18: #{_lambda_.11} parent=0 // pred_check
    _
  $region19: #{_lambda_.11} parent=0 // pred_check_branch
    %115 = sbr.rel (0) target = $region21
  $region20: #{_lambda_.11} parent=0 // pred_region
    _
  $region21: #{_lambda_.11} parent=0 // pred_fallthru
    _

// kernel: _lambda_.8
$region0: #{_lambda_.8}
  #allocation0 [shape = 'u32[]', space=smem, size = 0x4, offset = 0x4, fixed_abs, tag = 'smem constant byte address 0x4 - core index']
  #allocation1 [shape = 'u32[144,128]{1,0:T(1,128)}', space=vmem, size = 0x12000, scoped, tag = 'internal scratch']
  %s0 = inlined_call_operand.vmem [shape: f32[2,8,32], index: 0, kind: input, shape index: {}]
  %s1 = inlined_call_operand.vmem [shape: f32[1,8,1], index: 1, kind: input, shape index: {}]
  %s2 = inlined_call_operand.vmem [shape: f32[5,32,32], index: 2, kind: input, shape index: {}]
  %s3 = inlined_call_operand.vmem [shape: f32[1,32], index: 3, kind: input, shape index: {}]
  %s4 = inlined_call_operand.vmem [shape: f32[1,32], index: 4, kind: input, shape index: {}]
  %s5 = inlined_call_operand.vmem [shape: f32[5,32,32], index: 5, kind: input, shape index: {}]
  %s6 = inlined_call_operand.vmem [shape: f32[1,32], index: 6, kind: input, shape index: {}]
  %s7 = inlined_call_operand.vmem [shape: f32[1,32], index: 7, kind: input, shape index: {}]
  %s8 = inlined_call_operand.vmem [shape: f32[2,8,32], index: 8, kind: output, shape index: {}]
  %s9 = sld [smem:[#allocation0]]
  $region42: #{_lambda_.8} parent=0
    _
  %s11 = ssub.s32 1, %s9
  %s12 = scalar_select 0, %s11, %s9
  // Predicated region
  $region2: #{_lambda_.8} parent=0 // pred_check
    _
  $region3: #{_lambda_.8} parent=0 // pred_check_branch
    %14 = sbr.rel (0) target = $region5
  $region4: #{_lambda_.8} parent=0 // pred_region
    _
  $region5: #{_lambda_.8} parent=0 // pred_fallthru
    _
  // Predicated region
  $region6: #{_lambda_.8} parent=0 // pred_check
    _
  $region7: #{_lambda_.8} parent=0 // pred_check_branch
    %16 = sbr.rel (0) target = $region9
  $region8: #{_lambda_.8} parent=0 // pred_region
    _
  $region9: #{_lambda_.8} parent=0 // pred_fallthru
    _
  // Predicated region
  $region10: #{_lambda_.8} parent=0 // pred_check
    _
  $region11: #{_lambda_.8} parent=0 // pred_check_branch
    %18 = sbr.rel (0) target = $region13
  $region12: #{_lambda_.8} parent=0 // pred_region
    _
  $region13: #{_lambda_.8} parent=0 // pred_fallthru
    _
  // Predicated region
  $region14: #{_lambda_.8} parent=0 // pred_check
    _
  $region15: #{_lambda_.8} parent=0 // pred_check_branch
    %20 = sbr.rel (0) target = $region17
  $region16: #{_lambda_.8} parent=0 // pred_region
    _
  $region17: #{_lambda_.8} parent=0 // pred_fallthru
    _
  // Predicated region
  $region18: #{_lambda_.8} parent=0 // pred_check
    _
  $region19: #{_lambda_.8} parent=0 // pred_check_branch
    %22 = sbr.rel (0) target = $region21
  $region20: #{_lambda_.8} parent=0 // pred_region
    _
  $region21: #{_lambda_.8} parent=0 // pred_fallthru
    _
  // Predicated region
  $region22: #{_lambda_.8} parent=0 // pred_check
    _
  $region23: #{_lambda_.8} parent=0 // pred_check_branch
    %24 = sbr.rel (0) target = $region25
  $region24: #{_lambda_.8} parent=0 // pred_region
    _
  $region25: #{_lambda_.8} parent=0 // pred_fallthru
    _
  // Predicated region
  $region26: #{_lambda_.8} parent=0 // pred_check
    _
  $region27: #{_lambda_.8} parent=0 // pred_check_branch
    %26 = sbr.rel (0) target = $region29
  $region28: #{_lambda_.8} parent=0 // pred_region
    _
  $region29: #{_lambda_.8} parent=0 // pred_fallthru
    _
  // Predicated region
  $region30: #{_lambda_.8} parent=0 // pred_check
    _
  $region31: #{_lambda_.8} parent=0 // pred_check_branch
    %28 = sbr.rel (0) target = $region33
  $region32: #{_lambda_.8} parent=0 // pred_region
    _
  $region33: #{_lambda_.8} parent=0 // pred_fallthru
    _
  %v29 = vld [vmem:[%s1] sm:$0xff]
  %v30 = vld [vmem:[%s0] sm:$0xff]
  %v31 = vld [vmem:[%s0 + $0x8] sm:$0xff]
  %v34 = vrot.slane %v30, 6
  %v35 = vrot.slane %v31, 6
  %vm38 = vcmask 1041408
  %v39 = vsel %vm38, 0.0, %v34
  %v40 = vsel %vm38, 0.0, %v35
  %v41 = vld [vmem:[%s2] sm:$0xff]
  %v42 = vld [vmem:[%s2 + $0x8] sm:$0xff]
  %v43 = vld [vmem:[%s2 + $0x10] sm:$0xff]
  %v44 = vld [vmem:[%s2 + $0x18] sm:$0xff]
  %v45 = vrot.slane %v30, 7
  %v46 = vrot.slane %v31, 7
  %vm49 = vcmask 1040384
  %v50 = vsel %vm49, 0.0, %v45
  %v51 = vsel %vm49, 0.0, %v46
  %s52 = scalar_lea.vmem %s2, 32
  %v53 = vld [vmem:[%s52] sm:$0xff]
  %v54 = vld [vmem:[%s52 + $0x8] sm:$0xff]
  %v55 = vld [vmem:[%s52 + $0x10] sm:$0xff]
  %v56 = vld [vmem:[%s52 + $0x18] sm:$0xff]
  %vm57 = vcmask 261120
  %v59 = vsel %vm57, %v50, 0
  %v62 = vsel %vm57, %v51, 0
  %64 = vmatprep.subr.mxu0 0.0
  %65 = vmatpush1.msra.mxu0 0.0
  %66 = vmatprep.subr.mxu0 0.0
  %67 = vmatpush1.msra.mxu0 0.0
  %68 = vmatprep.subr.mxu0 0.0
  %69 = vmatpush1.msra.mxu0 0.0
  %70 = vmatprep.subr.mxu0 0.0
  %71 = vmatpush1.msra.mxu0 0.0
  %72 = vmatprep.subr.mxu0 0.0
  %73 = vmatpush1.msra.mxu0 0.0
  %74 = vmatprep.subr.mxu0 0.0
  %75 = vmatpush1.msra.mxu0 0.0
  %76 = vmatprep.subr.mxu0 0.0
  %77 = vmatpush1.msra.mxu0 0.0
  %78 = vmatprep.subr.mxu0 0.0
  %79 = vmatpush1.msra.mxu0 0.0
  %80 = vmatprep.subr.mxu0 0.0
  %81 = vmatpush1.msra.mxu0 0.0
  %82 = vmatprep.subr.mxu0 0.0
  %83 = vmatpush1.msra.mxu0 0.0
  %84 = vmatprep.subr.mxu0 0.0
  %85 = vmatpush1.msra.mxu0 0.0
  %86 = vmatprep.subr.mxu0 0.0
  %87 = vmatpush1.msra.mxu0 0.0
  %88 = vmatprep.subr.mxu0 0.0
  %89 = vmatpush1.msra.mxu0 %v56
  %90 = vmatprep.subr.mxu0 0.0
  %91 = vmatpush1.msra.mxu0 %v55
  %92 = vmatprep.subr.mxu0 0.0
  %93 = vmatpush1.msra.mxu0 %v54
  %94 = vmatprep.subr.mxu0 0.0
  %95 = vmatpush1.msra.mxu0 %v53
  %96 = vmatprep.subr.mxu0 0.0
  %97 = vmatpush2.msra.mxu0 0.0
  %98 = vmatprep.subr.mxu0 0.0
  %99 = vmatpush2.msra.mxu0 0.0
  %100 = vmatprep.subr.mxu0 0.0
  %101 = vmatpush2.msra.mxu0 0.0
  %102 = vmatprep.subr.mxu0 0.0
  %103 = vmatpush2.msra.mxu0 0.0
  %104 = vmatprep.subr.mxu0 0.0
  %105 = vmatpush2.msra.mxu0 0.0
  %106 = vmatprep.subr.mxu0 0.0
  %107 = vmatpush2.msra.mxu0 0.0
  %108 = vmatprep.subr.mxu0 0.0
  %109 = vmatpush2.msra.mxu0 0.0
  %110 = vmatprep.subr.mxu0 0.0
  %111 = vmatpush2.msra.mxu0 0.0
  %112 = vmatprep.subr.mxu0 0.0
  %113 = vmatpush2.msra.mxu0 0.0
  %114 = vmatprep.subr.mxu0 0.0
  %115 = vmatpush2.msra.mxu0 0.0
  %116 = vmatprep.subr.mxu0 0.0
  %117 = vmatpush2.msra.mxu0 0.0
  %118 = vmatprep.subr.mxu0 0.0
  %119 = vmatpush2.msra.mxu0 0.0
  %120 = vmatprep.subr.mxu0 0.0
  %121 = vmatpush2.msra.mxu0 0.0
  %122 = vmatprep.subr.mxu0 0.0
  %123 = vmatpush2.msra.mxu0 0.0
  %124 = vmatprep.subr.mxu0 0.0
  %125 = vmatpush2.msra.mxu0 0.0
  %126 = vmatprep.subr.mxu0 0.0
  %127 = vmatpush2.msra.mxu0 0.0
  %128 = vmatprep.mubr.f32.mxu0 0.0
  %129 = vmatmul.mubr.f32.gmra.mxu0 %v59
  %v130 = vpop.f32.mrf.mxu0
  %v131 = vadd.f32 0.0, %v130
  %v132 = vpop.f32.mrf.mxu0
  %133 = vmatprep.mubr.f32.mxu0 0.0
  %134 = vmatmul.mubr.f32.gmra.mxu0 %v62
  %v135 = vpop.f32.mrf.mxu0
  %v136 = vadd.f32 0.0, %v135
  %v137 = vpop.f32.mrf.mxu0
  %138 = vdwg.mxu0
  %v140 = vsel %vm57, %v39, 0
  %v143 = vsel %vm57, %v40, 0
  %145 = vmatprep.subr.mxu0 0.0
  %146 = vmatpush1.msra.mxu0 0.0
  %147 = vmatprep.subr.mxu0 0.0
  %148 = vmatpush1.msra.mxu0 0.0
  %149 = vmatprep.subr.mxu0 0.0
  %150 = vmatpush1.msra.mxu0 0.0
  %151 = vmatprep.subr.mxu0 0.0
  %152 = vmatpush1.msra.mxu0 0.0
  %153 = vmatprep.subr.mxu0 0.0
  %154 = vmatpush1.msra.mxu0 0.0
  %155 = vmatprep.subr.mxu0 0.0
  %156 = vmatpush1.msra.mxu0 0.0
  %157 = vmatprep.subr.mxu0 0.0
  %158 = vmatpush1.msra.mxu0 0.0
  %159 = vmatprep.subr.mxu0 0.0
  %160 = vmatpush1.msra.mxu0 0.0
  %161 = vmatprep.subr.mxu0 0.0
  %162 = vmatpush1.msra.mxu0 0.0
  %163 = vmatprep.subr.mxu0 0.0
  %164 = vmatpush1.msra.mxu0 0.0
  %165 = vmatprep.subr.mxu0 0.0
  %166 = vmatpush1.msra.mxu0 0.0
  %167 = vmatprep.subr.mxu0 0.0
  %168 = vmatpush1.msra.mxu0 0.0
  %169 = vmatprep.subr.mxu0 0.0
  %170 = vmatpush1.msra.mxu0 %v44
  %171 = vmatprep.subr.mxu0 0.0
  %172 = vmatpush1.msra.mxu0 %v43
  %173 = vmatprep.subr.mxu0 0.0
  %174 = vmatpush1.msra.mxu0 %v42
  %175 = vmatprep.subr.mxu0 0.0
  %176 = vmatpush1.msra.mxu0 %v41
  %177 = vmatprep.subr.mxu0 0.0
  %178 = vmatpush2.msra.mxu0 0.0
  %179 = vmatprep.subr.mxu0 0.0
  %180 = vmatpush2.msra.mxu0 0.0
  %181 = vmatprep.subr.mxu0 0.0
  %182 = vmatpush2.msra.mxu0 0.0
  %183 = vmatprep.subr.mxu0 0.0
  %184 = vmatpush2.msra.mxu0 0.0
  %185 = vmatprep.subr.mxu0 0.0
  %186 = vmatpush2.msra.mxu0 0.0
  %187 = vmatprep.subr.mxu0 0.0
  %188 = vmatpush2.msra.mxu0 0.0
  %189 = vmatprep.subr.mxu0 0.0
  %190 = vmatpush2.msra.mxu0 0.0
  %191 = vmatprep.subr.mxu0 0.0
  %192 = vmatpush2.msra.mxu0 0.0
  %193 = vmatprep.subr.mxu0 0.0
  %194 = vmatpush2.msra.mxu0 0.0
  %195 = vmatprep.subr.mxu0 0.0
  %196 = vmatpush2.msra.mxu0 0.0
  %197 = vmatprep.subr.mxu0 0.0
  %198 = vmatpush2.msra.mxu0 0.0
  %199 = vmatprep.subr.mxu0 0.0
  %200 = vmatpush2.msra.mxu0 0.0
  %201 = vmatprep.subr.mxu0 0.0
  %202 = vmatpush2.msra.mxu0 0.0
  %203 = vmatprep.subr.mxu0 0.0
  %204 = vmatpush2.msra.mxu0 0.0
  %205 = vmatprep.subr.mxu0 0.0
  %206 = vmatpush2.msra.mxu0 0.0
  %207 = vmatprep.subr.mxu0 0.0
  %208 = vmatpush2.msra.mxu0 0.0
  %209 = vmatprep.mubr.f32.mxu0 0.0
  %210 = vmatmul.mubr.f32.gmra.mxu0 %v140
  %v211 = vpop.f32.mrf.mxu0
  %v212 = vadd.f32 %v131, %v211
  %v213 = vpop.f32.mrf.mxu0
  %214 = vmatprep.mubr.f32.mxu0 0.0
  %215 = vmatmul.mubr.f32.gmra.mxu0 %v143
  %v216 = vpop.f32.mrf.mxu0
  %v217 = vadd.f32 %v136, %v216
  %v218 = vpop.f32.mrf.mxu0
  %219 = vdwg.mxu0
  %s220 = scalar_lea.vmem %s2, 64
  %v221 = vld [vmem:[%s220] sm:$0xff]
  %v222 = vld [vmem:[%s220 + $0x8] sm:$0xff]
  %v223 = vld [vmem:[%s220 + $0x10] sm:$0xff]
  %v224 = vld [vmem:[%s220 + $0x18] sm:$0xff]
  %v225 = vsel %vm57, %v30, 0
  %v227 = vsel %vm57, %v31, 0
  %229 = vmatprep.subr.mxu0 0.0
  %230 = vmatpush1.msra.mxu0 0.0
  %231 = vmatprep.subr.mxu0 0.0
  %232 = vmatpush1.msra.mxu0 0.0
  %233 = vmatprep.subr.mxu0 0.0
  %234 = vmatpush1.msra.mxu0 0.0
  %235 = vmatprep.subr.mxu0 0.0
  %236 = vmatpush1.msra.mxu0 0.0
  %237 = vmatprep.subr.mxu0 0.0
  %238 = vmatpush1.msra.mxu0 0.0
  %239 = vmatprep.subr.mxu0 0.0
  %240 = vmatpush1.msra.mxu0 0.0
  %241 = vmatprep.subr.mxu0 0.0
  %242 = vmatpush1.msra.mxu0 0.0
  %243 = vmatprep.subr.mxu0 0.0
  %244 = vmatpush1.msra.mxu0 0.0
  %245 = vmatprep.subr.mxu0 0.0
  %246 = vmatpush1.msra.mxu0 0.0
  %247 = vmatprep.subr.mxu0 0.0
  %248 = vmatpush1.msra.mxu0 0.0
  %249 = vmatprep.subr.mxu0 0.0
  %250 = vmatpush1.msra.mxu0 0.0
  %251 = vmatprep.subr.mxu0 0.0
  %252 = vmatpush1.msra.mxu0 0.0
  %253 = vmatprep.subr.mxu0 0.0
  %254 = vmatpush1.msra.mxu0 %v224
  %255 = vmatprep.subr.mxu0 0.0
  %256 = vmatpush1.msra.mxu0 %v223
  %257 = vmatprep.subr.mxu0 0.0
  %258 = vmatpush1.msra.mxu0 %v222
  %259 = vmatprep.subr.mxu0 0.0
  %260 = vmatpush1.msra.mxu0 %v221
  %261 = vmatprep.subr.mxu0 0.0
  %262 = vmatpush2.msra.mxu0 0.0
  %263 = vmatprep.subr.mxu0 0.0
  %264 = vmatpush2.msra.mxu0 0.0
  %265 = vmatprep.subr.mxu0 0.0
  %266 = vmatpush2.msra.mxu0 0.0
  %267 = vmatprep.subr.mxu0 0.0
  %268 = vmatpush2.msra.mxu0 0.0
  %269 = vmatprep.subr.mxu0 0.0
  %270 = vmatpush2.msra.mxu0 0.0
  %271 = vmatprep.subr.mxu0 0.0
  %272 = vmatpush2.msra.mxu0 0.0
  %273 = vmatprep.subr.mxu0 0.0
  %274 = vmatpush2.msra.mxu0 0.0
  %275 = vmatprep.subr.mxu0 0.0
  %276 = vmatpush2.msra.mxu0 0.0
  %277 = vmatprep.subr.mxu0 0.0
  %278 = vmatpush2.msra.mxu0 0.0
  %279 = vmatprep.subr.mxu0 0.0
  %280 = vmatpush2.msra.mxu0 0.0
  %281 = vmatprep.subr.mxu0 0.0
  %282 = vmatpush2.msra.mxu0 0.0
  %283 = vmatprep.subr.mxu0 0.0
  %284 = vmatpush2.msra.mxu0 0.0
  %285 = vmatprep.subr.mxu0 0.0
  %286 = vmatpush2.msra.mxu0 0.0
  %287 = vmatprep.subr.mxu0 0.0
  %288 = vmatpush2.msra.mxu0 0.0
  %289 = vmatprep.subr.mxu0 0.0
  %290 = vmatpush2.msra.mxu0 0.0
  %291 = vmatprep.subr.mxu0 0.0
  %292 = vmatpush2.msra.mxu0 0.0
  %293 = vmatprep.mubr.f32.mxu0 0.0
  %294 = vmatmul.mubr.f32.gmra.mxu0 %v225
  %v295 = vpop.f32.mrf.mxu0
  %v296 = vadd.f32 0.0, %v295
  %v297 = vpop.f32.mrf.mxu0
  %298 = vmatprep.mubr.f32.mxu0 0.0
  %299 = vmatmul.mubr.f32.gmra.mxu0 %v227
  %v300 = vpop.f32.mrf.mxu0
  %v301 = vadd.f32 0.0, %v300
  %v302 = vpop.f32.mrf.mxu0
  %303 = vdwg.mxu0
  %v304 = vadd.f32 %v212, %v296
  %v305 = vadd.f32 %v217, %v301
  %v306 = vrot.slane %v30, 1
  %v307 = vrot.slane %v31, 1
  %vm310 = vcmask 1046528
  %v311 = vsel %vm310, %v306, 0.0
  %v312 = vsel %vm310, %v307, 0.0
  %s313 = scalar_lea.vmem %s2, 96
  %v314 = vld [vmem:[%s313] sm:$0xff]
  %v315 = vld [vmem:[%s313 + $0x8] sm:$0xff]
  %v316 = vld [vmem:[%s313 + $0x10] sm:$0xff]
  %v317 = vld [vmem:[%s313 + $0x18] sm:$0xff]
  %v319 = vsel %vm57, %v311, 0
  %v322 = vsel %vm57, %v312, 0
  %324 = vmatprep.subr.mxu0 0.0
  %325 = vmatpush1.msra.mxu0 0.0
  %326 = vmatprep.subr.mxu0 0.0
  %327 = vmatpush1.msra.mxu0 0.0
  %328 = vmatprep.subr.mxu0 0.0
  %329 = vmatpush1.msra.mxu0 0.0
  %330 = vmatprep.subr.mxu0 0.0
  %331 = vmatpush1.msra.mxu0 0.0
  %332 = vmatprep.subr.mxu0 0.0
  %333 = vmatpush1.msra.mxu0 0.0
  %334 = vmatprep.subr.mxu0 0.0
  %335 = vmatpush1.msra.mxu0 0.0
  %336 = vmatprep.subr.mxu0 0.0
  %337 = vmatpush1.msra.mxu0 0.0
  %338 = vmatprep.subr.mxu0 0.0
  %339 = vmatpush1.msra.mxu0 0.0
  %340 = vmatprep.subr.mxu0 0.0
  %341 = vmatpush1.msra.mxu0 0.0
  %342 = vmatprep.subr.mxu0 0.0
  %343 = vmatpush1.msra.mxu0 0.0
  %344 = vmatprep.subr.mxu0 0.0
  %345 = vmatpush1.msra.mxu0 0.0
  %346 = vmatprep.subr.mxu0 0.0
  %347 = vmatpush1.msra.mxu0 0.0
  %348 = vmatprep.subr.mxu0 0.0
  %349 = vmatpush1.msra.mxu0 %v317
  %350 = vmatprep.subr.mxu0 0.0
  %351 = vmatpush1.msra.mxu0 %v316
  %352 = vmatprep.subr.mxu0 0.0
  %353 = vmatpush1.msra.mxu0 %v315
  %354 = vmatprep.subr.mxu0 0.0
  %355 = vmatpush1.msra.mxu0 %v314
  %356 = vmatprep.subr.mxu0 0.0
  %357 = vmatpush2.msra.mxu0 0.0
  %358 = vmatprep.subr.mxu0 0.0
  %359 = vmatpush2.msra.mxu0 0.0
  %360 = vmatprep.subr.mxu0 0.0
  %361 = vmatpush2.msra.mxu0 0.0
  %362 = vmatprep.subr.mxu0 0.0
  %363 = vmatpush2.msra.mxu0 0.0
  %364 = vmatprep.subr.mxu0 0.0
  %365 = vmatpush2.msra.mxu0 0.0
  %366 = vmatprep.subr.mxu0 0.0
  %367 = vmatpush2.msra.mxu0 0.0
  %368 = vmatprep.subr.mxu0 0.0
  %369 = vmatpush2.msra.mxu0 0.0
  %370 = vmatprep.subr.mxu0 0.0
  %371 = vmatpush2.msra.mxu0 0.0
  %372 = vmatprep.subr.mxu0 0.0
  %373 = vmatpush2.msra.mxu0 0.0
  %374 = vmatprep.subr.mxu0 0.0
  %375 = vmatpush2.msra.mxu0 0.0
  %376 = vmatprep.subr.mxu0 0.0
  %377 = vmatpush2.msra.mxu0 0.0
  %378 = vmatprep.subr.mxu0 0.0
  %379 = vmatpush2.msra.mxu0 0.0
  %380 = vmatprep.subr.mxu0 0.0
  %381 = vmatpush2.msra.mxu0 0.0
  %382 = vmatprep.subr.mxu0 0.0
  %383 = vmatpush2.msra.mxu0 0.0
  %384 = vmatprep.subr.mxu0 0.0
  %385 = vmatpush2.msra.mxu0 0.0
  %386 = vmatprep.subr.mxu0 0.0
  %387 = vmatpush2.msra.mxu0 0.0
  %388 = vmatprep.mubr.f32.mxu0 0.0
  %389 = vmatmul.mubr.f32.gmra.mxu0 %v319
  %v390 = vpop.f32.mrf.mxu0
  %v391 = vadd.f32 0.0, %v390
  %v392 = vpop.f32.mrf.mxu0
  %393 = vmatprep.mubr.f32.mxu0 0.0
  %394 = vmatmul.mubr.f32.gmra.mxu0 %v322
  %v395 = vpop.f32.mrf.mxu0
  %v396 = vadd.f32 0.0, %v395
  %v397 = vpop.f32.mrf.mxu0
  %398 = vdwg.mxu0
  %v399 = vadd.f32 %v304, %v391
  %v400 = vadd.f32 %v305, %v396
  %v401 = vrot.slane %v30, 2
  %v402 = vrot.slane %v31, 2
  %vm405 = vcmask 1045504
  %v406 = vsel %vm405, %v401, 0.0
  %v407 = vsel %vm405, %v402, 0.0
  %s408 = scalar_lea.vmem %s2, 128
  %v409 = vld [vmem:[%s408] sm:$0xff]
  %v410 = vld [vmem:[%s408 + $0x8] sm:$0xff]
  %v411 = vld [vmem:[%s408 + $0x10] sm:$0xff]
  %v412 = vld [vmem:[%s408 + $0x18] sm:$0xff]
  %v414 = vsel %vm57, %v406, 0
  %v417 = vsel %vm57, %v407, 0
  %419 = vmatprep.subr.mxu0 0.0
  %420 = vmatpush1.msra.mxu0 0.0
  %421 = vmatprep.subr.mxu0 0.0
  %422 = vmatpush1.msra.mxu0 0.0
  %423 = vmatprep.subr.mxu0 0.0
  %424 = vmatpush1.msra.mxu0 0.0
  %425 = vmatprep.subr.mxu0 0.0
  %426 = vmatpush1.msra.mxu0 0.0
  %427 = vmatprep.subr.mxu0 0.0
  %428 = vmatpush1.msra.mxu0 0.0
  %429 = vmatprep.subr.mxu0 0.0
  %430 = vmatpush1.msra.mxu0 0.0
  %431 = vmatprep.subr.mxu0 0.0
  %432 = vmatpush1.msra.mxu0 0.0
  %433 = vmatprep.subr.mxu0 0.0
  %434 = vmatpush1.msra.mxu0 0.0
  %435 = vmatprep.subr.mxu0 0.0
  %436 = vmatpush1.msra.mxu0 0.0
  %437 = vmatprep.subr.mxu0 0.0
  %438 = vmatpush1.msra.mxu0 0.0
  %439 = vmatprep.subr.mxu0 0.0
  %440 = vmatpush1.msra.mxu0 0.0
  %441 = vmatprep.subr.mxu0 0.0
  %442 = vmatpush1.msra.mxu0 0.0
  %443 = vmatprep.subr.mxu0 0.0
  %444 = vmatpush1.msra.mxu0 %v412
  %445 = vmatprep.subr.mxu0 0.0
  %446 = vmatpush1.msra.mxu0 %v411
  %447 = vmatprep.subr.mxu0 0.0
  %448 = vmatpush1.msra.mxu0 %v410
  %449 = vmatprep.subr.mxu0 0.0
  %450 = vmatpush1.msra.mxu0 %v409
  %451 = vmatprep.subr.mxu0 0.0
  %452 = vmatpush2.msra.mxu0 0.0
  %453 = vmatprep.subr.mxu0 0.0
  %454 = vmatpush2.msra.mxu0 0.0
  %455 = vmatprep.subr.mxu0 0.0
  %456 = vmatpush2.msra.mxu0 0.0
  %457 = vmatprep.subr.mxu0 0.0
  %458 = vmatpush2.msra.mxu0 0.0
  %459 = vmatprep.subr.mxu0 0.0
  %460 = vmatpush2.msra.mxu0 0.0
  %461 = vmatprep.subr.mxu0 0.0
  %462 = vmatpush2.msra.mxu0 0.0
  %463 = vmatprep.subr.mxu0 0.0
  %464 = vmatpush2.msra.mxu0 0.0
  %465 = vmatprep.subr.mxu0 0.0
  %466 = vmatpush2.msra.mxu0 0.0
  %467 = vmatprep.subr.mxu0 0.0
  %468 = vmatpush2.msra.mxu0 0.0
  %469 = vmatprep.subr.mxu0 0.0
  %470 = vmatpush2.msra.mxu0 0.0
  %471 = vmatprep.subr.mxu0 0.0
  %472 = vmatpush2.msra.mxu0 0.0
  %473 = vmatprep.subr.mxu0 0.0
  %474 = vmatpush2.msra.mxu0 0.0
  %475 = vmatprep.subr.mxu0 0.0
  %476 = vmatpush2.msra.mxu0 0.0
  %477 = vmatprep.subr.mxu0 0.0
  %478 = vmatpush2.msra.mxu0 0.0
  %479 = vmatprep.subr.mxu0 0.0
  %480 = vmatpush2.msra.mxu0 0.0
  %481 = vmatprep.subr.mxu0 0.0
  %482 = vmatpush2.msra.mxu0 0.0
  %483 = vmatprep.mubr.f32.mxu0 0.0
  %484 = vmatmul.mubr.f32.gmra.mxu0 %v414
  %v485 = vpop.f32.mrf.mxu0
  %v486 = vadd.f32 0.0, %v485
  %v487 = vpop.f32.mrf.mxu0
  %488 = vmatprep.mubr.f32.mxu0 0.0
  %489 = vmatmul.mubr.f32.gmra.mxu0 %v417
  %v490 = vpop.f32.mrf.mxu0
  %v491 = vadd.f32 0.0, %v490
  %v492 = vpop.f32.mrf.mxu0
  %493 = vdwg.mxu0
  %v494 = vadd.f32 %v399, %v486
  %v495 = vadd.f32 %v400, %v491
  %v496 = vld [vmem:[%s3] sm:$0x1]
  %v498 = vlaneseq
  %v499 = vshrl.u32 %v498, 7
  %v500 = vsub.s32 0, %v499
  %v501 = vrot.slane %v496, %v500
  %v503 = vmul.f32 %v494, %v501
  %v504 = vmul.f32 %v495, %v501
  %v505 = vld [vmem:[%s4] sm:$0x1]
  %v507 = vlaneseq
  %v508 = vshrl.u32 %v507, 7
  %v509 = vsub.s32 0, %v508
  %v510 = vrot.slane %v505, %v509
  %v512 = vadd.f32 %v503, %v510
  %v513 = vadd.f32 %v504, %v510
  %v514 = vmax.f32 %v512, 0.0
  %v515 = vmax.f32 %v513, 0.0
  %517 = vset.pattern.permute.xlu0 0
  %518 = vperm.xlu0 %517, %v29
  %v519 = vpop.permute.xlu0 %518
  %v521 = vmul.f32 %v514, %v519
  %v522 = vmul.f32 %v515, %v519
  %v525 = vrot.slane %v521, 6
  %v526 = vrot.slane %v522, 6
  %v529 = vsel %vm38, 0.0, %v525
  %v530 = vsel %vm38, 0.0, %v526
  %v531 = vld [vmem:[%s5] sm:$0xff]
  %v532 = vld [vmem:[%s5 + $0x8] sm:$0xff]
  %v533 = vld [vmem:[%s5 + $0x10] sm:$0xff]
  %v534 = vld [vmem:[%s5 + $0x18] sm:$0xff]
  %v535 = vrot.slane %v521, 7
  %v536 = vrot.slane %v522, 7
  %v539 = vsel %vm49, 0.0, %v535
  %v540 = vsel %vm49, 0.0, %v536
  %s541 = scalar_lea.vmem %s5, 32
  %v542 = vld [vmem:[%s541] sm:$0xff]
  %v543 = vld [vmem:[%s541 + $0x8] sm:$0xff]
  %v544 = vld [vmem:[%s541 + $0x10] sm:$0xff]
  %v545 = vld [vmem:[%s541 + $0x18] sm:$0xff]
  %v547 = vsel %vm57, %v539, 0
  %v550 = vsel %vm57, %v540, 0
  %552 = vmatprep.subr.mxu0 0.0
  %553 = vmatpush1.msra.mxu0 0.0
  %554 = vmatprep.subr.mxu0 0.0
  %555 = vmatpush1.msra.mxu0 0.0
  %556 = vmatprep.subr.mxu0 0.0
  %557 = vmatpush1.msra.mxu0 0.0
  %558 = vmatprep.subr.mxu0 0.0
  %559 = vmatpush1.msra.mxu0 0.0
  %560 = vmatprep.subr.mxu0 0.0
  %561 = vmatpush1.msra.mxu0 0.0
  %562 = vmatprep.subr.mxu0 0.0
  %563 = vmatpush1.msra.mxu0 0.0
  %564 = vmatprep.subr.mxu0 0.0
  %565 = vmatpush1.msra.mxu0 0.0
  %566 = vmatprep.subr.mxu0 0.0
  %567 = vmatpush1.msra.mxu0 0.0
  %568 = vmatprep.subr.mxu0 0.0
  %569 = vmatpush1.msra.mxu0 0.0
  %570 = vmatprep.subr.mxu0 0.0
  %571 = vmatpush1.msra.mxu0 0.0
  %572 = vmatprep.subr.mxu0 0.0
  %573 = vmatpush1.msra.mxu0 0.0
  %574 = vmatprep.subr.mxu0 0.0
  %575 = vmatpush1.msra.mxu0 0.0
  %576 = vmatprep.subr.mxu0 0.0
  %577 = vmatpush1.msra.mxu0 %v545
  %578 = vmatprep.subr.mxu0 0.0
  %579 = vmatpush1.msra.mxu0 %v544
  %580 = vmatprep.subr.mxu0 0.0
  %581 = vmatpush1.msra.mxu0 %v543
  %582 = vmatprep.subr.mxu0 0.0
  %583 = vmatpush1.msra.mxu0 %v542
  %584 = vmatprep.subr.mxu0 0.0
  %585 = vmatpush2.msra.mxu0 0.0
  %586 = vmatprep.subr.mxu0 0.0
  %587 = vmatpush2.msra.mxu0 0.0
  %588 = vmatprep.subr.mxu0 0.0
  %589 = vmatpush2.msra.mxu0 0.0
  %590 = vmatprep.subr.mxu0 0.0
  %591 = vmatpush2.msra.mxu0 0.0
  %592 = vmatprep.subr.mxu0 0.0
  %593 = vmatpush2.msra.mxu0 0.0
  %594 = vmatprep.subr.mxu0 0.0
  %595 = vmatpush2.msra.mxu0 0.0
  %596 = vmatprep.subr.mxu0 0.0
  %597 = vmatpush2.msra.mxu0 0.0
  %598 = vmatprep.subr.mxu0 0.0
  %599 = vmatpush2.msra.mxu0 0.0
  %600 = vmatprep.subr.mxu0 0.0
  %601 = vmatpush2.msra.mxu0 0.0
  %602 = vmatprep.subr.mxu0 0.0
  %603 = vmatpush2.msra.mxu0 0.0
  %604 = vmatprep.subr.mxu0 0.0
  %605 = vmatpush2.msra.mxu0 0.0
  %606 = vmatprep.subr.mxu0 0.0
  %607 = vmatpush2.msra.mxu0 0.0
  %608 = vmatprep.subr.mxu0 0.0
  %609 = vmatpush2.msra.mxu0 0.0
  %610 = vmatprep.subr.mxu0 0.0
  %611 = vmatpush2.msra.mxu0 0.0
  %612 = vmatprep.subr.mxu0 0.0
  %613 = vmatpush2.msra.mxu0 0.0
  %614 = vmatprep.subr.mxu0 0.0
  %615 = vmatpush2.msra.mxu0 0.0
  %616 = vmatprep.mubr.f32.mxu0 0.0
  %617 = vmatmul.mubr.f32.gmra.mxu0 %v547
  %v618 = vpop.f32.mrf.mxu0
  %v619 = vadd.f32 0.0, %v618
  %v620 = vpop.f32.mrf.mxu0
  %621 = vmatprep.mubr.f32.mxu0 0.0
  %622 = vmatmul.mubr.f32.gmra.mxu0 %v550
  %v623 = vpop.f32.mrf.mxu0
  %v624 = vadd.f32 0.0, %v623
  %v625 = vpop.f32.mrf.mxu0
  %626 = vdwg.mxu0
  %v628 = vsel %vm57, %v529, 0
  %v631 = vsel %vm57, %v530, 0
  %633 = vmatprep.subr.mxu0 0.0
  %634 = vmatpush1.msra.mxu0 0.0
  %635 = vmatprep.subr.mxu0 0.0
  %636 = vmatpush1.msra.mxu0 0.0
  %637 = vmatprep.subr.mxu0 0.0
  %638 = vmatpush1.msra.mxu0 0.0
  %639 = vmatprep.subr.mxu0 0.0
  %640 = vmatpush1.msra.mxu0 0.0
  %641 = vmatprep.subr.mxu0 0.0
  %642 = vmatpush1.msra.mxu0 0.0
  %643 = vmatprep.subr.mxu0 0.0
  %644 = vmatpush1.msra.mxu0 0.0
  %645 = vmatprep.subr.mxu0 0.0
  %646 = vmatpush1.msra.mxu0 0.0
  %647 = vmatprep.subr.mxu0 0.0
  %648 = vmatpush1.msra.mxu0 0.0
  %649 = vmatprep.subr.mxu0 0.0
  %650 = vmatpush1.msra.mxu0 0.0
  %651 = vmatprep.subr.mxu0 0.0
  %652 = vmatpush1.msra.mxu0 0.0
  %653 = vmatprep.subr.mxu0 0.0
  %654 = vmatpush1.msra.mxu0 0.0
  %655 = vmatprep.subr.mxu0 0.0
  %656 = vmatpush1.msra.mxu0 0.0
  %657 = vmatprep.subr.mxu0 0.0
  %658 = vmatpush1.msra.mxu0 %v534
  %659 = vmatprep.subr.mxu0 0.0
  %660 = vmatpush1.msra.mxu0 %v533
  %661 = vmatprep.subr.mxu0 0.0
  %662 = vmatpush1.msra.mxu0 %v532
  %663 = vmatprep.subr.mxu0 0.0
  %664 = vmatpush1.msra.mxu0 %v531
  %665 = vmatprep.subr.mxu0 0.0
  %666 = vmatpush2.msra.mxu0 0.0
  %667 = vmatprep.subr.mxu0 0.0
  %668 = vmatpush2.msra.mxu0 0.0
  %669 = vmatprep.subr.mxu0 0.0
  %670 = vmatpush2.msra.mxu0 0.0
  %671 = vmatprep.subr.mxu0 0.0
  %672 = vmatpush2.msra.mxu0 0.0
  %673 = vmatprep.subr.mxu0 0.0
  %674 = vmatpush2.msra.mxu0 0.0
  %675 = vmatprep.subr.mxu0 0.0
  %676 = vmatpush2.msra.mxu0 0.0
  %677 = vmatprep.subr.mxu0 0.0
  %678 = vmatpush2.msra.mxu0 0.0
  %679 = vmatprep.subr.mxu0 0.0
  %680 = vmatpush2.msra.mxu0 0.0
  %681 = vmatprep.subr.mxu0 0.0
  %682 = vmatpush2.msra.mxu0 0.0
  %683 = vmatprep.subr.mxu0 0.0
  %684 = vmatpush2.msra.mxu0 0.0
  %685 = vmatprep.subr.mxu0 0.0
  %686 = vmatpush2.msra.mxu0 0.0
  %687 = vmatprep.subr.mxu0 0.0
  %688 = vmatpush2.msra.mxu0 0.0
  %689 = vmatprep.subr.mxu0 0.0
  %690 = vmatpush2.msra.mxu0 0.0
  %691 = vmatprep.subr.mxu0 0.0
  %692 = vmatpush2.msra.mxu0 0.0
  %693 = vmatprep.subr.mxu0 0.0
  %694 = vmatpush2.msra.mxu0 0.0
  %695 = vmatprep.subr.mxu0 0.0
  %696 = vmatpush2.msra.mxu0 0.0
  %697 = vmatprep.mubr.f32.mxu0 0.0
  %698 = vmatmul.mubr.f32.gmra.mxu0 %v628
  %v699 = vpop.f32.mrf.mxu0
  %v700 = vadd.f32 %v619, %v699
  %v701 = vpop.f32.mrf.mxu0
  %702 = vmatprep.mubr.f32.mxu0 0.0
  %703 = vmatmul.mubr.f32.gmra.mxu0 %v631
  %v704 = vpop.f32.mrf.mxu0
  %v705 = vadd.f32 %v624, %v704
  %v706 = vpop.f32.mrf.mxu0
  %707 = vdwg.mxu0
  %s708 = scalar_lea.vmem %s5, 64
  %v709 = vld [vmem:[%s708] sm:$0xff]
  %v710 = vld [vmem:[%s708 + $0x8] sm:$0xff]
  %v711 = vld [vmem:[%s708 + $0x10] sm:$0xff]
  %v712 = vld [vmem:[%s708 + $0x18] sm:$0xff]
  %v713 = vsel %vm57, %v521, 0
  %v715 = vsel %vm57, %v522, 0
  %717 = vmatprep.subr.mxu0 0.0
  %718 = vmatpush1.msra.mxu0 0.0
  %719 = vmatprep.subr.mxu0 0.0
  %720 = vmatpush1.msra.mxu0 0.0
  %721 = vmatprep.subr.mxu0 0.0
  %722 = vmatpush1.msra.mxu0 0.0
  %723 = vmatprep.subr.mxu0 0.0
  %724 = vmatpush1.msra.mxu0 0.0
  %725 = vmatprep.subr.mxu0 0.0
  %726 = vmatpush1.msra.mxu0 0.0
  %727 = vmatprep.subr.mxu0 0.0
  %728 = vmatpush1.msra.mxu0 0.0
  %729 = vmatprep.subr.mxu0 0.0
  %730 = vmatpush1.msra.mxu0 0.0
  %731 = vmatprep.subr.mxu0 0.0
  %732 = vmatpush1.msra.mxu0 0.0
  %733 = vmatprep.subr.mxu0 0.0
  %734 = vmatpush1.msra.mxu0 0.0
  %735 = vmatprep.subr.mxu0 0.0
  %736 = vmatpush1.msra.mxu0 0.0
  %737 = vmatprep.subr.mxu0 0.0
  %738 = vmatpush1.msra.mxu0 0.0
  %739 = vmatprep.subr.mxu0 0.0
  %740 = vmatpush1.msra.mxu0 0.0
  %741 = vmatprep.subr.mxu0 0.0
  %742 = vmatpush1.msra.mxu0 %v712
  %743 = vmatprep.subr.mxu0 0.0
  %744 = vmatpush1.msra.mxu0 %v711
  %745 = vmatprep.subr.mxu0 0.0
  %746 = vmatpush1.msra.mxu0 %v710
  %747 = vmatprep.subr.mxu0 0.0
  %748 = vmatpush1.msra.mxu0 %v709
  %749 = vmatprep.subr.mxu0 0.0
  %750 = vmatpush2.msra.mxu0 0.0
  %751 = vmatprep.subr.mxu0 0.0
  %752 = vmatpush2.msra.mxu0 0.0
  %753 = vmatprep.subr.mxu0 0.0
  %754 = vmatpush2.msra.mxu0 0.0
  %755 = vmatprep.subr.mxu0 0.0
  %756 = vmatpush2.msra.mxu0 0.0
  %757 = vmatprep.subr.mxu0 0.0
  %758 = vmatpush2.msra.mxu0 0.0
  %759 = vmatprep.subr.mxu0 0.0
  %760 = vmatpush2.msra.mxu0 0.0
  %761 = vmatprep.subr.mxu0 0.0
  %762 = vmatpush2.msra.mxu0 0.0
  %763 = vmatprep.subr.mxu0 0.0
  %764 = vmatpush2.msra.mxu0 0.0
  %765 = vmatprep.subr.mxu0 0.0
  %766 = vmatpush2.msra.mxu0 0.0
  %767 = vmatprep.subr.mxu0 0.0
  %768 = vmatpush2.msra.mxu0 0.0
  %769 = vmatprep.subr.mxu0 0.0
  %770 = vmatpush2.msra.mxu0 0.0
  %771 = vmatprep.subr.mxu0 0.0
  %772 = vmatpush2.msra.mxu0 0.0
  %773 = vmatprep.subr.mxu0 0.0
  %774 = vmatpush2.msra.mxu0 0.0
  %775 = vmatprep.subr.mxu0 0.0
  %776 = vmatpush2.msra.mxu0 0.0
  %777 = vmatprep.subr.mxu0 0.0
  %778 = vmatpush2.msra.mxu0 0.0
  %779 = vmatprep.subr.mxu0 0.0
  %780 = vmatpush2.msra.mxu0 0.0
  %781 = vmatprep.mubr.f32.mxu0 0.0
  %782 = vmatmul.mubr.f32.gmra.mxu0 %v713
  %v783 = vpop.f32.mrf.mxu0
  %v784 = vadd.f32 0.0, %v783
  %v785 = vpop.f32.mrf.mxu0
  %786 = vmatprep.mubr.f32.mxu0 0.0
  %787 = vmatmul.mubr.f32.gmra.mxu0 %v715
  %v788 = vpop.f32.mrf.mxu0
  %v789 = vadd.f32 0.0, %v788
  %v790 = vpop.f32.mrf.mxu0
  %791 = vdwg.mxu0
  %v792 = vadd.f32 %v700, %v784
  %v793 = vadd.f32 %v705, %v789
  %v794 = vrot.slane %v521, 1
  %v795 = vrot.slane %v522, 1
  %v798 = vsel %vm310, %v794, 0.0
  %v799 = vsel %vm310, %v795, 0.0
  %s800 = scalar_lea.vmem %s5, 96
  %v801 = vld [vmem:[%s800] sm:$0xff]
  %v802 = vld [vmem:[%s800 + $0x8] sm:$0xff]
  %v803 = vld [vmem:[%s800 + $0x10] sm:$0xff]
  %v804 = vld [vmem:[%s800 + $0x18] sm:$0xff]
  %v806 = vsel %vm57, %v798, 0
  %v809 = vsel %vm57, %v799, 0
  %811 = vmatprep.subr.mxu0 0.0
  %812 = vmatpush1.msra.mxu0 0.0
  %813 = vmatprep.subr.mxu0 0.0
  %814 = vmatpush1.msra.mxu0 0.0
  %815 = vmatprep.subr.mxu0 0.0
  %816 = vmatpush1.msra.mxu0 0.0
  %817 = vmatprep.subr.mxu0 0.0
  %818 = vmatpush1.msra.mxu0 0.0
  %819 = vmatprep.subr.mxu0 0.0
  %820 = vmatpush1.msra.mxu0 0.0
  %821 = vmatprep.subr.mxu0 0.0
  %822 = vmatpush1.msra.mxu0 0.0
  %823 = vmatprep.subr.mxu0 0.0
  %824 = vmatpush1.msra.mxu0 0.0
  %825 = vmatprep.subr.mxu0 0.0
  %826 = vmatpush1.msra.mxu0 0.0
  %827 = vmatprep.subr.mxu0 0.0
  %828 = vmatpush1.msra.mxu0 0.0
  %829 = vmatprep.subr.mxu0 0.0
  %830 = vmatpush1.msra.mxu0 0.0
  %831 = vmatprep.subr.mxu0 0.0
  %832 = vmatpush1.msra.mxu0 0.0
  %833 = vmatprep.subr.mxu0 0.0
  %834 = vmatpush1.msra.mxu0 0.0
  %835 = vmatprep.subr.mxu0 0.0
  %836 = vmatpush1.msra.mxu0 %v804
  %837 = vmatprep.subr.mxu0 0.0
  %838 = vmatpush1.msra.mxu0 %v803
  %839 = vmatprep.subr.mxu0 0.0
  %840 = vmatpush1.msra.mxu0 %v802
  %841 = vmatprep.subr.mxu0 0.0
  %842 = vmatpush1.msra.mxu0 %v801
  %843 = vmatprep.subr.mxu0 0.0
  %844 = vmatpush2.msra.mxu0 0.0
  %845 = vmatprep.subr.mxu0 0.0
  %846 = vmatpush2.msra.mxu0 0.0
  %847 = vmatprep.subr.mxu0 0.0
  %848 = vmatpush2.msra.mxu0 0.0
  %849 = vmatprep.subr.mxu0 0.0
  %850 = vmatpush2.msra.mxu0 0.0
  %851 = vmatprep.subr.mxu0 0.0
  %852 = vmatpush2.msra.mxu0 0.0
  %853 = vmatprep.subr.mxu0 0.0
  %854 = vmatpush2.msra.mxu0 0.0
  %855 = vmatprep.subr.mxu0 0.0
  %856 = vmatpush2.msra.mxu0 0.0
  %857 = vmatprep.subr.mxu0 0.0
  %858 = vmatpush2.msra.mxu0 0.0
  %859 = vmatprep.subr.mxu0 0.0
  %860 = vmatpush2.msra.mxu0 0.0
  %861 = vmatprep.subr.mxu0 0.0
  %862 = vmatpush2.msra.mxu0 0.0
  %863 = vmatprep.subr.mxu0 0.0
  %864 = vmatpush2.msra.mxu0 0.0
  %865 = vmatprep.subr.mxu0 0.0
  %866 = vmatpush2.msra.mxu0 0.0
  %867 = vmatprep.subr.mxu0 0.0
  %868 = vmatpush2.msra.mxu0 0.0
  %869 = vmatprep.subr.mxu0 0.0
  %870 = vmatpush2.msra.mxu0 0.0
  %871 = vmatprep.subr.mxu0 0.0
  %872 = vmatpush2.msra.mxu0 0.0
  %873 = vmatprep.subr.mxu0 0.0
  %874 = vmatpush2.msra.mxu0 0.0
  %875 = vmatprep.mubr.f32.mxu0 0.0
  %876 = vmatmul.mubr.f32.gmra.mxu0 %v806
  %v877 = vpop.f32.mrf.mxu0
  %v878 = vadd.f32 0.0, %v877
  %v879 = vpop.f32.mrf.mxu0
  %880 = vmatprep.mubr.f32.mxu0 0.0
  %881 = vmatmul.mubr.f32.gmra.mxu0 %v809
  %v882 = vpop.f32.mrf.mxu0
  %v883 = vadd.f32 0.0, %v882
  %v884 = vpop.f32.mrf.mxu0
  %885 = vdwg.mxu0
  %v886 = vadd.f32 %v792, %v878
  %v887 = vadd.f32 %v793, %v883
  %v888 = vrot.slane %v521, 2
  %v889 = vrot.slane %v522, 2
  %v892 = vsel %vm405, %v888, 0.0
  %v893 = vsel %vm405, %v889, 0.0
  %s894 = scalar_lea.vmem %s5, 128
  %v895 = vld [vmem:[%s894] sm:$0xff]
  %v896 = vld [vmem:[%s894 + $0x8] sm:$0xff]
  %v897 = vld [vmem:[%s894 + $0x10] sm:$0xff]
  %v898 = vld [vmem:[%s894 + $0x18] sm:$0xff]
  %v900 = vsel %vm57, %v892, 0
  %v903 = vsel %vm57, %v893, 0
  %905 = vmatprep.subr.mxu0 0.0
  %906 = vmatpush1.msra.mxu0 0.0
  %907 = vmatprep.subr.mxu0 0.0
  %908 = vmatpush1.msra.mxu0 0.0
  %909 = vmatprep.subr.mxu0 0.0
  %910 = vmatpush1.msra.mxu0 0.0
  %911 = vmatprep.subr.mxu0 0.0
  %912 = vmatpush1.msra.mxu0 0.0
  %913 = vmatprep.subr.mxu0 0.0
  %914 = vmatpush1.msra.mxu0 0.0
  %915 = vmatprep.subr.mxu0 0.0
  %916 = vmatpush1.msra.mxu0 0.0
  %917 = vmatprep.subr.mxu0 0.0
  %918 = vmatpush1.msra.mxu0 0.0
  %919 = vmatprep.subr.mxu0 0.0
  %920 = vmatpush1.msra.mxu0 0.0
  %921 = vmatprep.subr.mxu0 0.0
  %922 = vmatpush1.msra.mxu0 0.0
  %923 = vmatprep.subr.mxu0 0.0
  %924 = vmatpush1.msra.mxu0 0.0
  %925 = vmatprep.subr.mxu0 0.0
  %926 = vmatpush1.msra.mxu0 0.0
  %927 = vmatprep.subr.mxu0 0.0
  %928 = vmatpush1.msra.mxu0 0.0
  %929 = vmatprep.subr.mxu0 0.0
  %930 = vmatpush1.msra.mxu0 %v898
  %931 = vmatprep.subr.mxu0 0.0
  %932 = vmatpush1.msra.mxu0 %v897
  %933 = vmatprep.subr.mxu0 0.0
  %934 = vmatpush1.msra.mxu0 %v896
  %935 = vmatprep.subr.mxu0 0.0
  %936 = vmatpush1.msra.mxu0 %v895
  %937 = vmatprep.subr.mxu0 0.0
  %938 = vmatpush2.msra.mxu0 0.0
  %939 = vmatprep.subr.mxu0 0.0
  %940 = vmatpush2.msra.mxu0 0.0
  %941 = vmatprep.subr.mxu0 0.0
  %942 = vmatpush2.msra.mxu0 0.0
  %943 = vmatprep.subr.mxu0 0.0
  %944 = vmatpush2.msra.mxu0 0.0
  %945 = vmatprep.subr.mxu0 0.0
  %946 = vmatpush2.msra.mxu0 0.0
  %947 = vmatprep.subr.mxu0 0.0
  %948 = vmatpush2.msra.mxu0 0.0
  %949 = vmatprep.subr.mxu0 0.0
  %950 = vmatpush2.msra.mxu0 0.0
  %951 = vmatprep.subr.mxu0 0.0
  %952 = vmatpush2.msra.mxu0 0.0
  %953 = vmatprep.subr.mxu0 0.0
  %954 = vmatpush2.msra.mxu0 0.0
  %955 = vmatprep.subr.mxu0 0.0
  %956 = vmatpush2.msra.mxu0 0.0
  %957 = vmatprep.subr.mxu0 0.0
  %958 = vmatpush2.msra.mxu0 0.0
  %959 = vmatprep.subr.mxu0 0.0
  %960 = vmatpush2.msra.mxu0 0.0
  %961 = vmatprep.subr.mxu0 0.0
  %962 = vmatpush2.msra.mxu0 0.0
  %963 = vmatprep.subr.mxu0 0.0
  %964 = vmatpush2.msra.mxu0 0.0
  %965 = vmatprep.subr.mxu0 0.0
  %966 = vmatpush2.msra.mxu0 0.0
  %967 = vmatprep.subr.mxu0 0.0
  %968 = vmatpush2.msra.mxu0 0.0
  %969 = vmatprep.mubr.f32.mxu0 0.0
  %970 = vmatmul.mubr.f32.gmra.mxu0 %v900
  %v971 = vpop.f32.mrf.mxu0
  %v972 = vadd.f32 0.0, %v971
  %v973 = vpop.f32.mrf.mxu0
  %974 = vmatprep.mubr.f32.mxu0 0.0
  %975 = vmatmul.mubr.f32.gmra.mxu0 %v903
  %v976 = vpop.f32.mrf.mxu0
  %v977 = vadd.f32 0.0, %v976
  %v978 = vpop.f32.mrf.mxu0
  %979 = vdwg.mxu0
  %v980 = vadd.f32 %v886, %v972
  %v981 = vadd.f32 %v887, %v977
  %v982 = vld [vmem:[%s6] sm:$0x1]
  %v984 = vlaneseq
  %v985 = vshrl.u32 %v984, 7
  %v986 = vsub.s32 0, %v985
  %v987 = vrot.slane %v982, %v986
  %v989 = vmul.f32 %v980, %v987
  %v990 = vmul.f32 %v981, %v987
  %v991 = vld [vmem:[%s7] sm:$0x1]
  %v993 = vlaneseq
  %v994 = vshrl.u32 %v993, 7
  %v995 = vsub.s32 0, %v994
  %v996 = vrot.slane %v991, %v995
  %v998 = vadd.f32 %v989, %v996
  %v999 = vadd.f32 %v990, %v996
  %v1000 = vmax.f32 %v998, 0.0
  %v1001 = vmax.f32 %v999, 0.0
  %v1002 = vmul.f32 %v1000, %v519
  %v1003 = vmul.f32 %v1001, %v519
  %1004 = vst.msk [vmem:[%s8] sm:$0xff] %vm57, %v1002
  %1005 = vst.msk [vmem:[%s8 + $0x8] sm:$0xff] %vm57, %v1003
  // Predicated region
  $region34: #{_lambda_.8} parent=0 // pred_check
    _
  $region35: #{_lambda_.8} parent=0 // pred_check_branch
    %1007 = sbr.rel (0) target = $region37
  $region36: #{_lambda_.8} parent=0 // pred_region
    _
  $region37: #{_lambda_.8} parent=0 // pred_fallthru
    _
  // Predicated region
  $region38: #{_lambda_.8} parent=0 // pred_check
    _
  $region39: #{_lambda_.8} parent=0 // pred_check_branch
    %1009 = sbr.rel (0) target = $region41
  $region40: #{_lambda_.8} parent=0 // pred_region
    _
  $region41: #{_lambda_.8} parent=0 // pred_fallthru
    _

// kernel: _lambda_.10
$region0: #{_lambda_.10}
  #allocation0 [shape = 'u32[]', space=smem, size = 0x4, offset = 0x4, fixed_abs, tag = 'smem constant byte address 0x4 - core index']
  #allocation1 [shape = 'u32[144,128]{1,0:T(1,128)}', space=vmem, size = 0x12000, scoped, tag = 'internal scratch']
  #allocation2 [shape = 'f32[2,16]{1,0:T(2,128)}', space=vmem, size = 0x400, scoped, tag = 'scratch operand']
  #allocation3 [shape = 'f32[2,16]{1,0:T(2,128)}', space=vmem, size = 0x400, scoped, tag = 'scratch operand']
  #allocation4 [shape = 'f32[2,16]{1,0:T(2,128)}', space=vmem, size = 0x400, scoped, tag = 'scratch operand']
  #allocation5 [shape = 'f32[2,16]{1,0:T(2,128)}', space=vmem, size = 0x400, scoped, tag = 'scratch operand']
  %s0 = inlined_call_operand.vmem [shape: s32[2,1], index: 0, kind: input, shape index: {}]
  %s1 = inlined_call_operand.vmem [shape: f32[8,2,64], index: 1, kind: input, shape index: {}]
  %s2 = inlined_call_operand.vmem [shape: f32[8,2,64], index: 2, kind: input, shape index: {}]
  %s3 = inlined_call_operand.vmem [shape: f32[16,64], index: 3, kind: input, shape index: {}]
  %s4 = inlined_call_operand.vmem [shape: f32[16,64], index: 4, kind: input, shape index: {}]
  %s5 = inlined_call_operand.vmem [shape: f32[8,2,16], index: 5, kind: output, shape index: {0}]
  %s6 = inlined_call_operand.vmem [shape: f32[8,2,16], index: 6, kind: output, shape index: {1}]
  %7 = xla_tuple %s5, %s6
  %s8 = sld [smem:[#allocation0]]
  $region65: #{_lambda_.10} parent=0
    _
  %s10 = ssub.s32 1, %s8
  %s11 = scalar_select 0, %s10, %s8
  loop: start=0, step=1, limit=10
  $region2: #{_lambda_.10} parent=0 // loop_pre_header
    _
  $region3: #{_lambda_.10} parent=0 // loop_header
    %s13 = sphi 0, %s17
    %p14 = scmp.ge.s32.totalorder %s13, 10
    %s21 = sphi 0, %s21
    %s23 = sphi 0, %s21
    %s24 = sphi 0, %s23
    %s38 = sphi 0, %s24
    %s44 = sphi 0, %s46
    %s47 = sphi 0, %s44
    %s48 = sphi 0, %s47
    %s64 = sphi 0, %s48
    %s72 = sphi 0, %s74
    %s75 = sphi 0, %s72
    %s76 = sphi 0, %s75
    %s92 = sphi 0, %s76
    %s96 = sphi 0, %s96
    %s98 = sphi 0, %s96
    %s99 = sphi 0, %s98
    %s113 = sphi 0, %s99
    %s117 = sphi 0, %s117
    %s119 = sphi 0, %s117
    %s120 = sphi 0, %s119
    %s134 = sphi 0, %s120
    %s140 = sphi 0, %s142
    %s143 = sphi 0, %s140
    %s144 = sphi 0, %s143
    %s160 = sphi 0, %s144
    %s168 = sphi 0, %s170
    %s171 = sphi 0, %s168
    %s172 = sphi 0, %s171
    %s188 = sphi 0, %s172
  $region4: #{_lambda_.10} parent=0 // loop_header_branch
    %16 = sbr.rel (%p14) target = $region8
  $region5: #{_lambda_.10} parent=0 // loop_body
    %s18 = ssub.s32 %s13, 1
    %s19 = ssub.s32 %s13, 2
    %s20 = sadd.s32 %s13, 1
    %s22 = sadd.s32 %s21, 1
    %p25 = scmp.eq.s32.totalorder %s13, 7
    %p26 = scmp.ne.s32.totalorder %s21, %s23
    %p27 = scmp.eq.s32.totalorder %s13, 0
    %p28 = por %p26, %p27
    %p29 = scmp.ne.s32.totalorder %s21, %s23
    %p30 = scmp.eq.s32.totalorder %s18, 7
    %p31 = por %p29, %p30
    %p32 = scmp.ne.s32.totalorder %s23, %s24
    %p33 = scmp.eq.s32.totalorder %s18, 0
    %p34 = por %p32, %p33
    %p35 = scmp.ne.s32.totalorder %s23, %s24
    %p36 = scmp.eq.s32.totalorder %s19, 7
    %p37 = por %p35, %p36
    %p39 = scmp.ne.s32.totalorder %s24, %s38
    %p40 = scmp.eq.s32.totalorder %s19, 0
    %p41 = por %p39, %p40
    %s42 = ssub.s32 %s13, %s20
    %p43 = scmp.eq.s32.totalorder %s42, 0
    %s45 = sadd.s32 %s44, 1
    %s46 = scalar_select %p43, %s44, %s45
    %p49 = pneg %p43
    %p50 = scmp.eq.s32.totalorder %s13, 7
    %p51 = por %p49, %p50
    %p52 = scmp.ne.s32.totalorder %s44, %s47
    %p53 = scmp.eq.s32.totalorder %s13, 0
    %p54 = por %p52, %p53
    %p55 = scmp.ne.s32.totalorder %s44, %s47
    %p56 = scmp.eq.s32.totalorder %s18, 7
    %p57 = por %p55, %p56
    %p58 = scmp.ne.s32.totalorder %s47, %s48
    %p59 = scmp.eq.s32.totalorder %s18, 0
    %p60 = por %p58, %p59
    %p61 = scmp.ne.s32.totalorder %s47, %s48
    %p62 = scmp.eq.s32.totalorder %s19, 7
    %p63 = por %p61, %p62
    %p65 = scmp.ne.s32.totalorder %s48, %s64
    %p66 = scmp.eq.s32.totalorder %s19, 0
    %p67 = por %p65, %p66
    %s68 = ssub.s32 7, %s13
    %s69 = ssub.s32 7, %s20
    %s70 = ssub.s32 %s68, %s69
    %p71 = scmp.eq.s32.totalorder %s70, 0
    %s73 = sadd.s32 %s72, 1
    %s74 = scalar_select %p71, %s72, %s73
    %p77 = pneg %p71
    %p78 = scmp.eq.s32.totalorder %s13, 7
    %p79 = por %p77, %p78
    %p80 = scmp.ne.s32.totalorder %s72, %s75
    %p81 = scmp.eq.s32.totalorder %s13, 0
    %p82 = por %p80, %p81
    %p83 = scmp.ne.s32.totalorder %s72, %s75
    %p84 = scmp.eq.s32.totalorder %s18, 7
    %p85 = por %p83, %p84
    %p86 = scmp.ne.s32.totalorder %s75, %s76
    %p87 = scmp.eq.s32.totalorder %s18, 0
    %p88 = por %p86, %p87
    %p89 = scmp.ne.s32.totalorder %s75, %s76
    %p90 = scmp.eq.s32.totalorder %s19, 7
    %p91 = por %p89, %p90
    %p93 = scmp.ne.s32.totalorder %s76, %s92
    %p94 = scmp.eq.s32.totalorder %s19, 0
    %p95 = por %p93, %p94
    %s97 = sadd.s32 %s96, 1
    %p100 = scmp.eq.s32.totalorder %s13, 7
    %p101 = scmp.ne.s32.totalorder %s96, %s98
    %p102 = scmp.eq.s32.totalorder %s13, 0
    %p103 = por %p101, %p102
    %p104 = scmp.ne.s32.totalorder %s96, %s98
    %p105 = scmp.eq.s32.totalorder %s18, 7
    %p106 = por %p104, %p105
    %p107 = scmp.ne.s32.totalorder %s98, %s99
    %p108 = scmp.eq.s32.totalorder %s18, 0
    %p109 = por %p107, %p108
    %p110 = scmp.ne.s32.totalorder %s98, %s99
    %p111 = scmp.eq.s32.totalorder %s19, 7
    %p112 = por %p110, %p111
    %p114 = scmp.ne.s32.totalorder %s99, %s113
    %p115 = scmp.eq.s32.totalorder %s19, 0
    %p116 = por %p114, %p115
    %s118 = sadd.s32 %s117, 1
    %p121 = scmp.eq.s32.totalorder %s13, 7
    %p122 = scmp.ne.s32.totalorder %s117, %s119
    %p123 = scmp.eq.s32.totalorder %s13, 0
    %p124 = por %p122, %p123
    %p125 = scmp.ne.s32.totalorder %s117, %s119
    %p126 = scmp.eq.s32.totalorder %s18, 7
    %p127 = por %p125, %p126
    %p128 = scmp.ne.s32.totalorder %s119, %s120
    %p129 = scmp.eq.s32.totalorder %s18, 0
    %p130 = por %p128, %p129
    %p131 = scmp.ne.s32.totalorder %s119, %s120
    %p132 = scmp.eq.s32.totalorder %s19, 7
    %p133 = por %p131, %p132
    %p135 = scmp.ne.s32.totalorder %s120, %s134
    %p136 = scmp.eq.s32.totalorder %s19, 0
    %p137 = por %p135, %p136
    %s138 = ssub.s32 %s13, %s20
    %p139 = scmp.eq.s32.totalorder %s138, 0
    %s141 = sadd.s32 %s140, 1
    %s142 = scalar_select %p139, %s140, %s141
    %p145 = pneg %p139
    %p146 = scmp.eq.s32.totalorder %s13, 7
    %p147 = por %p145, %p146
    %p148 = scmp.ne.s32.totalorder %s140, %s143
    %p149 = scmp.eq.s32.totalorder %s13, 0
    %p150 = por %p148, %p149
    %p151 = scmp.ne.s32.totalorder %s140, %s143
    %p152 = scmp.eq.s32.totalorder %s18, 7
    %p153 = por %p151, %p152
    %p154 = scmp.ne.s32.totalorder %s143, %s144
    %p155 = scmp.eq.s32.totalorder %s18, 0
    %p156 = por %p154, %p155
    %p157 = scmp.ne.s32.totalorder %s143, %s144
    %p158 = scmp.eq.s32.totalorder %s19, 7
    %p159 = por %p157, %p158
    %p161 = scmp.ne.s32.totalorder %s144, %s160
    %p162 = scmp.eq.s32.totalorder %s19, 0
    %p163 = por %p161, %p162
    %s164 = ssub.s32 7, %s13
    %s165 = ssub.s32 7, %s20
    %s166 = ssub.s32 %s164, %s165
    %p167 = scmp.eq.s32.totalorder %s166, 0
    %s169 = sadd.s32 %s168, 1
    %s170 = scalar_select %p167, %s168, %s169
    %p173 = pneg %p167
    %p174 = scmp.eq.s32.totalorder %s13, 7
    %p175 = por %p173, %p174
    %p176 = scmp.ne.s32.totalorder %s168, %s171
    %p177 = scmp.eq.s32.totalorder %s13, 0
    %p178 = por %p176, %p177
    %p179 = scmp.ne.s32.totalorder %s168, %s171
    %p180 = scmp.eq.s32.totalorder %s18, 7
    %p181 = por %p179, %p180
    %p182 = scmp.ne.s32.totalorder %s171, %s172
    %p183 = scmp.eq.s32.totalorder %s18, 0
    %p184 = por %p182, %p183
    %p185 = scmp.ne.s32.totalorder %s171, %s172
    %p186 = scmp.eq.s32.totalorder %s19, 7
    %p187 = por %p185, %p186
    %p189 = scmp.ne.s32.totalorder %s172, %s188
    %p190 = scmp.eq.s32.totalorder %s19, 0
    %p191 = por %p189, %p190
    %p192 = scmp.le.s32.totalorder 1, %s13
    %p193 = scmp.lt.s32.totalorder %s13, 9
    %p194 = pnand %p192, %p193
    %p195 = pneg %p194
    // Predicated region
    $region9: #{_lambda_.10} parent=5 // pred_check
      _
    $region10: #{_lambda_.10} parent=5 // pred_check_branch
      %197 = sbr.rel (%p194) target = $region12
    $region11: #{_lambda_.10} parent=5 // pred_region
      %s198 = ssub.s32 %s13, 1
      // Predicated region
      $region13: #{_lambda_.10} parent=11 // pred_check
        %p199 = pneg %p34
      $region14: #{_lambda_.10} parent=11 // pred_check_branch
        %201 = sbr.rel (%p199) target = $region16
      $region15: #{_lambda_.10} parent=11 // pred_region
        _
      $region16: #{_lambda_.10} parent=11 // pred_fallthru
        _
      // Predicated region
      $region17: #{_lambda_.10} parent=11 // pred_check
        %p202 = pneg %p109
      $region18: #{_lambda_.10} parent=11 // pred_check_branch
        %204 = sbr.rel (%p202) target = $region20
      $region19: #{_lambda_.10} parent=11 // pred_region
        _
      $region20: #{_lambda_.10} parent=11 // pred_fallthru
        _
      // Predicated region
      $region21: #{_lambda_.10} parent=11 // pred_check
        %p205 = pneg %p130
      $region22: #{_lambda_.10} parent=11 // pred_check_branch
        %207 = sbr.rel (%p205) target = $region24
      $region23: #{_lambda_.10} parent=11 // pred_region
        _
      $region24: #{_lambda_.10} parent=11 // pred_fallthru
        _
    $region12: #{_lambda_.10} parent=5 // pred_fallthru
      _
    %p208 = scmp.lt.s32.totalorder %s13, 8
    // Predicated region
    $region25: #{_lambda_.10} parent=5 // pred_check
      %p209 = pneg %p208
    $region26: #{_lambda_.10} parent=5 // pred_check_branch
      %211 = sbr.rel (%p209) target = $region28
    $region27: #{_lambda_.10} parent=5 // pred_region
      // Predicated region
      $region29: #{_lambda_.10} parent=27 // pred_check
        %p212 = pneg %p54
      $region30: #{_lambda_.10} parent=27 // pred_check_branch
        %214 = sbr.rel (%p212) target = $region32
      $region31: #{_lambda_.10} parent=27 // pred_region
        %p215 = scmp.lt.s32.totalorder %s13, 7
        %s216 = scalar_select %p215, %s13, 7
        %s217 = smul.addr %s216, 2
        %s218 = scalar_lea.vmem %s1, %s217
      $region32: #{_lambda_.10} parent=27 // pred_fallthru
        _
      // Predicated region
      $region33: #{_lambda_.10} parent=27 // pred_check
        %p219 = pneg %p82
      $region34: #{_lambda_.10} parent=27 // pred_check_branch
        %221 = sbr.rel (%p219) target = $region36
      $region35: #{_lambda_.10} parent=27 // pred_region
        %s222 = ssub.s32 7, %s13
        %p223 = scmp.lt.s32.totalorder %s222, 7
        %s224 = scalar_select %p223, %s222, 7
        %s225 = smul.addr %s224, 2
        %s226 = scalar_lea.vmem %s2, %s225
        %s227 = ssub.s32 7, %s13
      $region36: #{_lambda_.10} parent=27 // pred_fallthru
        _
    $region28: #{_lambda_.10} parent=5 // pred_fallthru
      _
    %p228 = scmp.le.s32.totalorder 1, %s13
    %p229 = scmp.lt.s32.totalorder %s13, 9
    %p230 = pnand %p228, %p229
    %p231 = pneg %p230
    // Predicated region
    $region37: #{_lambda_.10} parent=5 // pred_check
      _
    $region38: #{_lambda_.10} parent=5 // pred_check_branch
      %233 = sbr.rel (%p230) target = $region40
    $region39: #{_lambda_.10} parent=5 // pred_region
      %s234 = ssub.s32 %s13, 1
      %p235 = pneg %p34
      %p236 = pneg %p31
      %p237 = scmp.lt.s32.totalorder %s18, 7
      %s238 = scalar_select %p237, %s18, 7
      %s239 = smul.addr %s238, 2
      %s240 = scalar_lea.vmem %s1, %s239
      %p241 = pneg %p60
      %p242 = pneg %p57
      %s243 = ssub.s32 7, %s18
      %p244 = scmp.lt.s32.totalorder %s243, 7
      %s245 = scalar_select %p244, %s243, 7
      %s246 = smul.addr %s245, 2
      %s247 = scalar_lea.vmem %s2, %s246
      %p248 = pneg %p88
      %p249 = pneg %p85
      %p250 = pneg %p109
      %p251 = pneg %p106
      %p252 = pneg %p130
      %p253 = pneg %p127
      %p254 = pneg %p156
      %p255 = pneg %p153
      %p256 = scmp.lt.s32.totalorder %s18, 7
      %s257 = scalar_select %p256, %s18, 7
      %s258 = smul.addr %s257, 2
      %s259 = scalar_lea.vmem %s5, %s258
      %p260 = pneg %p184
      %p261 = pneg %p181
      %s262 = ssub.s32 7, %s18
      %p263 = scmp.lt.s32.totalorder %s262, 7
      %s264 = scalar_select %p263, %s262, 7
      %s265 = smul.addr %s264, 2
      %s266 = scalar_lea.vmem %s6, %s265
      %p267 = scmp.lt.s32.totalorder %s18, 7
      %s268 = scalar_select %p267, %s18, 7
      %s269 = smul.addr %s268, 2
      %s270 = scalar_lea.vmem %s1, %s269
      %s271 = ssub.s32 7, %s18
      %p272 = scmp.lt.s32.totalorder %s271, 7
      %s273 = scalar_select %p272, %s271, 7
      %s274 = smul.addr %s273, 2
      %s275 = scalar_lea.vmem %s2, %s274
      %s276 = ssub.s32 7, %s18
      %p277 = scmp.lt.s32.totalorder %s18, 7
      %s278 = scalar_select %p277, %s18, 7
      %s279 = smul.addr %s278, 2
      %s280 = scalar_lea.vmem %s5, %s279
      %s281 = ssub.s32 7, %s18
      %p282 = scmp.lt.s32.totalorder %s281, 7
      %s283 = scalar_select %p282, %s281, 7
      %s284 = smul.addr %s283, 2
      %s285 = scalar_lea.vmem %s6, %s284
      %s286 = ssub.s32 7, %s18
      %p287 = scmp.eq.s32.totalorder %s18, 0
      // Predicated region
      $region41: #{_lambda_.10} parent=39 // pred_check
        %p288 = pneg %p287
      $region42: #{_lambda_.10} parent=39 // pred_check_branch
        %290 = sbr.rel (%p288) target = $region44
      $region43: #{_lambda_.10} parent=39 // pred_region
        %vm291 = vcmask 123904
        %292 = vst.msk [vmem:[#allocation2] sm:$0x3] %vm291, 0.0
        %293 = vst.msk [vmem:[#allocation3] sm:$0x3] %vm291, 0.0
        %294 = vst.msk [vmem:[#allocation4] sm:$0x3] %vm291, 0.0
        %295 = vst.msk [vmem:[#allocation5] sm:$0x3] %vm291, 0.0
      $region44: #{_lambda_.10} parent=39 // pred_fallthru
        _
      %v296 = vld [vmem:[%s0] sm:$0x3]
      %v297 = vstv %s18
      %vm298 = vcmp.lt.s32.totalorder %v297, %v296
      %v299 = vsel %vm298, 1, 0
      %v300 = vcvt.s32.f32 %v299
      %v301 = vld [vmem:[%s270] sm:$0x3]
      %v302 = vld [vmem:[#allocation2] sm:$0x3]
      %v303 = vld [vmem:[#allocation3] sm:$0x3]
      %v304 = vld [vmem:[%s3] sm:$0xff]
      %v305 = vld [vmem:[%s3 + $0x8] sm:$0xff]
      %vm306 = vcmask 130048
      %v308 = vsel %vm306, %v302, 0
      %310 = vmatprep.subr.mxu0 0.0
      %311 = vmatpush1.msra.mxu0 0.0
      %312 = vmatprep.subr.mxu0 0.0
      %313 = vmatpush1.msra.mxu0 0.0
      %314 = vmatprep.subr.mxu0 0.0
      %315 = vmatpush1.msra.mxu0 0.0
      %316 = vmatprep.subr.mxu0 0.0
      %317 = vmatpush1.msra.mxu0 0.0
      %318 = vmatprep.subr.mxu0 0.0
      %319 = vmatpush1.msra.mxu0 0.0
      %320 = vmatprep.subr.mxu0 0.0
      %321 = vmatpush1.msra.mxu0 0.0
      %322 = vmatprep.subr.mxu0 0.0
      %323 = vmatpush1.msra.mxu0 0.0
      %324 = vmatprep.subr.mxu0 0.0
      %325 = vmatpush1.msra.mxu0 0.0
      %326 = vmatprep.subr.mxu0 0.0
      %327 = vmatpush1.msra.mxu0 0.0
      %328 = vmatprep.subr.mxu0 0.0
      %329 = vmatpush1.msra.mxu0 0.0
      %330 = vmatprep.subr.mxu0 0.0
      %331 = vmatpush1.msra.mxu0 0.0
      %332 = vmatprep.subr.mxu0 0.0
      %333 = vmatpush1.msra.mxu0 0.0
      %334 = vmatprep.subr.mxu0 0.0
      %335 = vmatpush1.msra.mxu0 0.0
      %336 = vmatprep.subr.mxu0 0.0
      %337 = vmatpush1.msra.mxu0 0.0
      %338 = vmatprep.subr.mxu0 0.0
      %339 = vmatpush1.msra.mxu0 %v305
      %340 = vmatprep.subr.mxu0 0.0
      %341 = vmatpush1.msra.mxu0 %v304
      %342 = vmatprep.subr.mxu0 0.0
      %343 = vmatpush2.msra.mxu0 0.0
      %344 = vmatprep.subr.mxu0 0.0
      %345 = vmatpush2.msra.mxu0 0.0
      %346 = vmatprep.subr.mxu0 0.0
      %347 = vmatpush2.msra.mxu0 0.0
      %348 = vmatprep.subr.mxu0 0.0
      %349 = vmatpush2.msra.mxu0 0.0
      %350 = vmatprep.subr.mxu0 0.0
      %351 = vmatpush2.msra.mxu0 0.0
      %352 = vmatprep.subr.mxu0 0.0
      %353 = vmatpush2.msra.mxu0 0.0
      %354 = vmatprep.subr.mxu0 0.0
      %355 = vmatpush2.msra.mxu0 0.0
      %356 = vmatprep.subr.mxu0 0.0
      %357 = vmatpush2.msra.mxu0 0.0
      %358 = vmatprep.subr.mxu0 0.0
      %359 = vmatpush2.msra.mxu0 0.0
      %360 = vmatprep.subr.mxu0 0.0
      %361 = vmatpush2.msra.mxu0 0.0
      %362 = vmatprep.subr.mxu0 0.0
      %363 = vmatpush2.msra.mxu0 0.0
      %364 = vmatprep.subr.mxu0 0.0
      %365 = vmatpush2.msra.mxu0 0.0
      %366 = vmatprep.subr.mxu0 0.0
      %367 = vmatpush2.msra.mxu0 0.0
      %368 = vmatprep.subr.mxu0 0.0
      %369 = vmatpush2.msra.mxu0 0.0
      %370 = vmatprep.subr.mxu0 0.0
      %371 = vmatpush2.msra.mxu0 0.0
      %372 = vmatprep.subr.mxu0 0.0
      %373 = vmatpush2.msra.mxu0 0.0
      %374 = vmatprep.mubr.f32.mxu0 0.0
      %375 = vmatmul.mubr.f32.gmra.mxu0 %v308
      %v376 = vpop.f32.mrf.mxu0
      %v377 = vadd.f32 0.0, %v376
      %v378 = vpop.f32.mrf.mxu0
      %379 = vdwg.mxu0
      %v380 = vadd.f32 %v301, %v377
      %v381 = vxor.u32 %v380, 2147483648
      %v382 = vmul.f32 %v381, 1.442695
      %v383 = vpow.pop %v382
      %v384 = vadd.f32 %v383, 1.0
      %v385 = vrcp.pop %v384
      %v386 = vmul.f32 1.0, %v385
      %v387 = vtanh.pop %v380
      %389 = vrot.lane.b32.xlu0 %v303, 16
      %v390 = vpop.permute.xlu0 %389
      %v392 = vmul.f32 %v386, %v390
      %394 = vrot.lane.b32.xlu0 %v387, 96
      %v395 = vpop.permute.xlu0 %394
      %v397 = vmul.f32 %v386, %v395
      %399 = vrot.lane.b32.xlu0 %v397, 16
      %v400 = vpop.permute.xlu0 %399
      %v402 = vadd.f32 %v392, %v400
      %v403 = vtanh.pop %v402
      %405 = vrot.lane.b32.xlu0 %v403, 32
      %v406 = vpop.permute.xlu0 %405
      %v408 = vmul.f32 %v386, %v406
      %410 = vset.pattern.permute.xlu0 0
      %411 = vperm.xlu0 %410, %v300
      %v412 = vpop.permute.xlu0 %411
      %v414 = vmul.f32 %v412, %v408
      %v415 = vsub.f32 1.0, %v300
      %417 = vset.pattern.permute.xlu0 0
      %418 = vperm.xlu0 %417, %v415
      %v419 = vpop.permute.xlu0 %418
      %v421 = vmul.f32 %v419, %v302
      %423 = vrot.lane.b32.xlu0 %v421, 48
      %v424 = vpop.permute.xlu0 %423
      %v426 = vadd.f32 %v414, %v424
      %428 = vrot.lane.b32.xlu0 %v426, 80
      %v429 = vpop.permute.xlu0 %428
      %vm431 = vcmask 123904
      %432 = vst.msk [vmem:[#allocation2] sm:$0x3] %vm431, %v429
      %v433 = vmul.f32 %v412, %v402
      %v434 = vld [vmem:[#allocation3] sm:$0x3]
      %v435 = vmul.f32 %v419, %v434
      %437 = vrot.lane.b32.xlu0 %v435, 16
      %v438 = vpop.permute.xlu0 %437
      %v440 = vadd.f32 %v433, %v438
      %442 = vrot.lane.b32.xlu0 %v440, 112
      %v443 = vpop.permute.xlu0 %442
      %445 = vst.msk [vmem:[#allocation3] sm:$0x3] %vm431, %v443
      %447 = vrot.lane.b32.xlu0 %v414, 80
      %v448 = vpop.permute.xlu0 %447
      %450 = vst.msk [vmem:[%s280] sm:$0x3] %vm431, %v448
      %s451 = ssub.s32 7, %s18
      %v452 = vstv %s451
      %vm453 = vcmp.lt.s32.totalorder %v452, %v296
      %v454 = vsel %vm453, 1, 0
      %v455 = vcvt.s32.f32 %v454
      %v456 = vld [vmem:[%s275] sm:$0x3]
      %v457 = vld [vmem:[#allocation4] sm:$0x3]
      %v458 = vld [vmem:[#allocation5] sm:$0x3]
      %v459 = vld [vmem:[%s4] sm:$0xff]
      %v460 = vld [vmem:[%s4 + $0x8] sm:$0xff]
      %v462 = vsel %vm306, %v457, 0
      %464 = vmatprep.subr.mxu0 0.0
      %465 = vmatpush1.msra.mxu0 0.0
      %466 = vmatprep.subr.mxu0 0.0
      %467 = vmatpush1.msra.mxu0 0.0
      %468 = vmatprep.subr.mxu0 0.0
      %469 = vmatpush1.msra.mxu0 0.0
      %470 = vmatprep.subr.mxu0 0.0
      %471 = vmatpush1.msra.mxu0 0.0
      %472 = vmatprep.subr.mxu0 0.0
      %473 = vmatpush1.msra.mxu0 0.0
      %474 = vmatprep.subr.mxu0 0.0
      %475 = vmatpush1.msra.mxu0 0.0
      %476 = vmatprep.subr.mxu0 0.0
      %477 = vmatpush1.msra.mxu0 0.0
      %478 = vmatprep.subr.mxu0 0.0
      %479 = vmatpush1.msra.mxu0 0.0
      %480 = vmatprep.subr.mxu0 0.0
      %481 = vmatpush1.msra.mxu0 0.0
      %482 = vmatprep.subr.mxu0 0.0
      %483 = vmatpush1.msra.mxu0 0.0
      %484 = vmatprep.subr.mxu0 0.0
      %485 = vmatpush1.msra.mxu0 0.0
      %486 = vmatprep.subr.mxu0 0.0
      %487 = vmatpush1.msra.mxu0 0.0
      %488 = vmatprep.subr.mxu0 0.0
      %489 = vmatpush1.msra.mxu0 0.0
      %490 = vmatprep.subr.mxu0 0.0
      %491 = vmatpush1.msra.mxu0 0.0
      %492 = vmatprep.subr.mxu0 0.0
      %493 = vmatpush1.msra.mxu0 %v460
      %494 = vmatprep.subr.mxu0 0.0
      %495 = vmatpush1.msra.mxu0 %v459
      %496 = vmatprep.subr.mxu0 0.0
      %497 = vmatpush2.msra.mxu0 0.0
      %498 = vmatprep.subr.mxu0 0.0
      %499 = vmatpush2.msra.mxu0 0.0
      %500 = vmatprep.subr.mxu0 0.0
      %501 = vmatpush2.msra.mxu0 0.0
      %502 = vmatprep.subr.mxu0 0.0
      %503 = vmatpush2.msra.mxu0 0.0
      %504 = vmatprep.subr.mxu0 0.0
      %505 = vmatpush2.msra.mxu0 0.0
      %506 = vmatprep.subr.mxu0 0.0
      %507 = vmatpush2.msra.mxu0 0.0
      %508 = vmatprep.subr.mxu0 0.0
      %509 = vmatpush2.msra.mxu0 0.0
      %510 = vmatprep.subr.mxu0 0.0
      %511 = vmatpush2.msra.mxu0 0.0
      %512 = vmatprep.subr.mxu0 0.0
      %513 = vmatpush2.msra.mxu0 0.0
      %514 = vmatprep.subr.mxu0 0.0
      %515 = vmatpush2.msra.mxu0 0.0
      %516 = vmatprep.subr.mxu0 0.0
      %517 = vmatpush2.msra.mxu0 0.0
      %518 = vmatprep.subr.mxu0 0.0
      %519 = vmatpush2.msra.mxu0 0.0
      %520 = vmatprep.subr.mxu0 0.0
      %521 = vmatpush2.msra.mxu0 0.0
      %522 = vmatprep.subr.mxu0 0.0
      %523 = vmatpush2.msra.mxu0 0.0
      %524 = vmatprep.subr.mxu0 0.0
      %525 = vmatpush2.msra.mxu0 0.0
      %526 = vmatprep.subr.mxu0 0.0
      %527 = vmatpush2.msra.mxu0 0.0
      %528 = vmatprep.mubr.f32.mxu0 0.0
      %529 = vmatmul.mubr.f32.gmra.mxu0 %v462
      %v530 = vpop.f32.mrf.mxu0
      %v531 = vadd.f32 0.0, %v530
      %v532 = vpop.f32.mrf.mxu0
      %533 = vdwg.mxu0
      %v534 = vadd.f32 %v456, %v531
      %v535 = vxor.u32 %v534, 2147483648
      %v536 = vmul.f32 %v535, 1.442695
      %v537 = vpow.pop %v536
      %v538 = vadd.f32 %v537, 1.0
      %v539 = vrcp.pop %v538
      %v540 = vmul.f32 1.0, %v539
      %v541 = vtanh.pop %v534
      %543 = vrot.lane.b32.xlu0 %v458, 16
      %v544 = vpop.permute.xlu0 %543
      %v546 = vmul.f32 %v540, %v544
      %548 = vrot.lane.b32.xlu0 %v541, 96
      %v549 = vpop.permute.xlu0 %548
      %v551 = vmul.f32 %v540, %v549
      %553 = vrot.lane.b32.xlu0 %v551, 16
      %v554 = vpop.permute.xlu0 %553
      %v556 = vadd.f32 %v546, %v554
      %v557 = vtanh.pop %v556
      %559 = vrot.lane.b32.xlu0 %v557, 32
      %v560 = vpop.permute.xlu0 %559
      %v562 = vmul.f32 %v540, %v560
      %564 = vset.pattern.permute.xlu0 0
      %565 = vperm.xlu0 %564, %v455
      %v566 = vpop.permute.xlu0 %565
      %v568 = vmul.f32 %v566, %v562
      %v569 = vsub.f32 1.0, %v455
      %571 = vset.pattern.permute.xlu0 0
      %572 = vperm.xlu0 %571, %v569
      %v573 = vpop.permute.xlu0 %572
      %v575 = vmul.f32 %v573, %v457
      %577 = vrot.lane.b32.xlu0 %v575, 48
      %v578 = vpop.permute.xlu0 %577
      %v580 = vadd.f32 %v568, %v578
      %582 = vrot.lane.b32.xlu0 %v580, 80
      %v583 = vpop.permute.xlu0 %582
      %585 = vst.msk [vmem:[#allocation4] sm:$0x3] %vm431, %v583
      %v586 = vmul.f32 %v566, %v556
      %v587 = vld [vmem:[#allocation5] sm:$0x3]
      %v588 = vmul.f32 %v573, %v587
      %590 = vrot.lane.b32.xlu0 %v588, 16
      %v591 = vpop.permute.xlu0 %590
      %v593 = vadd.f32 %v586, %v591
      %595 = vrot.lane.b32.xlu0 %v593, 112
      %v596 = vpop.permute.xlu0 %595
      %598 = vst.msk [vmem:[#allocation5] sm:$0x3] %vm431, %v596
      %600 = vrot.lane.b32.xlu0 %v568, 80
      %v601 = vpop.permute.xlu0 %600
      %603 = vst.msk [vmem:[%s285] sm:$0x3] %vm431, %v601
      %p604 = scmp.lt.s32.totalorder %s18, 7
      %s605 = scalar_select %p604, %s18, 7
      %s606 = smul.addr %s605, 2
      %s607 = scalar_lea.vmem %s5, %s606
      %s608 = ssub.s32 7, %s18
      %p609 = scmp.lt.s32.totalorder %s608, 7
      %s610 = scalar_select %p609, %s608, 7
      %s611 = smul.addr %s610, 2
      %s612 = scalar_lea.vmem %s6, %s611
      // Predicated region
      $region45: #{_lambda_.10} parent=39 // pred_check
        %p613 = pneg %p153
      $region46: #{_lambda_.10} parent=39 // pred_check_branch
        %615 = sbr.rel (%p613) target = $region48
      $region47: #{_lambda_.10} parent=39 // pred_region
        _
      $region48: #{_lambda_.10} parent=39 // pred_fallthru
        _
      // Predicated region
      $region49: #{_lambda_.10} parent=39 // pred_check
        %p616 = pneg %p181
      $region50: #{_lambda_.10} parent=39 // pred_check_branch
        %618 = sbr.rel (%p616) target = $region52
      $region51: #{_lambda_.10} parent=39 // pred_region
        %s619 = ssub.s32 7, %s18
      $region52: #{_lambda_.10} parent=39 // pred_fallthru
        _
    $region40: #{_lambda_.10} parent=5 // pred_fallthru
      _
    %p620 = scmp.le.s32.totalorder 2, %s13
    // Predicated region
    $region53: #{_lambda_.10} parent=5 // pred_check
      %p621 = pneg %p620
    $region54: #{_lambda_.10} parent=5 // pred_check_branch
      %623 = sbr.rel (%p621) target = $region56
    $region55: #{_lambda_.10} parent=5 // pred_region
      %s624 = ssub.s32 %s13, 2
      // Predicated region
      $region57: #{_lambda_.10} parent=55 // pred_check
        %p625 = pneg %p159
      $region58: #{_lambda_.10} parent=55 // pred_check_branch
        %627 = sbr.rel (%p625) target = $region60
      $region59: #{_lambda_.10} parent=55 // pred_region
        %p628 = scmp.lt.s32.totalorder %s19, 7
        %s629 = scalar_select %p628, %s19, 7
        %s630 = smul.addr %s629, 2
        %s631 = scalar_lea.vmem %s5, %s630
      $region60: #{_lambda_.10} parent=55 // pred_fallthru
        _
      // Predicated region
      $region61: #{_lambda_.10} parent=55 // pred_check
        %p632 = pneg %p187
      $region62: #{_lambda_.10} parent=55 // pred_check_branch
        %634 = sbr.rel (%p632) target = $region64
      $region63: #{_lambda_.10} parent=55 // pred_region
        %s635 = ssub.s32 7, %s19
        %p636 = scmp.lt.s32.totalorder %s635, 7
        %s637 = scalar_select %p636, %s635, 7
        %s638 = smul.addr %s637, 2
        %s639 = scalar_lea.vmem %s6, %s638
      $region64: #{_lambda_.10} parent=55 // pred_fallthru
        _
    $region56: #{_lambda_.10} parent=5 // pred_fallthru
      _
  $region6: #{_lambda_.10} parent=0 // loop_footer
    %s17 = sadd.s32 1, %s13
  $region7: #{_lambda_.10} parent=0 // loop_footer_branch
    %12 = sbr.rel target = $region3
  $region8: #{_lambda_.10} parent=0 // loop_exit
    _

// kernel: _lambda_.13
$region0: #{_lambda_.13}
  #allocation0 [shape = 'u32[]', space=smem, size = 0x4, offset = 0x4, fixed_abs, tag = 'smem constant byte address 0x4 - core index']
  #allocation1 [shape = 'u32[144,128]{1,0:T(1,128)}', space=vmem, size = 0x12000, scoped, tag = 'internal scratch']
  %s0 = inlined_call_operand.vmem [shape: f32[2,8,8], index: 0, kind: input, shape index: {}]
  %s1 = inlined_call_operand.vmem [shape: f32[1,8,1], index: 1, kind: input, shape index: {}]
  %s2 = inlined_call_operand.vmem [shape: f32[5,8,16], index: 2, kind: input, shape index: {}]
  %s3 = inlined_call_operand.vmem [shape: f32[1,16], index: 3, kind: input, shape index: {}]
  %s4 = inlined_call_operand.vmem [shape: f32[1,16], index: 4, kind: input, shape index: {}]
  %s5 = inlined_call_operand.vmem [shape: f32[5,16,16], index: 5, kind: input, shape index: {}]
  %s6 = inlined_call_operand.vmem [shape: f32[1,16], index: 6, kind: input, shape index: {}]
  %s7 = inlined_call_operand.vmem [shape: f32[1,16], index: 7, kind: input, shape index: {}]
  %s8 = inlined_call_operand.vmem [shape: f32[5,16,8], index: 8, kind: input, shape index: {}]
  %s9 = inlined_call_operand.vmem [shape: f32[1,8], index: 9, kind: input, shape index: {}]
  %s10 = inlined_call_operand.vmem [shape: f32[1,8], index: 10, kind: input, shape index: {}]
  %s11 = inlined_call_operand.vmem [shape: f32[2,8,8], index: 11, kind: output, shape index: {}]
  %s12 = sld [smem:[#allocation0]]
  $region54: #{_lambda_.13} parent=0
    _
  %s14 = ssub.s32 1, %s12
  %s15 = scalar_select 0, %s14, %s12
  // Predicated region
  $region2: #{_lambda_.13} parent=0 // pred_check
    _
  $region3: #{_lambda_.13} parent=0 // pred_check_branch
    %17 = sbr.rel (0) target = $region5
  $region4: #{_lambda_.13} parent=0 // pred_region
    _
  $region5: #{_lambda_.13} parent=0 // pred_fallthru
    _
  // Predicated region
  $region6: #{_lambda_.13} parent=0 // pred_check
    _
  $region7: #{_lambda_.13} parent=0 // pred_check_branch
    %19 = sbr.rel (0) target = $region9
  $region8: #{_lambda_.13} parent=0 // pred_region
    _
  $region9: #{_lambda_.13} parent=0 // pred_fallthru
    _
  // Predicated region
  $region10: #{_lambda_.13} parent=0 // pred_check
    _
  $region11: #{_lambda_.13} parent=0 // pred_check_branch
    %21 = sbr.rel (0) target = $region13
  $region12: #{_lambda_.13} parent=0 // pred_region
    _
  $region13: #{_lambda_.13} parent=0 // pred_fallthru
    _
  // Predicated region
  $region14: #{_lambda_.13} parent=0 // pred_check
    _
  $region15: #{_lambda_.13} parent=0 // pred_check_branch
    %23 = sbr.rel (0) target = $region17
  $region16: #{_lambda_.13} parent=0 // pred_region
    _
  $region17: #{_lambda_.13} parent=0 // pred_fallthru
    _
  // Predicated region
  $region18: #{_lambda_.13} parent=0 // pred_check
    _
  $region19: #{_lambda_.13} parent=0 // pred_check_branch
    %25 = sbr.rel (0) target = $region21
  $region20: #{_lambda_.13} parent=0 // pred_region
    _
  $region21: #{_lambda_.13} parent=0 // pred_fallthru
    _
  // Predicated region
  $region22: #{_lambda_.13} parent=0 // pred_check
    _
  $region23: #{_lambda_.13} parent=0 // pred_check_branch
    %27 = sbr.rel (0) target = $region25
  $region24: #{_lambda_.13} parent=0 // pred_region
    _
  $region25: #{_lambda_.13} parent=0 // pred_fallthru
    _
  // Predicated region
  $region26: #{_lambda_.13} parent=0 // pred_check
    _
  $region27: #{_lambda_.13} parent=0 // pred_check_branch
    %29 = sbr.rel (0) target = $region29
  $region28: #{_lambda_.13} parent=0 // pred_region
    _
  $region29: #{_lambda_.13} parent=0 // pred_fallthru
    _
  // Predicated region
  $region30: #{_lambda_.13} parent=0 // pred_check
    _
  $region31: #{_lambda_.13} parent=0 // pred_check_branch
    %31 = sbr.rel (0) target = $region33
  $region32: #{_lambda_.13} parent=0 // pred_region
    _
  $region33: #{_lambda_.13} parent=0 // pred_fallthru
    _
  // Predicated region
  $region34: #{_lambda_.13} parent=0 // pred_check
    _
  $region35: #{_lambda_.13} parent=0 // pred_check_branch
    %33 = sbr.rel (0) target = $region37
  $region36: #{_lambda_.13} parent=0 // pred_region
    _
  $region37: #{_lambda_.13} parent=0 // pred_fallthru
    _
  // Predicated region
  $region38: #{_lambda_.13} parent=0 // pred_check
    _
  $region39: #{_lambda_.13} parent=0 // pred_check_branch
    %35 = sbr.rel (0) target = $region41
  $region40: #{_lambda_.13} parent=0 // pred_region
    _
  $region41: #{_lambda_.13} parent=0 // pred_fallthru
    _
  // Predicated region
  $region42: #{_lambda_.13} parent=0 // pred_check
    _
  $region43: #{_lambda_.13} parent=0 // pred_check_branch
    %37 = sbr.rel (0) target = $region45
  $region44: #{_lambda_.13} parent=0 // pred_region
    _
  $region45: #{_lambda_.13} parent=0 // pred_fallthru
    _
  %v38 = vld [vmem:[%s1] sm:$0xff]
  %v39 = vld [vmem:[%s0] sm:$0xff]
  %v40 = vld [vmem:[%s0 + $0x8] sm:$0xff]
  %v43 = vrot.slane %v39, 6
  %v44 = vrot.slane %v40, 6
  %vm47 = vcmask 1041408
  %v48 = vsel %vm47, 0.0, %v43
  %v49 = vsel %vm47, 0.0, %v44
  %v50 = vld [vmem:[%s2] sm:$0xff]
  %v51 = vrot.slane %v39, 7
  %v52 = vrot.slane %v40, 7
  %vm55 = vcmask 1040384
  %v56 = vsel %vm55, 0.0, %v51
  %v57 = vsel %vm55, 0.0, %v52
  %s58 = scalar_lea.vmem %s2, 8
  %v59 = vld [vmem:[%s58] sm:$0xff]
  %vm60 = vcmask 64512
  %v62 = vsel %vm60, %v56, 0
  %v65 = vsel %vm60, %v57, 0
  %67 = vmatprep.subr.mxu0 0.0
  %68 = vmatpush1.msra.mxu0 0.0
  %69 = vmatprep.subr.mxu0 0.0
  %70 = vmatpush1.msra.mxu0 0.0
  %71 = vmatprep.subr.mxu0 0.0
  %72 = vmatpush1.msra.mxu0 0.0
  %73 = vmatprep.subr.mxu0 0.0
  %74 = vmatpush1.msra.mxu0 0.0
  %75 = vmatprep.subr.mxu0 0.0
  %76 = vmatpush1.msra.mxu0 0.0
  %77 = vmatprep.subr.mxu0 0.0
  %78 = vmatpush1.msra.mxu0 0.0
  %79 = vmatprep.subr.mxu0 0.0
  %80 = vmatpush1.msra.mxu0 0.0
  %81 = vmatprep.subr.mxu0 0.0
  %82 = vmatpush1.msra.mxu0 0.0
  %83 = vmatprep.subr.mxu0 0.0
  %84 = vmatpush1.msra.mxu0 0.0
  %85 = vmatprep.subr.mxu0 0.0
  %86 = vmatpush1.msra.mxu0 0.0
  %87 = vmatprep.subr.mxu0 0.0
  %88 = vmatpush1.msra.mxu0 0.0
  %89 = vmatprep.subr.mxu0 0.0
  %90 = vmatpush1.msra.mxu0 0.0
  %91 = vmatprep.subr.mxu0 0.0
  %92 = vmatpush1.msra.mxu0 0.0
  %93 = vmatprep.subr.mxu0 0.0
  %94 = vmatpush1.msra.mxu0 0.0
  %95 = vmatprep.subr.mxu0 0.0
  %96 = vmatpush1.msra.mxu0 0.0
  %97 = vmatprep.subr.mxu0 0.0
  %98 = vmatpush1.msra.mxu0 %v59
  %99 = vmatprep.subr.mxu0 0.0
  %100 = vmatpush2.msra.mxu0 0.0
  %101 = vmatprep.subr.mxu0 0.0
  %102 = vmatpush2.msra.mxu0 0.0
  %103 = vmatprep.subr.mxu0 0.0
  %104 = vmatpush2.msra.mxu0 0.0
  %105 = vmatprep.subr.mxu0 0.0
  %106 = vmatpush2.msra.mxu0 0.0
  %107 = vmatprep.subr.mxu0 0.0
  %108 = vmatpush2.msra.mxu0 0.0
  %109 = vmatprep.subr.mxu0 0.0
  %110 = vmatpush2.msra.mxu0 0.0
  %111 = vmatprep.subr.mxu0 0.0
  %112 = vmatpush2.msra.mxu0 0.0
  %113 = vmatprep.subr.mxu0 0.0
  %114 = vmatpush2.msra.mxu0 0.0
  %115 = vmatprep.subr.mxu0 0.0
  %116 = vmatpush2.msra.mxu0 0.0
  %117 = vmatprep.subr.mxu0 0.0
  %118 = vmatpush2.msra.mxu0 0.0
  %119 = vmatprep.subr.mxu0 0.0
  %120 = vmatpush2.msra.mxu0 0.0
  %121 = vmatprep.subr.mxu0 0.0
  %122 = vmatpush2.msra.mxu0 0.0
  %123 = vmatprep.subr.mxu0 0.0
  %124 = vmatpush2.msra.mxu0 0.0
  %125 = vmatprep.subr.mxu0 0.0
  %126 = vmatpush2.msra.mxu0 0.0
  %127 = vmatprep.subr.mxu0 0.0
  %128 = vmatpush2.msra.mxu0 0.0
  %129 = vmatprep.subr.mxu0 0.0
  %130 = vmatpush2.msra.mxu0 0.0
  %131 = vmatprep.mubr.f32.mxu0 0.0
  %132 = vmatmul.mubr.f32.gmra.mxu0 %v62
  %v133 = vpop.f32.mrf.mxu0
  %v134 = vadd.f32 0.0, %v133
  %v135 = vpop.f32.mrf.mxu0
  %136 = vmatprep.mubr.f32.mxu0 0.0
  %137 = vmatmul.mubr.f32.gmra.mxu0 %v65
  %v138 = vpop.f32.mrf.mxu0
  %v139 = vadd.f32 0.0, %v138
  %v140 = vpop.f32.mrf.mxu0
  %141 = vdwg.mxu0
  %v143 = vsel %vm60, %v48, 0
  %v146 = vsel %vm60, %v49, 0
  %148 = vmatprep.subr.mxu0 0.0
  %149 = vmatpush1.msra.mxu0 0.0
  %150 = vmatprep.subr.mxu0 0.0
  %151 = vmatpush1.msra.mxu0 0.0
  %152 = vmatprep.subr.mxu0 0.0
  %153 = vmatpush1.msra.mxu0 0.0
  %154 = vmatprep.subr.mxu0 0.0
  %155 = vmatpush1.msra.mxu0 0.0
  %156 = vmatprep.subr.mxu0 0.0
  %157 = vmatpush1.msra.mxu0 0.0
  %158 = vmatprep.subr.mxu0 0.0
  %159 = vmatpush1.msra.mxu0 0.0
  %160 = vmatprep.subr.mxu0 0.0
  %161 = vmatpush1.msra.mxu0 0.0
  %162 = vmatprep.subr.mxu0 0.0
  %163 = vmatpush1.msra.mxu0 0.0
  %164 = vmatprep.subr.mxu0 0.0
  %165 = vmatpush1.msra.mxu0 0.0
  %166 = vmatprep.subr.mxu0 0.0
  %167 = vmatpush1.msra.mxu0 0.0
  %168 = vmatprep.subr.mxu0 0.0
  %169 = vmatpush1.msra.mxu0 0.0
  %170 = vmatprep.subr.mxu0 0.0
  %171 = vmatpush1.msra.mxu0 0.0
  %172 = vmatprep.subr.mxu0 0.0
  %173 = vmatpush1.msra.mxu0 0.0
  %174 = vmatprep.subr.mxu0 0.0
  %175 = vmatpush1.msra.mxu0 0.0
  %176 = vmatprep.subr.mxu0 0.0
  %177 = vmatpush1.msra.mxu0 0.0
  %178 = vmatprep.subr.mxu0 0.0
  %179 = vmatpush1.msra.mxu0 %v50
  %180 = vmatprep.subr.mxu0 0.0
  %181 = vmatpush2.msra.mxu0 0.0
  %182 = vmatprep.subr.mxu0 0.0
  %183 = vmatpush2.msra.mxu0 0.0
  %184 = vmatprep.subr.mxu0 0.0
  %185 = vmatpush2.msra.mxu0 0.0
  %186 = vmatprep.subr.mxu0 0.0
  %187 = vmatpush2.msra.mxu0 0.0
  %188 = vmatprep.subr.mxu0 0.0
  %189 = vmatpush2.msra.mxu0 0.0
  %190 = vmatprep.subr.mxu0 0.0
  %191 = vmatpush2.msra.mxu0 0.0
  %192 = vmatprep.subr.mxu0 0.0
  %193 = vmatpush2.msra.mxu0 0.0
  %194 = vmatprep.subr.mxu0 0.0
  %195 = vmatpush2.msra.mxu0 0.0
  %196 = vmatprep.subr.mxu0 0.0
  %197 = vmatpush2.msra.mxu0 0.0
  %198 = vmatprep.subr.mxu0 0.0
  %199 = vmatpush2.msra.mxu0 0.0
  %200 = vmatprep.subr.mxu0 0.0
  %201 = vmatpush2.msra.mxu0 0.0
  %202 = vmatprep.subr.mxu0 0.0
  %203 = vmatpush2.msra.mxu0 0.0
  %204 = vmatprep.subr.mxu0 0.0
  %205 = vmatpush2.msra.mxu0 0.0
  %206 = vmatprep.subr.mxu0 0.0
  %207 = vmatpush2.msra.mxu0 0.0
  %208 = vmatprep.subr.mxu0 0.0
  %209 = vmatpush2.msra.mxu0 0.0
  %210 = vmatprep.subr.mxu0 0.0
  %211 = vmatpush2.msra.mxu0 0.0
  %212 = vmatprep.mubr.f32.mxu0 0.0
  %213 = vmatmul.mubr.f32.gmra.mxu0 %v143
  %v214 = vpop.f32.mrf.mxu0
  %v215 = vadd.f32 %v134, %v214
  %v216 = vpop.f32.mrf.mxu0
  %217 = vmatprep.mubr.f32.mxu0 0.0
  %218 = vmatmul.mubr.f32.gmra.mxu0 %v146
  %v219 = vpop.f32.mrf.mxu0
  %v220 = vadd.f32 %v139, %v219
  %v221 = vpop.f32.mrf.mxu0
  %222 = vdwg.mxu0
  %s223 = scalar_lea.vmem %s2, 16
  %v224 = vld [vmem:[%s223] sm:$0xff]
  %v225 = vsel %vm60, %v39, 0
  %v227 = vsel %vm60, %v40, 0
  %229 = vmatprep.subr.mxu0 0.0
  %230 = vmatpush1.msra.mxu0 0.0
  %231 = vmatprep.subr.mxu0 0.0
  %232 = vmatpush1.msra.mxu0 0.0
  %233 = vmatprep.subr.mxu0 0.0
  %234 = vmatpush1.msra.mxu0 0.0
  %235 = vmatprep.subr.mxu0 0.0
  %236 = vmatpush1.msra.mxu0 0.0
  %237 = vmatprep.subr.mxu0 0.0
  %238 = vmatpush1.msra.mxu0 0.0
  %239 = vmatprep.subr.mxu0 0.0
  %240 = vmatpush1.msra.mxu0 0.0
  %241 = vmatprep.subr.mxu0 0.0
  %242 = vmatpush1.msra.mxu0 0.0
  %243 = vmatprep.subr.mxu0 0.0
  %244 = vmatpush1.msra.mxu0 0.0
  %245 = vmatprep.subr.mxu0 0.0
  %246 = vmatpush1.msra.mxu0 0.0
  %247 = vmatprep.subr.mxu0 0.0
  %248 = vmatpush1.msra.mxu0 0.0
  %249 = vmatprep.subr.mxu0 0.0
  %250 = vmatpush1.msra.mxu0 0.0
  %251 = vmatprep.subr.mxu0 0.0
  %252 = vmatpush1.msra.mxu0 0.0
  %253 = vmatprep.subr.mxu0 0.0
  %254 = vmatpush1.msra.mxu0 0.0
  %255 = vmatprep.subr.mxu0 0.0
  %256 = vmatpush1.msra.mxu0 0.0
  %257 = vmatprep.subr.mxu0 0.0
  %258 = vmatpush1.msra.mxu0 0.0
  %259 = vmatprep.subr.mxu0 0.0
  %260 = vmatpush1.msra.mxu0 %v224
  %261 = vmatprep.subr.mxu0 0.0
  %262 = vmatpush2.msra.mxu0 0.0
  %263 = vmatprep.subr.mxu0 0.0
  %264 = vmatpush2.msra.mxu0 0.0
  %265 = vmatprep.subr.mxu0 0.0
  %266 = vmatpush2.msra.mxu0 0.0
  %267 = vmatprep.subr.mxu0 0.0
  %268 = vmatpush2.msra.mxu0 0.0
  %269 = vmatprep.subr.mxu0 0.0
  %270 = vmatpush2.msra.mxu0 0.0
  %271 = vmatprep.subr.mxu0 0.0
  %272 = vmatpush2.msra.mxu0 0.0
  %273 = vmatprep.subr.mxu0 0.0
  %274 = vmatpush2.msra.mxu0 0.0
  %275 = vmatprep.subr.mxu0 0.0
  %276 = vmatpush2.msra.mxu0 0.0
  %277 = vmatprep.subr.mxu0 0.0
  %278 = vmatpush2.msra.mxu0 0.0
  %279 = vmatprep.subr.mxu0 0.0
  %280 = vmatpush2.msra.mxu0 0.0
  %281 = vmatprep.subr.mxu0 0.0
  %282 = vmatpush2.msra.mxu0 0.0
  %283 = vmatprep.subr.mxu0 0.0
  %284 = vmatpush2.msra.mxu0 0.0
  %285 = vmatprep.subr.mxu0 0.0
  %286 = vmatpush2.msra.mxu0 0.0
  %287 = vmatprep.subr.mxu0 0.0
  %288 = vmatpush2.msra.mxu0 0.0
  %289 = vmatprep.subr.mxu0 0.0
  %290 = vmatpush2.msra.mxu0 0.0
  %291 = vmatprep.subr.mxu0 0.0
  %292 = vmatpush2.msra.mxu0 0.0
  %293 = vmatprep.mubr.f32.mxu0 0.0
  %294 = vmatmul.mubr.f32.gmra.mxu0 %v225
  %v295 = vpop.f32.mrf.mxu0
  %v296 = vadd.f32 0.0, %v295
  %v297 = vpop.f32.mrf.mxu0
  %298 = vmatprep.mubr.f32.mxu0 0.0
  %299 = vmatmul.mubr.f32.gmra.mxu0 %v227
  %v300 = vpop.f32.mrf.mxu0
  %v301 = vadd.f32 0.0, %v300
  %v302 = vpop.f32.mrf.mxu0
  %303 = vdwg.mxu0
  %v304 = vadd.f32 %v215, %v296
  %v305 = vadd.f32 %v220, %v301
  %v306 = vrot.slane %v39, 1
  %v307 = vrot.slane %v40, 1
  %vm310 = vcmask 1046528
  %v311 = vsel %vm310, %v306, 0.0
  %v312 = vsel %vm310, %v307, 0.0
  %s313 = scalar_lea.vmem %s2, 24
  %v314 = vld [vmem:[%s313] sm:$0xff]
  %v316 = vsel %vm60, %v311, 0
  %v319 = vsel %vm60, %v312, 0
  %321 = vmatprep.subr.mxu0 0.0
  %322 = vmatpush1.msra.mxu0 0.0
  %323 = vmatprep.subr.mxu0 0.0
  %324 = vmatpush1.msra.mxu0 0.0
  %325 = vmatprep.subr.mxu0 0.0
  %326 = vmatpush1.msra.mxu0 0.0
  %327 = vmatprep.subr.mxu0 0.0
  %328 = vmatpush1.msra.mxu0 0.0
  %329 = vmatprep.subr.mxu0 0.0
  %330 = vmatpush1.msra.mxu0 0.0
  %331 = vmatprep.subr.mxu0 0.0
  %332 = vmatpush1.msra.mxu0 0.0
  %333 = vmatprep.subr.mxu0 0.0
  %334 = vmatpush1.msra.mxu0 0.0
  %335 = vmatprep.subr.mxu0 0.0
  %336 = vmatpush1.msra.mxu0 0.0
  %337 = vmatprep.subr.mxu0 0.0
  %338 = vmatpush1.msra.mxu0 0.0
  %339 = vmatprep.subr.mxu0 0.0
  %340 = vmatpush1.msra.mxu0 0.0
  %341 = vmatprep.subr.mxu0 0.0
  %342 = vmatpush1.msra.mxu0 0.0
  %343 = vmatprep.subr.mxu0 0.0
  %344 = vmatpush1.msra.mxu0 0.0
  %345 = vmatprep.subr.mxu0 0.0
  %346 = vmatpush1.msra.mxu0 0.0
  %347 = vmatprep.subr.mxu0 0.0
  %348 = vmatpush1.msra.mxu0 0.0
  %349 = vmatprep.subr.mxu0 0.0
  %350 = vmatpush1.msra.mxu0 0.0
  %351 = vmatprep.subr.mxu0 0.0
  %352 = vmatpush1.msra.mxu0 %v314
  %353 = vmatprep.subr.mxu0 0.0
  %354 = vmatpush2.msra.mxu0 0.0
  %355 = vmatprep.subr.mxu0 0.0
  %356 = vmatpush2.msra.mxu0 0.0
  %357 = vmatprep.subr.mxu0 0.0
  %358 = vmatpush2.msra.mxu0 0.0
  %359 = vmatprep.subr.mxu0 0.0
  %360 = vmatpush2.msra.mxu0 0.0
  %361 = vmatprep.subr.mxu0 0.0
  %362 = vmatpush2.msra.mxu0 0.0
  %363 = vmatprep.subr.mxu0 0.0
  %364 = vmatpush2.msra.mxu0 0.0
  %365 = vmatprep.subr.mxu0 0.0
  %366 = vmatpush2.msra.mxu0 0.0
  %367 = vmatprep.subr.mxu0 0.0
  %368 = vmatpush2.msra.mxu0 0.0
  %369 = vmatprep.subr.mxu0 0.0
  %370 = vmatpush2.msra.mxu0 0.0
  %371 = vmatprep.subr.mxu0 0.0
  %372 = vmatpush2.msra.mxu0 0.0
  %373 = vmatprep.subr.mxu0 0.0
  %374 = vmatpush2.msra.mxu0 0.0
  %375 = vmatprep.subr.mxu0 0.0
  %376 = vmatpush2.msra.mxu0 0.0
  %377 = vmatprep.subr.mxu0 0.0
  %378 = vmatpush2.msra.mxu0 0.0
  %379 = vmatprep.subr.mxu0 0.0
  %380 = vmatpush2.msra.mxu0 0.0
  %381 = vmatprep.subr.mxu0 0.0
  %382 = vmatpush2.msra.mxu0 0.0
  %383 = vmatprep.subr.mxu0 0.0
  %384 = vmatpush2.msra.mxu0 0.0
  %385 = vmatprep.mubr.f32.mxu0 0.0
  %386 = vmatmul.mubr.f32.gmra.mxu0 %v316
  %v387 = vpop.f32.mrf.mxu0
  %v388 = vadd.f32 0.0, %v387
  %v389 = vpop.f32.mrf.mxu0
  %390 = vmatprep.mubr.f32.mxu0 0.0
  %391 = vmatmul.mubr.f32.gmra.mxu0 %v319
  %v392 = vpop.f32.mrf.mxu0
  %v393 = vadd.f32 0.0, %v392
  %v394 = vpop.f32.mrf.mxu0
  %395 = vdwg.mxu0
  %v396 = vadd.f32 %v304, %v388
  %v397 = vadd.f32 %v305, %v393
  %v398 = vrot.slane %v39, 2
  %v399 = vrot.slane %v40, 2
  %vm402 = vcmask 1045504
  %v403 = vsel %vm402, %v398, 0.0
  %v404 = vsel %vm402, %v399, 0.0
  %s405 = scalar_lea.vmem %s2, 32
  %v406 = vld [vmem:[%s405] sm:$0xff]
  %v408 = vsel %vm60, %v403, 0
  %v411 = vsel %vm60, %v404, 0
  %413 = vmatprep.subr.mxu0 0.0
  %414 = vmatpush1.msra.mxu0 0.0
  %415 = vmatprep.subr.mxu0 0.0
  %416 = vmatpush1.msra.mxu0 0.0
  %417 = vmatprep.subr.mxu0 0.0
  %418 = vmatpush1.msra.mxu0 0.0
  %419 = vmatprep.subr.mxu0 0.0
  %420 = vmatpush1.msra.mxu0 0.0
  %421 = vmatprep.subr.mxu0 0.0
  %422 = vmatpush1.msra.mxu0 0.0
  %423 = vmatprep.subr.mxu0 0.0
  %424 = vmatpush1.msra.mxu0 0.0
  %425 = vmatprep.subr.mxu0 0.0
  %426 = vmatpush1.msra.mxu0 0.0
  %427 = vmatprep.subr.mxu0 0.0
  %428 = vmatpush1.msra.mxu0 0.0
  %429 = vmatprep.subr.mxu0 0.0
  %430 = vmatpush1.msra.mxu0 0.0
  %431 = vmatprep.subr.mxu0 0.0
  %432 = vmatpush1.msra.mxu0 0.0
  %433 = vmatprep.subr.mxu0 0.0
  %434 = vmatpush1.msra.mxu0 0.0
  %435 = vmatprep.subr.mxu0 0.0
  %436 = vmatpush1.msra.mxu0 0.0
  %437 = vmatprep.subr.mxu0 0.0
  %438 = vmatpush1.msra.mxu0 0.0
  %439 = vmatprep.subr.mxu0 0.0
  %440 = vmatpush1.msra.mxu0 0.0
  %441 = vmatprep.subr.mxu0 0.0
  %442 = vmatpush1.msra.mxu0 0.0
  %443 = vmatprep.subr.mxu0 0.0
  %444 = vmatpush1.msra.mxu0 %v406
  %445 = vmatprep.subr.mxu0 0.0
  %446 = vmatpush2.msra.mxu0 0.0
  %447 = vmatprep.subr.mxu0 0.0
  %448 = vmatpush2.msra.mxu0 0.0
  %449 = vmatprep.subr.mxu0 0.0
  %450 = vmatpush2.msra.mxu0 0.0
  %451 = vmatprep.subr.mxu0 0.0
  %452 = vmatpush2.msra.mxu0 0.0
  %453 = vmatprep.subr.mxu0 0.0
  %454 = vmatpush2.msra.mxu0 0.0
  %455 = vmatprep.subr.mxu0 0.0
  %456 = vmatpush2.msra.mxu0 0.0
  %457 = vmatprep.subr.mxu0 0.0
  %458 = vmatpush2.msra.mxu0 0.0
  %459 = vmatprep.subr.mxu0 0.0
  %460 = vmatpush2.msra.mxu0 0.0
  %461 = vmatprep.subr.mxu0 0.0
  %462 = vmatpush2.msra.mxu0 0.0
  %463 = vmatprep.subr.mxu0 0.0
  %464 = vmatpush2.msra.mxu0 0.0
  %465 = vmatprep.subr.mxu0 0.0
  %466 = vmatpush2.msra.mxu0 0.0
  %467 = vmatprep.subr.mxu0 0.0
  %468 = vmatpush2.msra.mxu0 0.0
  %469 = vmatprep.subr.mxu0 0.0
  %470 = vmatpush2.msra.mxu0 0.0
  %471 = vmatprep.subr.mxu0 0.0
  %472 = vmatpush2.msra.mxu0 0.0
  %473 = vmatprep.subr.mxu0 0.0
  %474 = vmatpush2.msra.mxu0 0.0
  %475 = vmatprep.subr.mxu0 0.0
  %476 = vmatpush2.msra.mxu0 0.0
  %477 = vmatprep.mubr.f32.mxu0 0.0
  %478 = vmatmul.mubr.f32.gmra.mxu0 %v408
  %v479 = vpop.f32.mrf.mxu0
  %v480 = vadd.f32 0.0, %v479
  %v481 = vpop.f32.mrf.mxu0
  %482 = vmatprep.mubr.f32.mxu0 0.0
  %483 = vmatmul.mubr.f32.gmra.mxu0 %v411
  %v484 = vpop.f32.mrf.mxu0
  %v485 = vadd.f32 0.0, %v484
  %v486 = vpop.f32.mrf.mxu0
  %487 = vdwg.mxu0
  %v488 = vadd.f32 %v396, %v480
  %v489 = vadd.f32 %v397, %v485
  %v490 = vld [vmem:[%s3] sm:$0x1]
  %v492 = vlaneseq
  %v493 = vshrl.u32 %v492, 7
  %v494 = vsub.s32 0, %v493
  %v495 = vrot.slane %v490, %v494
  %v497 = vmul.f32 %v488, %v495
  %v498 = vmul.f32 %v489, %v495
  %v499 = vld [vmem:[%s4] sm:$0x1]
  %v501 = vlaneseq
  %v502 = vshrl.u32 %v501, 7
  %v503 = vsub.s32 0, %v502
  %v504 = vrot.slane %v499, %v503
  %v506 = vadd.f32 %v497, %v504
  %v507 = vadd.f32 %v498, %v504
  %v508 = vtanh.pop %v506
  %v509 = vtanh.pop %v507
  %511 = vset.pattern.permute.xlu0 0
  %512 = vperm.xlu0 %511, %v38
  %v513 = vpop.permute.xlu0 %512
  %v515 = vmul.f32 %v508, %v513
  %v516 = vmul.f32 %v509, %v513
  %v519 = vrot.slane %v515, 6
  %v520 = vrot.slane %v516, 6
  %v523 = vsel %vm47, 0.0, %v519
  %v524 = vsel %vm47, 0.0, %v520
  %v525 = vld [vmem:[%s5] sm:$0xff]
  %v526 = vld [vmem:[%s5 + $0x8] sm:$0xff]
  %v527 = vrot.slane %v515, 7
  %v528 = vrot.slane %v516, 7
  %v531 = vsel %vm55, 0.0, %v527
  %v532 = vsel %vm55, 0.0, %v528
  %s533 = scalar_lea.vmem %s5, 16
  %v534 = vld [vmem:[%s533] sm:$0xff]
  %v535 = vld [vmem:[%s533 + $0x8] sm:$0xff]
  %vm536 = vcmask 130048
  %v538 = vsel %vm536, %v531, 0
  %v541 = vsel %vm536, %v532, 0
  %543 = vmatprep.subr.mxu0 0.0
  %544 = vmatpush1.msra.mxu0 0.0
  %545 = vmatprep.subr.mxu0 0.0
  %546 = vmatpush1.msra.mxu0 0.0
  %547 = vmatprep.subr.mxu0 0.0
  %548 = vmatpush1.msra.mxu0 0.0
  %549 = vmatprep.subr.mxu0 0.0
  %550 = vmatpush1.msra.mxu0 0.0
  %551 = vmatprep.subr.mxu0 0.0
  %552 = vmatpush1.msra.mxu0 0.0
  %553 = vmatprep.subr.mxu0 0.0
  %554 = vmatpush1.msra.mxu0 0.0
  %555 = vmatprep.subr.mxu0 0.0
  %556 = vmatpush1.msra.mxu0 0.0
  %557 = vmatprep.subr.mxu0 0.0
  %558 = vmatpush1.msra.mxu0 0.0
  %559 = vmatprep.subr.mxu0 0.0
  %560 = vmatpush1.msra.mxu0 0.0
  %561 = vmatprep.subr.mxu0 0.0
  %562 = vmatpush1.msra.mxu0 0.0
  %563 = vmatprep.subr.mxu0 0.0
  %564 = vmatpush1.msra.mxu0 0.0
  %565 = vmatprep.subr.mxu0 0.0
  %566 = vmatpush1.msra.mxu0 0.0
  %567 = vmatprep.subr.mxu0 0.0
  %568 = vmatpush1.msra.mxu0 0.0
  %569 = vmatprep.subr.mxu0 0.0
  %570 = vmatpush1.msra.mxu0 0.0
  %571 = vmatprep.subr.mxu0 0.0
  %572 = vmatpush1.msra.mxu0 %v535
  %573 = vmatprep.subr.mxu0 0.0
  %574 = vmatpush1.msra.mxu0 %v534
  %575 = vmatprep.subr.mxu0 0.0
  %576 = vmatpush2.msra.mxu0 0.0
  %577 = vmatprep.subr.mxu0 0.0
  %578 = vmatpush2.msra.mxu0 0.0
  %579 = vmatprep.subr.mxu0 0.0
  %580 = vmatpush2.msra.mxu0 0.0
  %581 = vmatprep.subr.mxu0 0.0
  %582 = vmatpush2.msra.mxu0 0.0
  %583 = vmatprep.subr.mxu0 0.0
  %584 = vmatpush2.msra.mxu0 0.0
  %585 = vmatprep.subr.mxu0 0.0
  %586 = vmatpush2.msra.mxu0 0.0
  %587 = vmatprep.subr.mxu0 0.0
  %588 = vmatpush2.msra.mxu0 0.0
  %589 = vmatprep.subr.mxu0 0.0
  %590 = vmatpush2.msra.mxu0 0.0
  %591 = vmatprep.subr.mxu0 0.0
  %592 = vmatpush2.msra.mxu0 0.0
  %593 = vmatprep.subr.mxu0 0.0
  %594 = vmatpush2.msra.mxu0 0.0
  %595 = vmatprep.subr.mxu0 0.0
  %596 = vmatpush2.msra.mxu0 0.0
  %597 = vmatprep.subr.mxu0 0.0
  %598 = vmatpush2.msra.mxu0 0.0
  %599 = vmatprep.subr.mxu0 0.0
  %600 = vmatpush2.msra.mxu0 0.0
  %601 = vmatprep.subr.mxu0 0.0
  %602 = vmatpush2.msra.mxu0 0.0
  %603 = vmatprep.subr.mxu0 0.0
  %604 = vmatpush2.msra.mxu0 0.0
  %605 = vmatprep.subr.mxu0 0.0
  %606 = vmatpush2.msra.mxu0 0.0
  %607 = vmatprep.mubr.f32.mxu0 0.0
  %608 = vmatmul.mubr.f32.gmra.mxu0 %v538
  %v609 = vpop.f32.mrf.mxu0
  %v610 = vadd.f32 0.0, %v609
  %v611 = vpop.f32.mrf.mxu0
  %612 = vmatprep.mubr.f32.mxu0 0.0
  %613 = vmatmul.mubr.f32.gmra.mxu0 %v541
  %v614 = vpop.f32.mrf.mxu0
  %v615 = vadd.f32 0.0, %v614
  %v616 = vpop.f32.mrf.mxu0
  %617 = vdwg.mxu0
  %v619 = vsel %vm536, %v523, 0
  %v622 = vsel %vm536, %v524, 0
  %624 = vmatprep.subr.mxu0 0.0
  %625 = vmatpush1.msra.mxu0 0.0
  %626 = vmatprep.subr.mxu0 0.0
  %627 = vmatpush1.msra.mxu0 0.0
  %628 = vmatprep.subr.mxu0 0.0
  %629 = vmatpush1.msra.mxu0 0.0
  %630 = vmatprep.subr.mxu0 0.0
  %631 = vmatpush1.msra.mxu0 0.0
  %632 = vmatprep.subr.mxu0 0.0
  %633 = vmatpush1.msra.mxu0 0.0
  %634 = vmatprep.subr.mxu0 0.0
  %635 = vmatpush1.msra.mxu0 0.0
  %636 = vmatprep.subr.mxu0 0.0
  %637 = vmatpush1.msra.mxu0 0.0
  %638 = vmatprep.subr.mxu0 0.0
  %639 = vmatpush1.msra.mxu0 0.0
  %640 = vmatprep.subr.mxu0 0.0
  %641 = vmatpush1.msra.mxu0 0.0
  %642 = vmatprep.subr.mxu0 0.0
  %643 = vmatpush1.msra.mxu0 0.0
  %644 = vmatprep.subr.mxu0 0.0
  %645 = vmatpush1.msra.mxu0 0.0
  %646 = vmatprep.subr.mxu0 0.0
  %647 = vmatpush1.msra.mxu0 0.0
  %648 = vmatprep.subr.mxu0 0.0
  %649 = vmatpush1.msra.mxu0 0.0
  %650 = vmatprep.subr.mxu0 0.0
  %651 = vmatpush1.msra.mxu0 0.0
  %652 = vmatprep.subr.mxu0 0.0
  %653 = vmatpush1.msra.mxu0 %v526
  %654 = vmatprep.subr.mxu0 0.0
  %655 = vmatpush1.msra.mxu0 %v525
  %656 = vmatprep.subr.mxu0 0.0
  %657 = vmatpush2.msra.mxu0 0.0
  %658 = vmatprep.subr.mxu0 0.0
  %659 = vmatpush2.msra.mxu0 0.0
  %660 = vmatprep.subr.mxu0 0.0
  %661 = vmatpush2.msra.mxu0 0.0
  %662 = vmatprep.subr.mxu0 0.0
  %663 = vmatpush2.msra.mxu0 0.0
  %664 = vmatprep.subr.mxu0 0.0
  %665 = vmatpush2.msra.mxu0 0.0
  %666 = vmatprep.subr.mxu0 0.0
  %667 = vmatpush2.msra.mxu0 0.0
  %668 = vmatprep.subr.mxu0 0.0
  %669 = vmatpush2.msra.mxu0 0.0
  %670 = vmatprep.subr.mxu0 0.0
  %671 = vmatpush2.msra.mxu0 0.0
  %672 = vmatprep.subr.mxu0 0.0
  %673 = vmatpush2.msra.mxu0 0.0
  %674 = vmatprep.subr.mxu0 0.0
  %675 = vmatpush2.msra.mxu0 0.0
  %676 = vmatprep.subr.mxu0 0.0
  %677 = vmatpush2.msra.mxu0 0.0
  %678 = vmatprep.subr.mxu0 0.0
  %679 = vmatpush2.msra.mxu0 0.0
  %680 = vmatprep.subr.mxu0 0.0
  %681 = vmatpush2.msra.mxu0 0.0
  %682 = vmatprep.subr.mxu0 0.0
  %683 = vmatpush2.msra.mxu0 0.0
  %684 = vmatprep.subr.mxu0 0.0
  %685 = vmatpush2.msra.mxu0 0.0
  %686 = vmatprep.subr.mxu0 0.0
  %687 = vmatpush2.msra.mxu0 0.0
  %688 = vmatprep.mubr.f32.mxu0 0.0
  %689 = vmatmul.mubr.f32.gmra.mxu0 %v619
  %v690 = vpop.f32.mrf.mxu0
  %v691 = vadd.f32 %v610, %v690
  %v692 = vpop.f32.mrf.mxu0
  %693 = vmatprep.mubr.f32.mxu0 0.0
  %694 = vmatmul.mubr.f32.gmra.mxu0 %v622
  %v695 = vpop.f32.mrf.mxu0
  %v696 = vadd.f32 %v615, %v695
  %v697 = vpop.f32.mrf.mxu0
  %698 = vdwg.mxu0
  %s699 = scalar_lea.vmem %s5, 32
  %v700 = vld [vmem:[%s699] sm:$0xff]
  %v701 = vld [vmem:[%s699 + $0x8] sm:$0xff]
  %v702 = vsel %vm536, %v515, 0
  %v704 = vsel %vm536, %v516, 0
  %706 = vmatprep.subr.mxu0 0.0
  %707 = vmatpush1.msra.mxu0 0.0
  %708 = vmatprep.subr.mxu0 0.0
  %709 = vmatpush1.msra.mxu0 0.0
  %710 = vmatprep.subr.mxu0 0.0
  %711 = vmatpush1.msra.mxu0 0.0
  %712 = vmatprep.subr.mxu0 0.0
  %713 = vmatpush1.msra.mxu0 0.0
  %714 = vmatprep.subr.mxu0 0.0
  %715 = vmatpush1.msra.mxu0 0.0
  %716 = vmatprep.subr.mxu0 0.0
  %717 = vmatpush1.msra.mxu0 0.0
  %718 = vmatprep.subr.mxu0 0.0
  %719 = vmatpush1.msra.mxu0 0.0
  %720 = vmatprep.subr.mxu0 0.0
  %721 = vmatpush1.msra.mxu0 0.0
  %722 = vmatprep.subr.mxu0 0.0
  %723 = vmatpush1.msra.mxu0 0.0
  %724 = vmatprep.subr.mxu0 0.0
  %725 = vmatpush1.msra.mxu0 0.0
  %726 = vmatprep.subr.mxu0 0.0
  %727 = vmatpush1.msra.mxu0 0.0
  %728 = vmatprep.subr.mxu0 0.0
  %729 = vmatpush1.msra.mxu0 0.0
  %730 = vmatprep.subr.mxu0 0.0
  %731 = vmatpush1.msra.mxu0 0.0
  %732 = vmatprep.subr.mxu0 0.0
  %733 = vmatpush1.msra.mxu0 0.0
  %734 = vmatprep.subr.mxu0 0.0
  %735 = vmatpush1.msra.mxu0 %v701
  %736 = vmatprep.subr.mxu0 0.0
  %737 = vmatpush1.msra.mxu0 %v700
  %738 = vmatprep.subr.mxu0 0.0
  %739 = vmatpush2.msra.mxu0 0.0
  %740 = vmatprep.subr.mxu0 0.0
  %741 = vmatpush2.msra.mxu0 0.0
  %742 = vmatprep.subr.mxu0 0.0
  %743 = vmatpush2.msra.mxu0 0.0
  %744 = vmatprep.subr.mxu0 0.0
  %745 = vmatpush2.msra.mxu0 0.0
  %746 = vmatprep.subr.mxu0 0.0
  %747 = vmatpush2.msra.mxu0 0.0
  %748 = vmatprep.subr.mxu0 0.0
  %749 = vmatpush2.msra.mxu0 0.0
  %750 = vmatprep.subr.mxu0 0.0
  %751 = vmatpush2.msra.mxu0 0.0
  %752 = vmatprep.subr.mxu0 0.0
  %753 = vmatpush2.msra.mxu0 0.0
  %754 = vmatprep.subr.mxu0 0.0
  %755 = vmatpush2.msra.mxu0 0.0
  %756 = vmatprep.subr.mxu0 0.0
  %757 = vmatpush2.msra.mxu0 0.0
  %758 = vmatprep.subr.mxu0 0.0
  %759 = vmatpush2.msra.mxu0 0.0
  %760 = vmatprep.subr.mxu0 0.0
  %761 = vmatpush2.msra.mxu0 0.0
  %762 = vmatprep.subr.mxu0 0.0
  %763 = vmatpush2.msra.mxu0 0.0
  %764 = vmatprep.subr.mxu0 0.0
  %765 = vmatpush2.msra.mxu0 0.0
  %766 = vmatprep.subr.mxu0 0.0
  %767 = vmatpush2.msra.mxu0 0.0
  %768 = vmatprep.subr.mxu0 0.0
  %769 = vmatpush2.msra.mxu0 0.0
  %770 = vmatprep.mubr.f32.mxu0 0.0
  %771 = vmatmul.mubr.f32.gmra.mxu0 %v702
  %v772 = vpop.f32.mrf.mxu0
  %v773 = vadd.f32 0.0, %v772
  %v774 = vpop.f32.mrf.mxu0
  %775 = vmatprep.mubr.f32.mxu0 0.0
  %776 = vmatmul.mubr.f32.gmra.mxu0 %v704
  %v777 = vpop.f32.mrf.mxu0
  %v778 = vadd.f32 0.0, %v777
  %v779 = vpop.f32.mrf.mxu0
  %780 = vdwg.mxu0
  %v781 = vadd.f32 %v691, %v773
  %v782 = vadd.f32 %v696, %v778
  %v783 = vrot.slane %v515, 1
  %v784 = vrot.slane %v516, 1
  %v787 = vsel %vm310, %v783, 0.0
  %v788 = vsel %vm310, %v784, 0.0
  %s789 = scalar_lea.vmem %s5, 48
  %v790 = vld [vmem:[%s789] sm:$0xff]
  %v791 = vld [vmem:[%s789 + $0x8] sm:$0xff]
  %v793 = vsel %vm536, %v787, 0
  %v796 = vsel %vm536, %v788, 0
  %798 = vmatprep.subr.mxu0 0.0
  %799 = vmatpush1.msra.mxu0 0.0
  %800 = vmatprep.subr.mxu0 0.0
  %801 = vmatpush1.msra.mxu0 0.0
  %802 = vmatprep.subr.mxu0 0.0
  %803 = vmatpush1.msra.mxu0 0.0
  %804 = vmatprep.subr.mxu0 0.0
  %805 = vmatpush1.msra.mxu0 0.0
  %806 = vmatprep.subr.mxu0 0.0
  %807 = vmatpush1.msra.mxu0 0.0
  %808 = vmatprep.subr.mxu0 0.0
  %809 = vmatpush1.msra.mxu0 0.0
  %810 = vmatprep.subr.mxu0 0.0
  %811 = vmatpush1.msra.mxu0 0.0
  %812 = vmatprep.subr.mxu0 0.0
  %813 = vmatpush1.msra.mxu0 0.0
  %814 = vmatprep.subr.mxu0 0.0
  %815 = vmatpush1.msra.mxu0 0.0
  %816 = vmatprep.subr.mxu0 0.0
  %817 = vmatpush1.msra.mxu0 0.0
  %818 = vmatprep.subr.mxu0 0.0
  %819 = vmatpush1.msra.mxu0 0.0
  %820 = vmatprep.subr.mxu0 0.0
  %821 = vmatpush1.msra.mxu0 0.0
  %822 = vmatprep.subr.mxu0 0.0
  %823 = vmatpush1.msra.mxu0 0.0
  %824 = vmatprep.subr.mxu0 0.0
  %825 = vmatpush1.msra.mxu0 0.0
  %826 = vmatprep.subr.mxu0 0.0
  %827 = vmatpush1.msra.mxu0 %v791
  %828 = vmatprep.subr.mxu0 0.0
  %829 = vmatpush1.msra.mxu0 %v790
  %830 = vmatprep.subr.mxu0 0.0
  %831 = vmatpush2.msra.mxu0 0.0
  %832 = vmatprep.subr.mxu0 0.0
  %833 = vmatpush2.msra.mxu0 0.0
  %834 = vmatprep.subr.mxu0 0.0
  %835 = vmatpush2.msra.mxu0 0.0
  %836 = vmatprep.subr.mxu0 0.0
  %837 = vmatpush2.msra.mxu0 0.0
  %838 = vmatprep.subr.mxu0 0.0
  %839 = vmatpush2.msra.mxu0 0.0
  %840 = vmatprep.subr.mxu0 0.0
  %841 = vmatpush2.msra.mxu0 0.0
  %842 = vmatprep.subr.mxu0 0.0
  %843 = vmatpush2.msra.mxu0 0.0
  %844 = vmatprep.subr.mxu0 0.0
  %845 = vmatpush2.msra.mxu0 0.0
  %846 = vmatprep.subr.mxu0 0.0
  %847 = vmatpush2.msra.mxu0 0.0
  %848 = vmatprep.subr.mxu0 0.0
  %849 = vmatpush2.msra.mxu0 0.0
  %850 = vmatprep.subr.mxu0 0.0
  %851 = vmatpush2.msra.mxu0 0.0
  %852 = vmatprep.subr.mxu0 0.0
  %853 = vmatpush2.msra.mxu0 0.0
  %854 = vmatprep.subr.mxu0 0.0
  %855 = vmatpush2.msra.mxu0 0.0
  %856 = vmatprep.subr.mxu0 0.0
  %857 = vmatpush2.msra.mxu0 0.0
  %858 = vmatprep.subr.mxu0 0.0
  %859 = vmatpush2.msra.mxu0 0.0
  %860 = vmatprep.subr.mxu0 0.0
  %861 = vmatpush2.msra.mxu0 0.0
  %862 = vmatprep.mubr.f32.mxu0 0.0
  %863 = vmatmul.mubr.f32.gmra.mxu0 %v793
  %v864 = vpop.f32.mrf.mxu0
  %v865 = vadd.f32 0.0, %v864
  %v866 = vpop.f32.mrf.mxu0
  %867 = vmatprep.mubr.f32.mxu0 0.0
  %868 = vmatmul.mubr.f32.gmra.mxu0 %v796
  %v869 = vpop.f32.mrf.mxu0
  %v870 = vadd.f32 0.0, %v869
  %v871 = vpop.f32.mrf.mxu0
  %872 = vdwg.mxu0
  %v873 = vadd.f32 %v781, %v865
  %v874 = vadd.f32 %v782, %v870
  %v875 = vrot.slane %v515, 2
  %v876 = vrot.slane %v516, 2
  %v879 = vsel %vm402, %v875, 0.0
  %v880 = vsel %vm402, %v876, 0.0
  %s881 = scalar_lea.vmem %s5, 64
  %v882 = vld [vmem:[%s881] sm:$0xff]
  %v883 = vld [vmem:[%s881 + $0x8] sm:$0xff]
  %v885 = vsel %vm536, %v879, 0
  %v888 = vsel %vm536, %v880, 0
  %890 = vmatprep.subr.mxu0 0.0
  %891 = vmatpush1.msra.mxu0 0.0
  %892 = vmatprep.subr.mxu0 0.0
  %893 = vmatpush1.msra.mxu0 0.0
  %894 = vmatprep.subr.mxu0 0.0
  %895 = vmatpush1.msra.mxu0 0.0
  %896 = vmatprep.subr.mxu0 0.0
  %897 = vmatpush1.msra.mxu0 0.0
  %898 = vmatprep.subr.mxu0 0.0
  %899 = vmatpush1.msra.mxu0 0.0
  %900 = vmatprep.subr.mxu0 0.0
  %901 = vmatpush1.msra.mxu0 0.0
  %902 = vmatprep.subr.mxu0 0.0
  %903 = vmatpush1.msra.mxu0 0.0
  %904 = vmatprep.subr.mxu0 0.0
  %905 = vmatpush1.msra.mxu0 0.0
  %906 = vmatprep.subr.mxu0 0.0
  %907 = vmatpush1.msra.mxu0 0.0
  %908 = vmatprep.subr.mxu0 0.0
  %909 = vmatpush1.msra.mxu0 0.0
  %910 = vmatprep.subr.mxu0 0.0
  %911 = vmatpush1.msra.mxu0 0.0
  %912 = vmatprep.subr.mxu0 0.0
  %913 = vmatpush1.msra.mxu0 0.0
  %914 = vmatprep.subr.mxu0 0.0
  %915 = vmatpush1.msra.mxu0 0.0
  %916 = vmatprep.subr.mxu0 0.0
  %917 = vmatpush1.msra.mxu0 0.0
  %918 = vmatprep.subr.mxu0 0.0
  %919 = vmatpush1.msra.mxu0 %v883
  %920 = vmatprep.subr.mxu0 0.0
  %921 = vmatpush1.msra.mxu0 %v882
  %922 = vmatprep.subr.mxu0 0.0
  %923 = vmatpush2.msra.mxu0 0.0
  %924 = vmatprep.subr.mxu0 0.0
  %925 = vmatpush2.msra.mxu0 0.0
  %926 = vmatprep.subr.mxu0 0.0
  %927 = vmatpush2.msra.mxu0 0.0
  %928 = vmatprep.subr.mxu0 0.0
  %929 = vmatpush2.msra.mxu0 0.0
  %930 = vmatprep.subr.mxu0 0.0
  %931 = vmatpush2.msra.mxu0 0.0
  %932 = vmatprep.subr.mxu0 0.0
  %933 = vmatpush2.msra.mxu0 0.0
  %934 = vmatprep.subr.mxu0 0.0
  %935 = vmatpush2.msra.mxu0 0.0
  %936 = vmatprep.subr.mxu0 0.0
  %937 = vmatpush2.msra.mxu0 0.0
  %938 = vmatprep.subr.mxu0 0.0
  %939 = vmatpush2.msra.mxu0 0.0
  %940 = vmatprep.subr.mxu0 0.0
  %941 = vmatpush2.msra.mxu0 0.0
  %942 = vmatprep.subr.mxu0 0.0
  %943 = vmatpush2.msra.mxu0 0.0
  %944 = vmatprep.subr.mxu0 0.0
  %945 = vmatpush2.msra.mxu0 0.0
  %946 = vmatprep.subr.mxu0 0.0
  %947 = vmatpush2.msra.mxu0 0.0
  %948 = vmatprep.subr.mxu0 0.0
  %949 = vmatpush2.msra.mxu0 0.0
  %950 = vmatprep.subr.mxu0 0.0
  %951 = vmatpush2.msra.mxu0 0.0
  %952 = vmatprep.subr.mxu0 0.0
  %953 = vmatpush2.msra.mxu0 0.0
  %954 = vmatprep.mubr.f32.mxu0 0.0
  %955 = vmatmul.mubr.f32.gmra.mxu0 %v885
  %v956 = vpop.f32.mrf.mxu0
  %v957 = vadd.f32 0.0, %v956
  %v958 = vpop.f32.mrf.mxu0
  %959 = vmatprep.mubr.f32.mxu0 0.0
  %960 = vmatmul.mubr.f32.gmra.mxu0 %v888
  %v961 = vpop.f32.mrf.mxu0
  %v962 = vadd.f32 0.0, %v961
  %v963 = vpop.f32.mrf.mxu0
  %964 = vdwg.mxu0
  %v965 = vadd.f32 %v873, %v957
  %v966 = vadd.f32 %v874, %v962
  %v967 = vld [vmem:[%s6] sm:$0x1]
  %v969 = vlaneseq
  %v970 = vshrl.u32 %v969, 7
  %v971 = vsub.s32 0, %v970
  %v972 = vrot.slane %v967, %v971
  %v974 = vmul.f32 %v965, %v972
  %v975 = vmul.f32 %v966, %v972
  %v976 = vld [vmem:[%s7] sm:$0x1]
  %v978 = vlaneseq
  %v979 = vshrl.u32 %v978, 7
  %v980 = vsub.s32 0, %v979
  %v981 = vrot.slane %v976, %v980
  %v983 = vadd.f32 %v974, %v981
  %v984 = vadd.f32 %v975, %v981
  %v985 = vtanh.pop %v983
  %v986 = vtanh.pop %v984
  %v987 = vmul.f32 %v985, %v513
  %v988 = vmul.f32 %v986, %v513
  %v991 = vrot.slane %v987, 6
  %v992 = vrot.slane %v988, 6
  %v995 = vsel %vm47, 0.0, %v991
  %v996 = vsel %vm47, 0.0, %v992
  %v997 = vld [vmem:[%s8] sm:$0xff]
  %v998 = vld [vmem:[%s8 + $0x8] sm:$0xff]
  %v999 = vrot.slane %v987, 7
  %v1000 = vrot.slane %v988, 7
  %v1003 = vsel %vm55, 0.0, %v999
  %v1004 = vsel %vm55, 0.0, %v1000
  %s1005 = scalar_lea.vmem %s8, 16
  %v1006 = vld [vmem:[%s1005] sm:$0xff]
  %v1007 = vld [vmem:[%s1005 + $0x8] sm:$0xff]
  %v1009 = vsel %vm536, %v1003, 0
  %v1012 = vsel %vm536, %v1004, 0
  %1014 = vmatprep.subr.mxu0 0.0
  %1015 = vmatpush1.msra.mxu0 0.0
  %1016 = vmatprep.subr.mxu0 0.0
  %1017 = vmatpush1.msra.mxu0 0.0
  %1018 = vmatprep.subr.mxu0 0.0
  %1019 = vmatpush1.msra.mxu0 0.0
  %1020 = vmatprep.subr.mxu0 0.0
  %1021 = vmatpush1.msra.mxu0 0.0
  %1022 = vmatprep.subr.mxu0 0.0
  %1023 = vmatpush1.msra.mxu0 0.0
  %1024 = vmatprep.subr.mxu0 0.0
  %1025 = vmatpush1.msra.mxu0 0.0
  %1026 = vmatprep.subr.mxu0 0.0
  %1027 = vmatpush1.msra.mxu0 0.0
  %1028 = vmatprep.subr.mxu0 0.0
  %1029 = vmatpush1.msra.mxu0 0.0
  %1030 = vmatprep.subr.mxu0 0.0
  %1031 = vmatpush1.msra.mxu0 0.0
  %1032 = vmatprep.subr.mxu0 0.0
  %1033 = vmatpush1.msra.mxu0 0.0
  %1034 = vmatprep.subr.mxu0 0.0
  %1035 = vmatpush1.msra.mxu0 0.0
  %1036 = vmatprep.subr.mxu0 0.0
  %1037 = vmatpush1.msra.mxu0 0.0
  %1038 = vmatprep.subr.mxu0 0.0
  %1039 = vmatpush1.msra.mxu0 0.0
  %1040 = vmatprep.subr.mxu0 0.0
  %1041 = vmatpush1.msra.mxu0 0.0
  %1042 = vmatprep.subr.mxu0 0.0
  %1043 = vmatpush1.msra.mxu0 %v1007
  %1044 = vmatprep.subr.mxu0 0.0
  %1045 = vmatpush1.msra.mxu0 %v1006
  %1046 = vmatprep.subr.mxu0 0.0
  %1047 = vmatpush2.msra.mxu0 0.0
  %1048 = vmatprep.subr.mxu0 0.0
  %1049 = vmatpush2.msra.mxu0 0.0
  %1050 = vmatprep.subr.mxu0 0.0
  %1051 = vmatpush2.msra.mxu0 0.0
  %1052 = vmatprep.subr.mxu0 0.0
  %1053 = vmatpush2.msra.mxu0 0.0
  %1054 = vmatprep.subr.mxu0 0.0
  %1055 = vmatpush2.msra.mxu0 0.0
  %1056 = vmatprep.subr.mxu0 0.0
  %1057 = vmatpush2.msra.mxu0 0.0
  %1058 = vmatprep.subr.mxu0 0.0
  %1059 = vmatpush2.msra.mxu0 0.0
  %1060 = vmatprep.subr.mxu0 0.0
  %1061 = vmatpush2.msra.mxu0 0.0
  %1062 = vmatprep.subr.mxu0 0.0
  %1063 = vmatpush2.msra.mxu0 0.0
  %1064 = vmatprep.subr.mxu0 0.0
  %1065 = vmatpush2.msra.mxu0 0.0
  %1066 = vmatprep.subr.mxu0 0.0
  %1067 = vmatpush2.msra.mxu0 0.0
  %1068 = vmatprep.subr.mxu0 0.0
  %1069 = vmatpush2.msra.mxu0 0.0
  %1070 = vmatprep.subr.mxu0 0.0
  %1071 = vmatpush2.msra.mxu0 0.0
  %1072 = vmatprep.subr.mxu0 0.0
  %1073 = vmatpush2.msra.mxu0 0.0
  %1074 = vmatprep.subr.mxu0 0.0
  %1075 = vmatpush2.msra.mxu0 0.0
  %1076 = vmatprep.subr.mxu0 0.0
  %1077 = vmatpush2.msra.mxu0 0.0
  %1078 = vmatprep.mubr.f32.mxu0 0.0
  %1079 = vmatmul.mubr.f32.gmra.mxu0 %v1009
  %v1080 = vpop.f32.mrf.mxu0
  %v1081 = vadd.f32 0.0, %v1080
  %v1082 = vpop.f32.mrf.mxu0
  %1083 = vmatprep.mubr.f32.mxu0 0.0
  %1084 = vmatmul.mubr.f32.gmra.mxu0 %v1012
  %v1085 = vpop.f32.mrf.mxu0
  %v1086 = vadd.f32 0.0, %v1085
  %v1087 = vpop.f32.mrf.mxu0
  %1088 = vdwg.mxu0
  %v1090 = vsel %vm536, %v995, 0
  %v1093 = vsel %vm536, %v996, 0
  %1095 = vmatprep.subr.mxu0 0.0
  %1096 = vmatpush1.msra.mxu0 0.0
  %1097 = vmatprep.subr.mxu0 0.0
  %1098 = vmatpush1.msra.mxu0 0.0
  %1099 = vmatprep.subr.mxu0 0.0
  %1100 = vmatpush1.msra.mxu0 0.0
  %1101 = vmatprep.subr.mxu0 0.0
  %1102 = vmatpush1.msra.mxu0 0.0
  %1103 = vmatprep.subr.mxu0 0.0
  %1104 = vmatpush1.msra.mxu0 0.0
  %1105 = vmatprep.subr.mxu0 0.0
  %1106 = vmatpush1.msra.mxu0 0.0
  %1107 = vmatprep.subr.mxu0 0.0
  %1108 = vmatpush1.msra.mxu0 0.0
  %1109 = vmatprep.subr.mxu0 0.0
  %1110 = vmatpush1.msra.mxu0 0.0
  %1111 = vmatprep.subr.mxu0 0.0
  %1112 = vmatpush1.msra.mxu0 0.0
  %1113 = vmatprep.subr.mxu0 0.0
  %1114 = vmatpush1.msra.mxu0 0.0
  %1115 = vmatprep.subr.mxu0 0.0
  %1116 = vmatpush1.msra.mxu0 0.0
  %1117 = vmatprep.subr.mxu0 0.0
  %1118 = vmatpush1.msra.mxu0 0.0
  %1119 = vmatprep.subr.mxu0 0.0
  %1120 = vmatpush1.msra.mxu0 0.0
  %1121 = vmatprep.subr.mxu0 0.0
  %1122 = vmatpush1.msra.mxu0 0.0
  %1123 = vmatprep.subr.mxu0 0.0
  %1124 = vmatpush1.msra.mxu0 %v998
  %1125 = vmatprep.subr.mxu0 0.0
  %1126 = vmatpush1.msra.mxu0 %v997
  %1127 = vmatprep.subr.mxu0 0.0
  %1128 = vmatpush2.msra.mxu0 0.0
  %1129 = vmatprep.subr.mxu0 0.0
  %1130 = vmatpush2.msra.mxu0 0.0
  %1131 = vmatprep.subr.mxu0 0.0
  %1132 = vmatpush2.msra.mxu0 0.0
  %1133 = vmatprep.subr.mxu0 0.0
  %1134 = vmatpush2.msra.mxu0 0.0
  %1135 = vmatprep.subr.mxu0 0.0
  %1136 = vmatpush2.msra.mxu0 0.0
  %1137 = vmatprep.subr.mxu0 0.0
  %1138 = vmatpush2.msra.mxu0 0.0
  %1139 = vmatprep.subr.mxu0 0.0
  %1140 = vmatpush2.msra.mxu0 0.0
  %1141 = vmatprep.subr.mxu0 0.0
  %1142 = vmatpush2.msra.mxu0 0.0
  %1143 = vmatprep.subr.mxu0 0.0
  %1144 = vmatpush2.msra.mxu0 0.0
  %1145 = vmatprep.subr.mxu0 0.0
  %1146 = vmatpush2.msra.mxu0 0.0
  %1147 = vmatprep.subr.mxu0 0.0
  %1148 = vmatpush2.msra.mxu0 0.0
  %1149 = vmatprep.subr.mxu0 0.0
  %1150 = vmatpush2.msra.mxu0 0.0
  %1151 = vmatprep.subr.mxu0 0.0
  %1152 = vmatpush2.msra.mxu0 0.0
  %1153 = vmatprep.subr.mxu0 0.0
  %1154 = vmatpush2.msra.mxu0 0.0
  %1155 = vmatprep.subr.mxu0 0.0
  %1156 = vmatpush2.msra.mxu0 0.0
  %1157 = vmatprep.subr.mxu0 0.0
  %1158 = vmatpush2.msra.mxu0 0.0
  %1159 = vmatprep.mubr.f32.mxu0 0.0
  %1160 = vmatmul.mubr.f32.gmra.mxu0 %v1090
  %v1161 = vpop.f32.mrf.mxu0
  %v1162 = vadd.f32 %v1081, %v1161
  %v1163 = vpop.f32.mrf.mxu0
  %1164 = vmatprep.mubr.f32.mxu0 0.0
  %1165 = vmatmul.mubr.f32.gmra.mxu0 %v1093
  %v1166 = vpop.f32.mrf.mxu0
  %v1167 = vadd.f32 %v1086, %v1166
  %v1168 = vpop.f32.mrf.mxu0
  %1169 = vdwg.mxu0
  %s1170 = scalar_lea.vmem %s8, 32
  %v1171 = vld [vmem:[%s1170] sm:$0xff]
  %v1172 = vld [vmem:[%s1170 + $0x8] sm:$0xff]
  %v1173 = vsel %vm536, %v987, 0
  %v1175 = vsel %vm536, %v988, 0
  %1177 = vmatprep.subr.mxu0 0.0
  %1178 = vmatpush1.msra.mxu0 0.0
  %1179 = vmatprep.subr.mxu0 0.0
  %1180 = vmatpush1.msra.mxu0 0.0
  %1181 = vmatprep.subr.mxu0 0.0
  %1182 = vmatpush1.msra.mxu0 0.0
  %1183 = vmatprep.subr.mxu0 0.0
  %1184 = vmatpush1.msra.mxu0 0.0
  %1185 = vmatprep.subr.mxu0 0.0
  %1186 = vmatpush1.msra.mxu0 0.0
  %1187 = vmatprep.subr.mxu0 0.0
  %1188 = vmatpush1.msra.mxu0 0.0
  %1189 = vmatprep.subr.mxu0 0.0
  %1190 = vmatpush1.msra.mxu0 0.0
  %1191 = vmatprep.subr.mxu0 0.0
  %1192 = vmatpush1.msra.mxu0 0.0
  %1193 = vmatprep.subr.mxu0 0.0
  %1194 = vmatpush1.msra.mxu0 0.0
  %1195 = vmatprep.subr.mxu0 0.0
  %1196 = vmatpush1.msra.mxu0 0.0
  %1197 = vmatprep.subr.mxu0 0.0
  %1198 = vmatpush1.msra.mxu0 0.0
  %1199 = vmatprep.subr.mxu0 0.0
  %1200 = vmatpush1.msra.mxu0 0.0
  %1201 = vmatprep.subr.mxu0 0.0
  %1202 = vmatpush1.msra.mxu0 0.0
  %1203 = vmatprep.subr.mxu0 0.0
  %1204 = vmatpush1.msra.mxu0 0.0
  %1205 = vmatprep.subr.mxu0 0.0
  %1206 = vmatpush1.msra.mxu0 %v1172
  %1207 = vmatprep.subr.mxu0 0.0
  %1208 = vmatpush1.msra.mxu0 %v1171
  %1209 = vmatprep.subr.mxu0 0.0
  %1210 = vmatpush2.msra.mxu0 0.0
  %1211 = vmatprep.subr.mxu0 0.0
  %1212 = vmatpush2.msra.mxu0 0.0
  %1213 = vmatprep.subr.mxu0 0.0
  %1214 = vmatpush2.msra.mxu0 0.0
  %1215 = vmatprep.subr.mxu0 0.0
  %1216 = vmatpush2.msra.mxu0 0.0
  %1217 = vmatprep.subr.mxu0 0.0
  %1218 = vmatpush2.msra.mxu0 0.0
  %1219 = vmatprep.subr.mxu0 0.0
  %1220 = vmatpush2.msra.mxu0 0.0
  %1221 = vmatprep.subr.mxu0 0.0
  %1222 = vmatpush2.msra.mxu0 0.0
  %1223 = vmatprep.subr.mxu0 0.0
  %1224 = vmatpush2.msra.mxu0 0.0
  %1225 = vmatprep.subr.mxu0 0.0
  %1226 = vmatpush2.msra.mxu0 0.0
  %1227 = vmatprep.subr.mxu0 0.0
  %1228 = vmatpush2.msra.mxu0 0.0
  %1229 = vmatprep.subr.mxu0 0.0
  %1230 = vmatpush2.msra.mxu0 0.0
  %1231 = vmatprep.subr.mxu0 0.0
  %1232 = vmatpush2.msra.mxu0 0.0
  %1233 = vmatprep.subr.mxu0 0.0
  %1234 = vmatpush2.msra.mxu0 0.0
  %1235 = vmatprep.subr.mxu0 0.0
  %1236 = vmatpush2.msra.mxu0 0.0
  %1237 = vmatprep.subr.mxu0 0.0
  %1238 = vmatpush2.msra.mxu0 0.0
  %1239 = vmatprep.subr.mxu0 0.0
  %1240 = vmatpush2.msra.mxu0 0.0
  %1241 = vmatprep.mubr.f32.mxu0 0.0
  %1242 = vmatmul.mubr.f32.gmra.mxu0 %v1173
  %v1243 = vpop.f32.mrf.mxu0
  %v1244 = vadd.f32 0.0, %v1243
  %v1245 = vpop.f32.mrf.mxu0
  %1246 = vmatprep.mubr.f32.mxu0 0.0
  %1247 = vmatmul.mubr.f32.gmra.mxu0 %v1175
  %v1248 = vpop.f32.mrf.mxu0
  %v1249 = vadd.f32 0.0, %v1248
  %v1250 = vpop.f32.mrf.mxu0
  %1251 = vdwg.mxu0
  %v1252 = vadd.f32 %v1162, %v1244
  %v1253 = vadd.f32 %v1167, %v1249
  %v1254 = vrot.slane %v987, 1
  %v1255 = vrot.slane %v988, 1
  %v1258 = vsel %vm310, %v1254, 0.0
  %v1259 = vsel %vm310, %v1255, 0.0
  %s1260 = scalar_lea.vmem %s8, 48
  %v1261 = vld [vmem:[%s1260] sm:$0xff]
  %v1262 = vld [vmem:[%s1260 + $0x8] sm:$0xff]
  %v1264 = vsel %vm536, %v1258, 0
  %v1267 = vsel %vm536, %v1259, 0
  %1269 = vmatprep.subr.mxu0 0.0
  %1270 = vmatpush1.msra.mxu0 0.0
  %1271 = vmatprep.subr.mxu0 0.0
  %1272 = vmatpush1.msra.mxu0 0.0
  %1273 = vmatprep.subr.mxu0 0.0
  %1274 = vmatpush1.msra.mxu0 0.0
  %1275 = vmatprep.subr.mxu0 0.0
  %1276 = vmatpush1.msra.mxu0 0.0
  %1277 = vmatprep.subr.mxu0 0.0
  %1278 = vmatpush1.msra.mxu0 0.0
  %1279 = vmatprep.subr.mxu0 0.0
  %1280 = vmatpush1.msra.mxu0 0.0
  %1281 = vmatprep.subr.mxu0 0.0
  %1282 = vmatpush1.msra.mxu0 0.0
  %1283 = vmatprep.subr.mxu0 0.0
  %1284 = vmatpush1.msra.mxu0 0.0
  %1285 = vmatprep.subr.mxu0 0.0
  %1286 = vmatpush1.msra.mxu0 0.0
  %1287 = vmatprep.subr.mxu0 0.0
  %1288 = vmatpush1.msra.mxu0 0.0
  %1289 = vmatprep.subr.mxu0 0.0
  %1290 = vmatpush1.msra.mxu0 0.0
  %1291 = vmatprep.subr.mxu0 0.0
  %1292 = vmatpush1.msra.mxu0 0.0
  %1293 = vmatprep.subr.mxu0 0.0
  %1294 = vmatpush1.msra.mxu0 0.0
  %1295 = vmatprep.subr.mxu0 0.0
  %1296 = vmatpush1.msra.mxu0 0.0
  %1297 = vmatprep.subr.mxu0 0.0
  %1298 = vmatpush1.msra.mxu0 %v1262
  %1299 = vmatprep.subr.mxu0 0.0
  %1300 = vmatpush1.msra.mxu0 %v1261
  %1301 = vmatprep.subr.mxu0 0.0
  %1302 = vmatpush2.msra.mxu0 0.0
  %1303 = vmatprep.subr.mxu0 0.0
  %1304 = vmatpush2.msra.mxu0 0.0
  %1305 = vmatprep.subr.mxu0 0.0
  %1306 = vmatpush2.msra.mxu0 0.0
  %1307 = vmatprep.subr.mxu0 0.0
  %1308 = vmatpush2.msra.mxu0 0.0
  %1309 = vmatprep.subr.mxu0 0.0
  %1310 = vmatpush2.msra.mxu0 0.0
  %1311 = vmatprep.subr.mxu0 0.0
  %1312 = vmatpush2.msra.mxu0 0.0
  %1313 = vmatprep.subr.mxu0 0.0
  %1314 = vmatpush2.msra.mxu0 0.0
  %1315 = vmatprep.subr.mxu0 0.0
  %1316 = vmatpush2.msra.mxu0 0.0
  %1317 = vmatprep.subr.mxu0 0.0
  %1318 = vmatpush2.msra.mxu0 0.0
  %1319 = vmatprep.subr.mxu0 0.0
  %1320 = vmatpush2.msra.mxu0 0.0
  %1321 = vmatprep.subr.mxu0 0.0
  %1322 = vmatpush2.msra.mxu0 0.0
  %1323 = vmatprep.subr.mxu0 0.0
  %1324 = vmatpush2.msra.mxu0 0.0
  %1325 = vmatprep.subr.mxu0 0.0
  %1326 = vmatpush2.msra.mxu0 0.0
  %1327 = vmatprep.subr.mxu0 0.0
  %1328 = vmatpush2.msra.mxu0 0.0
  %1329 = vmatprep.subr.mxu0 0.0
  %1330 = vmatpush2.msra.mxu0 0.0
  %1331 = vmatprep.subr.mxu0 0.0
  %1332 = vmatpush2.msra.mxu0 0.0
  %1333 = vmatprep.mubr.f32.mxu0 0.0
  %1334 = vmatmul.mubr.f32.gmra.mxu0 %v1264
  %v1335 = vpop.f32.mrf.mxu0
  %v1336 = vadd.f32 0.0, %v1335
  %v1337 = vpop.f32.mrf.mxu0
  %1338 = vmatprep.mubr.f32.mxu0 0.0
  %1339 = vmatmul.mubr.f32.gmra.mxu0 %v1267
  %v1340 = vpop.f32.mrf.mxu0
  %v1341 = vadd.f32 0.0, %v1340
  %v1342 = vpop.f32.mrf.mxu0
  %1343 = vdwg.mxu0
  %v1344 = vadd.f32 %v1252, %v1336
  %v1345 = vadd.f32 %v1253, %v1341
  %v1346 = vrot.slane %v987, 2
  %v1347 = vrot.slane %v988, 2
  %v1350 = vsel %vm402, %v1346, 0.0
  %v1351 = vsel %vm402, %v1347, 0.0
  %s1352 = scalar_lea.vmem %s8, 64
  %v1353 = vld [vmem:[%s1352] sm:$0xff]
  %v1354 = vld [vmem:[%s1352 + $0x8] sm:$0xff]
  %v1356 = vsel %vm536, %v1350, 0
  %v1359 = vsel %vm536, %v1351, 0
  %1361 = vmatprep.subr.mxu0 0.0
  %1362 = vmatpush1.msra.mxu0 0.0
  %1363 = vmatprep.subr.mxu0 0.0
  %1364 = vmatpush1.msra.mxu0 0.0
  %1365 = vmatprep.subr.mxu0 0.0
  %1366 = vmatpush1.msra.mxu0 0.0
  %1367 = vmatprep.subr.mxu0 0.0
  %1368 = vmatpush1.msra.mxu0 0.0
  %1369 = vmatprep.subr.mxu0 0.0
  %1370 = vmatpush1.msra.mxu0 0.0
  %1371 = vmatprep.subr.mxu0 0.0
  %1372 = vmatpush1.msra.mxu0 0.0
  %1373 = vmatprep.subr.mxu0 0.0
  %1374 = vmatpush1.msra.mxu0 0.0
  %1375 = vmatprep.subr.mxu0 0.0
  %1376 = vmatpush1.msra.mxu0 0.0
  %1377 = vmatprep.subr.mxu0 0.0
  %1378 = vmatpush1.msra.mxu0 0.0
  %1379 = vmatprep.subr.mxu0 0.0
  %1380 = vmatpush1.msra.mxu0 0.0
  %1381 = vmatprep.subr.mxu0 0.0
  %1382 = vmatpush1.msra.mxu0 0.0
  %1383 = vmatprep.subr.mxu0 0.0
  %1384 = vmatpush1.msra.mxu0 0.0
  %1385 = vmatprep.subr.mxu0 0.0
  %1386 = vmatpush1.msra.mxu0 0.0
  %1387 = vmatprep.subr.mxu0 0.0
  %1388 = vmatpush1.msra.mxu0 0.0
  %1389 = vmatprep.subr.mxu0 0.0
  %1390 = vmatpush1.msra.mxu0 %v1354
  %1391 = vmatprep.subr.mxu0 0.0
  %1392 = vmatpush1.msra.mxu0 %v1353
  %1393 = vmatprep.subr.mxu0 0.0
  %1394 = vmatpush2.msra.mxu0 0.0
  %1395 = vmatprep.subr.mxu0 0.0
  %1396 = vmatpush2.msra.mxu0 0.0
  %1397 = vmatprep.subr.mxu0 0.0
  %1398 = vmatpush2.msra.mxu0 0.0
  %1399 = vmatprep.subr.mxu0 0.0
  %1400 = vmatpush2.msra.mxu0 0.0
  %1401 = vmatprep.subr.mxu0 0.0
  %1402 = vmatpush2.msra.mxu0 0.0
  %1403 = vmatprep.subr.mxu0 0.0
  %1404 = vmatpush2.msra.mxu0 0.0
  %1405 = vmatprep.subr.mxu0 0.0
  %1406 = vmatpush2.msra.mxu0 0.0
  %1407 = vmatprep.subr.mxu0 0.0
  %1408 = vmatpush2.msra.mxu0 0.0
  %1409 = vmatprep.subr.mxu0 0.0
  %1410 = vmatpush2.msra.mxu0 0.0
  %1411 = vmatprep.subr.mxu0 0.0
  %1412 = vmatpush2.msra.mxu0 0.0
  %1413 = vmatprep.subr.mxu0 0.0
  %1414 = vmatpush2.msra.mxu0 0.0
  %1415 = vmatprep.subr.mxu0 0.0
  %1416 = vmatpush2.msra.mxu0 0.0
  %1417 = vmatprep.subr.mxu0 0.0
  %1418 = vmatpush2.msra.mxu0 0.0
  %1419 = vmatprep.subr.mxu0 0.0
  %1420 = vmatpush2.msra.mxu0 0.0
  %1421 = vmatprep.subr.mxu0 0.0
  %1422 = vmatpush2.msra.mxu0 0.0
  %1423 = vmatprep.subr.mxu0 0.0
  %1424 = vmatpush2.msra.mxu0 0.0
  %1425 = vmatprep.mubr.f32.mxu0 0.0
  %1426 = vmatmul.mubr.f32.gmra.mxu0 %v1356
  %v1427 = vpop.f32.mrf.mxu0
  %v1428 = vadd.f32 0.0, %v1427
  %v1429 = vpop.f32.mrf.mxu0
  %1430 = vmatprep.mubr.f32.mxu0 0.0
  %1431 = vmatmul.mubr.f32.gmra.mxu0 %v1359
  %v1432 = vpop.f32.mrf.mxu0
  %v1433 = vadd.f32 0.0, %v1432
  %v1434 = vpop.f32.mrf.mxu0
  %1435 = vdwg.mxu0
  %v1436 = vadd.f32 %v1344, %v1428
  %v1437 = vadd.f32 %v1345, %v1433
  %v1438 = vld [vmem:[%s9] sm:$0x1]
  %v1440 = vlaneseq
  %v1441 = vshrl.u32 %v1440, 7
  %v1442 = vsub.s32 0, %v1441
  %v1443 = vrot.slane %v1438, %v1442
  %v1445 = vmul.f32 %v1436, %v1443
  %v1446 = vmul.f32 %v1437, %v1443
  %v1447 = vld [vmem:[%s10] sm:$0x1]
  %v1449 = vlaneseq
  %v1450 = vshrl.u32 %v1449, 7
  %v1451 = vsub.s32 0, %v1450
  %v1452 = vrot.slane %v1447, %v1451
  %v1454 = vadd.f32 %v1445, %v1452
  %v1455 = vadd.f32 %v1446, %v1452
  %v1456 = vmul.f32 %v1454, %v513
  %v1457 = vmul.f32 %v1455, %v513
  %1458 = vst.msk [vmem:[%s11] sm:$0xff] %vm60, %v1456
  %1459 = vst.msk [vmem:[%s11 + $0x8] sm:$0xff] %vm60, %v1457
  // Predicated region
  $region46: #{_lambda_.13} parent=0 // pred_check
    _
  $region47: #{_lambda_.13} parent=0 // pred_check_branch
    %1461 = sbr.rel (0) target = $region49
  $region48: #{_lambda_.13} parent=0 // pred_region
    _
  $region49: #{_lambda_.13} parent=0 // pred_fallthru
    _
  // Predicated region
  $region50: #{_lambda_.13} parent=0 // pred_check
    _
  $region51: #{_lambda_.13} parent=0 // pred_check_branch
    %1463 = sbr.rel (0) target = $region53
  $region52: #{_lambda_.13} parent=0 // pred_region
    _
  $region53: #{_lambda_.13} parent=0 // pred_fallthru
    _

// kernel: _lambda_.12
$region0: #{_lambda_.12}
  #allocation0 [shape = 'u32[]', space=smem, size = 0x4, offset = 0x4, fixed_abs, tag = 'smem constant byte address 0x4 - core index']
  #allocation1 [shape = 'u32[144,128]{1,0:T(1,128)}', space=vmem, size = 0x12000, scoped, tag = 'internal scratch']
  #allocation2 [shape = 'f32[2,32]{1,0:T(2,128)}', space=vmem, size = 0x400, scoped, tag = 'scratch operand']
  #allocation3 [shape = 'f32[2,32]{1,0:T(2,128)}', space=vmem, size = 0x400, scoped, tag = 'scratch operand']
  #allocation4 [shape = 'f32[2,32]{1,0:T(2,128)}', space=vmem, size = 0x400, scoped, tag = 'scratch operand']
  #allocation5 [shape = 'f32[2,32]{1,0:T(2,128)}', space=vmem, size = 0x400, scoped, tag = 'scratch operand']
  #allocation6 [shape = 'f32[2,8]{1,0:T(2,128)}', space=vmem, size = 0x400, scoped, tag = 'scratch operand']
  #allocation7 [shape = 'f32[1,1]{1,0:T(1,128)S(1)}', space=vmem, size = 0x200, scoped, tag = 'scoped memory for _lambda_.12']
  #allocation8 [shape = 'f32[1,1]{1,0:T(1,128)S(1)}', space=vmem, size = 0x200, scoped, tag = 'scoped memory for _lambda_.12']
  %s0 = inlined_call_operand.vmem [shape: f32[6,2,8], index: 0, kind: input, shape index: {}]
  %s1 = inlined_call_operand.vmem [shape: f32[2,8,16], index: 1, kind: input, shape index: {}]
  %s2 = inlined_call_operand.vmem [shape: f32[2,8,32], index: 2, kind: input, shape index: {}]
  %s3 = inlined_call_operand.vmem [shape: f32[2,8], index: 3, kind: input, shape index: {}]
  %s4 = inlined_call_operand.vmem [shape: f32[2,8], index: 4, kind: input, shape index: {}]
  %s5 = inlined_call_operand.vmem [shape: f32[7,1,1,16], index: 5, kind: input, shape index: {}]
  %s6 = inlined_call_operand.vmem [shape: f32[32,16], index: 6, kind: input, shape index: {}]
  %s7 = inlined_call_operand.vmem [shape: f32[1,1,16], index: 7, kind: input, shape index: {}]
  %s8 = inlined_call_operand.<no memory space> [shape: f32[1,1], index: 8, kind: input, shape index: {}]
  %s9 = inlined_call_operand.vmem [shape: f32[8,16], index: 9, kind: input, shape index: {}]
  %s10 = inlined_call_operand.vmem [shape: f32[1,16], index: 10, kind: input, shape index: {}]
  %s11 = inlined_call_operand.vmem [shape: f32[16,16], index: 11, kind: input, shape index: {}]
  %s12 = inlined_call_operand.vmem [shape: f32[1,16], index: 12, kind: input, shape index: {}]
  %s13 = inlined_call_operand.vmem [shape: f32[80,128], index: 13, kind: input, shape index: {}]
  %s14 = inlined_call_operand.vmem [shape: f32[1,128], index: 14, kind: input, shape index: {}]
  %s15 = inlined_call_operand.vmem [shape: f32[64,128], index: 15, kind: input, shape index: {}]
  %s16 = inlined_call_operand.vmem [shape: f32[1,128], index: 16, kind: input, shape index: {}]
  %s17 = inlined_call_operand.vmem [shape: f32[64,8], index: 17, kind: input, shape index: {}]
  %s18 = inlined_call_operand.vmem [shape: f32[64,1], index: 18, kind: input, shape index: {}]
  %s19 = inlined_call_operand.<no memory space> [shape: f32[1,1], index: 19, kind: input, shape index: {}]
  %s20 = inlined_call_operand.vmem [shape: f32[6,2,128], index: 20, kind: output, shape index: {}]
  %s21 = sld [smem:[#allocation0]]
  $region117: #{_lambda_.12} parent=0
    _
  %s23 = ssub.s32 1, %s21
  %s24 = scalar_select 0, %s23, %s21
  %v25 = vstv %s8
  %26 = vst [vmem:[#allocation7] sm:$0x1] %v25
  %v27 = vstv %s19
  %28 = vst [vmem:[#allocation8] sm:$0x1] %v27
  loop: start=0, step=1, limit=8
  $region2: #{_lambda_.12} parent=0 // loop_pre_header
    _
  $region3: #{_lambda_.12} parent=0 // loop_header
    %s30 = sphi 0, %s34
    %p31 = scmp.ge.s32.totalorder %s30, 8
    %s40 = sphi 0, %s42
    %s43 = sphi 0, %s40
    %s44 = sphi 0, %s43
    %s60 = sphi 0, %s44
    %s64 = sphi 0, %s64
    %s66 = sphi 0, %s64
    %s67 = sphi 0, %s66
    %s81 = sphi 0, %s67
    %s85 = sphi 0, %s85
    %s87 = sphi 0, %s85
    %s88 = sphi 0, %s87
    %s102 = sphi 0, %s88
    %s106 = sphi 0, %s106
    %s108 = sphi 0, %s106
    %s109 = sphi 0, %s108
    %s123 = sphi 0, %s109
    %s127 = sphi 0, %s127
    %s129 = sphi 0, %s127
    %s130 = sphi 0, %s129
    %s144 = sphi 0, %s130
    %s148 = sphi 0, %s148
    %s150 = sphi 0, %s148
    %s151 = sphi 0, %s150
    %s165 = sphi 0, %s151
    %s169 = sphi 0, %s169
    %s171 = sphi 0, %s169
    %s172 = sphi 0, %s171
    %s186 = sphi 0, %s172
    %s190 = sphi 0, %s190
    %s192 = sphi 0, %s190
    %s193 = sphi 0, %s192
    %s207 = sphi 0, %s193
    %s211 = sphi 0, %s211
    %s213 = sphi 0, %s211
    %s214 = sphi 0, %s213
    %s228 = sphi 0, %s214
    %s232 = sphi 0, %s232
    %s234 = sphi 0, %s232
    %s235 = sphi 0, %s234
    %s249 = sphi 0, %s235
    %s253 = sphi 0, %s253
    %s255 = sphi 0, %s253
    %s256 = sphi 0, %s255
    %s270 = sphi 0, %s256
    %s274 = sphi 0, %s274
    %s276 = sphi 0, %s274
    %s277 = sphi 0, %s276
    %s291 = sphi 0, %s277
    %s295 = sphi 0, %s295
    %s297 = sphi 0, %s295
    %s298 = sphi 0, %s297
    %s312 = sphi 0, %s298
    %s316 = sphi 0, %s316
    %s318 = sphi 0, %s316
    %s319 = sphi 0, %s318
    %s333 = sphi 0, %s319
    %s337 = sphi 0, %s337
    %s339 = sphi 0, %s337
    %s340 = sphi 0, %s339
    %s354 = sphi 0, %s340
    %s358 = sphi 0, %s358
    %s360 = sphi 0, %s358
    %s361 = sphi 0, %s360
    %s375 = sphi 0, %s361
    %s379 = sphi 0, %s379
    %s381 = sphi 0, %s379
    %s382 = sphi 0, %s381
    %s396 = sphi 0, %s382
    %s400 = sphi 0, %s400
    %s402 = sphi 0, %s400
    %s403 = sphi 0, %s402
    %s417 = sphi 0, %s403
    %s421 = sphi 0, %s421
    %s423 = sphi 0, %s421
    %s424 = sphi 0, %s423
    %s438 = sphi 0, %s424
    %s442 = sphi 0, %s442
    %s444 = sphi 0, %s442
    %s445 = sphi 0, %s444
    %s459 = sphi 0, %s445
    %s465 = sphi 0, %s467
    %s468 = sphi 0, %s465
    %s469 = sphi 0, %s468
    %s485 = sphi 0, %s469
  $region4: #{_lambda_.12} parent=0 // loop_header_branch
    %33 = sbr.rel (%p31) target = $region8
  $region5: #{_lambda_.12} parent=0 // loop_body
    %s35 = ssub.s32 %s30, 1
    %s36 = ssub.s32 %s30, 2
    %s37 = sadd.s32 %s30, 1
    %s38 = ssub.s32 %s30, %s37
    %p39 = scmp.eq.s32.totalorder %s38, 0
    %s41 = sadd.s32 %s40, 1
    %s42 = scalar_select %p39, %s40, %s41
    %p45 = pneg %p39
    %p46 = scmp.eq.s32.totalorder %s30, 5
    %p47 = por %p45, %p46
    %p48 = scmp.ne.s32.totalorder %s40, %s43
    %p49 = scmp.eq.s32.totalorder %s30, 0
    %p50 = por %p48, %p49
    %p51 = scmp.ne.s32.totalorder %s40, %s43
    %p52 = scmp.eq.s32.totalorder %s35, 5
    %p53 = por %p51, %p52
    %p54 = scmp.ne.s32.totalorder %s43, %s44
    %p55 = scmp.eq.s32.totalorder %s35, 0
    %p56 = por %p54, %p55
    %p57 = scmp.ne.s32.totalorder %s43, %s44
    %p58 = scmp.eq.s32.totalorder %s36, 5
    %p59 = por %p57, %p58
    %p61 = scmp.ne.s32.totalorder %s44, %s60
    %p62 = scmp.eq.s32.totalorder %s36, 0
    %p63 = por %p61, %p62
    %s65 = sadd.s32 %s64, 1
    %p68 = scmp.eq.s32.totalorder %s30, 5
    %p69 = scmp.ne.s32.totalorder %s64, %s66
    %p70 = scmp.eq.s32.totalorder %s30, 0
    %p71 = por %p69, %p70
    %p72 = scmp.ne.s32.totalorder %s64, %s66
    %p73 = scmp.eq.s32.totalorder %s35, 5
    %p74 = por %p72, %p73
    %p75 = scmp.ne.s32.totalorder %s66, %s67
    %p76 = scmp.eq.s32.totalorder %s35, 0
    %p77 = por %p75, %p76
    %p78 = scmp.ne.s32.totalorder %s66, %s67
    %p79 = scmp.eq.s32.totalorder %s36, 5
    %p80 = por %p78, %p79
    %p82 = scmp.ne.s32.totalorder %s67, %s81
    %p83 = scmp.eq.s32.totalorder %s36, 0
    %p84 = por %p82, %p83
    %s86 = sadd.s32 %s85, 1
    %p89 = scmp.eq.s32.totalorder %s30, 5
    %p90 = scmp.ne.s32.totalorder %s85, %s87
    %p91 = scmp.eq.s32.totalorder %s30, 0
    %p92 = por %p90, %p91
    %p93 = scmp.ne.s32.totalorder %s85, %s87
    %p94 = scmp.eq.s32.totalorder %s35, 5
    %p95 = por %p93, %p94
    %p96 = scmp.ne.s32.totalorder %s87, %s88
    %p97 = scmp.eq.s32.totalorder %s35, 0
    %p98 = por %p96, %p97
    %p99 = scmp.ne.s32.totalorder %s87, %s88
    %p100 = scmp.eq.s32.totalorder %s36, 5
    %p101 = por %p99, %p100
    %p103 = scmp.ne.s32.totalorder %s88, %s102
    %p104 = scmp.eq.s32.totalorder %s36, 0
    %p105 = por %p103, %p104
    %s107 = sadd.s32 %s106, 1
    %p110 = scmp.eq.s32.totalorder %s30, 5
    %p111 = scmp.ne.s32.totalorder %s106, %s108
    %p112 = scmp.eq.s32.totalorder %s30, 0
    %p113 = por %p111, %p112
    %p114 = scmp.ne.s32.totalorder %s106, %s108
    %p115 = scmp.eq.s32.totalorder %s35, 5
    %p116 = por %p114, %p115
    %p117 = scmp.ne.s32.totalorder %s108, %s109
    %p118 = scmp.eq.s32.totalorder %s35, 0
    %p119 = por %p117, %p118
    %p120 = scmp.ne.s32.totalorder %s108, %s109
    %p121 = scmp.eq.s32.totalorder %s36, 5
    %p122 = por %p120, %p121
    %p124 = scmp.ne.s32.totalorder %s109, %s123
    %p125 = scmp.eq.s32.totalorder %s36, 0
    %p126 = por %p124, %p125
    %s128 = sadd.s32 %s127, 1
    %p131 = scmp.eq.s32.totalorder %s30, 5
    %p132 = scmp.ne.s32.totalorder %s127, %s129
    %p133 = scmp.eq.s32.totalorder %s30, 0
    %p134 = por %p132, %p133
    %p135 = scmp.ne.s32.totalorder %s127, %s129
    %p136 = scmp.eq.s32.totalorder %s35, 5
    %p137 = por %p135, %p136
    %p138 = scmp.ne.s32.totalorder %s129, %s130
    %p139 = scmp.eq.s32.totalorder %s35, 0
    %p140 = por %p138, %p139
    %p141 = scmp.ne.s32.totalorder %s129, %s130
    %p142 = scmp.eq.s32.totalorder %s36, 5
    %p143 = por %p141, %p142
    %p145 = scmp.ne.s32.totalorder %s130, %s144
    %p146 = scmp.eq.s32.totalorder %s36, 0
    %p147 = por %p145, %p146
    %s149 = sadd.s32 %s148, 1
    %p152 = scmp.eq.s32.totalorder %s30, 5
    %p153 = scmp.ne.s32.totalorder %s148, %s150
    %p154 = scmp.eq.s32.totalorder %s30, 0
    %p155 = por %p153, %p154
    %p156 = scmp.ne.s32.totalorder %s148, %s150
    %p157 = scmp.eq.s32.totalorder %s35, 5
    %p158 = por %p156, %p157
    %p159 = scmp.ne.s32.totalorder %s150, %s151
    %p160 = scmp.eq.s32.totalorder %s35, 0
    %p161 = por %p159, %p160
    %p162 = scmp.ne.s32.totalorder %s150, %s151
    %p163 = scmp.eq.s32.totalorder %s36, 5
    %p164 = por %p162, %p163
    %p166 = scmp.ne.s32.totalorder %s151, %s165
    %p167 = scmp.eq.s32.totalorder %s36, 0
    %p168 = por %p166, %p167
    %s170 = sadd.s32 %s169, 1
    %p173 = scmp.eq.s32.totalorder %s30, 5
    %p174 = scmp.ne.s32.totalorder %s169, %s171
    %p175 = scmp.eq.s32.totalorder %s30, 0
    %p176 = por %p174, %p175
    %p177 = scmp.ne.s32.totalorder %s169, %s171
    %p178 = scmp.eq.s32.totalorder %s35, 5
    %p179 = por %p177, %p178
    %p180 = scmp.ne.s32.totalorder %s171, %s172
    %p181 = scmp.eq.s32.totalorder %s35, 0
    %p182 = por %p180, %p181
    %p183 = scmp.ne.s32.totalorder %s171, %s172
    %p184 = scmp.eq.s32.totalorder %s36, 5
    %p185 = por %p183, %p184
    %p187 = scmp.ne.s32.totalorder %s172, %s186
    %p188 = scmp.eq.s32.totalorder %s36, 0
    %p189 = por %p187, %p188
    %s191 = sadd.s32 %s190, 1
    %p194 = scmp.eq.s32.totalorder %s30, 5
    %p195 = scmp.ne.s32.totalorder %s190, %s192
    %p196 = scmp.eq.s32.totalorder %s30, 0
    %p197 = por %p195, %p196
    %p198 = scmp.ne.s32.totalorder %s190, %s192
    %p199 = scmp.eq.s32.totalorder %s35, 5
    %p200 = por %p198, %p199
    %p201 = scmp.ne.s32.totalorder %s192, %s193
    %p202 = scmp.eq.s32.totalorder %s35, 0
    %p203 = por %p201, %p202
    %p204 = scmp.ne.s32.totalorder %s192, %s193
    %p205 = scmp.eq.s32.totalorder %s36, 5
    %p206 = por %p204, %p205
    %p208 = scmp.ne.s32.totalorder %s193, %s207
    %p209 = scmp.eq.s32.totalorder %s36, 0
    %p210 = por %p208, %p209
    %s212 = sadd.s32 %s211, 1
    %p215 = scmp.eq.s32.totalorder %s30, 5
    %p216 = scmp.ne.s32.totalorder %s211, %s213
    %p217 = scmp.eq.s32.totalorder %s30, 0
    %p218 = por %p216, %p217
    %p219 = scmp.ne.s32.totalorder %s211, %s213
    %p220 = scmp.eq.s32.totalorder %s35, 5
    %p221 = por %p219, %p220
    %p222 = scmp.ne.s32.totalorder %s213, %s214
    %p223 = scmp.eq.s32.totalorder %s35, 0
    %p224 = por %p222, %p223
    %p225 = scmp.ne.s32.totalorder %s213, %s214
    %p226 = scmp.eq.s32.totalorder %s36, 5
    %p227 = por %p225, %p226
    %p229 = scmp.ne.s32.totalorder %s214, %s228
    %p230 = scmp.eq.s32.totalorder %s36, 0
    %p231 = por %p229, %p230
    %s233 = sadd.s32 %s232, 1
    %p236 = scmp.eq.s32.totalorder %s30, 5
    %p237 = scmp.ne.s32.totalorder %s232, %s234
    %p238 = scmp.eq.s32.totalorder %s30, 0
    %p239 = por %p237, %p238
    %p240 = scmp.ne.s32.totalorder %s232, %s234
    %p241 = scmp.eq.s32.totalorder %s35, 5
    %p242 = por %p240, %p241
    %p243 = scmp.ne.s32.totalorder %s234, %s235
    %p244 = scmp.eq.s32.totalorder %s35, 0
    %p245 = por %p243, %p244
    %p246 = scmp.ne.s32.totalorder %s234, %s235
    %p247 = scmp.eq.s32.totalorder %s36, 5
    %p248 = por %p246, %p247
    %p250 = scmp.ne.s32.totalorder %s235, %s249
    %p251 = scmp.eq.s32.totalorder %s36, 0
    %p252 = por %p250, %p251
    %s254 = sadd.s32 %s253, 1
    %p257 = scmp.eq.s32.totalorder %s30, 5
    %p258 = scmp.ne.s32.totalorder %s253, %s255
    %p259 = scmp.eq.s32.totalorder %s30, 0
    %p260 = por %p258, %p259
    %p261 = scmp.ne.s32.totalorder %s253, %s255
    %p262 = scmp.eq.s32.totalorder %s35, 5
    %p263 = por %p261, %p262
    %p264 = scmp.ne.s32.totalorder %s255, %s256
    %p265 = scmp.eq.s32.totalorder %s35, 0
    %p266 = por %p264, %p265
    %p267 = scmp.ne.s32.totalorder %s255, %s256
    %p268 = scmp.eq.s32.totalorder %s36, 5
    %p269 = por %p267, %p268
    %p271 = scmp.ne.s32.totalorder %s256, %s270
    %p272 = scmp.eq.s32.totalorder %s36, 0
    %p273 = por %p271, %p272
    %s275 = sadd.s32 %s274, 1
    %p278 = scmp.eq.s32.totalorder %s30, 5
    %p279 = scmp.ne.s32.totalorder %s274, %s276
    %p280 = scmp.eq.s32.totalorder %s30, 0
    %p281 = por %p279, %p280
    %p282 = scmp.ne.s32.totalorder %s274, %s276
    %p283 = scmp.eq.s32.totalorder %s35, 5
    %p284 = por %p282, %p283
    %p285 = scmp.ne.s32.totalorder %s276, %s277
    %p286 = scmp.eq.s32.totalorder %s35, 0
    %p287 = por %p285, %p286
    %p288 = scmp.ne.s32.totalorder %s276, %s277
    %p289 = scmp.eq.s32.totalorder %s36, 5
    %p290 = por %p288, %p289
    %p292 = scmp.ne.s32.totalorder %s277, %s291
    %p293 = scmp.eq.s32.totalorder %s36, 0
    %p294 = por %p292, %p293
    %s296 = sadd.s32 %s295, 1
    %p299 = scmp.eq.s32.totalorder %s30, 5
    %p300 = scmp.ne.s32.totalorder %s295, %s297
    %p301 = scmp.eq.s32.totalorder %s30, 0
    %p302 = por %p300, %p301
    %p303 = scmp.ne.s32.totalorder %s295, %s297
    %p304 = scmp.eq.s32.totalorder %s35, 5
    %p305 = por %p303, %p304
    %p306 = scmp.ne.s32.totalorder %s297, %s298
    %p307 = scmp.eq.s32.totalorder %s35, 0
    %p308 = por %p306, %p307
    %p309 = scmp.ne.s32.totalorder %s297, %s298
    %p310 = scmp.eq.s32.totalorder %s36, 5
    %p311 = por %p309, %p310
    %p313 = scmp.ne.s32.totalorder %s298, %s312
    %p314 = scmp.eq.s32.totalorder %s36, 0
    %p315 = por %p313, %p314
    %s317 = sadd.s32 %s316, 1
    %p320 = scmp.eq.s32.totalorder %s30, 5
    %p321 = scmp.ne.s32.totalorder %s316, %s318
    %p322 = scmp.eq.s32.totalorder %s30, 0
    %p323 = por %p321, %p322
    %p324 = scmp.ne.s32.totalorder %s316, %s318
    %p325 = scmp.eq.s32.totalorder %s35, 5
    %p326 = por %p324, %p325
    %p327 = scmp.ne.s32.totalorder %s318, %s319
    %p328 = scmp.eq.s32.totalorder %s35, 0
    %p329 = por %p327, %p328
    %p330 = scmp.ne.s32.totalorder %s318, %s319
    %p331 = scmp.eq.s32.totalorder %s36, 5
    %p332 = por %p330, %p331
    %p334 = scmp.ne.s32.totalorder %s319, %s333
    %p335 = scmp.eq.s32.totalorder %s36, 0
    %p336 = por %p334, %p335
    %s338 = sadd.s32 %s337, 1
    %p341 = scmp.eq.s32.totalorder %s30, 5
    %p342 = scmp.ne.s32.totalorder %s337, %s339
    %p343 = scmp.eq.s32.totalorder %s30, 0
    %p344 = por %p342, %p343
    %p345 = scmp.ne.s32.totalorder %s337, %s339
    %p346 = scmp.eq.s32.totalorder %s35, 5
    %p347 = por %p345, %p346
    %p348 = scmp.ne.s32.totalorder %s339, %s340
    %p349 = scmp.eq.s32.totalorder %s35, 0
    %p350 = por %p348, %p349
    %p351 = scmp.ne.s32.totalorder %s339, %s340
    %p352 = scmp.eq.s32.totalorder %s36, 5
    %p353 = por %p351, %p352
    %p355 = scmp.ne.s32.totalorder %s340, %s354
    %p356 = scmp.eq.s32.totalorder %s36, 0
    %p357 = por %p355, %p356
    %s359 = sadd.s32 %s358, 1
    %p362 = scmp.eq.s32.totalorder %s30, 5
    %p363 = scmp.ne.s32.totalorder %s358, %s360
    %p364 = scmp.eq.s32.totalorder %s30, 0
    %p365 = por %p363, %p364
    %p366 = scmp.ne.s32.totalorder %s358, %s360
    %p367 = scmp.eq.s32.totalorder %s35, 5
    %p368 = por %p366, %p367
    %p369 = scmp.ne.s32.totalorder %s360, %s361
    %p370 = scmp.eq.s32.totalorder %s35, 0
    %p371 = por %p369, %p370
    %p372 = scmp.ne.s32.totalorder %s360, %s361
    %p373 = scmp.eq.s32.totalorder %s36, 5
    %p374 = por %p372, %p373
    %p376 = scmp.ne.s32.totalorder %s361, %s375
    %p377 = scmp.eq.s32.totalorder %s36, 0
    %p378 = por %p376, %p377
    %s380 = sadd.s32 %s379, 1
    %p383 = scmp.eq.s32.totalorder %s30, 5
    %p384 = scmp.ne.s32.totalorder %s379, %s381
    %p385 = scmp.eq.s32.totalorder %s30, 0
    %p386 = por %p384, %p385
    %p387 = scmp.ne.s32.totalorder %s379, %s381
    %p388 = scmp.eq.s32.totalorder %s35, 5
    %p389 = por %p387, %p388
    %p390 = scmp.ne.s32.totalorder %s381, %s382
    %p391 = scmp.eq.s32.totalorder %s35, 0
    %p392 = por %p390, %p391
    %p393 = scmp.ne.s32.totalorder %s381, %s382
    %p394 = scmp.eq.s32.totalorder %s36, 5
    %p395 = por %p393, %p394
    %p397 = scmp.ne.s32.totalorder %s382, %s396
    %p398 = scmp.eq.s32.totalorder %s36, 0
    %p399 = por %p397, %p398
    %s401 = sadd.s32 %s400, 1
    %p404 = scmp.eq.s32.totalorder %s30, 5
    %p405 = scmp.ne.s32.totalorder %s400, %s402
    %p406 = scmp.eq.s32.totalorder %s30, 0
    %p407 = por %p405, %p406
    %p408 = scmp.ne.s32.totalorder %s400, %s402
    %p409 = scmp.eq.s32.totalorder %s35, 5
    %p410 = por %p408, %p409
    %p411 = scmp.ne.s32.totalorder %s402, %s403
    %p412 = scmp.eq.s32.totalorder %s35, 0
    %p413 = por %p411, %p412
    %p414 = scmp.ne.s32.totalorder %s402, %s403
    %p415 = scmp.eq.s32.totalorder %s36, 5
    %p416 = por %p414, %p415
    %p418 = scmp.ne.s32.totalorder %s403, %s417
    %p419 = scmp.eq.s32.totalorder %s36, 0
    %p420 = por %p418, %p419
    %s422 = sadd.s32 %s421, 1
    %p425 = scmp.eq.s32.totalorder %s30, 5
    %p426 = scmp.ne.s32.totalorder %s421, %s423
    %p427 = scmp.eq.s32.totalorder %s30, 0
    %p428 = por %p426, %p427
    %p429 = scmp.ne.s32.totalorder %s421, %s423
    %p430 = scmp.eq.s32.totalorder %s35, 5
    %p431 = por %p429, %p430
    %p432 = scmp.ne.s32.totalorder %s423, %s424
    %p433 = scmp.eq.s32.totalorder %s35, 0
    %p434 = por %p432, %p433
    %p435 = scmp.ne.s32.totalorder %s423, %s424
    %p436 = scmp.eq.s32.totalorder %s36, 5
    %p437 = por %p435, %p436
    %p439 = scmp.ne.s32.totalorder %s424, %s438
    %p440 = scmp.eq.s32.totalorder %s36, 0
    %p441 = por %p439, %p440
    %s443 = sadd.s32 %s442, 1
    %p446 = scmp.eq.s32.totalorder %s30, 5
    %p447 = scmp.ne.s32.totalorder %s442, %s444
    %p448 = scmp.eq.s32.totalorder %s30, 0
    %p449 = por %p447, %p448
    %p450 = scmp.ne.s32.totalorder %s442, %s444
    %p451 = scmp.eq.s32.totalorder %s35, 5
    %p452 = por %p450, %p451
    %p453 = scmp.ne.s32.totalorder %s444, %s445
    %p454 = scmp.eq.s32.totalorder %s35, 0
    %p455 = por %p453, %p454
    %p456 = scmp.ne.s32.totalorder %s444, %s445
    %p457 = scmp.eq.s32.totalorder %s36, 5
    %p458 = por %p456, %p457
    %p460 = scmp.ne.s32.totalorder %s445, %s459
    %p461 = scmp.eq.s32.totalorder %s36, 0
    %p462 = por %p460, %p461
    %s463 = ssub.s32 %s30, %s37
    %p464 = scmp.eq.s32.totalorder %s463, 0
    %s466 = sadd.s32 %s465, 1
    %s467 = scalar_select %p464, %s465, %s466
    %p470 = pneg %p464
    %p471 = scmp.eq.s32.totalorder %s30, 5
    %p472 = por %p470, %p471
    %p473 = scmp.ne.s32.totalorder %s465, %s468
    %p474 = scmp.eq.s32.totalorder %s30, 0
    %p475 = por %p473, %p474
    %p476 = scmp.ne.s32.totalorder %s465, %s468
    %p477 = scmp.eq.s32.totalorder %s35, 5
    %p478 = por %p476, %p477
    %p479 = scmp.ne.s32.totalorder %s468, %s469
    %p480 = scmp.eq.s32.totalorder %s35, 0
    %p481 = por %p479, %p480
    %p482 = scmp.ne.s32.totalorder %s468, %s469
    %p483 = scmp.eq.s32.totalorder %s36, 5
    %p484 = por %p482, %p483
    %p486 = scmp.ne.s32.totalorder %s469, %s485
    %p487 = scmp.eq.s32.totalorder %s36, 0
    %p488 = por %p486, %p487
    %p489 = scmp.le.s32.totalorder 1, %s30
    %p490 = scmp.lt.s32.totalorder %s30, 7
    %p491 = pnand %p489, %p490
    %p492 = pneg %p491
    // Predicated region
    $region9: #{_lambda_.12} parent=5 // pred_check
      _
    $region10: #{_lambda_.12} parent=5 // pred_check_branch
      %494 = sbr.rel (%p491) target = $region12
    $region11: #{_lambda_.12} parent=5 // pred_region
      %s495 = ssub.s32 %s30, 1
      // Predicated region
      $region13: #{_lambda_.12} parent=11 // pred_check
        %p496 = pneg %p77
      $region14: #{_lambda_.12} parent=11 // pred_check_branch
        %498 = sbr.rel (%p496) target = $region16
      $region15: #{_lambda_.12} parent=11 // pred_region
        _
      $region16: #{_lambda_.12} parent=11 // pred_fallthru
        _
      // Predicated region
      $region17: #{_lambda_.12} parent=11 // pred_check
        %p499 = pneg %p98
      $region18: #{_lambda_.12} parent=11 // pred_check_branch
        %501 = sbr.rel (%p499) target = $region20
      $region19: #{_lambda_.12} parent=11 // pred_region
        _
      $region20: #{_lambda_.12} parent=11 // pred_fallthru
        _
      // Predicated region
      $region21: #{_lambda_.12} parent=11 // pred_check
        %p502 = pneg %p119
      $region22: #{_lambda_.12} parent=11 // pred_check_branch
        %504 = sbr.rel (%p502) target = $region24
      $region23: #{_lambda_.12} parent=11 // pred_region
        _
      $region24: #{_lambda_.12} parent=11 // pred_fallthru
        _
      // Predicated region
      $region25: #{_lambda_.12} parent=11 // pred_check
        %p505 = pneg %p140
      $region26: #{_lambda_.12} parent=11 // pred_check_branch
        %507 = sbr.rel (%p505) target = $region28
      $region27: #{_lambda_.12} parent=11 // pred_region
        _
      $region28: #{_lambda_.12} parent=11 // pred_fallthru
        _
      // Predicated region
      $region29: #{_lambda_.12} parent=11 // pred_check
        %p508 = pneg %p161
      $region30: #{_lambda_.12} parent=11 // pred_check_branch
        %510 = sbr.rel (%p508) target = $region32
      $region31: #{_lambda_.12} parent=11 // pred_region
        _
      $region32: #{_lambda_.12} parent=11 // pred_fallthru
        _
      // Predicated region
      $region33: #{_lambda_.12} parent=11 // pred_check
        %p511 = pneg %p182
      $region34: #{_lambda_.12} parent=11 // pred_check_branch
        %513 = sbr.rel (%p511) target = $region36
      $region35: #{_lambda_.12} parent=11 // pred_region
        _
      $region36: #{_lambda_.12} parent=11 // pred_fallthru
        _
      // Predicated region
      $region37: #{_lambda_.12} parent=11 // pred_check
        %p514 = pneg %p203
      $region38: #{_lambda_.12} parent=11 // pred_check_branch
        %516 = sbr.rel (%p514) target = $region40
      $region39: #{_lambda_.12} parent=11 // pred_region
        _
      $region40: #{_lambda_.12} parent=11 // pred_fallthru
        _
      // Predicated region
      $region41: #{_lambda_.12} parent=11 // pred_check
        %p517 = pneg %p224
      $region42: #{_lambda_.12} parent=11 // pred_check_branch
        %519 = sbr.rel (%p517) target = $region44
      $region43: #{_lambda_.12} parent=11 // pred_region
        _
      $region44: #{_lambda_.12} parent=11 // pred_fallthru
        _
      // Predicated region
      $region45: #{_lambda_.12} parent=11 // pred_check
        %p520 = pneg %p245
      $region46: #{_lambda_.12} parent=11 // pred_check_branch
        %522 = sbr.rel (%p520) target = $region48
      $region47: #{_lambda_.12} parent=11 // pred_region
        _
      $region48: #{_lambda_.12} parent=11 // pred_fallthru
        _
      // Predicated region
      $region49: #{_lambda_.12} parent=11 // pred_check
        %p523 = pneg %p266
      $region50: #{_lambda_.12} parent=11 // pred_check_branch
        %525 = sbr.rel (%p523) target = $region52
      $region51: #{_lambda_.12} parent=11 // pred_region
        _
      $region52: #{_lambda_.12} parent=11 // pred_fallthru
        _
      // Predicated region
      $region53: #{_lambda_.12} parent=11 // pred_check
        %p526 = pneg %p287
      $region54: #{_lambda_.12} parent=11 // pred_check_branch
        %528 = sbr.rel (%p526) target = $region56
      $region55: #{_lambda_.12} parent=11 // pred_region
        _
      $region56: #{_lambda_.12} parent=11 // pred_fallthru
        _
      // Predicated region
      $region57: #{_lambda_.12} parent=11 // pred_check
        %p529 = pneg %p308
      $region58: #{_lambda_.12} parent=11 // pred_check_branch
        %531 = sbr.rel (%p529) target = $region60
      $region59: #{_lambda_.12} parent=11 // pred_region
        _
      $region60: #{_lambda_.12} parent=11 // pred_fallthru
        _
      // Predicated region
      $region61: #{_lambda_.12} parent=11 // pred_check
        %p532 = pneg %p329
      $region62: #{_lambda_.12} parent=11 // pred_check_branch
        %534 = sbr.rel (%p532) target = $region64
      $region63: #{_lambda_.12} parent=11 // pred_region
        _
      $region64: #{_lambda_.12} parent=11 // pred_fallthru
        _
      // Predicated region
      $region65: #{_lambda_.12} parent=11 // pred_check
        %p535 = pneg %p350
      $region66: #{_lambda_.12} parent=11 // pred_check_branch
        %537 = sbr.rel (%p535) target = $region68
      $region67: #{_lambda_.12} parent=11 // pred_region
        _
      $region68: #{_lambda_.12} parent=11 // pred_fallthru
        _
      // Predicated region
      $region69: #{_lambda_.12} parent=11 // pred_check
        %p538 = pneg %p371
      $region70: #{_lambda_.12} parent=11 // pred_check_branch
        %540 = sbr.rel (%p538) target = $region72
      $region71: #{_lambda_.12} parent=11 // pred_region
        _
      $region72: #{_lambda_.12} parent=11 // pred_fallthru
        _
      // Predicated region
      $region73: #{_lambda_.12} parent=11 // pred_check
        %p541 = pneg %p392
      $region74: #{_lambda_.12} parent=11 // pred_check_branch
        %543 = sbr.rel (%p541) target = $region76
      $region75: #{_lambda_.12} parent=11 // pred_region
        _
      $region76: #{_lambda_.12} parent=11 // pred_fallthru
        _
      // Predicated region
      $region77: #{_lambda_.12} parent=11 // pred_check
        %p544 = pneg %p413
      $region78: #{_lambda_.12} parent=11 // pred_check_branch
        %546 = sbr.rel (%p544) target = $region80
      $region79: #{_lambda_.12} parent=11 // pred_region
        _
      $region80: #{_lambda_.12} parent=11 // pred_fallthru
        _
      // Predicated region
      $region81: #{_lambda_.12} parent=11 // pred_check
        %p547 = pneg %p434
      $region82: #{_lambda_.12} parent=11 // pred_check_branch
        %549 = sbr.rel (%p547) target = $region84
      $region83: #{_lambda_.12} parent=11 // pred_region
        _
      $region84: #{_lambda_.12} parent=11 // pred_fallthru
        _
      // Predicated region
      $region85: #{_lambda_.12} parent=11 // pred_check
        %p550 = pneg %p455
      $region86: #{_lambda_.12} parent=11 // pred_check_branch
        %552 = sbr.rel (%p550) target = $region88
      $region87: #{_lambda_.12} parent=11 // pred_region
        _
      $region88: #{_lambda_.12} parent=11 // pred_fallthru
        _
    $region12: #{_lambda_.12} parent=5 // pred_fallthru
      _
    %p553 = scmp.lt.s32.totalorder %s30, 6
    // Predicated region
    $region89: #{_lambda_.12} parent=5 // pred_check
      %p554 = pneg %p553
    $region90: #{_lambda_.12} parent=5 // pred_check_branch
      %556 = sbr.rel (%p554) target = $region92
    $region91: #{_lambda_.12} parent=5 // pred_region
      // Predicated region
      $region93: #{_lambda_.12} parent=91 // pred_check
        %p557 = pneg %p50
      $region94: #{_lambda_.12} parent=91 // pred_check_branch
        %559 = sbr.rel (%p557) target = $region96
      $region95: #{_lambda_.12} parent=91 // pred_region
        %p560 = scmp.lt.s32.totalorder %s30, 5
        %s561 = scalar_select %p560, %s30, 5
        %s562 = smul.addr %s561, 2
        %s563 = scalar_lea.vmem %s0, %s562
      $region96: #{_lambda_.12} parent=91 // pred_fallthru
        _
    $region92: #{_lambda_.12} parent=5 // pred_fallthru
      _
    %p564 = scmp.le.s32.totalorder 1, %s30
    %p565 = scmp.lt.s32.totalorder %s30, 7
    %p566 = pnand %p564, %p565
    %p567 = pneg %p566
    // Predicated region
    $region97: #{_lambda_.12} parent=5 // pred_check
      _
    $region98: #{_lambda_.12} parent=5 // pred_check_branch
      %569 = sbr.rel (%p566) target = $region100
    $region99: #{_lambda_.12} parent=5 // pred_region
      %s570 = ssub.s32 %s30, 1
      %p571 = scmp.lt.s32.totalorder %s35, 5
      %s572 = scalar_select %p571, %s35, 5
      %s573 = smul.addr %s572, 2
      %s574 = scalar_lea.vmem %s0, %s573
      %p575 = pneg %p56
      %p576 = pneg %p53
      %p577 = pneg %p77
      %p578 = pneg %p74
      %p579 = pneg %p98
      %p580 = pneg %p95
      %p581 = pneg %p119
      %p582 = pneg %p116
      %p583 = pneg %p140
      %p584 = pneg %p137
      %p585 = pneg %p161
      %p586 = pneg %p158
      %p587 = pneg %p182
      %p588 = pneg %p179
      %p589 = pneg %p203
      %p590 = pneg %p200
      %p591 = pneg %p224
      %p592 = pneg %p221
      %p593 = pneg %p245
      %p594 = pneg %p242
      %p595 = pneg %p266
      %p596 = pneg %p263
      %p597 = pneg %p287
      %p598 = pneg %p284
      %p599 = pneg %p308
      %p600 = pneg %p305
      %p601 = pneg %p329
      %p602 = pneg %p326
      %p603 = pneg %p350
      %p604 = pneg %p347
      %p605 = pneg %p371
      %p606 = pneg %p368
      %p607 = pneg %p392
      %p608 = pneg %p389
      %p609 = pneg %p413
      %p610 = pneg %p410
      %p611 = pneg %p434
      %p612 = pneg %p431
      %p613 = pneg %p455
      %p614 = pneg %p452
      %p615 = pneg %p481
      %p616 = pneg %p478
      %p617 = scmp.lt.s32.totalorder %s35, 5
      %s618 = scalar_select %p617, %s35, 5
      %s619 = smul.addr %s618, 2
      %s620 = scalar_lea.vmem %s20, %s619
      %p621 = scmp.lt.s32.totalorder %s35, 5
      %s622 = scalar_select %p621, %s35, 5
      %s623 = smul.addr %s622, 2
      %s624 = scalar_lea.vmem %s0, %s623
      %p625 = scmp.lt.s32.totalorder %s35, 5
      %s626 = scalar_select %p625, %s35, 5
      %s627 = smul.addr %s626, 2
      %s628 = scalar_lea.vmem %s20, %s627
      %p629 = scmp.eq.s32.totalorder %s35, 0
      // Predicated region
      $region101: #{_lambda_.12} parent=99 // pred_check
        %p630 = pneg %p629
      $region102: #{_lambda_.12} parent=99 // pred_check_branch
        %632 = sbr.rel (%p630) target = $region104
      $region103: #{_lambda_.12} parent=99 // pred_region
        %vm633 = vcmask 254976
        %634 = vst.msk [vmem:[#allocation2] sm:$0x3] %vm633, 0.0
        %635 = vst.msk [vmem:[#allocation3] sm:$0x3] %vm633, 0.0
        %636 = vst.msk [vmem:[#allocation4] sm:$0x3] %vm633, 0.0
        %637 = vst.msk [vmem:[#allocation5] sm:$0x3] %vm633, 0.0
        %vm638 = vcmask 58368
        %639 = vst.msk [vmem:[#allocation6] sm:$0x3] %vm638, 0.0
      $region104: #{_lambda_.12} parent=99 // pred_fallthru
        _
      %v640 = vld [vmem:[#allocation2] sm:$0x3]
      %v641 = vld [vmem:[#allocation4] sm:$0x3]
      %v642 = vld [vmem:[#allocation3] sm:$0x3]
      %v643 = vld [vmem:[#allocation5] sm:$0x3]
      %s644 = scalar_select %p629, 1, 0
      %s645 = scvt.s32.f32 %s644
      %v646 = vld [vmem:[%s4] sm:$0x3]
      %v647 = vstv %s645
      %v648 = vmul.f32 %v647, %v646
      %s649 = ssub.f32 1.0, %s645
      %v650 = vld [vmem:[#allocation6] sm:$0x3]
      %v651 = vstv %s649
      %v652 = vmul.f32 %v651, %v650
      %v653 = vadd.f32 %v648, %v652
      %v654 = vld [vmem:[%s6] sm:$0xff]
      %v655 = vld [vmem:[%s6 + $0x8] sm:$0xff]
      %v656 = vld [vmem:[%s6 + $0x10] sm:$0xff]
      %v657 = vld [vmem:[%s6 + $0x18] sm:$0xff]
      %vm658 = vcmask 261120
      %v660 = vsel %vm658, %v640, 0
      %662 = vmatprep.subr.mxu0 0.0
      %663 = vmatpush1.msra.mxu0 0.0
      %664 = vmatprep.subr.mxu0 0.0
      %665 = vmatpush1.msra.mxu0 0.0
      %666 = vmatprep.subr.mxu0 0.0
      %667 = vmatpush1.msra.mxu0 0.0
      %668 = vmatprep.subr.mxu0 0.0
      %669 = vmatpush1.msra.mxu0 0.0
      %670 = vmatprep.subr.mxu0 0.0
      %671 = vmatpush1.msra.mxu0 0.0
      %672 = vmatprep.subr.mxu0 0.0
      %673 = vmatpush1.msra.mxu0 0.0
      %674 = vmatprep.subr.mxu0 0.0
      %675 = vmatpush1.msra.mxu0 0.0
      %676 = vmatprep.subr.mxu0 0.0
      %677 = vmatpush1.msra.mxu0 0.0
      %678 = vmatprep.subr.mxu0 0.0
      %679 = vmatpush1.msra.mxu0 0.0
      %680 = vmatprep.subr.mxu0 0.0
      %681 = vmatpush1.msra.mxu0 0.0
      %682 = vmatprep.subr.mxu0 0.0
      %683 = vmatpush1.msra.mxu0 0.0
      %684 = vmatprep.subr.mxu0 0.0
      %685 = vmatpush1.msra.mxu0 0.0
      %686 = vmatprep.subr.mxu0 0.0
      %687 = vmatpush1.msra.mxu0 %v657
      %688 = vmatprep.subr.mxu0 0.0
      %689 = vmatpush1.msra.mxu0 %v656
      %690 = vmatprep.subr.mxu0 0.0
      %691 = vmatpush1.msra.mxu0 %v655
      %692 = vmatprep.subr.mxu0 0.0
      %693 = vmatpush1.msra.mxu0 %v654
      %694 = vmatprep.subr.mxu0 0.0
      %695 = vmatpush2.msra.mxu0 0.0
      %696 = vmatprep.subr.mxu0 0.0
      %697 = vmatpush2.msra.mxu0 0.0
      %698 = vmatprep.subr.mxu0 0.0
      %699 = vmatpush2.msra.mxu0 0.0
      %700 = vmatprep.subr.mxu0 0.0
      %701 = vmatpush2.msra.mxu0 0.0
      %702 = vmatprep.subr.mxu0 0.0
      %703 = vmatpush2.msra.mxu0 0.0
      %704 = vmatprep.subr.mxu0 0.0
      %705 = vmatpush2.msra.mxu0 0.0
      %706 = vmatprep.subr.mxu0 0.0
      %707 = vmatpush2.msra.mxu0 0.0
      %708 = vmatprep.subr.mxu0 0.0
      %709 = vmatpush2.msra.mxu0 0.0
      %710 = vmatprep.subr.mxu0 0.0
      %711 = vmatpush2.msra.mxu0 0.0
      %712 = vmatprep.subr.mxu0 0.0
      %713 = vmatpush2.msra.mxu0 0.0
      %714 = vmatprep.subr.mxu0 0.0
      %715 = vmatpush2.msra.mxu0 0.0
      %716 = vmatprep.subr.mxu0 0.0
      %717 = vmatpush2.msra.mxu0 0.0
      %718 = vmatprep.subr.mxu0 0.0
      %719 = vmatpush2.msra.mxu0 0.0
      %720 = vmatprep.subr.mxu0 0.0
      %721 = vmatpush2.msra.mxu0 0.0
      %722 = vmatprep.subr.mxu0 0.0
      %723 = vmatpush2.msra.mxu0 0.0
      %724 = vmatprep.subr.mxu0 0.0
      %725 = vmatpush2.msra.mxu0 0.0
      %726 = vmatprep.mubr.f32.mxu0 0.0
      %727 = vmatmul.mubr.f32.gmra.mxu0 %v660
      %v728 = vpop.f32.mrf.mxu0
      %v729 = vadd.f32 0.0, %v728
      %v730 = vpop.f32.mrf.mxu0
      %731 = vdwg.mxu0
      %v732 = vld [vmem:[%s1] sm:$0xff]
      %v733 = vld [vmem:[%s1 + $0x8] sm:$0xff]
      %v736 = vunpack.c.l.s4 1966171168
      %v737 = vunpack.c.0.s8 %v736
      %v738 = vlaneseq
      %v739 = vshrl.u32 %v738, 7
      %v740 = vsub.s32 %v737, %v739
      %v741 = vrot.slane %v729, %v740
      %v742 = vcombine.high %v741, %v741
      %v744 = vunpack.c.l.s4 1966171168
      %v745 = vunpack.c.0.s8 %v744
      %v746 = vlaneseq
      %v747 = vshrl.u32 %v746, 7
      %v748 = vsub.s32 %v745, %v747
      %v749 = vrot.slane %v741, %v748
      %v751 = vunpack.c.l.s4 1966171168
      %v752 = vunpack.c.0.s8 %v751
      %v753 = vlaneseq
      %v754 = vshrl.u32 %v753, 7
      %v755 = vsub.s32 %v752, %v754
      %v756 = vrot.slane %v742, %v755
      %v757 = vlaneseq
      %v758 = vshrl.u32 %v757, 7
      %v759 = vsub.s32 0, %v758
      %v760 = vrot.slane %v749, %v759
      %v761 = vlaneseq
      %v762 = vshrl.u32 %v761, 7
      %v763 = vsub.s32 0, %v762
      %v764 = vrot.slane %v756, %v763
      %v767 = vadd.f32 %v732, %v760
      %v768 = vadd.f32 %v733, %v764
      %770 = vrot.lane.b32.xlu0 %v653, 3
      %v771 = vpop.permute.xlu0 %770
      %vm773 = vcmask 23552
      %v774 = vsel %vm773, 0.0, %v771
      %v775 = vlaneseq
      %v776 = vshrl.u32 %v775, 7
      %v777 = vsub.s32 0, %v776
      %v778 = vrot.slane %v774, %v777
      %780 = vbcast.lane.b32.xlu0 %v778, 256
      %v781 = vpop.permute.xlu0 %780
      %v782 = vlaneseq
      %v783 = vshrl.u32 %v782, 7
      %v784 = vsub.s32 1, %v783
      %v785 = vrot.slane %v774, %v784
      %787 = vbcast.lane.b32.xlu0 %v785, 256
      %v788 = vpop.permute.xlu0 %787
      %v789 = vld [vmem:[%s5] sm:$0x1]
      %v791 = vlaneseq
      %v792 = vshrl.u32 %v791, 7
      %v793 = vsub.s32 0, %v792
      %v794 = vrot.slane %v789, %v793
      %v796 = vmul.f32 %v781, %v794
      %v797 = vmul.f32 %v788, %v794
      %v798 = vadd.f32 %v767, %v796
      %v799 = vadd.f32 %v768, %v797
      %800 = vrot.lane.b32.xlu0 %v653, 2
      %v801 = vpop.permute.xlu0 %800
      %vm803 = vcmask 15360
      %v804 = vsel %vm803, 0.0, %v801
      %v805 = vlaneseq
      %v806 = vshrl.u32 %v805, 7
      %v807 = vsub.s32 0, %v806
      %v808 = vrot.slane %v804, %v807
      %810 = vbcast.lane.b32.xlu0 %v808, 256
      %v811 = vpop.permute.xlu0 %810
      %v812 = vlaneseq
      %v813 = vshrl.u32 %v812, 7
      %v814 = vsub.s32 1, %v813
      %v815 = vrot.slane %v804, %v814
      %817 = vbcast.lane.b32.xlu0 %v815, 256
      %v818 = vpop.permute.xlu0 %817
      %s819 = scalar_lea.vmem %s5, 1
      %v820 = vld [vmem:[%s819] sm:$0x1]
      %v822 = vlaneseq
      %v823 = vshrl.u32 %v822, 7
      %v824 = vsub.s32 0, %v823
      %v825 = vrot.slane %v820, %v824
      %v827 = vmul.f32 %v811, %v825
      %v828 = vmul.f32 %v818, %v825
      %v829 = vadd.f32 %v798, %v827
      %v830 = vadd.f32 %v799, %v828
      %831 = vrot.lane.b32.xlu0 %v653, 1
      %v832 = vpop.permute.xlu0 %831
      %vm834 = vcmask 7168
      %v835 = vsel %vm834, 0.0, %v832
      %v836 = vlaneseq
      %v837 = vshrl.u32 %v836, 7
      %v838 = vsub.s32 0, %v837
      %v839 = vrot.slane %v835, %v838
      %841 = vbcast.lane.b32.xlu0 %v839, 256
      %v842 = vpop.permute.xlu0 %841
      %v843 = vlaneseq
      %v844 = vshrl.u32 %v843, 7
      %v845 = vsub.s32 1, %v844
      %v846 = vrot.slane %v835, %v845
      %848 = vbcast.lane.b32.xlu0 %v846, 256
      %v849 = vpop.permute.xlu0 %848
      %s850 = scalar_lea.vmem %s5, 2
      %v851 = vld [vmem:[%s850] sm:$0x1]
      %v853 = vlaneseq
      %v854 = vshrl.u32 %v853, 7
      %v855 = vsub.s32 0, %v854
      %v856 = vrot.slane %v851, %v855
      %v858 = vmul.f32 %v842, %v856
      %v859 = vmul.f32 %v849, %v856
      %v860 = vadd.f32 %v829, %v858
      %v861 = vadd.f32 %v830, %v859
      %v862 = vlaneseq
      %v863 = vshrl.u32 %v862, 7
      %v864 = vsub.s32 0, %v863
      %v865 = vrot.slane %v653, %v864
      %867 = vbcast.lane.b32.xlu0 %v865, 256
      %v868 = vpop.permute.xlu0 %867
      %v869 = vlaneseq
      %v870 = vshrl.u32 %v869, 7
      %v871 = vsub.s32 1, %v870
      %v872 = vrot.slane %v653, %v871
      %874 = vbcast.lane.b32.xlu0 %v872, 256
      %v875 = vpop.permute.xlu0 %874
      %s876 = scalar_lea.vmem %s5, 3
      %v877 = vld [vmem:[%s876] sm:$0x1]
      %v879 = vlaneseq
      %v880 = vshrl.u32 %v879, 7
      %v881 = vsub.s32 0, %v880
      %v882 = vrot.slane %v877, %v881
      %v884 = vmul.f32 %v868, %v882
      %v885 = vmul.f32 %v875, %v882
      %v886 = vadd.f32 %v860, %v884
      %v887 = vadd.f32 %v861, %v885
      %888 = vrot.lane.b32.xlu0 %v653, 127
      %v889 = vpop.permute.xlu0 %888
      %vm891 = vcmask 56320
      %v892 = vsel %vm891, %v889, 0.0
      %v893 = vlaneseq
      %v894 = vshrl.u32 %v893, 7
      %v895 = vsub.s32 0, %v894
      %v896 = vrot.slane %v892, %v895
      %898 = vbcast.lane.b32.xlu0 %v896, 256
      %v899 = vpop.permute.xlu0 %898
      %v900 = vlaneseq
      %v901 = vshrl.u32 %v900, 7
      %v902 = vsub.s32 1, %v901
      %v903 = vrot.slane %v892, %v902
      %905 = vbcast.lane.b32.xlu0 %v903, 256
      %v906 = vpop.permute.xlu0 %905
      %s907 = scalar_lea.vmem %s5, 4
      %v908 = vld [vmem:[%s907] sm:$0x1]
      %v910 = vlaneseq
      %v911 = vshrl.u32 %v910, 7
      %v912 = vsub.s32 0, %v911
      %v913 = vrot.slane %v908, %v912
      %v915 = vmul.f32 %v899, %v913
      %v916 = vmul.f32 %v906, %v913
      %v917 = vadd.f32 %v886, %v915
      %v918 = vadd.f32 %v887, %v916
      %919 = vrot.lane.b32.xlu0 %v653, 126
      %v920 = vpop.permute.xlu0 %919
      %vm922 = vcmask 48128
      %v923 = vsel %vm922, %v920, 0.0
      %v924 = vlaneseq
      %v925 = vshrl.u32 %v924, 7
      %v926 = vsub.s32 0, %v925
      %v927 = vrot.slane %v923, %v926
      %929 = vbcast.lane.b32.xlu0 %v927, 256
      %v930 = vpop.permute.xlu0 %929
      %v931 = vlaneseq
      %v932 = vshrl.u32 %v931, 7
      %v933 = vsub.s32 1, %v932
      %v934 = vrot.slane %v923, %v933
      %936 = vbcast.lane.b32.xlu0 %v934, 256
      %v937 = vpop.permute.xlu0 %936
      %s938 = scalar_lea.vmem %s5, 5
      %v939 = vld [vmem:[%s938] sm:$0x1]
      %v941 = vlaneseq
      %v942 = vshrl.u32 %v941, 7
      %v943 = vsub.s32 0, %v942
      %v944 = vrot.slane %v939, %v943
      %v946 = vmul.f32 %v930, %v944
      %v947 = vmul.f32 %v937, %v944
      %v948 = vadd.f32 %v917, %v946
      %v949 = vadd.f32 %v918, %v947
      %950 = vrot.lane.b32.xlu0 %v653, 125
      %v951 = vpop.permute.xlu0 %950
      %vm953 = vcmask 39936
      %v954 = vsel %vm953, %v951, 0.0
      %v955 = vlaneseq
      %v956 = vshrl.u32 %v955, 7
      %v957 = vsub.s32 0, %v956
      %v958 = vrot.slane %v954, %v957
      %960 = vbcast.lane.b32.xlu0 %v958, 256
      %v961 = vpop.permute.xlu0 %960
      %v962 = vlaneseq
      %v963 = vshrl.u32 %v962, 7
      %v964 = vsub.s32 1, %v963
      %v965 = vrot.slane %v954, %v964
      %967 = vbcast.lane.b32.xlu0 %v965, 256
      %v968 = vpop.permute.xlu0 %967
      %s969 = scalar_lea.vmem %s5, 6
      %v970 = vld [vmem:[%s969] sm:$0x1]
      %v972 = vlaneseq
      %v973 = vshrl.u32 %v972, 7
      %v974 = vsub.s32 0, %v973
      %v975 = vrot.slane %v970, %v974
      %v977 = vmul.f32 %v961, %v975
      %v978 = vmul.f32 %v968, %v975
      %v979 = vadd.f32 %v948, %v977
      %v980 = vadd.f32 %v949, %v978
      %v981 = vtanh.pop %v979
      %v982 = vtanh.pop %v980
      %v983 = vld [vmem:[%s7] sm:$0x1]
      %v985 = vlaneseq
      %v986 = vshrl.u32 %v985, 7
      %v987 = vsub.s32 0, %v986
      %v988 = vrot.slane %v983, %v987
      %v990 = vmul.f32 %v981, %v988
      %v991 = vmul.f32 %v982, %v988
      %vm992 = vcmask 130048
      %v993 = vsel %vm992, %v990, 0.0
      %994 = vadd.xlane.f32.xlu0 %v993
      %v995 = vpop.xlane.xlu0 %994
      %v996 = vsel %vm992, %v991, 0.0
      %997 = vadd.xlane.f32.xlu0 %v996
      %v998 = vpop.xlane.xlu0 %997
      %v999 = vld [vmem:[#allocation7] sm:$0x1]
      %v1001 = vlaneseq
      %v1002 = vshrl.u32 %v1001, 7
      %v1003 = vsub.s32 0, %v1002
      %v1004 = vrot.slane %v999, %v1003
      %1005 = vset.pattern.permute.xlu0 0
      %1006 = vperm.xlu0 %1005, %v1004
      %v1007 = vpop.permute.xlu0 %1006
      %v1009 = vadd.f32 %v995, %v1007
      %v1010 = vadd.f32 %v998, %v1007
      %v1011 = vld [vmem:[%s3] sm:$0x3]
      %vm1012 = vcmp.gt.f32.partialorder %v1011, 0.5
      %v1015 = vlaneseq
      %v1016 = vand.u32 %v1015, 127
      %v1017 = vlaneseq
      %v1018 = vshrl.u32 %v1017, 7
      %v1019 = vsub.s32 %v1016, %v1018
      %v1020 = vrot.slane %v1009, %v1019
      %v1021 = vlaneseq
      %v1022 = vshrl.u32 %v1021, 7
      %v1023 = vsub.s32 %v1016, %v1022
      %v1024 = vrot.slane %v1010, %v1023
      %vm1025 = vcmask 1041409
      %v1026 = vsel %vm1025, %v1024, %v1020
      %v1028 = vsel %vm1012, -1e+30, %v1026
      %vm1029 = vcmask 58368
      %v1030 = vsel %vm1029, %v1028, -inf
      %1031 = vmax.xlane.f32.xlu0 %v1030
      %v1032 = vpop.xlane.xlu0 %1031
      %v1033 = vsub.f32 %v1028, %v1032
      %v1034 = vmul.f32 %v1033, 1.442695
      %v1035 = vpow.pop %v1034
      %v1036 = vsel %vm1029, %v1035, 0.0
      %1037 = vadd.xlane.f32.xlu0 %v1036
      %v1038 = vpop.xlane.xlu0 %1037
      %v1039 = vrcp.pop %v1038
      %v1040 = vmul.f32 %v1035, %v1039
      %v1043 = vunpack.c.l.s4 1966171168
      %v1044 = vunpack.c.0.s8 %v1043
      %v1045 = vlaneseq
      %v1046 = vshrl.u32 %v1045, 7
      %v1047 = vsub.s32 %v1044, %v1046
      %v1048 = vrot.slane %v1040, %v1047
      %v1049 = vcombine.high %v1048, %v1048
      %v1051 = vunpack.c.l.s4 1966171168
      %v1052 = vunpack.c.0.s8 %v1051
      %v1053 = vlaneseq
      %v1054 = vshrl.u32 %v1053, 7
      %v1055 = vsub.s32 %v1052, %v1054
      %v1056 = vrot.slane %v1048, %v1055
      %v1058 = vunpack.c.l.s4 1966171168
      %v1059 = vunpack.c.0.s8 %v1058
      %v1060 = vlaneseq
      %v1061 = vshrl.u32 %v1060, 7
      %v1062 = vsub.s32 %v1059, %v1061
      %v1063 = vrot.slane %v1049, %v1062
      %v1064 = vld [vmem:[%s2] sm:$0xff]
      %v1065 = vld [vmem:[%s2 + $0x8] sm:$0xff]
      %vm1066 = vcmask 64512
      %v1067 = vsel %vm1066, %v1056, 0
      %1069 = vmatprep.subr.mxu0 0.0
      %1070 = vmatpush1.msra.mxu0 0.0
      %1071 = vmatprep.subr.mxu0 0.0
      %1072 = vmatpush1.msra.mxu0 0.0
      %1073 = vmatprep.subr.mxu0 0.0
      %1074 = vmatpush1.msra.mxu0 0.0
      %1075 = vmatprep.subr.mxu0 0.0
      %1076 = vmatpush1.msra.mxu0 0.0
      %1077 = vmatprep.subr.mxu0 0.0
      %1078 = vmatpush1.msra.mxu0 0.0
      %1079 = vmatprep.subr.mxu0 0.0
      %1080 = vmatpush1.msra.mxu0 0.0
      %1081 = vmatprep.subr.mxu0 0.0
      %1082 = vmatpush1.msra.mxu0 0.0
      %1083 = vmatprep.subr.mxu0 0.0
      %1084 = vmatpush1.msra.mxu0 0.0
      %1085 = vmatprep.subr.mxu0 0.0
      %1086 = vmatpush1.msra.mxu0 0.0
      %1087 = vmatprep.subr.mxu0 0.0
      %1088 = vmatpush1.msra.mxu0 0.0
      %1089 = vmatprep.subr.mxu0 0.0
      %1090 = vmatpush1.msra.mxu0 0.0
      %1091 = vmatprep.subr.mxu0 0.0
      %1092 = vmatpush1.msra.mxu0 0.0
      %1093 = vmatprep.subr.mxu0 0.0
      %1094 = vmatpush1.msra.mxu0 0.0
      %1095 = vmatprep.subr.mxu0 0.0
      %1096 = vmatpush1.msra.mxu0 0.0
      %1097 = vmatprep.subr.mxu0 0.0
      %1098 = vmatpush1.msra.mxu0 0.0
      %1099 = vmatprep.subr.mxu0 0.0
      %1100 = vmatpush1.msra.mxu0 %v1064
      %1101 = vmatprep.subr.mxu0 0.0
      %1102 = vmatpush2.msra.mxu0 0.0
      %1103 = vmatprep.subr.mxu0 0.0
      %1104 = vmatpush2.msra.mxu0 0.0
      %1105 = vmatprep.subr.mxu0 0.0
      %1106 = vmatpush2.msra.mxu0 0.0
      %1107 = vmatprep.subr.mxu0 0.0
      %1108 = vmatpush2.msra.mxu0 0.0
      %1109 = vmatprep.subr.mxu0 0.0
      %1110 = vmatpush2.msra.mxu0 0.0
      %1111 = vmatprep.subr.mxu0 0.0
      %1112 = vmatpush2.msra.mxu0 0.0
      %1113 = vmatprep.subr.mxu0 0.0
      %1114 = vmatpush2.msra.mxu0 0.0
      %1115 = vmatprep.subr.mxu0 0.0
      %1116 = vmatpush2.msra.mxu0 0.0
      %1117 = vmatprep.subr.mxu0 0.0
      %1118 = vmatpush2.msra.mxu0 0.0
      %1119 = vmatprep.subr.mxu0 0.0
      %1120 = vmatpush2.msra.mxu0 0.0
      %1121 = vmatprep.subr.mxu0 0.0
      %1122 = vmatpush2.msra.mxu0 0.0
      %1123 = vmatprep.subr.mxu0 0.0
      %1124 = vmatpush2.msra.mxu0 0.0
      %1125 = vmatprep.subr.mxu0 0.0
      %1126 = vmatpush2.msra.mxu0 0.0
      %1127 = vmatprep.subr.mxu0 0.0
      %1128 = vmatpush2.msra.mxu0 0.0
      %1129 = vmatprep.subr.mxu0 0.0
      %1130 = vmatpush2.msra.mxu0 0.0
      %1131 = vmatprep.subr.mxu0 0.0
      %1132 = vmatpush2.msra.mxu0 0.0
      %1133 = vmatprep.mubr.f32.mxu0 0.0
      %1134 = vmatmul.mubr.f32.gmra.mxu0 %v1067
      %v1135 = vpop.f32.mrf.mxu0
      %v1136 = vadd.f32 0.0, %v1135
      %v1137 = vpop.f32.mrf.mxu0
      %1138 = vdwg.mxu0
      %v1139 = vsel %vm1066, %v1063, 0
      %1141 = vmatprep.subr.mxu0 0.0
      %1142 = vmatpush1.msra.mxu0 0.0
      %1143 = vmatprep.subr.mxu0 0.0
      %1144 = vmatpush1.msra.mxu0 0.0
      %1145 = vmatprep.subr.mxu0 0.0
      %1146 = vmatpush1.msra.mxu0 0.0
      %1147 = vmatprep.subr.mxu0 0.0
      %1148 = vmatpush1.msra.mxu0 0.0
      %1149 = vmatprep.subr.mxu0 0.0
      %1150 = vmatpush1.msra.mxu0 0.0
      %1151 = vmatprep.subr.mxu0 0.0
      %1152 = vmatpush1.msra.mxu0 0.0
      %1153 = vmatprep.subr.mxu0 0.0
      %1154 = vmatpush1.msra.mxu0 0.0
      %1155 = vmatprep.subr.mxu0 0.0
      %1156 = vmatpush1.msra.mxu0 0.0
      %1157 = vmatprep.subr.mxu0 0.0
      %1158 = vmatpush1.msra.mxu0 0.0
      %1159 = vmatprep.subr.mxu0 0.0
      %1160 = vmatpush1.msra.mxu0 0.0
      %1161 = vmatprep.subr.mxu0 0.0
      %1162 = vmatpush1.msra.mxu0 0.0
      %1163 = vmatprep.subr.mxu0 0.0
      %1164 = vmatpush1.msra.mxu0 0.0
      %1165 = vmatprep.subr.mxu0 0.0
      %1166 = vmatpush1.msra.mxu0 0.0
      %1167 = vmatprep.subr.mxu0 0.0
      %1168 = vmatpush1.msra.mxu0 0.0
      %1169 = vmatprep.subr.mxu0 0.0
      %1170 = vmatpush1.msra.mxu0 0.0
      %1171 = vmatprep.subr.mxu0 0.0
      %1172 = vmatpush1.msra.mxu0 %v1065
      %1173 = vmatprep.subr.mxu0 0.0
      %1174 = vmatpush2.msra.mxu0 0.0
      %1175 = vmatprep.subr.mxu0 0.0
      %1176 = vmatpush2.msra.mxu0 0.0
      %1177 = vmatprep.subr.mxu0 0.0
      %1178 = vmatpush2.msra.mxu0 0.0
      %1179 = vmatprep.subr.mxu0 0.0
      %1180 = vmatpush2.msra.mxu0 0.0
      %1181 = vmatprep.subr.mxu0 0.0
      %1182 = vmatpush2.msra.mxu0 0.0
      %1183 = vmatprep.subr.mxu0 0.0
      %1184 = vmatpush2.msra.mxu0 0.0
      %1185 = vmatprep.subr.mxu0 0.0
      %1186 = vmatpush2.msra.mxu0 0.0
      %1187 = vmatprep.subr.mxu0 0.0
      %1188 = vmatpush2.msra.mxu0 0.0
      %1189 = vmatprep.subr.mxu0 0.0
      %1190 = vmatpush2.msra.mxu0 0.0
      %1191 = vmatprep.subr.mxu0 0.0
      %1192 = vmatpush2.msra.mxu0 0.0
      %1193 = vmatprep.subr.mxu0 0.0
      %1194 = vmatpush2.msra.mxu0 0.0
      %1195 = vmatprep.subr.mxu0 0.0
      %1196 = vmatpush2.msra.mxu0 0.0
      %1197 = vmatprep.subr.mxu0 0.0
      %1198 = vmatpush2.msra.mxu0 0.0
      %1199 = vmatprep.subr.mxu0 0.0
      %1200 = vmatpush2.msra.mxu0 0.0
      %1201 = vmatprep.subr.mxu0 0.0
      %1202 = vmatpush2.msra.mxu0 0.0
      %1203 = vmatprep.subr.mxu0 0.0
      %1204 = vmatpush2.msra.mxu0 0.0
      %1205 = vmatprep.mubr.f32.mxu0 0.0
      %1206 = vmatmul.mubr.f32.gmra.mxu0 %v1139
      %v1207 = vpop.f32.mrf.mxu0
      %v1208 = vadd.f32 0.0, %v1207
      %v1209 = vpop.f32.mrf.mxu0
      %1210 = vdwg.mxu0
      %v1211 = vld [vmem:[#allocation6] sm:$0x3]
      %v1212 = vadd.f32 %v1211, %v1040
      %1213 = vst.msk [vmem:[#allocation6] sm:$0x3] %vm1029, %v1212
      %v1214 = vld [vmem:[%s624] sm:$0x3]
      %v1215 = vld [vmem:[%s9] sm:$0xff]
      %v1216 = vld [vmem:[%s10] sm:$0x1]
      %v1218 = vlaneseq
      %v1219 = vshrl.u32 %v1218, 7
      %v1220 = vsub.s32 0, %v1219
      %v1221 = vrot.slane %v1216, %v1220
      %v1224 = vsel %vm1066, %v1214, 0
      %1226 = vmatprep.subr.mxu0 0.0
      %1227 = vmatpush1.msra.mxu0 0.0
      %1228 = vmatprep.subr.mxu0 0.0
      %1229 = vmatpush1.msra.mxu0 0.0
      %1230 = vmatprep.subr.mxu0 0.0
      %1231 = vmatpush1.msra.mxu0 0.0
      %1232 = vmatprep.subr.mxu0 0.0
      %1233 = vmatpush1.msra.mxu0 0.0
      %1234 = vmatprep.subr.mxu0 0.0
      %1235 = vmatpush1.msra.mxu0 0.0
      %1236 = vmatprep.subr.mxu0 0.0
      %1237 = vmatpush1.msra.mxu0 0.0
      %1238 = vmatprep.subr.mxu0 0.0
      %1239 = vmatpush1.msra.mxu0 0.0
      %1240 = vmatprep.subr.mxu0 0.0
      %1241 = vmatpush1.msra.mxu0 0.0
      %1242 = vmatprep.subr.mxu0 0.0
      %1243 = vmatpush1.msra.mxu0 0.0
      %1244 = vmatprep.subr.mxu0 0.0
      %1245 = vmatpush1.msra.mxu0 0.0
      %1246 = vmatprep.subr.mxu0 0.0
      %1247 = vmatpush1.msra.mxu0 0.0
      %1248 = vmatprep.subr.mxu0 0.0
      %1249 = vmatpush1.msra.mxu0 0.0
      %1250 = vmatprep.subr.mxu0 0.0
      %1251 = vmatpush1.msra.mxu0 0.0
      %1252 = vmatprep.subr.mxu0 0.0
      %1253 = vmatpush1.msra.mxu0 0.0
      %1254 = vmatprep.subr.mxu0 0.0
      %1255 = vmatpush1.msra.mxu0 0.0
      %1256 = vmatprep.subr.mxu0 0.0
      %1257 = vmatpush1.msra.mxu0 %v1215
      %1258 = vmatprep.subr.mxu0 0.0
      %1259 = vmatpush2.msra.mxu0 0.0
      %1260 = vmatprep.subr.mxu0 0.0
      %1261 = vmatpush2.msra.mxu0 0.0
      %1262 = vmatprep.subr.mxu0 0.0
      %1263 = vmatpush2.msra.mxu0 0.0
      %1264 = vmatprep.subr.mxu0 0.0
      %1265 = vmatpush2.msra.mxu0 0.0
      %1266 = vmatprep.subr.mxu0 0.0
      %1267 = vmatpush2.msra.mxu0 0.0
      %1268 = vmatprep.subr.mxu0 0.0
      %1269 = vmatpush2.msra.mxu0 0.0
      %1270 = vmatprep.subr.mxu0 0.0
      %1271 = vmatpush2.msra.mxu0 0.0
      %1272 = vmatprep.subr.mxu0 0.0
      %1273 = vmatpush2.msra.mxu0 0.0
      %1274 = vmatprep.subr.mxu0 0.0
      %1275 = vmatpush2.msra.mxu0 0.0
      %1276 = vmatprep.subr.mxu0 0.0
      %1277 = vmatpush2.msra.mxu0 0.0
      %1278 = vmatprep.subr.mxu0 0.0
      %1279 = vmatpush2.msra.mxu0 0.0
      %1280 = vmatprep.subr.mxu0 0.0
      %1281 = vmatpush2.msra.mxu0 0.0
      %1282 = vmatprep.subr.mxu0 0.0
      %1283 = vmatpush2.msra.mxu0 0.0
      %1284 = vmatprep.subr.mxu0 0.0
      %1285 = vmatpush2.msra.mxu0 0.0
      %1286 = vmatprep.subr.mxu0 0.0
      %1287 = vmatpush2.msra.mxu0 0.0
      %1288 = vmatprep.subr.mxu0 0.0
      %1289 = vmatpush2.msra.mxu0 0.0
      %1290 = vmatprep.mubr.f32.mxu0 0.0
      %1291 = vmatmul.mubr.f32.gmra.mxu0 %v1224
      %v1292 = vpop.f32.mrf.mxu0
      %v1293 = vadd.f32 %v1221, %v1292
      %v1294 = vpop.f32.mrf.mxu0
      %1295 = vdwg.mxu0
      %v1296 = vmax.f32 %v1293, 0.0
      %v1297 = vld [vmem:[%s11] sm:$0xff]
      %v1298 = vld [vmem:[%s11 + $0x8] sm:$0xff]
      %v1299 = vld [vmem:[%s12] sm:$0x1]
      %v1301 = vlaneseq
      %v1302 = vshrl.u32 %v1301, 7
      %v1303 = vsub.s32 0, %v1302
      %v1304 = vrot.slane %v1299, %v1303
      %v1307 = vsel %vm992, %v1296, 0
      %1309 = vmatprep.subr.mxu0 0.0
      %1310 = vmatpush1.msra.mxu0 0.0
      %1311 = vmatprep.subr.mxu0 0.0
      %1312 = vmatpush1.msra.mxu0 0.0
      %1313 = vmatprep.subr.mxu0 0.0
      %1314 = vmatpush1.msra.mxu0 0.0
      %1315 = vmatprep.subr.mxu0 0.0
      %1316 = vmatpush1.msra.mxu0 0.0
      %1317 = vmatprep.subr.mxu0 0.0
      %1318 = vmatpush1.msra.mxu0 0.0
      %1319 = vmatprep.subr.mxu0 0.0
      %1320 = vmatpush1.msra.mxu0 0.0
      %1321 = vmatprep.subr.mxu0 0.0
      %1322 = vmatpush1.msra.mxu0 0.0
      %1323 = vmatprep.subr.mxu0 0.0
      %1324 = vmatpush1.msra.mxu0 0.0
      %1325 = vmatprep.subr.mxu0 0.0
      %1326 = vmatpush1.msra.mxu0 0.0
      %1327 = vmatprep.subr.mxu0 0.0
      %1328 = vmatpush1.msra.mxu0 0.0
      %1329 = vmatprep.subr.mxu0 0.0
      %1330 = vmatpush1.msra.mxu0 0.0
      %1331 = vmatprep.subr.mxu0 0.0
      %1332 = vmatpush1.msra.mxu0 0.0
      %1333 = vmatprep.subr.mxu0 0.0
      %1334 = vmatpush1.msra.mxu0 0.0
      %1335 = vmatprep.subr.mxu0 0.0
      %1336 = vmatpush1.msra.mxu0 0.0
      %1337 = vmatprep.subr.mxu0 0.0
      %1338 = vmatpush1.msra.mxu0 %v1298
      %1339 = vmatprep.subr.mxu0 0.0
      %1340 = vmatpush1.msra.mxu0 %v1297
      %1341 = vmatprep.subr.mxu0 0.0
      %1342 = vmatpush2.msra.mxu0 0.0
      %1343 = vmatprep.subr.mxu0 0.0
      %1344 = vmatpush2.msra.mxu0 0.0
      %1345 = vmatprep.subr.mxu0 0.0
      %1346 = vmatpush2.msra.mxu0 0.0
      %1347 = vmatprep.subr.mxu0 0.0
      %1348 = vmatpush2.msra.mxu0 0.0
      %1349 = vmatprep.subr.mxu0 0.0
      %1350 = vmatpush2.msra.mxu0 0.0
      %1351 = vmatprep.subr.mxu0 0.0
      %1352 = vmatpush2.msra.mxu0 0.0
      %1353 = vmatprep.subr.mxu0 0.0
      %1354 = vmatpush2.msra.mxu0 0.0
      %1355 = vmatprep.subr.mxu0 0.0
      %1356 = vmatpush2.msra.mxu0 0.0
      %1357 = vmatprep.subr.mxu0 0.0
      %1358 = vmatpush2.msra.mxu0 0.0
      %1359 = vmatprep.subr.mxu0 0.0
      %1360 = vmatpush2.msra.mxu0 0.0
      %1361 = vmatprep.subr.mxu0 0.0
      %1362 = vmatpush2.msra.mxu0 0.0
      %1363 = vmatprep.subr.mxu0 0.0
      %1364 = vmatpush2.msra.mxu0 0.0
      %1365 = vmatprep.subr.mxu0 0.0
      %1366 = vmatpush2.msra.mxu0 0.0
      %1367 = vmatprep.subr.mxu0 0.0
      %1368 = vmatpush2.msra.mxu0 0.0
      %1369 = vmatprep.subr.mxu0 0.0
      %1370 = vmatpush2.msra.mxu0 0.0
      %1371 = vmatprep.subr.mxu0 0.0
      %1372 = vmatpush2.msra.mxu0 0.0
      %1373 = vmatprep.mubr.f32.mxu0 0.0
      %1374 = vmatmul.mubr.f32.gmra.mxu0 %v1307
      %v1375 = vpop.f32.mrf.mxu0
      %v1376 = vadd.f32 %v1304, %v1375
      %v1377 = vpop.f32.mrf.mxu0
      %1378 = vdwg.mxu0
      %v1379 = vmax.f32 %v1376, 0.0
      %v1382 = vrot.slane %v1208, 7
      %v1383 = vsel %vm1025, %v1382, %v1136
      %1386 = vrot.lane.b32.xlu0 %v1379, 32
      %v1387 = vpop.permute.xlu0 %1386
      %v1389 = vsel %vm658, %v1383, %v1387
      %v1390 = vld [vmem:[%s13] sm:$0xff]
      %v1391 = vld [vmem:[%s13 + $0x8] sm:$0xff]
      %v1392 = vld [vmem:[%s13 + $0x10] sm:$0xff]
      %v1393 = vld [vmem:[%s13 + $0x18] sm:$0xff]
      %v1394 = vld [vmem:[%s13 + $0x20] sm:$0xff]
      %v1395 = vld [vmem:[%s13 + $0x28] sm:$0xff]
      %v1396 = vld [vmem:[%s13 + $0x30] sm:$0xff]
      %v1397 = vld [vmem:[%s13 + $0x38] sm:$0xff]
      %v1398 = vld [vmem:[%s13 + $0x40] sm:$0xff]
      %v1399 = vld [vmem:[%s13 + $0x48] sm:$0xff]
      %v1400 = vld [vmem:[%s14] sm:$0x1]
      %1401 = vrot.lane.b32.xlu0 %v640, 48
      %v1402 = vpop.permute.xlu0 %1401
      %vm1404 = vcmask 392192
      %v1405 = vsel %vm1404, %v1389, %v1402
      %v1407 = vlaneseq
      %v1408 = vshrl.u32 %v1407, 7
      %v1409 = vsub.s32 0, %v1408
      %v1410 = vrot.slane %v1400, %v1409
      %vm1412 = vcmask 654336
      %v1414 = vsel %vm1412, %v1405, 0
      %1416 = vmatprep.subr.mxu0 0.0
      %1417 = vmatpush1.msra.mxu0 0.0
      %1418 = vmatprep.subr.mxu0 0.0
      %1419 = vmatpush1.msra.mxu0 0.0
      %1420 = vmatprep.subr.mxu0 0.0
      %1421 = vmatpush1.msra.mxu0 0.0
      %1422 = vmatprep.subr.mxu0 0.0
      %1423 = vmatpush1.msra.mxu0 0.0
      %1424 = vmatprep.subr.mxu0 0.0
      %1425 = vmatpush1.msra.mxu0 0.0
      %1426 = vmatprep.subr.mxu0 0.0
      %1427 = vmatpush1.msra.mxu0 0.0
      %1428 = vmatprep.subr.mxu0 0.0
      %1429 = vmatpush1.msra.mxu0 %v1399
      %1430 = vmatprep.subr.mxu0 0.0
      %1431 = vmatpush1.msra.mxu0 %v1398
      %1432 = vmatprep.subr.mxu0 0.0
      %1433 = vmatpush1.msra.mxu0 %v1397
      %1434 = vmatprep.subr.mxu0 0.0
      %1435 = vmatpush1.msra.mxu0 %v1396
      %1436 = vmatprep.subr.mxu0 0.0
      %1437 = vmatpush1.msra.mxu0 %v1395
      %1438 = vmatprep.subr.mxu0 0.0
      %1439 = vmatpush1.msra.mxu0 %v1394
      %1440 = vmatprep.subr.mxu0 0.0
      %1441 = vmatpush1.msra.mxu0 %v1393
      %1442 = vmatprep.subr.mxu0 0.0
      %1443 = vmatpush1.msra.mxu0 %v1392
      %1444 = vmatprep.subr.mxu0 0.0
      %1445 = vmatpush1.msra.mxu0 %v1391
      %1446 = vmatprep.subr.mxu0 0.0
      %1447 = vmatpush1.msra.mxu0 %v1390
      %1448 = vmatprep.subr.mxu0 0.0
      %1449 = vmatpush2.msra.mxu0 0.0
      %1450 = vmatprep.subr.mxu0 0.0
      %1451 = vmatpush2.msra.mxu0 0.0
      %1452 = vmatprep.subr.mxu0 0.0
      %1453 = vmatpush2.msra.mxu0 0.0
      %1454 = vmatprep.subr.mxu0 0.0
      %1455 = vmatpush2.msra.mxu0 0.0
      %1456 = vmatprep.subr.mxu0 0.0
      %1457 = vmatpush2.msra.mxu0 0.0
      %1458 = vmatprep.subr.mxu0 0.0
      %1459 = vmatpush2.msra.mxu0 0.0
      %1460 = vmatprep.subr.mxu0 0.0
      %1461 = vmatpush2.msra.mxu0 0.0
      %1462 = vmatprep.subr.mxu0 0.0
      %1463 = vmatpush2.msra.mxu0 0.0
      %1464 = vmatprep.subr.mxu0 0.0
      %1465 = vmatpush2.msra.mxu0 0.0
      %1466 = vmatprep.subr.mxu0 0.0
      %1467 = vmatpush2.msra.mxu0 0.0
      %1468 = vmatprep.subr.mxu0 0.0
      %1469 = vmatpush2.msra.mxu0 0.0
      %1470 = vmatprep.subr.mxu0 0.0
      %1471 = vmatpush2.msra.mxu0 0.0
      %1472 = vmatprep.subr.mxu0 0.0
      %1473 = vmatpush2.msra.mxu0 0.0
      %1474 = vmatprep.subr.mxu0 0.0
      %1475 = vmatpush2.msra.mxu0 0.0
      %1476 = vmatprep.subr.mxu0 0.0
      %1477 = vmatpush2.msra.mxu0 0.0
      %1478 = vmatprep.subr.mxu0 0.0
      %1479 = vmatpush2.msra.mxu0 0.0
      %1480 = vmatprep.mubr.f32.mxu0 0.0
      %1481 = vmatmul.mubr.f32.gmra.mxu0 %v1414
      %v1482 = vpop.f32.mrf.mxu0
      %v1483 = vadd.f32 %v1410, %v1482
      %v1484 = vpop.f32.mrf.mxu0
      %1485 = vdwg.mxu0
      %v1486 = vxor.u32 %v1483, 2147483648
      %v1487 = vmul.f32 %v1486, 1.442695
      %v1488 = vpow.pop %v1487
      %v1489 = vadd.f32 %v1488, 1.0
      %v1490 = vrcp.pop %v1489
      %v1491 = vmul.f32 1.0, %v1490
      %v1492 = vtanh.pop %v1483
      %1494 = vrot.lane.b32.xlu0 %v642, 32
      %v1495 = vpop.permute.xlu0 %1494
      %v1497 = vmul.f32 %v1491, %v1495
      %1499 = vrot.lane.b32.xlu0 %v1492, 64
      %v1500 = vpop.permute.xlu0 %1499
      %v1502 = vmul.f32 %v1491, %v1500
      %1504 = vrot.lane.b32.xlu0 %v1502, 32
      %v1505 = vpop.permute.xlu0 %1504
      %v1507 = vadd.f32 %v1497, %v1505
      %v1508 = vtanh.pop %v1507
      %1510 = vrot.lane.b32.xlu0 %v1508, 64
      %v1511 = vpop.permute.xlu0 %1510
      %v1513 = vmul.f32 %v1491, %v1511
      %v1514 = vmul.f32 %v640, 0.1
      %v1515 = vmul.f32 %v1513, 0.9
      %1517 = vrot.lane.b32.xlu0 %v1515, 32
      %v1518 = vpop.permute.xlu0 %1517
      %v1520 = vadd.f32 %v1514, %v1518
      %v1521 = vmul.f32 %v642, 0.1
      %v1522 = vmul.f32 %v1507, 0.9
      %1524 = vrot.lane.b32.xlu0 %v1522, 96
      %v1525 = vpop.permute.xlu0 %1524
      %v1527 = vadd.f32 %v1521, %v1525
      %vm1528 = vcmask 254976
      %1529 = vst.msk [vmem:[#allocation2] sm:$0x3] %vm1528, %v1520
      %1530 = vst.msk [vmem:[#allocation3] sm:$0x3] %vm1528, %v1527
      %v1531 = vld [vmem:[%s15] sm:$0xff]
      %v1532 = vld [vmem:[%s15 + $0x8] sm:$0xff]
      %v1533 = vld [vmem:[%s15 + $0x10] sm:$0xff]
      %v1534 = vld [vmem:[%s15 + $0x18] sm:$0xff]
      %v1535 = vld [vmem:[%s15 + $0x20] sm:$0xff]
      %v1536 = vld [vmem:[%s15 + $0x28] sm:$0xff]
      %v1537 = vld [vmem:[%s15 + $0x30] sm:$0xff]
      %v1538 = vld [vmem:[%s15 + $0x38] sm:$0xff]
      %v1539 = vld [vmem:[%s16] sm:$0x1]
      %1541 = vrot.lane.b32.xlu0 %v641, 32
      %v1542 = vpop.permute.xlu0 %1541
      %v1544 = vsel %vm658, %v1520, %v1542
      %v1546 = vlaneseq
      %v1547 = vshrl.u32 %v1546, 7
      %v1548 = vsub.s32 0, %v1547
      %v1549 = vrot.slane %v1539, %v1548
      %vm1551 = vcmask 523264
      %v1553 = vsel %vm1551, %v1544, 0
      %1555 = vmatprep.subr.mxu0 0.0
      %1556 = vmatpush1.msra.mxu0 0.0
      %1557 = vmatprep.subr.mxu0 0.0
      %1558 = vmatpush1.msra.mxu0 0.0
      %1559 = vmatprep.subr.mxu0 0.0
      %1560 = vmatpush1.msra.mxu0 0.0
      %1561 = vmatprep.subr.mxu0 0.0
      %1562 = vmatpush1.msra.mxu0 0.0
      %1563 = vmatprep.subr.mxu0 0.0
      %1564 = vmatpush1.msra.mxu0 0.0
      %1565 = vmatprep.subr.mxu0 0.0
      %1566 = vmatpush1.msra.mxu0 0.0
      %1567 = vmatprep.subr.mxu0 0.0
      %1568 = vmatpush1.msra.mxu0 0.0
      %1569 = vmatprep.subr.mxu0 0.0
      %1570 = vmatpush1.msra.mxu0 0.0
      %1571 = vmatprep.subr.mxu0 0.0
      %1572 = vmatpush1.msra.mxu0 %v1538
      %1573 = vmatprep.subr.mxu0 0.0
      %1574 = vmatpush1.msra.mxu0 %v1537
      %1575 = vmatprep.subr.mxu0 0.0
      %1576 = vmatpush1.msra.mxu0 %v1536
      %1577 = vmatprep.subr.mxu0 0.0
      %1578 = vmatpush1.msra.mxu0 %v1535
      %1579 = vmatprep.subr.mxu0 0.0
      %1580 = vmatpush1.msra.mxu0 %v1534
      %1581 = vmatprep.subr.mxu0 0.0
      %1582 = vmatpush1.msra.mxu0 %v1533
      %1583 = vmatprep.subr.mxu0 0.0
      %1584 = vmatpush1.msra.mxu0 %v1532
      %1585 = vmatprep.subr.mxu0 0.0
      %1586 = vmatpush1.msra.mxu0 %v1531
      %1587 = vmatprep.subr.mxu0 0.0
      %1588 = vmatpush2.msra.mxu0 0.0
      %1589 = vmatprep.subr.mxu0 0.0
      %1590 = vmatpush2.msra.mxu0 0.0
      %1591 = vmatprep.subr.mxu0 0.0
      %1592 = vmatpush2.msra.mxu0 0.0
      %1593 = vmatprep.subr.mxu0 0.0
      %1594 = vmatpush2.msra.mxu0 0.0
      %1595 = vmatprep.subr.mxu0 0.0
      %1596 = vmatpush2.msra.mxu0 0.0
      %1597 = vmatprep.subr.mxu0 0.0
      %1598 = vmatpush2.msra.mxu0 0.0
      %1599 = vmatprep.subr.mxu0 0.0
      %1600 = vmatpush2.msra.mxu0 0.0
      %1601 = vmatprep.subr.mxu0 0.0
      %1602 = vmatpush2.msra.mxu0 0.0
      %1603 = vmatprep.subr.mxu0 0.0
      %1604 = vmatpush2.msra.mxu0 0.0
      %1605 = vmatprep.subr.mxu0 0.0
      %1606 = vmatpush2.msra.mxu0 0.0
      %1607 = vmatprep.subr.mxu0 0.0
      %1608 = vmatpush2.msra.mxu0 0.0
      %1609 = vmatprep.subr.mxu0 0.0
      %1610 = vmatpush2.msra.mxu0 0.0
      %1611 = vmatprep.subr.mxu0 0.0
      %1612 = vmatpush2.msra.mxu0 0.0
      %1613 = vmatprep.subr.mxu0 0.0
      %1614 = vmatpush2.msra.mxu0 0.0
      %1615 = vmatprep.subr.mxu0 0.0
      %1616 = vmatpush2.msra.mxu0 0.0
      %1617 = vmatprep.subr.mxu0 0.0
      %1618 = vmatpush2.msra.mxu0 0.0
      %1619 = vmatprep.mubr.f32.mxu0 0.0
      %1620 = vmatmul.mubr.f32.gmra.mxu0 %v1553
      %v1621 = vpop.f32.mrf.mxu0
      %v1622 = vadd.f32 %v1549, %v1621
      %v1623 = vpop.f32.mrf.mxu0
      %1624 = vdwg.mxu0
      %v1625 = vxor.u32 %v1622, 2147483648
      %v1626 = vmul.f32 %v1625, 1.442695
      %v1627 = vpow.pop %v1626
      %v1628 = vadd.f32 %v1627, 1.0
      %v1629 = vrcp.pop %v1628
      %v1630 = vmul.f32 1.0, %v1629
      %v1631 = vtanh.pop %v1622
      %1633 = vrot.lane.b32.xlu0 %v643, 32
      %v1634 = vpop.permute.xlu0 %1633
      %v1636 = vmul.f32 %v1630, %v1634
      %1638 = vrot.lane.b32.xlu0 %v1631, 64
      %v1639 = vpop.permute.xlu0 %1638
      %v1641 = vmul.f32 %v1630, %v1639
      %1643 = vrot.lane.b32.xlu0 %v1641, 32
      %v1644 = vpop.permute.xlu0 %1643
      %v1646 = vadd.f32 %v1636, %v1644
      %v1647 = vtanh.pop %v1646
      %1649 = vrot.lane.b32.xlu0 %v1647, 64
      %v1650 = vpop.permute.xlu0 %1649
      %v1652 = vmul.f32 %v1630, %v1650
      %v1653 = vmul.f32 %v641, 0.1
      %v1654 = vmul.f32 %v1652, 0.9
      %1656 = vrot.lane.b32.xlu0 %v1654, 32
      %v1657 = vpop.permute.xlu0 %1656
      %v1659 = vadd.f32 %v1653, %v1657
      %v1660 = vmul.f32 %v643, 0.1
      %v1661 = vmul.f32 %v1646, 0.9
      %1663 = vrot.lane.b32.xlu0 %v1661, 96
      %v1664 = vpop.permute.xlu0 %1663
      %v1666 = vadd.f32 %v1660, %v1664
      %1667 = vst.msk [vmem:[#allocation4] sm:$0x3] %vm1528, %v1659
      %1668 = vst.msk [vmem:[#allocation5] sm:$0x3] %vm1528, %v1666
      %1669 = vrot.lane.b32.xlu0 %v1383, 32
      %v1670 = vpop.permute.xlu0 %1669
      %v1672 = vsel %vm658, %v1659, %v1670
      %v1673 = vld [vmem:[%s17] sm:$0xff]
      %v1674 = vld [vmem:[%s17 + $0x8] sm:$0xff]
      %v1675 = vld [vmem:[%s17 + $0x10] sm:$0xff]
      %v1676 = vld [vmem:[%s17 + $0x18] sm:$0xff]
      %v1677 = vld [vmem:[%s17 + $0x20] sm:$0xff]
      %v1678 = vld [vmem:[%s17 + $0x28] sm:$0xff]
      %v1679 = vld [vmem:[%s17 + $0x30] sm:$0xff]
      %v1680 = vld [vmem:[%s17 + $0x38] sm:$0xff]
      %v1682 = vsel %vm1551, %v1672, 0
      %1684 = vmatprep.subr.mxu0 0.0
      %1685 = vmatpush1.msra.mxu0 0.0
      %1686 = vmatprep.subr.mxu0 0.0
      %1687 = vmatpush1.msra.mxu0 0.0
      %1688 = vmatprep.subr.mxu0 0.0
      %1689 = vmatpush1.msra.mxu0 0.0
      %1690 = vmatprep.subr.mxu0 0.0
      %1691 = vmatpush1.msra.mxu0 0.0
      %1692 = vmatprep.subr.mxu0 0.0
      %1693 = vmatpush1.msra.mxu0 0.0
      %1694 = vmatprep.subr.mxu0 0.0
      %1695 = vmatpush1.msra.mxu0 0.0
      %1696 = vmatprep.subr.mxu0 0.0
      %1697 = vmatpush1.msra.mxu0 0.0
      %1698 = vmatprep.subr.mxu0 0.0
      %1699 = vmatpush1.msra.mxu0 0.0
      %1700 = vmatprep.subr.mxu0 0.0
      %1701 = vmatpush1.msra.mxu0 %v1680
      %1702 = vmatprep.subr.mxu0 0.0
      %1703 = vmatpush1.msra.mxu0 %v1679
      %1704 = vmatprep.subr.mxu0 0.0
      %1705 = vmatpush1.msra.mxu0 %v1678
      %1706 = vmatprep.subr.mxu0 0.0
      %1707 = vmatpush1.msra.mxu0 %v1677
      %1708 = vmatprep.subr.mxu0 0.0
      %1709 = vmatpush1.msra.mxu0 %v1676
      %1710 = vmatprep.subr.mxu0 0.0
      %1711 = vmatpush1.msra.mxu0 %v1675
      %1712 = vmatprep.subr.mxu0 0.0
      %1713 = vmatpush1.msra.mxu0 %v1674
      %1714 = vmatprep.subr.mxu0 0.0
      %1715 = vmatpush1.msra.mxu0 %v1673
      %1716 = vmatprep.subr.mxu0 0.0
      %1717 = vmatpush2.msra.mxu0 0.0
      %1718 = vmatprep.subr.mxu0 0.0
      %1719 = vmatpush2.msra.mxu0 0.0
      %1720 = vmatprep.subr.mxu0 0.0
      %1721 = vmatpush2.msra.mxu0 0.0
      %1722 = vmatprep.subr.mxu0 0.0
      %1723 = vmatpush2.msra.mxu0 0.0
      %1724 = vmatprep.subr.mxu0 0.0
      %1725 = vmatpush2.msra.mxu0 0.0
      %1726 = vmatprep.subr.mxu0 0.0
      %1727 = vmatpush2.msra.mxu0 0.0
      %1728 = vmatprep.subr.mxu0 0.0
      %1729 = vmatpush2.msra.mxu0 0.0
      %1730 = vmatprep.subr.mxu0 0.0
      %1731 = vmatpush2.msra.mxu0 0.0
      %1732 = vmatprep.subr.mxu0 0.0
      %1733 = vmatpush2.msra.mxu0 0.0
      %1734 = vmatprep.subr.mxu0 0.0
      %1735 = vmatpush2.msra.mxu0 0.0
      %1736 = vmatprep.subr.mxu0 0.0
      %1737 = vmatpush2.msra.mxu0 0.0
      %1738 = vmatprep.subr.mxu0 0.0
      %1739 = vmatpush2.msra.mxu0 0.0
      %1740 = vmatprep.subr.mxu0 0.0
      %1741 = vmatpush2.msra.mxu0 0.0
      %1742 = vmatprep.subr.mxu0 0.0
      %1743 = vmatpush2.msra.mxu0 0.0
      %1744 = vmatprep.subr.mxu0 0.0
      %1745 = vmatpush2.msra.mxu0 0.0
      %1746 = vmatprep.subr.mxu0 0.0
      %1747 = vmatpush2.msra.mxu0 0.0
      %1748 = vmatprep.mubr.f32.mxu0 0.0
      %1749 = vmatmul.mubr.f32.gmra.mxu0 %v1682
      %v1750 = vpop.f32.mrf.mxu0
      %v1751 = vadd.f32 0.0, %v1750
      %v1752 = vpop.f32.mrf.mxu0
      %1753 = vdwg.mxu0
      %v1754 = vld [vmem:[%s18] sm:$0xff]
      %v1755 = vld [vmem:[%s18 + $0x8] sm:$0xff]
      %v1756 = vld [vmem:[%s18 + $0x10] sm:$0xff]
      %v1757 = vld [vmem:[%s18 + $0x18] sm:$0xff]
      %v1758 = vld [vmem:[%s18 + $0x20] sm:$0xff]
      %v1759 = vld [vmem:[%s18 + $0x28] sm:$0xff]
      %v1760 = vld [vmem:[%s18 + $0x30] sm:$0xff]
      %v1761 = vld [vmem:[%s18 + $0x38] sm:$0xff]
      %v1762 = vld [vmem:[#allocation8] sm:$0x1]
      %v1764 = vlaneseq
      %v1765 = vshrl.u32 %v1764, 7
      %v1766 = vsub.s32 0, %v1765
      %v1767 = vrot.slane %v1762, %v1766
      %1769 = vmatprep.subr.mxu0 0.0
      %1770 = vmatpush1.msra.mxu0 0.0
      %1771 = vmatprep.subr.mxu0 0.0
      %1772 = vmatpush1.msra.mxu0 0.0
      %1773 = vmatprep.subr.mxu0 0.0
      %1774 = vmatpush1.msra.mxu0 0.0
      %1775 = vmatprep.subr.mxu0 0.0
      %1776 = vmatpush1.msra.mxu0 0.0
      %1777 = vmatprep.subr.mxu0 0.0
      %1778 = vmatpush1.msra.mxu0 0.0
      %1779 = vmatprep.subr.mxu0 0.0
      %1780 = vmatpush1.msra.mxu0 0.0
      %1781 = vmatprep.subr.mxu0 0.0
      %1782 = vmatpush1.msra.mxu0 0.0
      %1783 = vmatprep.subr.mxu0 0.0
      %1784 = vmatpush1.msra.mxu0 0.0
      %1785 = vmatprep.subr.mxu0 0.0
      %1786 = vmatpush1.msra.mxu0 %v1761
      %1787 = vmatprep.subr.mxu0 0.0
      %1788 = vmatpush1.msra.mxu0 %v1760
      %1789 = vmatprep.subr.mxu0 0.0
      %1790 = vmatpush1.msra.mxu0 %v1759
      %1791 = vmatprep.subr.mxu0 0.0
      %1792 = vmatpush1.msra.mxu0 %v1758
      %1793 = vmatprep.subr.mxu0 0.0
      %1794 = vmatpush1.msra.mxu0 %v1757
      %1795 = vmatprep.subr.mxu0 0.0
      %1796 = vmatpush1.msra.mxu0 %v1756
      %1797 = vmatprep.subr.mxu0 0.0
      %1798 = vmatpush1.msra.mxu0 %v1755
      %1799 = vmatprep.subr.mxu0 0.0
      %1800 = vmatpush1.msra.mxu0 %v1754
      %1801 = vmatprep.subr.mxu0 0.0
      %1802 = vmatpush2.msra.mxu0 0.0
      %1803 = vmatprep.subr.mxu0 0.0
      %1804 = vmatpush2.msra.mxu0 0.0
      %1805 = vmatprep.subr.mxu0 0.0
      %1806 = vmatpush2.msra.mxu0 0.0
      %1807 = vmatprep.subr.mxu0 0.0
      %1808 = vmatpush2.msra.mxu0 0.0
      %1809 = vmatprep.subr.mxu0 0.0
      %1810 = vmatpush2.msra.mxu0 0.0
      %1811 = vmatprep.subr.mxu0 0.0
      %1812 = vmatpush2.msra.mxu0 0.0
      %1813 = vmatprep.subr.mxu0 0.0
      %1814 = vmatpush2.msra.mxu0 0.0
      %1815 = vmatprep.subr.mxu0 0.0
      %1816 = vmatpush2.msra.mxu0 0.0
      %1817 = vmatprep.subr.mxu0 0.0
      %1818 = vmatpush2.msra.mxu0 0.0
      %1819 = vmatprep.subr.mxu0 0.0
      %1820 = vmatpush2.msra.mxu0 0.0
      %1821 = vmatprep.subr.mxu0 0.0
      %1822 = vmatpush2.msra.mxu0 0.0
      %1823 = vmatprep.subr.mxu0 0.0
      %1824 = vmatpush2.msra.mxu0 0.0
      %1825 = vmatprep.subr.mxu0 0.0
      %1826 = vmatpush2.msra.mxu0 0.0
      %1827 = vmatprep.subr.mxu0 0.0
      %1828 = vmatpush2.msra.mxu0 0.0
      %1829 = vmatprep.subr.mxu0 0.0
      %1830 = vmatpush2.msra.mxu0 0.0
      %1831 = vmatprep.subr.mxu0 0.0
      %1832 = vmatpush2.msra.mxu0 0.0
      %1833 = vmatprep.mubr.f32.mxu0 0.0
      %1834 = vmatmul.mubr.f32.gmra.mxu0 %v1682
      %v1835 = vpop.f32.mrf.mxu0
      %v1836 = vadd.f32 %v1767, %v1835
      %v1837 = vpop.f32.mrf.mxu0
      %1838 = vdwg.mxu0
      %1840 = vrot.lane.b32.xlu0 %v1836, 8
      %v1841 = vpop.permute.xlu0 %1840
      %1843 = vrot.lane.b32.xlu0 %v1040, 9
      %v1844 = vpop.permute.xlu0 %1843
      %v1846 = vsel %vm1066, %v1751, %v1841
      %vm1847 = vcmask 72704
      %v1848 = vsel %vm1847, %v1846, %v1844
      %vm1849 = vcmask 138240
      %v1850 = vsel %vm1849, %v1848, 0.0
      %1851 = vst [vmem:[%s628] sm:$0x3] %v1850
      %p1852 = scmp.lt.s32.totalorder %s35, 5
      %s1853 = scalar_select %p1852, %s35, 5
      %s1854 = smul.addr %s1853, 2
      %s1855 = scalar_lea.vmem %s20, %s1854
      // Predicated region
      $region105: #{_lambda_.12} parent=99 // pred_check
        %p1856 = pneg %p478
      $region106: #{_lambda_.12} parent=99 // pred_check_branch
        %1858 = sbr.rel (%p1856) target = $region108
      $region107: #{_lambda_.12} parent=99 // pred_region
        _
      $region108: #{_lambda_.12} parent=99 // pred_fallthru
        _
    $region100: #{_lambda_.12} parent=5 // pred_fallthru
      _
    %p1859 = scmp.le.s32.totalorder 2, %s30
    // Predicated region
    $region109: #{_lambda_.12} parent=5 // pred_check
      %p1860 = pneg %p1859
    $region110: #{_lambda_.12} parent=5 // pred_check_branch
      %1862 = sbr.rel (%p1860) target = $region112
    $region111: #{_lambda_.12} parent=5 // pred_region
      %s1863 = ssub.s32 %s30, 2
      // Predicated region
      $region113: #{_lambda_.12} parent=111 // pred_check
        %p1864 = pneg %p484
      $region114: #{_lambda_.12} parent=111 // pred_check_branch
        %1866 = sbr.rel (%p1864) target = $region116
      $region115: #{_lambda_.12} parent=111 // pred_region
        %p1867 = scmp.lt.s32.totalorder %s36, 5
        %s1868 = scalar_select %p1867, %s36, 5
        %s1869 = smul.addr %s1868, 2
        %s1870 = scalar_lea.vmem %s20, %s1869
      $region116: #{_lambda_.12} parent=111 // pred_fallthru
        _
    $region112: #{_lambda_.12} parent=5 // pred_fallthru
      _
  $region6: #{_lambda_.12} parent=0 // loop_footer
    %s34 = sadd.s32 1, %s30
  $region7: #{_lambda_.12} parent=0 // loop_footer_branch
    %29 = sbr.rel target = $region3
  $region8: #{_lambda_.12} parent=0 // loop_exit
    _

</llo_original>
